<compile_context>
chip_gen: v5e
topology: v5e:2x2
jax: 0.10.0
libtpu: 0.0.40
codegen_flags: <defaults>
</compile_context>

<pallas_src>
import functools

import jax
import jax.numpy as jnp
import numpy as np
from jax.experimental import pallas as pl
from jax.experimental.pallas import tpu as pltpu

HID = 32          # hid_dim of the Encoder
KH = KW = 5       # conv kernel size
PAD = 2           # padding=2 ("same" conv)
N_LAYERS = 4


def _build_grid(H, W):
    """JAX port of build_grid: returns (H, W, 4) float32 = [grid, 1-grid]."""
    ys = jnp.linspace(0.0, 1.0, H)
    xs = jnp.linspace(0.0, 1.0, W)
    gy, gx = jnp.meshgrid(ys, xs, indexing="ij")
    grid = jnp.stack([gy, gx], axis=-1)                   # (H, W, 2)
    return jnp.concatenate([grid, 1.0 - grid], -1).astype(jnp.float32)


def _round_up(n, m):
    return (n + m - 1) // m * m


def _pick_batch_tile(B):
    """Largest tile that still leaves >= 2 grid steps (megacore-friendly)."""
    for bt in (8, 4, 2, 1):
        if bt <= B and B % bt == 0 and B // bt >= 2:
            return bt
    return B


def _encoder_kernel(h_ref, wc_ref, bc_ref, out_ref, pad_ref, *, H, W, hid, Wp):
    # h_ref   : (Bt, H, W*hid)        SoftPositionEmbed output, lane-dense
    # wc_ref  : (L, KH*hid, KW*hid)   conv weights, rows dy-major, cols dx-major
    # bc_ref  : (L, 1, hid)           conv biases
    # out_ref : (Bt, H, W*hid)        lane-dense output block
    # pad_ref : (Bt, H+2P, Wp, hid)   VMEM scratch, zero spatial border
    Bt = h_ref.shape[0]

    # Zero the padded scratch ONCE per grid step: the border is never written
    # afterwards and the interior is fully overwritten by every layer.
    pad_ref[...] = jnp.zeros(pad_ref.shape, pad_ref.dtype)

    # Lane-dense input -> NHWC working form.
    h = h_ref[...].reshape(Bt, H, W, hid)

    # --- 4 x (5x5 same conv), relu between layers 1..3 -----------------------
    for layer in range(N_LAYERS):
        pad_ref[:, PAD:PAD + H, PAD:PAD + W, :] = h

        # Hoisted dy concat: one (Bt, H, Wp, KH*hid) patch per layer.  The dy
        # taps are free leading-dim slices of the padded scratch.
        patch = jnp.concatenate(
            [pad_ref[:, dy:dy + H, :, :] for dy in range(KH)], axis=-1)

        # Single wide MXU dot per layer: K = KH*hid = 160, N = KW*hid = 160.
        y = jnp.dot(patch.reshape(Bt * H * Wp, KH * hid),
                    wc_ref[layer],
                    preferred_element_type=jnp.float32)
        y = y.reshape(Bt, H, Wp, KW * hid)

        # dx accumulation: 5 slice-adds of the dot output (bias pre-seeded).
        acc = jnp.broadcast_to(bc_ref[layer].reshape(1, 1, 1, hid),
                               (Bt, H, W, hid))
        for dx in range(KW):
            acc = acc + y[:, :, dx:dx + W, dx * hid:(dx + 1) * hid]

        if layer < N_LAYERS - 1:           # relu after conv1/2/3, not conv4
            acc = jnp.maximum(acc, 0.0)
        h = acc

    # Lane-dense store: last dim W*hid is a multiple of 128 -> unmasked vst.
    out_ref[...] = h.reshape(Bt, H, W * hid).astype(out_ref.dtype)


def encoder_forward(x_nchw, params):
    """Pallas Encoder forward. x_nchw: (B, 3, H, W) -> (B, hid, H, W)."""
    we, be, wc, bc = params["we"], params["be"], params["wc"], params["bc"]
    B, C, H, W = x_nchw.shape
    assert C == 3, "Linear(7, hid) implies 3 input channels (4 grid + 3 image)"
    hid = we.shape[1]

    # --- SoftPositionEmbed in the wrapper (tiny Linear(7, hid) glue) ---------
    grid2d = _build_grid(H, W)                                   # (H, W, 4)
    x_nhwc = jnp.transpose(x_nchw, (0, 2, 3, 1))                 # (B, H, W, 3)
    feat = jnp.concatenate(
        [jnp.broadcast_to(grid2d[None], (B, H, W, 4)), x_nhwc], axis=-1)
    h0 = (feat.reshape(B * H * W, 7) @ we + be).reshape(B, H, W * hid)

    # --- pre-pack conv weights wide ------------------------------------------
    # (L, KH, KW, in, out) -> (L, KH*in, KW*out): row = dy*hid + ci (matches
    # the in-kernel dy channel-concat), col = dx*hid + co (matches the dx
    # slice of the dot output).
    wc_wide = jnp.transpose(wc, (0, 1, 3, 2, 4)).reshape(
        N_LAYERS, KH * hid, KW * hid)
    bc_r = bc.reshape(N_LAYERS, 1, hid)

    Bt = _pick_batch_tile(B)
    Wp = _round_up(W + 2 * PAD, 8)     # sublane-aligned padded width

    kernel = functools.partial(_encoder_kernel, H=H, W=W, hid=hid, Wp=Wp)

    out_flat = pl.pallas_call(
        kernel,
        out_shape=jax.ShapeDtypeStruct((B, H, W * hid), jnp.float32),
        grid_spec=pltpu.PrefetchScalarGridSpec(
            num_scalar_prefetch=0,
            grid=(B // Bt,),
            in_specs=[
                pl.BlockSpec((Bt, H, W * hid), lambda b: (b, 0, 0)),
                pl.BlockSpec((N_LAYERS, KH * hid, KW * hid),
                             lambda b: (0, 0, 0)),
                pl.BlockSpec((N_LAYERS, 1, hid), lambda b: (0, 0, 0)),
            ],
            out_specs=pl.BlockSpec((Bt, H, W * hid), lambda b: (b, 0, 0)),
            scratch_shapes=[
                pltpu.VMEM((Bt, H + 2 * PAD, Wp, hid), jnp.float32)],
        ),
        compiler_params=pltpu.CompilerParams(
            dimension_semantics=("parallel",)),
    )(h0, wc_wide, bc_r)

    out_nhwc = out_flat.reshape(B, H, W, hid)
    return jnp.transpose(out_nhwc, (0, 3, 1, 2))                 # back to NCHW


def init_params(key, hid):
    """Deterministic synthetic parameters (shapes match the PyTorch module)."""
    k0, k1, k2, k3 = jax.random.split(key, 4)
    we = jax.random.normal(k0, (7, hid), jnp.float32) / np.sqrt(7.0)
    be = jax.random.normal(k1, (hid,), jnp.float32) * 0.01
    # conv weights stored HWIO per layer: (layer, kh, kw, in, out)
    wc = jax.random.normal(k2, (N_LAYERS, KH, KW, hid, hid),
                           jnp.float32) / np.sqrt(KH * KW * hid)
    bc = jax.random.normal(k3, (N_LAYERS, hid), jnp.float32) * 0.01
    return dict(we=we, be=be, wc=wc, bc=bc)


def reference_forward(x_nchw, params):
    """Pure-JAX reference mirroring the PyTorch forward (for verification)."""
    we, be, wc, bc = params["we"], params["be"], params["wc"], params["bc"]
    B, C, H, W = x_nchw.shape
    grid2d = _build_grid(H, W)
    x_nhwc = jnp.transpose(x_nchw, (0, 2, 3, 1))
    feat = jnp.concatenate(
        [jnp.broadcast_to(grid2d[None], (B, H, W, 4)), x_nhwc], axis=-1)
    h = feat @ we + be
    for l in range(N_LAYERS):
        h = jax.lax.conv_general_dilated(
            h, wc[l], window_strides=(1, 1), padding="SAME",
            dimension_numbers=("NHWC", "HWIO", "NHWC")) + bc[l]
        if l < N_LAYERS - 1:
            h = jax.nn.relu(h)
    return jnp.transpose(h, (0, 3, 1, 2))


if __name__ == "__main__":
    key = jax.random.PRNGKey(0)
    kx, kp = jax.random.split(key)
    B, C, H, W = 2, 3, 16, 16
    x = jax.random.normal(kx, (B, C, H, W), jnp.float32)
    params = init_params(kp, HID)

    out = encoder_forward(x, params)
    out = jax.block_until_ready(out)

    ref = reference_forward(x, params)
    np.testing.assert_allclose(np.asarray(out), np.asarray(ref),
                               rtol=2e-4, atol=2e-4)
    print("KERNEL_OK")
</pallas_src>

<mosaic_0001>
module attributes {stable_mosaic.version = 11 : i64} {
  func.func @_encoder_kernel(%arg0: i32, %arg1: memref<1x16x512xf32, #tpu.memory_space<vmem>>, %arg2: memref<4x160x160xf32, #tpu.memory_space<vmem>>, %arg3: memref<4x1x32xf32, #tpu.memory_space<vmem>>, %arg4: memref<1x16x512xf32, #tpu.memory_space<vmem>>, %arg5: memref<1x20x24x32xf32, #tpu.memory_space<vmem>>) attributes {dimension_semantics = [#tpu.dimension_semantics<parallel>], iteration_bounds = array<i64: 2>, scalar_prefetch = 0 : i64, scratch_operands = 1 : i64, tpu.core_type = #tpu.core_type<tc>, window_params = [{transform_indices = @transform_0, window_bounds = array<i64: 1, 16, 512>}, {pipeline_mode = #tpu.pipeline_mode<synchronous>, transform_indices = @transform_1, window_bounds = array<i64: 4, 160, 160>}, {pipeline_mode = #tpu.pipeline_mode<synchronous>, transform_indices = @transform_2, window_bounds = array<i64: 4, 1, 32>}, {transform_indices = @transform_3, window_bounds = array<i64: 1, 16, 512>}]} {
    %cst = arith.constant 0.000000e+00 : f32
    %0 = vector.broadcast %cst : f32 to vector<1x20x24x32xf32>
    %c0 = arith.constant 0 : index
    %c0_0 = arith.constant 0 : index
    %c0_1 = arith.constant 0 : index
    %c0_2 = arith.constant 0 : index
    %1 = vector.load %arg5[%c0, %c0_0, %c0_1, %c0_2] : memref<1x20x24x32xf32, #tpu.memory_space<vmem>>, vector<1x20x24x32xf32>
    tpu.vector_store %arg5[%c0, %c0_0, %c0_1, %c0_2], %0 {strides = array<i32>} : memref<1x20x24x32xf32, #tpu.memory_space<vmem>>, vector<1x20x24x32xf32>,
    %c0_3 = arith.constant 0 : index
    %c0_4 = arith.constant 0 : index
    %c0_5 = arith.constant 0 : index
    %2 = vector.load %arg1[%c0_3, %c0_4, %c0_5] : memref<1x16x512xf32, #tpu.memory_space<vmem>>, vector<1x16x512xf32>
    %3 = vector.shape_cast %2 : vector<1x16x512xf32> to vector<1x16x16x32xf32>
    %c0_6 = arith.constant 0 : index
    %c2 = arith.constant 2 : index
    %c2_7 = arith.constant 2 : index
    %c0_8 = arith.constant 0 : index
    %4 = vector.load %arg5[%c0_6, %c2, %c2_7, %c0_8] : memref<1x20x24x32xf32, #tpu.memory_space<vmem>>, vector<1x16x16x32xf32>
    tpu.vector_store %arg5[%c0_6, %c2, %c2_7, %c0_8], %3 {strides = array<i32>} : memref<1x20x24x32xf32, #tpu.memory_space<vmem>>, vector<1x16x16x32xf32>,
    %c0_9 = arith.constant 0 : index
    %c0_10 = arith.constant 0 : index
    %c0_11 = arith.constant 0 : index
    %c0_12 = arith.constant 0 : index
    %5 = vector.load %arg5[%c0_9, %c0_10, %c0_11, %c0_12] : memref<1x20x24x32xf32, #tpu.memory_space<vmem>>, vector<1x16x24x32xf32>
    %c0_13 = arith.constant 0 : index
    %c1 = arith.constant 1 : index
    %c0_14 = arith.constant 0 : index
    %c0_15 = arith.constant 0 : index
    %6 = vector.load %arg5[%c0_13, %c1, %c0_14, %c0_15] : memref<1x20x24x32xf32, #tpu.memory_space<vmem>>, vector<1x16x24x32xf32>
    %c0_16 = arith.constant 0 : index
    %c2_17 = arith.constant 2 : index
    %c0_18 = arith.constant 0 : index
    %c0_19 = arith.constant 0 : index
    %7 = vector.load %arg5[%c0_16, %c2_17, %c0_18, %c0_19] : memref<1x20x24x32xf32, #tpu.memory_space<vmem>>, vector<1x16x24x32xf32>
    %c0_20 = arith.constant 0 : index
    %c3 = arith.constant 3 : index
    %c0_21 = arith.constant 0 : index
    %c0_22 = arith.constant 0 : index
    %8 = vector.load %arg5[%c0_20, %c3, %c0_21, %c0_22] : memref<1x20x24x32xf32, #tpu.memory_space<vmem>>, vector<1x16x24x32xf32>
    %c0_23 = arith.constant 0 : index
    %c4 = arith.constant 4 : index
    %c0_24 = arith.constant 0 : index
    %c0_25 = arith.constant 0 : index
    %9 = vector.load %arg5[%c0_23, %c4, %c0_24, %c0_25] : memref<1x20x24x32xf32, #tpu.memory_space<vmem>>, vector<1x16x24x32xf32>
    %10 = tpu.concatenate %5, %6, %7, %8, %9 in 3 : vector<1x16x24x32xf32>, vector<1x16x24x32xf32>, vector<1x16x24x32xf32>, vector<1x16x24x32xf32>, vector<1x16x24x32xf32> -> vector<1x16x24x160xf32>
    %11 = vector.shape_cast %10 : vector<1x16x24x160xf32> to vector<384x160xf32>
    %c0_26 = arith.constant 0 : index
    %c0_27 = arith.constant 0 : index
    %c0_28 = arith.constant 0 : index
    %12 = vector.load %arg2[%c0_26, %c0_27, %c0_28] : memref<4x160x160xf32, #tpu.memory_space<vmem>>, vector<1x160x160xf32>
    %13 = vector.shape_cast %12 : vector<1x160x160xf32> to vector<160x160xf32>
    %cst_29 = arith.constant dense<0.000000e+00> : vector<384x160xf32>
    %14 = tpu.matmul %11, %13, %cst_29 {dimension_numbers = #tpu.dot_dimension_numbers<[1], [0], [0], [1], [0, 0, 1, 1], [], []>} : vector<384x160xf32>, vector<160x160xf32>, vector<384x160xf32> -> vector<384x160xf32>
    %15 = vector.shape_cast %14 : vector<384x160xf32> to vector<1x16x24x160xf32>
    %c0_30 = arith.constant 0 : index
    %c0_31 = arith.constant 0 : index
    %c0_32 = arith.constant 0 : index
    %16 = vector.load %arg3[%c0_30, %c0_31, %c0_32] : memref<4x1x32xf32, #tpu.memory_space<vmem>>, vector<1x1x32xf32>
    %17 = vector.shape_cast %16 : vector<1x1x32xf32> to vector<1x32xf32>
    %18 = vector.shape_cast %17 : vector<1x32xf32> to vector<1x1x1x32xf32>
    %19 = vector.shape_cast %18 : vector<1x1x1x32xf32> to vector<1x1x1x32xf32>
    %20 = vector.broadcast %19 : vector<1x1x1x32xf32> to vector<1x16x16x32xf32>
    %21 = vector.extract_strided_slice %15 {offsets = [0, 0, 0, 0], sizes = [1, 16, 16, 32], strides = [1, 1, 1, 1]} : vector<1x16x24x160xf32> to vector<1x16x16x32xf32>
    %22 = arith.addf %20, %21 : vector<1x16x16x32xf32>
    %23 = vector.extract_strided_slice %15 {offsets = [0, 0, 1, 32], sizes = [1, 16, 16, 32], strides = [1, 1, 1, 1]} : vector<1x16x24x160xf32> to vector<1x16x16x32xf32>
    %24 = arith.addf %22, %23 : vector<1x16x16x32xf32>
    %25 = vector.extract_strided_slice %15 {offsets = [0, 0, 2, 64], sizes = [1, 16, 16, 32], strides = [1, 1, 1, 1]} : vector<1x16x24x160xf32> to vector<1x16x16x32xf32>
    %26 = arith.addf %24, %25 : vector<1x16x16x32xf32>
    %27 = vector.extract_strided_slice %15 {offsets = [0, 0, 3, 96], sizes = [1, 16, 16, 32], strides = [1, 1, 1, 1]} : vector<1x16x24x160xf32> to vector<1x16x16x32xf32>
    %28 = arith.addf %26, %27 : vector<1x16x16x32xf32>
    %29 = vector.extract_strided_slice %15 {offsets = [0, 0, 4, 128], sizes = [1, 16, 16, 32], strides = [1, 1, 1, 1]} : vector<1x16x24x160xf32> to vector<1x16x16x32xf32>
    %30 = arith.addf %28, %29 : vector<1x16x16x32xf32>
    %cst_33 = arith.constant 0.000000e+00 : f32
    %31 = vector.broadcast %cst_33 : f32 to vector<1x16x16x32xf32>
    %32 = arith.maximumf %30, %31 : vector<1x16x16x32xf32>
    %c0_34 = arith.constant 0 : index
    %c2_35 = arith.constant 2 : index
    %c2_36 = arith.constant 2 : index
    %c0_37 = arith.constant 0 : index
    %33 = vector.load %arg5[%c0_34, %c2_35, %c2_36, %c0_37] : memref<1x20x24x32xf32, #tpu.memory_space<vmem>>, vector<1x16x16x32xf32>
    tpu.vector_store %arg5[%c0_34, %c2_35, %c2_36, %c0_37], %32 {strides = array<i32>} : memref<1x20x24x32xf32, #tpu.memory_space<vmem>>, vector<1x16x16x32xf32>,
    %c0_38 = arith.constant 0 : index
    %c0_39 = arith.constant 0 : index
    %c0_40 = arith.constant 0 : index
    %c0_41 = arith.constant 0 : index
    %34 = vector.load %arg5[%c0_38, %c0_39, %c0_40, %c0_41] : memref<1x20x24x32xf32, #tpu.memory_space<vmem>>, vector<1x16x24x32xf32>
    %c0_42 = arith.constant 0 : index
    %c1_43 = arith.constant 1 : index
    %c0_44 = arith.constant 0 : index
    %c0_45 = arith.constant 0 : index
    %35 = vector.load %arg5[%c0_42, %c1_43, %c0_44, %c0_45] : memref<1x20x24x32xf32, #tpu.memory_space<vmem>>, vector<1x16x24x32xf32>
    %c0_46 = arith.constant 0 : index
    %c2_47 = arith.constant 2 : index
    %c0_48 = arith.constant 0 : index
    %c0_49 = arith.constant 0 : index
    %36 = vector.load %arg5[%c0_46, %c2_47, %c0_48, %c0_49] : memref<1x20x24x32xf32, #tpu.memory_space<vmem>>, vector<1x16x24x32xf32>
    %c0_50 = arith.constant 0 : index
    %c3_51 = arith.constant 3 : index
    %c0_52 = arith.constant 0 : index
    %c0_53 = arith.constant 0 : index
    %37 = vector.load %arg5[%c0_50, %c3_51, %c0_52, %c0_53] : memref<1x20x24x32xf32, #tpu.memory_space<vmem>>, vector<1x16x24x32xf32>
    %c0_54 = arith.constant 0 : index
    %c4_55 = arith.constant 4 : index
    %c0_56 = arith.constant 0 : index
    %c0_57 = arith.constant 0 : index
    %38 = vector.load %arg5[%c0_54, %c4_55, %c0_56, %c0_57] : memref<1x20x24x32xf32, #tpu.memory_space<vmem>>, vector<1x16x24x32xf32>
    %39 = tpu.concatenate %34, %35, %36, %37, %38 in 3 : vector<1x16x24x32xf32>, vector<1x16x24x32xf32>, vector<1x16x24x32xf32>, vector<1x16x24x32xf32>, vector<1x16x24x32xf32> -> vector<1x16x24x160xf32>
    %40 = vector.shape_cast %39 : vector<1x16x24x160xf32> to vector<384x160xf32>
    %c1_58 = arith.constant 1 : index
    %c0_59 = arith.constant 0 : index
    %c0_60 = arith.constant 0 : index
    %41 = vector.load %arg2[%c1_58, %c0_59, %c0_60] : memref<4x160x160xf32, #tpu.memory_space<vmem>>, vector<1x160x160xf32>
    %42 = vector.shape_cast %41 : vector<1x160x160xf32> to vector<160x160xf32>
    %cst_61 = arith.constant dense<0.000000e+00> : vector<384x160xf32>
    %43 = tpu.matmul %40, %42, %cst_61 {dimension_numbers = #tpu.dot_dimension_numbers<[1], [0], [0], [1], [0, 0, 1, 1], [], []>} : vector<384x160xf32>, vector<160x160xf32>, vector<384x160xf32> -> vector<384x160xf32>
    %44 = vector.shape_cast %43 : vector<384x160xf32> to vector<1x16x24x160xf32>
    %c1_62 = arith.constant 1 : index
    %c0_63 = arith.constant 0 : index
    %c0_64 = arith.constant 0 : index
    %45 = vector.load %arg3[%c1_62, %c0_63, %c0_64] : memref<4x1x32xf32, #tpu.memory_space<vmem>>, vector<1x1x32xf32>
    %46 = vector.shape_cast %45 : vector<1x1x32xf32> to vector<1x32xf32>
    %47 = vector.shape_cast %46 : vector<1x32xf32> to vector<1x1x1x32xf32>
    %48 = vector.shape_cast %47 : vector<1x1x1x32xf32> to vector<1x1x1x32xf32>
    %49 = vector.broadcast %48 : vector<1x1x1x32xf32> to vector<1x16x16x32xf32>
    %50 = vector.extract_strided_slice %44 {offsets = [0, 0, 0, 0], sizes = [1, 16, 16, 32], strides = [1, 1, 1, 1]} : vector<1x16x24x160xf32> to vector<1x16x16x32xf32>
    %51 = arith.addf %49, %50 : vector<1x16x16x32xf32>
    %52 = vector.extract_strided_slice %44 {offsets = [0, 0, 1, 32], sizes = [1, 16, 16, 32], strides = [1, 1, 1, 1]} : vector<1x16x24x160xf32> to vector<1x16x16x32xf32>
    %53 = arith.addf %51, %52 : vector<1x16x16x32xf32>
    %54 = vector.extract_strided_slice %44 {offsets = [0, 0, 2, 64], sizes = [1, 16, 16, 32], strides = [1, 1, 1, 1]} : vector<1x16x24x160xf32> to vector<1x16x16x32xf32>
    %55 = arith.addf %53, %54 : vector<1x16x16x32xf32>
    %56 = vector.extract_strided_slice %44 {offsets = [0, 0, 3, 96], sizes = [1, 16, 16, 32], strides = [1, 1, 1, 1]} : vector<1x16x24x160xf32> to vector<1x16x16x32xf32>
    %57 = arith.addf %55, %56 : vector<1x16x16x32xf32>
    %58 = vector.extract_strided_slice %44 {offsets = [0, 0, 4, 128], sizes = [1, 16, 16, 32], strides = [1, 1, 1, 1]} : vector<1x16x24x160xf32> to vector<1x16x16x32xf32>
    %59 = arith.addf %57, %58 : vector<1x16x16x32xf32>
    %cst_65 = arith.constant 0.000000e+00 : f32
    %60 = vector.broadcast %cst_65 : f32 to vector<1x16x16x32xf32>
    %61 = arith.maximumf %59, %60 : vector<1x16x16x32xf32>
    %c0_66 = arith.constant 0 : index
    %c2_67 = arith.constant 2 : index
    %c2_68 = arith.constant 2 : index
    %c0_69 = arith.constant 0 : index
    %62 = vector.load %arg5[%c0_66, %c2_67, %c2_68, %c0_69] : memref<1x20x24x32xf32, #tpu.memory_space<vmem>>, vector<1x16x16x32xf32>
    tpu.vector_store %arg5[%c0_66, %c2_67, %c2_68, %c0_69], %61 {strides = array<i32>} : memref<1x20x24x32xf32, #tpu.memory_space<vmem>>, vector<1x16x16x32xf32>,
    %c0_70 = arith.constant 0 : index
    %c0_71 = arith.constant 0 : index
    %c0_72 = arith.constant 0 : index
    %c0_73 = arith.constant 0 : index
    %63 = vector.load %arg5[%c0_70, %c0_71, %c0_72, %c0_73] : memref<1x20x24x32xf32, #tpu.memory_space<vmem>>, vector<1x16x24x32xf32>
    %c0_74 = arith.constant 0 : index
    %c1_75 = arith.constant 1 : index
    %c0_76 = arith.constant 0 : index
    %c0_77 = arith.constant 0 : index
    %64 = vector.load %arg5[%c0_74, %c1_75, %c0_76, %c0_77] : memref<1x20x24x32xf32, #tpu.memory_space<vmem>>, vector<1x16x24x32xf32>
    %c0_78 = arith.constant 0 : index
    %c2_79 = arith.constant 2 : index
    %c0_80 = arith.constant 0 : index
    %c0_81 = arith.constant 0 : index
    %65 = vector.load %arg5[%c0_78, %c2_79, %c0_80, %c0_81] : memref<1x20x24x32xf32, #tpu.memory_space<vmem>>, vector<1x16x24x32xf32>
    %c0_82 = arith.constant 0 : index
    %c3_83 = arith.constant 3 : index
    %c0_84 = arith.constant 0 : index
    %c0_85 = arith.constant 0 : index
    %66 = vector.load %arg5[%c0_82, %c3_83, %c0_84, %c0_85] : memref<1x20x24x32xf32, #tpu.memory_space<vmem>>, vector<1x16x24x32xf32>
    %c0_86 = arith.constant 0 : index
    %c4_87 = arith.constant 4 : index
    %c0_88 = arith.constant 0 : index
    %c0_89 = arith.constant 0 : index
    %67 = vector.load %arg5[%c0_86, %c4_87, %c0_88, %c0_89] : memref<1x20x24x32xf32, #tpu.memory_space<vmem>>, vector<1x16x24x32xf32>
    %68 = tpu.concatenate %63, %64, %65, %66, %67 in 3 : vector<1x16x24x32xf32>, vector<1x16x24x32xf32>, vector<1x16x24x32xf32>, vector<1x16x24x32xf32>, vector<1x16x24x32xf32> -> vector<1x16x24x160xf32>
    %69 = vector.shape_cast %68 : vector<1x16x24x160xf32> to vector<384x160xf32>
    %c2_90 = arith.constant 2 : index
    %c0_91 = arith.constant 0 : index
    %c0_92 = arith.constant 0 : index
    %70 = vector.load %arg2[%c2_90, %c0_91, %c0_92] : memref<4x160x160xf32, #tpu.memory_space<vmem>>, vector<1x160x160xf32>
    %71 = vector.shape_cast %70 : vector<1x160x160xf32> to vector<160x160xf32>
    %cst_93 = arith.constant dense<0.000000e+00> : vector<384x160xf32>
    %72 = tpu.matmul %69, %71, %cst_93 {dimension_numbers = #tpu.dot_dimension_numbers<[1], [0], [0], [1], [0, 0, 1, 1], [], []>} : vector<384x160xf32>, vector<160x160xf32>, vector<384x160xf32> -> vector<384x160xf32>
    %73 = vector.shape_cast %72 : vector<384x160xf32> to vector<1x16x24x160xf32>
    %c2_94 = arith.constant 2 : index
    %c0_95 = arith.constant 0 : index
    %c0_96 = arith.constant 0 : index
    %74 = vector.load %arg3[%c2_94, %c0_95, %c0_96] : memref<4x1x32xf32, #tpu.memory_space<vmem>>, vector<1x1x32xf32>
    %75 = vector.shape_cast %74 : vector<1x1x32xf32> to vector<1x32xf32>
    %76 = vector.shape_cast %75 : vector<1x32xf32> to vector<1x1x1x32xf32>
    %77 = vector.shape_cast %76 : vector<1x1x1x32xf32> to vector<1x1x1x32xf32>
    %78 = vector.broadcast %77 : vector<1x1x1x32xf32> to vector<1x16x16x32xf32>
    %79 = vector.extract_strided_slice %73 {offsets = [0, 0, 0, 0], sizes = [1, 16, 16, 32], strides = [1, 1, 1, 1]} : vector<1x16x24x160xf32> to vector<1x16x16x32xf32>
    %80 = arith.addf %78, %79 : vector<1x16x16x32xf32>
    %81 = vector.extract_strided_slice %73 {offsets = [0, 0, 1, 32], sizes = [1, 16, 16, 32], strides = [1, 1, 1, 1]} : vector<1x16x24x160xf32> to vector<1x16x16x32xf32>
    %82 = arith.addf %80, %81 : vector<1x16x16x32xf32>
    %83 = vector.extract_strided_slice %73 {offsets = [0, 0, 2, 64], sizes = [1, 16, 16, 32], strides = [1, 1, 1, 1]} : vector<1x16x24x160xf32> to vector<1x16x16x32xf32>
    %84 = arith.addf %82, %83 : vector<1x16x16x32xf32>
    %85 = vector.extract_strided_slice %73 {offsets = [0, 0, 3, 96], sizes = [1, 16, 16, 32], strides = [1, 1, 1, 1]} : vector<1x16x24x160xf32> to vector<1x16x16x32xf32>
    %86 = arith.addf %84, %85 : vector<1x16x16x32xf32>
    %87 = vector.extract_strided_slice %73 {offsets = [0, 0, 4, 128], sizes = [1, 16, 16, 32], strides = [1, 1, 1, 1]} : vector<1x16x24x160xf32> to vector<1x16x16x32xf32>
    %88 = arith.addf %86, %87 : vector<1x16x16x32xf32>
    %cst_97 = arith.constant 0.000000e+00 : f32
    %89 = vector.broadcast %cst_97 : f32 to vector<1x16x16x32xf32>
    %90 = arith.maximumf %88, %89 : vector<1x16x16x32xf32>
    %c0_98 = arith.constant 0 : index
    %c2_99 = arith.constant 2 : index
    %c2_100 = arith.constant 2 : index
    %c0_101 = arith.constant 0 : index
    %91 = vector.load %arg5[%c0_98, %c2_99, %c2_100, %c0_101] : memref<1x20x24x32xf32, #tpu.memory_space<vmem>>, vector<1x16x16x32xf32>
    tpu.vector_store %arg5[%c0_98, %c2_99, %c2_100, %c0_101], %90 {strides = array<i32>} : memref<1x20x24x32xf32, #tpu.memory_space<vmem>>, vector<1x16x16x32xf32>,
    %c0_102 = arith.constant 0 : index
    %c0_103 = arith.constant 0 : index
    %c0_104 = arith.constant 0 : index
    %c0_105 = arith.constant 0 : index
    %92 = vector.load %arg5[%c0_102, %c0_103, %c0_104, %c0_105] : memref<1x20x24x32xf32, #tpu.memory_space<vmem>>, vector<1x16x24x32xf32>
    %c0_106 = arith.constant 0 : index
    %c1_107 = arith.constant 1 : index
    %c0_108 = arith.constant 0 : index
    %c0_109 = arith.constant 0 : index
    %93 = vector.load %arg5[%c0_106, %c1_107, %c0_108, %c0_109] : memref<1x20x24x32xf32, #tpu.memory_space<vmem>>, vector<1x16x24x32xf32>
    %c0_110 = arith.constant 0 : index
    %c2_111 = arith.constant 2 : index
    %c0_112 = arith.constant 0 : index
    %c0_113 = arith.constant 0 : index
    %94 = vector.load %arg5[%c0_110, %c2_111, %c0_112, %c0_113] : memref<1x20x24x32xf32, #tpu.memory_space<vmem>>, vector<1x16x24x32xf32>
    %c0_114 = arith.constant 0 : index
    %c3_115 = arith.constant 3 : index
    %c0_116 = arith.constant 0 : index
    %c0_117 = arith.constant 0 : index
    %95 = vector.load %arg5[%c0_114, %c3_115, %c0_116, %c0_117] : memref<1x20x24x32xf32, #tpu.memory_space<vmem>>, vector<1x16x24x32xf32>
    %c0_118 = arith.constant 0 : index
    %c4_119 = arith.constant 4 : index
    %c0_120 = arith.constant 0 : index
    %c0_121 = arith.constant 0 : index
    %96 = vector.load %arg5[%c0_118, %c4_119, %c0_120, %c0_121] : memref<1x20x24x32xf32, #tpu.memory_space<vmem>>, vector<1x16x24x32xf32>
    %97 = tpu.concatenate %92, %93, %94, %95, %96 in 3 : vector<1x16x24x32xf32>, vector<1x16x24x32xf32>, vector<1x16x24x32xf32>, vector<1x16x24x32xf32>, vector<1x16x24x32xf32> -> vector<1x16x24x160xf32>
    %98 = vector.shape_cast %97 : vector<1x16x24x160xf32> to vector<384x160xf32>
    %c3_122 = arith.constant 3 : index
    %c0_123 = arith.constant 0 : index
    %c0_124 = arith.constant 0 : index
    %99 = vector.load %arg2[%c3_122, %c0_123, %c0_124] : memref<4x160x160xf32, #tpu.memory_space<vmem>>, vector<1x160x160xf32>
    %100 = vector.shape_cast %99 : vector<1x160x160xf32> to vector<160x160xf32>
    %cst_125 = arith.constant dense<0.000000e+00> : vector<384x160xf32>
    %101 = tpu.matmul %98, %100, %cst_125 {dimension_numbers = #tpu.dot_dimension_numbers<[1], [0], [0], [1], [0, 0, 1, 1], [], []>} : vector<384x160xf32>, vector<160x160xf32>, vector<384x160xf32> -> vector<384x160xf32>
    %102 = vector.shape_cast %101 : vector<384x160xf32> to vector<1x16x24x160xf32>
    %c3_126 = arith.constant 3 : index
    %c0_127 = arith.constant 0 : index
    %c0_128 = arith.constant 0 : index
    %103 = vector.load %arg3[%c3_126, %c0_127, %c0_128] : memref<4x1x32xf32, #tpu.memory_space<vmem>>, vector<1x1x32xf32>
    %104 = vector.shape_cast %103 : vector<1x1x32xf32> to vector<1x32xf32>
    %105 = vector.shape_cast %104 : vector<1x32xf32> to vector<1x1x1x32xf32>
    %106 = vector.shape_cast %105 : vector<1x1x1x32xf32> to vector<1x1x1x32xf32>
    %107 = vector.broadcast %106 : vector<1x1x1x32xf32> to vector<1x16x16x32xf32>
    %108 = vector.extract_strided_slice %102 {offsets = [0, 0, 0, 0], sizes = [1, 16, 16, 32], strides = [1, 1, 1, 1]} : vector<1x16x24x160xf32> to vector<1x16x16x32xf32>
    %109 = arith.addf %107, %108 : vector<1x16x16x32xf32>
    %110 = vector.extract_strided_slice %102 {offsets = [0, 0, 1, 32], sizes = [1, 16, 16, 32], strides = [1, 1, 1, 1]} : vector<1x16x24x160xf32> to vector<1x16x16x32xf32>
    %111 = arith.addf %109, %110 : vector<1x16x16x32xf32>
    %112 = vector.extract_strided_slice %102 {offsets = [0, 0, 2, 64], sizes = [1, 16, 16, 32], strides = [1, 1, 1, 1]} : vector<1x16x24x160xf32> to vector<1x16x16x32xf32>
    %113 = arith.addf %111, %112 : vector<1x16x16x32xf32>
    %114 = vector.extract_strided_slice %102 {offsets = [0, 0, 3, 96], sizes = [1, 16, 16, 32], strides = [1, 1, 1, 1]} : vector<1x16x24x160xf32> to vector<1x16x16x32xf32>
    %115 = arith.addf %113, %114 : vector<1x16x16x32xf32>
    %116 = vector.extract_strided_slice %102 {offsets = [0, 0, 4, 128], sizes = [1, 16, 16, 32], strides = [1, 1, 1, 1]} : vector<1x16x24x160xf32> to vector<1x16x16x32xf32>
    %117 = arith.addf %115, %116 : vector<1x16x16x32xf32>
    %118 = vector.shape_cast %117 : vector<1x16x16x32xf32> to vector<1x16x512xf32>
    %c0_129 = arith.constant 0 : index
    %c0_130 = arith.constant 0 : index
    %c0_131 = arith.constant 0 : index
    %119 = vector.load %arg4[%c0_129, %c0_130, %c0_131] : memref<1x16x512xf32, #tpu.memory_space<vmem>>, vector<1x16x512xf32>
    tpu.vector_store %arg4[%c0_129, %c0_130, %c0_131], %118 {strides = array<i32>} : memref<1x16x512xf32, #tpu.memory_space<vmem>>, vector<1x16x512xf32>,
    return
  }
  func.func @transform_0(%arg0: i32) -> (i32, i32, i32) {
    %c0_i32 = arith.constant 0 : i32
    %c0_i32_0 = arith.constant 0 : i32
    %c0_i32_1 = arith.constant 0 : i32
    return %arg0, %c0_i32, %c0_i32_0 : i32, i32, i32
  }
  func.func @transform_1(%arg0: i32) -> (i32, i32, i32) {
    %c0_i32 = arith.constant 0 : i32
    %c0_i32_0 = arith.constant 0 : i32
    %c0_i32_1 = arith.constant 0 : i32
    %c0_i32_2 = arith.constant 0 : i32
    return %c0_i32, %c0_i32_0, %c0_i32_1 : i32, i32, i32
  }
  func.func @transform_2(%arg0: i32) -> (i32, i32, i32) {
    %c0_i32 = arith.constant 0 : i32
    %c0_i32_0 = arith.constant 0 : i32
    %c0_i32_1 = arith.constant 0 : i32
    %c0_i32_2 = arith.constant 0 : i32
    return %c0_i32, %c0_i32_0, %c0_i32_1 : i32, i32, i32
  }
  func.func @transform_3(%arg0: i32) -> (i32, i32, i32) {
    %c0_i32 = arith.constant 0 : i32
    %c0_i32_0 = arith.constant 0 : i32
    %c0_i32_1 = arith.constant 0 : i32
    return %arg0, %c0_i32, %c0_i32_0 : i32, i32, i32
  }
}

</mosaic_0001>

<llo_original>
// kernel: tpu_custom_call.1
$region0: #{tpu_custom_call.1}
  #allocation0 [shape = 'u32[]', space=smem, size = 0x4, offset = 0x4, fixed_abs, tag = 'smem constant byte address 0x4 - core index']
  #allocation1 [shape = 'u32[72,128]{1,0:T(1,128)}', space=vmem, size = 0x9000, scoped, tag = 'internal scratch']
  #allocation2 [shape = 'f32[1,20,24,32]{3,2,1,0:T(8,128)}', space=vmem, size = 0x3c000, scoped, tag = 'scratch operand']
  %s0 = inlined_call_operand.hbm [shape: f32[2,16,512], index: 0, kind: input, shape index: {}]
  %s1 = inlined_call_operand.hbm [shape: f32[4,160,160], index: 1, kind: input, shape index: {}]
  %s2 = inlined_call_operand.hbm [shape: f32[4,1,32], index: 2, kind: input, shape index: {}]
  %s3 = inlined_call_operand.hbm [shape: f32[2,16,512], index: 3, kind: output, shape index: {}]
  %s4 = sld [smem:[#allocation0]]
  $region57: #{tpu_custom_call.1} parent=0
    _
  %s6 = ssub.s32 1, %s4
  %s7 = scalar_select 0, %s6, %s4
  $region1: #{tpu_custom_call.1} parent=0
    #allocation3 [shape = 'u8[65536]{0}', space=vmem, size = 0x10000, scoped, tag = 'input window, operand 0']
    #allocation4 [shape = 's32[2]{0}', space=sflag, size = 0x8, scoped, tag = 'scoped memory for tpu_custom_call.1']
    #allocation5 [shape = 's32[2]{0}', space=sflag, size = 0x8, scoped, tag = 'scoped memory for tpu_custom_call.1']
    #allocation6 [shape = 'u8[655360]{0}', space=vmem, size = 0xa0000, scoped, tag = 'input window, operand 1, single buffered']
    #allocation7 [shape = 's32[1]{0}', space=sflag, size = 0x4, scoped, tag = 'scoped memory for tpu_custom_call.1']
    #allocation8 [shape = 'u8[2048]{0}', space=vmem, size = 0x800, scoped, tag = 'input window, operand 2, single buffered']
    #allocation9 [shape = 'u8[65536]{0}', space=vmem, size = 0x10000, scoped, tag = 'output window, operand 0']
    %8 = vsyncpa [#allocation4], 0
    %s9 = scalar_lea.sflag [#allocation4], 1
    %10 = vsyncpa %s9, 0
    %11 = vsyncpa [#allocation7], 0
    %12 = vsyncpa [#allocation5], 0
    %s13 = scalar_lea.sflag [#allocation5], 1
    %14 = vsyncpa %s13, 0
    loop: start=0, step=1, limit=4
    $region2: #{tpu_custom_call.1} parent=1 // loop_pre_header
      _
    $region3: #{tpu_custom_call.1} parent=1 // loop_header
      %s16 = sphi 0, %s20
      %p17 = scmp.ge.s32.totalorder %s16, 4
      %s26 = sphi 0, %s28
      %s29 = sphi 0, %s26
      %s30 = sphi 0, %s29
      %s46 = sphi 0, %s30
      %s50 = sphi 0, %s50
      %s52 = sphi 0, %s50
      %s53 = sphi 0, %s52
      %s67 = sphi 0, %s53
      %s71 = sphi 0, %s71
      %s73 = sphi 0, %s71
      %s74 = sphi 0, %s73
      %s88 = sphi 0, %s74
      %s94 = sphi 0, %s96
      %s97 = sphi 0, %s94
      %s98 = sphi 0, %s97
      %s114 = sphi 0, %s98
    $region4: #{tpu_custom_call.1} parent=1 // loop_header_branch
      %19 = sbr.rel (%p17) target = $region8
    $region5: #{tpu_custom_call.1} parent=1 // loop_body
      %s21 = ssub.s32 %s16, 1
      %s22 = ssub.s32 %s16, 2
      %s23 = sadd.s32 %s16, 1
      %s24 = ssub.s32 %s16, %s23
      %p25 = scmp.eq.s32.totalorder %s24, 0
      %s27 = sadd.s32 %s26, 1
      %s28 = scalar_select %p25, %s26, %s27
      %p31 = pneg %p25
      %p32 = scmp.eq.s32.totalorder %s16, 1
      %p33 = por %p31, %p32
      %p34 = scmp.ne.s32.totalorder %s26, %s29
      %p35 = scmp.eq.s32.totalorder %s16, 0
      %p36 = por %p34, %p35
      %p37 = scmp.ne.s32.totalorder %s26, %s29
      %p38 = scmp.eq.s32.totalorder %s21, 1
      %p39 = por %p37, %p38
      %p40 = scmp.ne.s32.totalorder %s29, %s30
      %p41 = scmp.eq.s32.totalorder %s21, 0
      %p42 = por %p40, %p41
      %p43 = scmp.ne.s32.totalorder %s29, %s30
      %p44 = scmp.eq.s32.totalorder %s22, 1
      %p45 = por %p43, %p44
      %p47 = scmp.ne.s32.totalorder %s30, %s46
      %p48 = scmp.eq.s32.totalorder %s22, 0
      %p49 = por %p47, %p48
      %s51 = sadd.s32 %s50, 1
      %p54 = scmp.eq.s32.totalorder %s16, 1
      %p55 = scmp.ne.s32.totalorder %s50, %s52
      %p56 = scmp.eq.s32.totalorder %s16, 0
      %p57 = por %p55, %p56
      %p58 = scmp.ne.s32.totalorder %s50, %s52
      %p59 = scmp.eq.s32.totalorder %s21, 1
      %p60 = por %p58, %p59
      %p61 = scmp.ne.s32.totalorder %s52, %s53
      %p62 = scmp.eq.s32.totalorder %s21, 0
      %p63 = por %p61, %p62
      %p64 = scmp.ne.s32.totalorder %s52, %s53
      %p65 = scmp.eq.s32.totalorder %s22, 1
      %p66 = por %p64, %p65
      %p68 = scmp.ne.s32.totalorder %s53, %s67
      %p69 = scmp.eq.s32.totalorder %s22, 0
      %p70 = por %p68, %p69
      %s72 = sadd.s32 %s71, 1
      %p75 = scmp.eq.s32.totalorder %s16, 1
      %p76 = scmp.ne.s32.totalorder %s71, %s73
      %p77 = scmp.eq.s32.totalorder %s16, 0
      %p78 = por %p76, %p77
      %p79 = scmp.ne.s32.totalorder %s71, %s73
      %p80 = scmp.eq.s32.totalorder %s21, 1
      %p81 = por %p79, %p80
      %p82 = scmp.ne.s32.totalorder %s73, %s74
      %p83 = scmp.eq.s32.totalorder %s21, 0
      %p84 = por %p82, %p83
      %p85 = scmp.ne.s32.totalorder %s73, %s74
      %p86 = scmp.eq.s32.totalorder %s22, 1
      %p87 = por %p85, %p86
      %p89 = scmp.ne.s32.totalorder %s74, %s88
      %p90 = scmp.eq.s32.totalorder %s22, 0
      %p91 = por %p89, %p90
      %s92 = ssub.s32 %s16, %s23
      %p93 = scmp.eq.s32.totalorder %s92, 0
      %s95 = sadd.s32 %s94, 1
      %s96 = scalar_select %p93, %s94, %s95
      %p99 = pneg %p93
      %p100 = scmp.eq.s32.totalorder %s16, 1
      %p101 = por %p99, %p100
      %p102 = scmp.ne.s32.totalorder %s94, %s97
      %p103 = scmp.eq.s32.totalorder %s16, 0
      %p104 = por %p102, %p103
      %p105 = scmp.ne.s32.totalorder %s94, %s97
      %p106 = scmp.eq.s32.totalorder %s21, 1
      %p107 = por %p105, %p106
      %p108 = scmp.ne.s32.totalorder %s97, %s98
      %p109 = scmp.eq.s32.totalorder %s21, 0
      %p110 = por %p108, %p109
      %p111 = scmp.ne.s32.totalorder %s97, %s98
      %p112 = scmp.eq.s32.totalorder %s22, 1
      %p113 = por %p111, %p112
      %p115 = scmp.ne.s32.totalorder %s98, %s114
      %p116 = scmp.eq.s32.totalorder %s22, 0
      %p117 = por %p115, %p116
      %p118 = scmp.le.s32.totalorder 1, %s16
      %p119 = scmp.lt.s32.totalorder %s16, 3
      %p120 = pnand %p118, %p119
      %p121 = pneg %p120
      // Predicated region
      $region9: #{tpu_custom_call.1} parent=5 // pred_check
        _
      $region10: #{tpu_custom_call.1} parent=5 // pred_check_branch
        %123 = sbr.rel (%p120) target = $region12
      $region11: #{tpu_custom_call.1} parent=5 // pred_region
        %s124 = ssub.s32 %s16, 1
        // Predicated region
        $region13: #{tpu_custom_call.1} parent=11 // pred_check
          %p125 = pneg %p63
        $region14: #{tpu_custom_call.1} parent=11 // pred_check_branch
          %127 = sbr.rel (%p125) target = $region16
        $region15: #{tpu_custom_call.1} parent=11 // pred_region
          %129 = vsyncadd [#allocation7], 0
          %s130 = sshll.u32 %s1, 4
          %s131 = int_to_ptr.hbm [resolvable:$true] %s130
          %s132 = sshll.u32 [#allocation6], 4
          %s133 = int_to_ptr.vmem [resolvable:$true] %s132
          %138 = dma.hbm_to_vmem [thread:$0]  %s131, 20480, %s133, [#allocation7], 256, 256, 16
        $region16: #{tpu_custom_call.1} parent=11 // pred_fallthru
          _
        // Predicated region
        $region17: #{tpu_custom_call.1} parent=11 // pred_check
          %p139 = pneg %p84
        $region18: #{tpu_custom_call.1} parent=11 // pred_check_branch
          %141 = sbr.rel (%p139) target = $region20
        $region19: #{tpu_custom_call.1} parent=11 // pred_region
          %143 = vsyncadd [#allocation7], 0
          %s144 = sshll.u32 %s2, 4
          %s145 = int_to_ptr.hbm [resolvable:$true] %s144
          %s146 = sshll.u32 [#allocation8], 4
          %s147 = int_to_ptr.vmem [resolvable:$true] %s146
          %152 = dma.hbm_to_vmem [thread:$0]  %s145, 64, %s147, [#allocation7], 16, 16, 1
        $region20: #{tpu_custom_call.1} parent=11 // pred_fallthru
          _
      $region12: #{tpu_custom_call.1} parent=5 // pred_fallthru
        _
      %p153 = scmp.lt.s32.totalorder %s16, 2
      // Predicated region
      $region21: #{tpu_custom_call.1} parent=5 // pred_check
        %p154 = pneg %p153
      $region22: #{tpu_custom_call.1} parent=5 // pred_check_branch
        %156 = sbr.rel (%p154) target = $region24
      $region23: #{tpu_custom_call.1} parent=5 // pred_region
        // Predicated region
        $region25: #{tpu_custom_call.1} parent=23 // pred_check
          %p157 = pneg %p36
        $region26: #{tpu_custom_call.1} parent=23 // pred_check_branch
          %159 = sbr.rel (%p157) target = $region28
        $region27: #{tpu_custom_call.1} parent=23 // pred_region
          %s160 = sand.u32 %s26, 1
          %s161 = scalar_lea.sflag [#allocation4], %s160
          %s162 = sand.u32 %s26, 1
          %s163 = smul.addr %s162, 64
          %s164 = scalar_lea.vmem [#allocation3], %s163
          %166 = vsyncadd %s161, 0
          %s167 = smul.addr %s16, 8
          %s168 = smul.addr %s167, 8
          %s169 = scalar_lea.hbm %s0, %s168
          %s170 = sshll.u32 %s169, 4
          %s171 = int_to_ptr.hbm [resolvable:$true] %s170
          %s172 = sshll.u32 %s164, 4
          %s173 = int_to_ptr.vmem [resolvable:$true] %s172
          %178 = dma.hbm_to_vmem [thread:$0]  %s171, 1024, %s173, %s161, 512, 512, 32
        $region28: #{tpu_custom_call.1} parent=23 // pred_fallthru
          _
      $region24: #{tpu_custom_call.1} parent=5 // pred_fallthru
        _
      %p179 = scmp.le.s32.totalorder 1, %s16
      %p180 = scmp.lt.s32.totalorder %s16, 3
      %p181 = pnand %p179, %p180
      %p182 = pneg %p181
      // Predicated region
      $region29: #{tpu_custom_call.1} parent=5 // pred_check
        _
      $region30: #{tpu_custom_call.1} parent=5 // pred_check_branch
        %184 = sbr.rel (%p181) target = $region32
      $region31: #{tpu_custom_call.1} parent=5 // pred_region
        %s185 = ssub.s32 %s16, 1
        %s186 = sand.u32 %s29, 1
        %s187 = scalar_lea.sflag [#allocation4], %s186
        %s188 = sand.u32 %s29, 1
        %s189 = smul.addr %s188, 64
        %s190 = scalar_lea.vmem [#allocation3], %s189
        // Predicated region
        $region33: #{tpu_custom_call.1} parent=31 // pred_check
          %p191 = pneg %p42
        $region34: #{tpu_custom_call.1} parent=31 // pred_check_branch
          %193 = sbr.rel (%p191) target = $region36
        $region35: #{tpu_custom_call.1} parent=31 // pred_region
          %195 = dma.done %s187, 1024
        $region36: #{tpu_custom_call.1} parent=31 // pred_fallthru
          _
        // Predicated region
        $region37: #{tpu_custom_call.1} parent=31 // pred_check
          %p196 = pneg %p63
        $region38: #{tpu_custom_call.1} parent=31 // pred_check_branch
          %198 = sbr.rel (%p196) target = $region40
        $region39: #{tpu_custom_call.1} parent=31 // pred_region
          %200 = dma.done [#allocation7], 20480
        $region40: #{tpu_custom_call.1} parent=31 // pred_fallthru
          _
        // Predicated region
        $region41: #{tpu_custom_call.1} parent=31 // pred_check
          %p201 = pneg %p84
        $region42: #{tpu_custom_call.1} parent=31 // pred_check_branch
          %203 = sbr.rel (%p201) target = $region44
        $region43: #{tpu_custom_call.1} parent=31 // pred_region
          %205 = dma.done [#allocation7], 64
        $region44: #{tpu_custom_call.1} parent=31 // pred_fallthru
          _
        %s206 = sand.u32 %s29, 1
        %s207 = scalar_lea.sflag [#allocation4], %s206
        %s208 = sand.u32 %s29, 1
        %s209 = smul.addr %s208, 64
        %s210 = scalar_lea.vmem [#allocation3], %s209
        %p211 = pneg %p42
        %p212 = pneg %p39
        %p213 = pneg %p63
        %p214 = pneg %p60
        %p215 = pneg %p84
        %p216 = pneg %p81
        %p217 = pneg %p110
        %p218 = pneg %p107
        %s219 = sand.u32 %s97, 1
        %s220 = scalar_lea.sflag [#allocation5], %s219
        %s221 = sand.u32 %s97, 1
        %s222 = smul.addr %s221, 64
        %s223 = scalar_lea.vmem [#allocation9], %s222
        %vm224 = vcmask 261120
        %225 = vst.msk [vmem:[#allocation2] sm:$0xff] %vm224, 0.0
        %226 = vst.msk [vmem:[#allocation2 + $0x8] sm:$0xff] %vm224, 0.0
        %227 = vst.msk [vmem:[#allocation2 + $0x10] sm:$0xff] %vm224, 0.0
        %228 = vst.msk [vmem:[#allocation2 + $0x18] sm:$0xff] %vm224, 0.0
        %229 = vst.msk [vmem:[#allocation2 + $0x20] sm:$0xff] %vm224, 0.0
        %230 = vst.msk [vmem:[#allocation2 + $0x28] sm:$0xff] %vm224, 0.0
        %231 = vst.msk [vmem:[#allocation2 + $0x30] sm:$0xff] %vm224, 0.0
        %232 = vst.msk [vmem:[#allocation2 + $0x38] sm:$0xff] %vm224, 0.0
        %233 = vst.msk [vmem:[#allocation2 + $0x40] sm:$0xff] %vm224, 0.0
        %234 = vst.msk [vmem:[#allocation2 + $0x48] sm:$0xff] %vm224, 0.0
        %235 = vst.msk [vmem:[#allocation2 + $0x50] sm:$0xff] %vm224, 0.0
        %236 = vst.msk [vmem:[#allocation2 + $0x58] sm:$0xff] %vm224, 0.0
        %237 = vst.msk [vmem:[#allocation2 + $0x60] sm:$0xff] %vm224, 0.0
        %238 = vst.msk [vmem:[#allocation2 + $0x68] sm:$0xff] %vm224, 0.0
        %239 = vst.msk [vmem:[#allocation2 + $0x70] sm:$0xff] %vm224, 0.0
        %240 = vst.msk [vmem:[#allocation2 + $0x78] sm:$0xff] %vm224, 0.0
        %241 = vst.msk [vmem:[#allocation2 + $0x80] sm:$0xff] %vm224, 0.0
        %242 = vst.msk [vmem:[#allocation2 + $0x88] sm:$0xff] %vm224, 0.0
        %243 = vst.msk [vmem:[#allocation2 + $0x90] sm:$0xff] %vm224, 0.0
        %244 = vst.msk [vmem:[#allocation2 + $0x98] sm:$0xff] %vm224, 0.0
        %245 = vst.msk [vmem:[#allocation2 + $0xa0] sm:$0xff] %vm224, 0.0
        %246 = vst.msk [vmem:[#allocation2 + $0xa8] sm:$0xff] %vm224, 0.0
        %247 = vst.msk [vmem:[#allocation2 + $0xb0] sm:$0xff] %vm224, 0.0
        %248 = vst.msk [vmem:[#allocation2 + $0xb8] sm:$0xff] %vm224, 0.0
        %249 = vst.msk [vmem:[#allocation2 + $0xc0] sm:$0xff] %vm224, 0.0
        %250 = vst.msk [vmem:[#allocation2 + $0xc8] sm:$0xff] %vm224, 0.0
        %251 = vst.msk [vmem:[#allocation2 + $0xd0] sm:$0xff] %vm224, 0.0
        %252 = vst.msk [vmem:[#allocation2 + $0xd8] sm:$0xff] %vm224, 0.0
        %253 = vst.msk [vmem:[#allocation2 + $0xe0] sm:$0xff] %vm224, 0.0
        %254 = vst.msk [vmem:[#allocation2 + $0xe8] sm:$0xff] %vm224, 0.0
        %255 = vst.msk [vmem:[#allocation2 + $0xf0] sm:$0xff] %vm224, 0.0
        %256 = vst.msk [vmem:[#allocation2 + $0xf8] sm:$0xff] %vm224, 0.0
        %257 = vst.msk [vmem:[#allocation2 + $0x100] sm:$0xff] %vm224, 0.0
        %258 = vst.msk [vmem:[#allocation2 + $0x108] sm:$0xff] %vm224, 0.0
        %259 = vst.msk [vmem:[#allocation2 + $0x110] sm:$0xff] %vm224, 0.0
        %260 = vst.msk [vmem:[#allocation2 + $0x118] sm:$0xff] %vm224, 0.0
        %261 = vst.msk [vmem:[#allocation2 + $0x120] sm:$0xff] %vm224, 0.0
        %262 = vst.msk [vmem:[#allocation2 + $0x128] sm:$0xff] %vm224, 0.0
        %263 = vst.msk [vmem:[#allocation2 + $0x130] sm:$0xff] %vm224, 0.0
        %264 = vst.msk [vmem:[#allocation2 + $0x138] sm:$0xff] %vm224, 0.0
        %265 = vst.msk [vmem:[#allocation2 + $0x140] sm:$0xff] %vm224, 0.0
        %266 = vst.msk [vmem:[#allocation2 + $0x148] sm:$0xff] %vm224, 0.0
        %267 = vst.msk [vmem:[#allocation2 + $0x150] sm:$0xff] %vm224, 0.0
        %268 = vst.msk [vmem:[#allocation2 + $0x158] sm:$0xff] %vm224, 0.0
        %269 = vst.msk [vmem:[#allocation2 + $0x160] sm:$0xff] %vm224, 0.0
        %270 = vst.msk [vmem:[#allocation2 + $0x168] sm:$0xff] %vm224, 0.0
        %271 = vst.msk [vmem:[#allocation2 + $0x170] sm:$0xff] %vm224, 0.0
        %272 = vst.msk [vmem:[#allocation2 + $0x178] sm:$0xff] %vm224, 0.0
        %273 = vst.msk [vmem:[#allocation2 + $0x180] sm:$0xff] %vm224, 0.0
        %274 = vst.msk [vmem:[#allocation2 + $0x188] sm:$0xff] %vm224, 0.0
        %275 = vst.msk [vmem:[#allocation2 + $0x190] sm:$0xff] %vm224, 0.0
        %276 = vst.msk [vmem:[#allocation2 + $0x198] sm:$0xff] %vm224, 0.0
        %277 = vst.msk [vmem:[#allocation2 + $0x1a0] sm:$0xff] %vm224, 0.0
        %278 = vst.msk [vmem:[#allocation2 + $0x1a8] sm:$0xff] %vm224, 0.0
        %279 = vst.msk [vmem:[#allocation2 + $0x1b0] sm:$0xff] %vm224, 0.0
        %280 = vst.msk [vmem:[#allocation2 + $0x1b8] sm:$0xff] %vm224, 0.0
        %281 = vst.msk [vmem:[#allocation2 + $0x1c0] sm:$0xff] %vm224, 0.0
        %282 = vst.msk [vmem:[#allocation2 + $0x1c8] sm:$0xff] %vm224, 0.0
        %283 = vst.msk [vmem:[#allocation2 + $0x1d0] sm:$0xff] %vm224, 0.0
        %284 = vst.msk [vmem:[#allocation2 + $0x1d8] sm:$0xff] %vm224, 0.0
        %v285 = vld [vmem:[%s190] sm:$0xff]
        %v286 = vld [vmem:[%s190 + $0x8] sm:$0xff]
        %v287 = vld [vmem:[%s190 + $0x10] sm:$0xff]
        %v288 = vld [vmem:[%s190 + $0x18] sm:$0xff]
        %v289 = vld [vmem:[%s190 + $0x20] sm:$0xff]
        %v290 = vld [vmem:[%s190 + $0x28] sm:$0xff]
        %v291 = vld [vmem:[%s190 + $0x30] sm:$0xff]
        %v292 = vld [vmem:[%s190 + $0x38] sm:$0xff]
        %295 = vrot.lane.b32.xlu0 %v285, 96
        %v296 = vpop.permute.xlu0 %295
        %297 = vrot.lane.b32.xlu0 %v289, 96
        %v298 = vpop.permute.xlu0 %297
        %301 = vrot.lane.b32.xlu0 %v285, 64
        %v302 = vpop.permute.xlu0 %301
        %303 = vrot.lane.b32.xlu0 %v289, 64
        %v304 = vpop.permute.xlu0 %303
        %307 = vrot.lane.b32.xlu0 %v285, 32
        %v308 = vpop.permute.xlu0 %307
        %309 = vrot.lane.b32.xlu0 %v289, 32
        %v310 = vpop.permute.xlu0 %309
        %315 = vrot.lane.b32.xlu0 %v286, 96
        %v316 = vpop.permute.xlu0 %315
        %317 = vrot.lane.b32.xlu0 %v290, 96
        %v318 = vpop.permute.xlu0 %317
        %321 = vrot.lane.b32.xlu0 %v286, 64
        %v322 = vpop.permute.xlu0 %321
        %323 = vrot.lane.b32.xlu0 %v290, 64
        %v324 = vpop.permute.xlu0 %323
        %327 = vrot.lane.b32.xlu0 %v286, 32
        %v328 = vpop.permute.xlu0 %327
        %329 = vrot.lane.b32.xlu0 %v290, 32
        %v330 = vpop.permute.xlu0 %329
        %335 = vrot.lane.b32.xlu0 %v287, 96
        %v336 = vpop.permute.xlu0 %335
        %337 = vrot.lane.b32.xlu0 %v291, 96
        %v338 = vpop.permute.xlu0 %337
        %341 = vrot.lane.b32.xlu0 %v287, 64
        %v342 = vpop.permute.xlu0 %341
        %343 = vrot.lane.b32.xlu0 %v291, 64
        %v344 = vpop.permute.xlu0 %343
        %347 = vrot.lane.b32.xlu0 %v287, 32
        %v348 = vpop.permute.xlu0 %347
        %349 = vrot.lane.b32.xlu0 %v291, 32
        %v350 = vpop.permute.xlu0 %349
        %355 = vrot.lane.b32.xlu0 %v288, 96
        %v356 = vpop.permute.xlu0 %355
        %357 = vrot.lane.b32.xlu0 %v292, 96
        %v358 = vpop.permute.xlu0 %357
        %361 = vrot.lane.b32.xlu0 %v288, 64
        %v362 = vpop.permute.xlu0 %361
        %363 = vrot.lane.b32.xlu0 %v292, 64
        %v364 = vpop.permute.xlu0 %363
        %367 = vrot.lane.b32.xlu0 %v288, 32
        %v368 = vpop.permute.xlu0 %367
        %369 = vrot.lane.b32.xlu0 %v292, 32
        %v370 = vpop.permute.xlu0 %369
        %v373 = vrot.slane %v302, 4
        %vm374 = vcmask 1047556
        %v375 = vsel %vm374, %v373, %v285
        %v376 = vrot.slane %v285, 4
        %v377 = vsel %vm374, %v302, %v376
        %v379 = vunpack.c.l.s4 1983009808
        %v380 = vunpack.c.0.s8 %v379
        %v381 = vperm.slane %v375, %v380
        %v383 = vunpack.c.l.s4 1983009808
        %v384 = vunpack.c.0.s8 %v383
        %v385 = vperm.slane %v377, %v384
        %v386 = vrot.slane %v308, 4
        %v387 = vsel %vm374, %v386, %v296
        %v388 = vrot.slane %v296, 4
        %v389 = vsel %vm374, %v308, %v388
        %v391 = vunpack.c.l.s4 1983009808
        %v392 = vunpack.c.0.s8 %v391
        %v393 = vperm.slane %v387, %v392
        %v395 = vunpack.c.l.s4 1983009808
        %v396 = vunpack.c.0.s8 %v395
        %v397 = vperm.slane %v389, %v396
        %v398 = vrot.slane %v322, 4
        %v399 = vsel %vm374, %v398, %v286
        %v400 = vrot.slane %v286, 4
        %v401 = vsel %vm374, %v322, %v400
        %v403 = vunpack.c.l.s4 1983009808
        %v404 = vunpack.c.0.s8 %v403
        %v405 = vperm.slane %v399, %v404
        %v407 = vunpack.c.l.s4 1983009808
        %v408 = vunpack.c.0.s8 %v407
        %v409 = vperm.slane %v401, %v408
        %v410 = vrot.slane %v328, 4
        %v411 = vsel %vm374, %v410, %v316
        %v412 = vrot.slane %v316, 4
        %v413 = vsel %vm374, %v328, %v412
        %v415 = vunpack.c.l.s4 1983009808
        %v416 = vunpack.c.0.s8 %v415
        %v417 = vperm.slane %v411, %v416
        %v419 = vunpack.c.l.s4 1983009808
        %v420 = vunpack.c.0.s8 %v419
        %v421 = vperm.slane %v413, %v420
        %v422 = vrot.slane %v393, 4
        %v423 = vsel %vm374, %v422, %v381
        %v424 = vrot.slane %v381, 4
        %v425 = vsel %vm374, %v393, %v424
        %v427 = vunpack.c.l.s4 1934713408
        %v428 = vunpack.c.0.s8 %v427
        %v429 = vperm.slane %v423, %v428
        %v431 = vunpack.c.l.s4 1934713408
        %v432 = vunpack.c.0.s8 %v431
        %v433 = vperm.slane %v425, %v432
        %v434 = vrot.slane %v397, 4
        %v435 = vsel %vm374, %v434, %v385
        %v436 = vrot.slane %v385, 4
        %v437 = vsel %vm374, %v397, %v436
        %v439 = vunpack.c.l.s4 1934713408
        %v440 = vunpack.c.0.s8 %v439
        %v441 = vperm.slane %v435, %v440
        %v443 = vunpack.c.l.s4 1934713408
        %v444 = vunpack.c.0.s8 %v443
        %v445 = vperm.slane %v437, %v444
        %v446 = vrot.slane %v417, 4
        %v447 = vsel %vm374, %v446, %v405
        %v448 = vrot.slane %v405, 4
        %v449 = vsel %vm374, %v417, %v448
        %v451 = vunpack.c.l.s4 1934713408
        %v452 = vunpack.c.0.s8 %v451
        %v453 = vperm.slane %v447, %v452
        %v455 = vunpack.c.l.s4 1934713408
        %v456 = vunpack.c.0.s8 %v455
        %v457 = vperm.slane %v449, %v456
        %v458 = vrot.slane %v421, 4
        %v459 = vsel %vm374, %v458, %v409
        %v460 = vrot.slane %v409, 4
        %v461 = vsel %vm374, %v421, %v460
        %v463 = vunpack.c.l.s4 1934713408
        %v464 = vunpack.c.0.s8 %v463
        %v465 = vperm.slane %v459, %v464
        %v467 = vunpack.c.l.s4 1934713408
        %v468 = vunpack.c.0.s8 %v467
        %v469 = vperm.slane %v461, %v468
        %v470 = vrot.slane %v453, 4
        %v471 = vsel %vm374, %v470, %v429
        %v472 = vrot.slane %v429, 4
        %v473 = vsel %vm374, %v453, %v472
        %v474 = vrot.slane %v457, 4
        %v475 = vsel %vm374, %v474, %v433
        %v476 = vrot.slane %v433, 4
        %v477 = vsel %vm374, %v457, %v476
        %v478 = vrot.slane %v465, 4
        %v479 = vsel %vm374, %v478, %v441
        %v480 = vrot.slane %v441, 4
        %v481 = vsel %vm374, %v465, %v480
        %v482 = vrot.slane %v469, 4
        %v483 = vsel %vm374, %v482, %v445
        %v484 = vrot.slane %v445, 4
        %v485 = vsel %vm374, %v469, %v484
        %v486 = vrot.slane %v342, 4
        %v487 = vsel %vm374, %v486, %v287
        %v488 = vrot.slane %v287, 4
        %v489 = vsel %vm374, %v342, %v488
        %v491 = vunpack.c.l.s4 1983009808
        %v492 = vunpack.c.0.s8 %v491
        %v493 = vperm.slane %v487, %v492
        %v495 = vunpack.c.l.s4 1983009808
        %v496 = vunpack.c.0.s8 %v495
        %v497 = vperm.slane %v489, %v496
        %v498 = vrot.slane %v348, 4
        %v499 = vsel %vm374, %v498, %v336
        %v500 = vrot.slane %v336, 4
        %v501 = vsel %vm374, %v348, %v500
        %v503 = vunpack.c.l.s4 1983009808
        %v504 = vunpack.c.0.s8 %v503
        %v505 = vperm.slane %v499, %v504
        %v507 = vunpack.c.l.s4 1983009808
        %v508 = vunpack.c.0.s8 %v507
        %v509 = vperm.slane %v501, %v508
        %v510 = vrot.slane %v362, 4
        %v511 = vsel %vm374, %v510, %v288
        %v512 = vrot.slane %v288, 4
        %v513 = vsel %vm374, %v362, %v512
        %v515 = vunpack.c.l.s4 1983009808
        %v516 = vunpack.c.0.s8 %v515
        %v517 = vperm.slane %v511, %v516
        %v519 = vunpack.c.l.s4 1983009808
        %v520 = vunpack.c.0.s8 %v519
        %v521 = vperm.slane %v513, %v520
        %v522 = vrot.slane %v368, 4
        %v523 = vsel %vm374, %v522, %v356
        %v524 = vrot.slane %v356, 4
        %v525 = vsel %vm374, %v368, %v524
        %v527 = vunpack.c.l.s4 1983009808
        %v528 = vunpack.c.0.s8 %v527
        %v529 = vperm.slane %v523, %v528
        %v531 = vunpack.c.l.s4 1983009808
        %v532 = vunpack.c.0.s8 %v531
        %v533 = vperm.slane %v525, %v532
        %v534 = vrot.slane %v505, 4
        %v535 = vsel %vm374, %v534, %v493
        %v536 = vrot.slane %v493, 4
        %v537 = vsel %vm374, %v505, %v536
        %v539 = vunpack.c.l.s4 1934713408
        %v540 = vunpack.c.0.s8 %v539
        %v541 = vperm.slane %v535, %v540
        %v543 = vunpack.c.l.s4 1934713408
        %v544 = vunpack.c.0.s8 %v543
        %v545 = vperm.slane %v537, %v544
        %v546 = vrot.slane %v509, 4
        %v547 = vsel %vm374, %v546, %v497
        %v548 = vrot.slane %v497, 4
        %v549 = vsel %vm374, %v509, %v548
        %v551 = vunpack.c.l.s4 1934713408
        %v552 = vunpack.c.0.s8 %v551
        %v553 = vperm.slane %v547, %v552
        %v555 = vunpack.c.l.s4 1934713408
        %v556 = vunpack.c.0.s8 %v555
        %v557 = vperm.slane %v549, %v556
        %v558 = vrot.slane %v529, 4
        %v559 = vsel %vm374, %v558, %v517
        %v560 = vrot.slane %v517, 4
        %v561 = vsel %vm374, %v529, %v560
        %v563 = vunpack.c.l.s4 1934713408
        %v564 = vunpack.c.0.s8 %v563
        %v565 = vperm.slane %v559, %v564
        %v567 = vunpack.c.l.s4 1934713408
        %v568 = vunpack.c.0.s8 %v567
        %v569 = vperm.slane %v561, %v568
        %v570 = vrot.slane %v533, 4
        %v571 = vsel %vm374, %v570, %v521
        %v572 = vrot.slane %v521, 4
        %v573 = vsel %vm374, %v533, %v572
        %v575 = vunpack.c.l.s4 1934713408
        %v576 = vunpack.c.0.s8 %v575
        %v577 = vperm.slane %v571, %v576
        %v579 = vunpack.c.l.s4 1934713408
        %v580 = vunpack.c.0.s8 %v579
        %v581 = vperm.slane %v573, %v580
        %v582 = vrot.slane %v565, 4
        %v583 = vsel %vm374, %v582, %v541
        %v584 = vrot.slane %v541, 4
        %v585 = vsel %vm374, %v565, %v584
        %v586 = vrot.slane %v569, 4
        %v587 = vsel %vm374, %v586, %v545
        %v588 = vrot.slane %v545, 4
        %v589 = vsel %vm374, %v569, %v588
        %v590 = vrot.slane %v577, 4
        %v591 = vsel %vm374, %v590, %v553
        %v592 = vrot.slane %v553, 4
        %v593 = vsel %vm374, %v577, %v592
        %v594 = vrot.slane %v581, 4
        %v595 = vsel %vm374, %v594, %v557
        %v596 = vrot.slane %v557, 4
        %v597 = vsel %vm374, %v581, %v596
        %v598 = vrot.slane %v304, 4
        %v599 = vsel %vm374, %v598, %v289
        %v600 = vrot.slane %v289, 4
        %v601 = vsel %vm374, %v304, %v600
        %v603 = vunpack.c.l.s4 1983009808
        %v604 = vunpack.c.0.s8 %v603
        %v605 = vperm.slane %v599, %v604
        %v607 = vunpack.c.l.s4 1983009808
        %v608 = vunpack.c.0.s8 %v607
        %v609 = vperm.slane %v601, %v608
        %v610 = vrot.slane %v310, 4
        %v611 = vsel %vm374, %v610, %v298
        %v612 = vrot.slane %v298, 4
        %v613 = vsel %vm374, %v310, %v612
        %v615 = vunpack.c.l.s4 1983009808
        %v616 = vunpack.c.0.s8 %v615
        %v617 = vperm.slane %v611, %v616
        %v619 = vunpack.c.l.s4 1983009808
        %v620 = vunpack.c.0.s8 %v619
        %v621 = vperm.slane %v613, %v620
        %v622 = vrot.slane %v324, 4
        %v623 = vsel %vm374, %v622, %v290
        %v624 = vrot.slane %v290, 4
        %v625 = vsel %vm374, %v324, %v624
        %v627 = vunpack.c.l.s4 1983009808
        %v628 = vunpack.c.0.s8 %v627
        %v629 = vperm.slane %v623, %v628
        %v631 = vunpack.c.l.s4 1983009808
        %v632 = vunpack.c.0.s8 %v631
        %v633 = vperm.slane %v625, %v632
        %v634 = vrot.slane %v330, 4
        %v635 = vsel %vm374, %v634, %v318
        %v636 = vrot.slane %v318, 4
        %v637 = vsel %vm374, %v330, %v636
        %v639 = vunpack.c.l.s4 1983009808
        %v640 = vunpack.c.0.s8 %v639
        %v641 = vperm.slane %v635, %v640
        %v643 = vunpack.c.l.s4 1983009808
        %v644 = vunpack.c.0.s8 %v643
        %v645 = vperm.slane %v637, %v644
        %v646 = vrot.slane %v617, 4
        %v647 = vsel %vm374, %v646, %v605
        %v648 = vrot.slane %v605, 4
        %v649 = vsel %vm374, %v617, %v648
        %v651 = vunpack.c.l.s4 1934713408
        %v652 = vunpack.c.0.s8 %v651
        %v653 = vperm.slane %v647, %v652
        %v655 = vunpack.c.l.s4 1934713408
        %v656 = vunpack.c.0.s8 %v655
        %v657 = vperm.slane %v649, %v656
        %v658 = vrot.slane %v621, 4
        %v659 = vsel %vm374, %v658, %v609
        %v660 = vrot.slane %v609, 4
        %v661 = vsel %vm374, %v621, %v660
        %v663 = vunpack.c.l.s4 1934713408
        %v664 = vunpack.c.0.s8 %v663
        %v665 = vperm.slane %v659, %v664
        %v667 = vunpack.c.l.s4 1934713408
        %v668 = vunpack.c.0.s8 %v667
        %v669 = vperm.slane %v661, %v668
        %v670 = vrot.slane %v641, 4
        %v671 = vsel %vm374, %v670, %v629
        %v672 = vrot.slane %v629, 4
        %v673 = vsel %vm374, %v641, %v672
        %v675 = vunpack.c.l.s4 1934713408
        %v676 = vunpack.c.0.s8 %v675
        %v677 = vperm.slane %v671, %v676
        %v679 = vunpack.c.l.s4 1934713408
        %v680 = vunpack.c.0.s8 %v679
        %v681 = vperm.slane %v673, %v680
        %v682 = vrot.slane %v645, 4
        %v683 = vsel %vm374, %v682, %v633
        %v684 = vrot.slane %v633, 4
        %v685 = vsel %vm374, %v645, %v684
        %v687 = vunpack.c.l.s4 1934713408
        %v688 = vunpack.c.0.s8 %v687
        %v689 = vperm.slane %v683, %v688
        %v691 = vunpack.c.l.s4 1934713408
        %v692 = vunpack.c.0.s8 %v691
        %v693 = vperm.slane %v685, %v692
        %v694 = vrot.slane %v677, 4
        %v695 = vsel %vm374, %v694, %v653
        %v696 = vrot.slane %v653, 4
        %v697 = vsel %vm374, %v677, %v696
        %v698 = vrot.slane %v681, 4
        %v699 = vsel %vm374, %v698, %v657
        %v700 = vrot.slane %v657, 4
        %v701 = vsel %vm374, %v681, %v700
        %v702 = vrot.slane %v689, 4
        %v703 = vsel %vm374, %v702, %v665
        %v704 = vrot.slane %v665, 4
        %v705 = vsel %vm374, %v689, %v704
        %v706 = vrot.slane %v693, 4
        %v707 = vsel %vm374, %v706, %v669
        %v708 = vrot.slane %v669, 4
        %v709 = vsel %vm374, %v693, %v708
        %v710 = vrot.slane %v344, 4
        %v711 = vsel %vm374, %v710, %v291
        %v712 = vrot.slane %v291, 4
        %v713 = vsel %vm374, %v344, %v712
        %v715 = vunpack.c.l.s4 1983009808
        %v716 = vunpack.c.0.s8 %v715
        %v717 = vperm.slane %v711, %v716
        %v719 = vunpack.c.l.s4 1983009808
        %v720 = vunpack.c.0.s8 %v719
        %v721 = vperm.slane %v713, %v720
        %v722 = vrot.slane %v350, 4
        %v723 = vsel %vm374, %v722, %v338
        %v724 = vrot.slane %v338, 4
        %v725 = vsel %vm374, %v350, %v724
        %v727 = vunpack.c.l.s4 1983009808
        %v728 = vunpack.c.0.s8 %v727
        %v729 = vperm.slane %v723, %v728
        %v731 = vunpack.c.l.s4 1983009808
        %v732 = vunpack.c.0.s8 %v731
        %v733 = vperm.slane %v725, %v732
        %v734 = vrot.slane %v364, 4
        %v735 = vsel %vm374, %v734, %v292
        %v736 = vrot.slane %v292, 4
        %v737 = vsel %vm374, %v364, %v736
        %v739 = vunpack.c.l.s4 1983009808
        %v740 = vunpack.c.0.s8 %v739
        %v741 = vperm.slane %v735, %v740
        %v743 = vunpack.c.l.s4 1983009808
        %v744 = vunpack.c.0.s8 %v743
        %v745 = vperm.slane %v737, %v744
        %v746 = vrot.slane %v370, 4
        %v747 = vsel %vm374, %v746, %v358
        %v748 = vrot.slane %v358, 4
        %v749 = vsel %vm374, %v370, %v748
        %v751 = vunpack.c.l.s4 1983009808
        %v752 = vunpack.c.0.s8 %v751
        %v753 = vperm.slane %v747, %v752
        %v755 = vunpack.c.l.s4 1983009808
        %v756 = vunpack.c.0.s8 %v755
        %v757 = vperm.slane %v749, %v756
        %v758 = vrot.slane %v729, 4
        %v759 = vsel %vm374, %v758, %v717
        %v760 = vrot.slane %v717, 4
        %v761 = vsel %vm374, %v729, %v760
        %v763 = vunpack.c.l.s4 1934713408
        %v764 = vunpack.c.0.s8 %v763
        %v765 = vperm.slane %v759, %v764
        %v767 = vunpack.c.l.s4 1934713408
        %v768 = vunpack.c.0.s8 %v767
        %v769 = vperm.slane %v761, %v768
        %v770 = vrot.slane %v733, 4
        %v771 = vsel %vm374, %v770, %v721
        %v772 = vrot.slane %v721, 4
        %v773 = vsel %vm374, %v733, %v772
        %v775 = vunpack.c.l.s4 1934713408
        %v776 = vunpack.c.0.s8 %v775
        %v777 = vperm.slane %v771, %v776
        %v779 = vunpack.c.l.s4 1934713408
        %v780 = vunpack.c.0.s8 %v779
        %v781 = vperm.slane %v773, %v780
        %v782 = vrot.slane %v753, 4
        %v783 = vsel %vm374, %v782, %v741
        %v784 = vrot.slane %v741, 4
        %v785 = vsel %vm374, %v753, %v784
        %v787 = vunpack.c.l.s4 1934713408
        %v788 = vunpack.c.0.s8 %v787
        %v789 = vperm.slane %v783, %v788
        %v791 = vunpack.c.l.s4 1934713408
        %v792 = vunpack.c.0.s8 %v791
        %v793 = vperm.slane %v785, %v792
        %v794 = vrot.slane %v757, 4
        %v795 = vsel %vm374, %v794, %v745
        %v796 = vrot.slane %v745, 4
        %v797 = vsel %vm374, %v757, %v796
        %v799 = vunpack.c.l.s4 1934713408
        %v800 = vunpack.c.0.s8 %v799
        %v801 = vperm.slane %v795, %v800
        %v803 = vunpack.c.l.s4 1934713408
        %v804 = vunpack.c.0.s8 %v803
        %v805 = vperm.slane %v797, %v804
        %v806 = vrot.slane %v789, 4
        %v807 = vsel %vm374, %v806, %v765
        %v808 = vrot.slane %v765, 4
        %v809 = vsel %vm374, %v789, %v808
        %v810 = vrot.slane %v793, 4
        %v811 = vsel %vm374, %v810, %v769
        %v812 = vrot.slane %v769, 4
        %v813 = vsel %vm374, %v793, %v812
        %v814 = vrot.slane %v801, 4
        %v815 = vsel %vm374, %v814, %v777
        %v816 = vrot.slane %v777, 4
        %v817 = vsel %vm374, %v801, %v816
        %v818 = vrot.slane %v805, 4
        %v819 = vsel %vm374, %v818, %v781
        %v820 = vrot.slane %v781, 4
        %v821 = vsel %vm374, %v805, %v820
        %s822 = scalar_lea.vmem [#allocation2], 48
        %823 = vst.msk [vmem:[%s822 + $0x2] sm:$0xff] %vm224, %v471
        %824 = vst.msk [vmem:[%s822 + $0xa] sm:$0xff] %vm224, %v583
        %825 = vst.msk [vmem:[%s822 + $0x1a] sm:$0xff] %vm224, %v473
        %826 = vst.msk [vmem:[%s822 + $0x22] sm:$0xff] %vm224, %v585
        %827 = vst.msk [vmem:[%s822 + $0x32] sm:$0xff] %vm224, %v475
        %828 = vst.msk [vmem:[%s822 + $0x3a] sm:$0xff] %vm224, %v587
        %829 = vst.msk [vmem:[%s822 + $0x4a] sm:$0xff] %vm224, %v477
        %830 = vst.msk [vmem:[%s822 + $0x52] sm:$0xff] %vm224, %v589
        %831 = vst.msk [vmem:[%s822 + $0x62] sm:$0xff] %vm224, %v479
        %832 = vst.msk [vmem:[%s822 + $0x6a] sm:$0xff] %vm224, %v591
        %833 = vst.msk [vmem:[%s822 + $0x7a] sm:$0xff] %vm224, %v481
        %834 = vst.msk [vmem:[%s822 + $0x82] sm:$0xff] %vm224, %v593
        %835 = vst.msk [vmem:[%s822 + $0x92] sm:$0xff] %vm224, %v483
        %836 = vst.msk [vmem:[%s822 + $0x9a] sm:$0xff] %vm224, %v595
        %837 = vst.msk [vmem:[%s822 + $0xaa] sm:$0xff] %vm224, %v485
        %838 = vst.msk [vmem:[%s822 + $0xb2] sm:$0xff] %vm224, %v597
        %839 = vst.msk [vmem:[%s822 + $0xc2] sm:$0xff] %vm224, %v695
        %840 = vst.msk [vmem:[%s822 + $0xca] sm:$0xff] %vm224, %v807
        %841 = vst.msk [vmem:[%s822 + $0xda] sm:$0xff] %vm224, %v697
        %842 = vst.msk [vmem:[%s822 + $0xe2] sm:$0xff] %vm224, %v809
        %843 = vst.msk [vmem:[%s822 + $0xf2] sm:$0xff] %vm224, %v699
        %844 = vst.msk [vmem:[%s822 + $0xfa] sm:$0xff] %vm224, %v811
        %845 = vst.msk [vmem:[%s822 + $0x10a] sm:$0xff] %vm224, %v701
        %846 = vst.msk [vmem:[%s822 + $0x112] sm:$0xff] %vm224, %v813
        %847 = vst.msk [vmem:[%s822 + $0x122] sm:$0xff] %vm224, %v703
        %848 = vst.msk [vmem:[%s822 + $0x12a] sm:$0xff] %vm224, %v815
        %849 = vst.msk [vmem:[%s822 + $0x13a] sm:$0xff] %vm224, %v705
        %850 = vst.msk [vmem:[%s822 + $0x142] sm:$0xff] %vm224, %v817
        %851 = vst.msk [vmem:[%s822 + $0x152] sm:$0xff] %vm224, %v707
        %852 = vst.msk [vmem:[%s822 + $0x15a] sm:$0xff] %vm224, %v819
        %853 = vst.msk [vmem:[%s822 + $0x16a] sm:$0xff] %vm224, %v709
        %854 = vst.msk [vmem:[%s822 + $0x172] sm:$0xff] %vm224, %v821
        %v855 = vld [vmem:[#allocation2] sm:$0xff]
        %v856 = vld [vmem:[#allocation2 + $0x8] sm:$0xff]
        %v857 = vld [vmem:[#allocation2 + $0x10] sm:$0xff]
        %v858 = vld [vmem:[#allocation2 + $0x18] sm:$0xff]
        %v859 = vld [vmem:[#allocation2 + $0x20] sm:$0xff]
        %v860 = vld [vmem:[#allocation2 + $0x28] sm:$0xff]
        %v861 = vld [vmem:[#allocation2 + $0x30] sm:$0xff]
        %v862 = vld [vmem:[#allocation2 + $0x38] sm:$0xff]
        %v863 = vld [vmem:[#allocation2 + $0x40] sm:$0xff]
        %v864 = vld [vmem:[#allocation2 + $0x48] sm:$0xff]
        %v865 = vld [vmem:[#allocation2 + $0x50] sm:$0xff]
        %v866 = vld [vmem:[#allocation2 + $0x58] sm:$0xff]
        %v867 = vld [vmem:[#allocation2 + $0x60] sm:$0xff]
        %v868 = vld [vmem:[#allocation2 + $0x68] sm:$0xff]
        %v869 = vld [vmem:[#allocation2 + $0x70] sm:$0xff]
        %v870 = vld [vmem:[#allocation2 + $0x78] sm:$0xff]
        %v871 = vld [vmem:[#allocation2 + $0x80] sm:$0xff]
        %v872 = vld [vmem:[#allocation2 + $0x88] sm:$0xff]
        %v873 = vld [vmem:[#allocation2 + $0x90] sm:$0xff]
        %v874 = vld [vmem:[#allocation2 + $0x98] sm:$0xff]
        %v875 = vld [vmem:[#allocation2 + $0xa0] sm:$0xff]
        %v876 = vld [vmem:[#allocation2 + $0xa8] sm:$0xff]
        %v877 = vld [vmem:[#allocation2 + $0xb0] sm:$0xff]
        %v878 = vld [vmem:[#allocation2 + $0xb8] sm:$0xff]
        %v879 = vld [vmem:[#allocation2 + $0xc0] sm:$0xff]
        %v880 = vld [vmem:[#allocation2 + $0xc8] sm:$0xff]
        %v881 = vld [vmem:[#allocation2 + $0xd0] sm:$0xff]
        %v882 = vld [vmem:[#allocation2 + $0xd8] sm:$0xff]
        %v883 = vld [vmem:[#allocation2 + $0xe0] sm:$0xff]
        %v884 = vld [vmem:[#allocation2 + $0xe8] sm:$0xff]
        %v885 = vld [vmem:[#allocation2 + $0xf0] sm:$0xff]
        %v886 = vld [vmem:[#allocation2 + $0xf8] sm:$0xff]
        %v887 = vld [vmem:[#allocation2 + $0x100] sm:$0xff]
        %v888 = vld [vmem:[#allocation2 + $0x108] sm:$0xff]
        %v889 = vld [vmem:[#allocation2 + $0x110] sm:$0xff]
        %v890 = vld [vmem:[#allocation2 + $0x118] sm:$0xff]
        %v891 = vld [vmem:[#allocation2 + $0x120] sm:$0xff]
        %v892 = vld [vmem:[#allocation2 + $0x128] sm:$0xff]
        %v893 = vld [vmem:[#allocation2 + $0x130] sm:$0xff]
        %v894 = vld [vmem:[#allocation2 + $0x138] sm:$0xff]
        %v895 = vld [vmem:[#allocation2 + $0x140] sm:$0xff]
        %v896 = vld [vmem:[#allocation2 + $0x148] sm:$0xff]
        %v897 = vld [vmem:[#allocation2 + $0x150] sm:$0xff]
        %v898 = vld [vmem:[#allocation2 + $0x158] sm:$0xff]
        %v899 = vld [vmem:[#allocation2 + $0x160] sm:$0xff]
        %v900 = vld [vmem:[#allocation2 + $0x168] sm:$0xff]
        %v901 = vld [vmem:[#allocation2 + $0x170] sm:$0xff]
        %v902 = vld [vmem:[#allocation2 + $0x178] sm:$0xff]
        %s903 = scalar_lea.vmem [#allocation2], 24
        %v904 = vld [vmem:[%s903] sm:$0xff]
        %v905 = vld [vmem:[%s903 + $0x8] sm:$0xff]
        %v906 = vld [vmem:[%s903 + $0x10] sm:$0xff]
        %v907 = vld [vmem:[%s903 + $0x18] sm:$0xff]
        %v908 = vld [vmem:[%s903 + $0x20] sm:$0xff]
        %v909 = vld [vmem:[%s903 + $0x28] sm:$0xff]
        %v910 = vld [vmem:[%s903 + $0x30] sm:$0xff]
        %v911 = vld [vmem:[%s903 + $0x38] sm:$0xff]
        %v912 = vld [vmem:[%s903 + $0x40] sm:$0xff]
        %v913 = vld [vmem:[%s903 + $0x48] sm:$0xff]
        %v914 = vld [vmem:[%s903 + $0x50] sm:$0xff]
        %v915 = vld [vmem:[%s903 + $0x58] sm:$0xff]
        %v916 = vld [vmem:[%s903 + $0x60] sm:$0xff]
        %v917 = vld [vmem:[%s903 + $0x68] sm:$0xff]
        %v918 = vld [vmem:[%s903 + $0x70] sm:$0xff]
        %v919 = vld [vmem:[%s903 + $0x78] sm:$0xff]
        %v920 = vld [vmem:[%s903 + $0x80] sm:$0xff]
        %v921 = vld [vmem:[%s903 + $0x88] sm:$0xff]
        %v922 = vld [vmem:[%s903 + $0x90] sm:$0xff]
        %v923 = vld [vmem:[%s903 + $0x98] sm:$0xff]
        %v924 = vld [vmem:[%s903 + $0xa0] sm:$0xff]
        %v925 = vld [vmem:[%s903 + $0xa8] sm:$0xff]
        %v926 = vld [vmem:[%s903 + $0xb0] sm:$0xff]
        %v927 = vld [vmem:[%s903 + $0xb8] sm:$0xff]
        %v928 = vld [vmem:[%s903 + $0xc0] sm:$0xff]
        %v929 = vld [vmem:[%s903 + $0xc8] sm:$0xff]
        %v930 = vld [vmem:[%s903 + $0xd0] sm:$0xff]
        %v931 = vld [vmem:[%s903 + $0xd8] sm:$0xff]
        %v932 = vld [vmem:[%s903 + $0xe0] sm:$0xff]
        %v933 = vld [vmem:[%s903 + $0xe8] sm:$0xff]
        %v934 = vld [vmem:[%s903 + $0xf0] sm:$0xff]
        %v935 = vld [vmem:[%s903 + $0xf8] sm:$0xff]
        %v936 = vld [vmem:[%s903 + $0x100] sm:$0xff]
        %v937 = vld [vmem:[%s903 + $0x108] sm:$0xff]
        %v938 = vld [vmem:[%s903 + $0x110] sm:$0xff]
        %v939 = vld [vmem:[%s903 + $0x118] sm:$0xff]
        %v940 = vld [vmem:[%s903 + $0x120] sm:$0xff]
        %v941 = vld [vmem:[%s903 + $0x128] sm:$0xff]
        %v942 = vld [vmem:[%s903 + $0x130] sm:$0xff]
        %v943 = vld [vmem:[%s903 + $0x138] sm:$0xff]
        %v944 = vld [vmem:[%s903 + $0x140] sm:$0xff]
        %v945 = vld [vmem:[%s903 + $0x148] sm:$0xff]
        %v946 = vld [vmem:[%s903 + $0x150] sm:$0xff]
        %v947 = vld [vmem:[%s903 + $0x158] sm:$0xff]
        %v948 = vld [vmem:[%s903 + $0x160] sm:$0xff]
        %v949 = vld [vmem:[%s903 + $0x168] sm:$0xff]
        %v950 = vld [vmem:[%s903 + $0x170] sm:$0xff]
        %v951 = vld [vmem:[%s903 + $0x178] sm:$0xff]
        %v952 = vld [vmem:[%s822] sm:$0xff]
        %v953 = vld [vmem:[%s822 + $0x8] sm:$0xff]
        %v954 = vld [vmem:[%s822 + $0x10] sm:$0xff]
        %v955 = vld [vmem:[%s822 + $0x18] sm:$0xff]
        %v956 = vld [vmem:[%s822 + $0x20] sm:$0xff]
        %v957 = vld [vmem:[%s822 + $0x28] sm:$0xff]
        %v958 = vld [vmem:[%s822 + $0x30] sm:$0xff]
        %v959 = vld [vmem:[%s822 + $0x38] sm:$0xff]
        %v960 = vld [vmem:[%s822 + $0x40] sm:$0xff]
        %v961 = vld [vmem:[%s822 + $0x48] sm:$0xff]
        %v962 = vld [vmem:[%s822 + $0x50] sm:$0xff]
        %v963 = vld [vmem:[%s822 + $0x58] sm:$0xff]
        %v964 = vld [vmem:[%s822 + $0x60] sm:$0xff]
        %v965 = vld [vmem:[%s822 + $0x68] sm:$0xff]
        %v966 = vld [vmem:[%s822 + $0x70] sm:$0xff]
        %v967 = vld [vmem:[%s822 + $0x78] sm:$0xff]
        %v968 = vld [vmem:[%s822 + $0x80] sm:$0xff]
        %v969 = vld [vmem:[%s822 + $0x88] sm:$0xff]
        %v970 = vld [vmem:[%s822 + $0x90] sm:$0xff]
        %v971 = vld [vmem:[%s822 + $0x98] sm:$0xff]
        %v972 = vld [vmem:[%s822 + $0xa0] sm:$0xff]
        %v973 = vld [vmem:[%s822 + $0xa8] sm:$0xff]
        %v974 = vld [vmem:[%s822 + $0xb0] sm:$0xff]
        %v975 = vld [vmem:[%s822 + $0xb8] sm:$0xff]
        %v976 = vld [vmem:[%s822 + $0xc0] sm:$0xff]
        %v977 = vld [vmem:[%s822 + $0xc8] sm:$0xff]
        %v978 = vld [vmem:[%s822 + $0xd0] sm:$0xff]
        %v979 = vld [vmem:[%s822 + $0xd8] sm:$0xff]
        %v980 = vld [vmem:[%s822 + $0xe0] sm:$0xff]
        %v981 = vld [vmem:[%s822 + $0xe8] sm:$0xff]
        %v982 = vld [vmem:[%s822 + $0xf0] sm:$0xff]
        %v983 = vld [vmem:[%s822 + $0xf8] sm:$0xff]
        %v984 = vld [vmem:[%s822 + $0x100] sm:$0xff]
        %v985 = vld [vmem:[%s822 + $0x108] sm:$0xff]
        %v986 = vld [vmem:[%s822 + $0x110] sm:$0xff]
        %v987 = vld [vmem:[%s822 + $0x118] sm:$0xff]
        %v988 = vld [vmem:[%s822 + $0x120] sm:$0xff]
        %v989 = vld [vmem:[%s822 + $0x128] sm:$0xff]
        %v990 = vld [vmem:[%s822 + $0x130] sm:$0xff]
        %v991 = vld [vmem:[%s822 + $0x138] sm:$0xff]
        %v992 = vld [vmem:[%s822 + $0x140] sm:$0xff]
        %v993 = vld [vmem:[%s822 + $0x148] sm:$0xff]
        %v994 = vld [vmem:[%s822 + $0x150] sm:$0xff]
        %v995 = vld [vmem:[%s822 + $0x158] sm:$0xff]
        %v996 = vld [vmem:[%s822 + $0x160] sm:$0xff]
        %v997 = vld [vmem:[%s822 + $0x168] sm:$0xff]
        %v998 = vld [vmem:[%s822 + $0x170] sm:$0xff]
        %v999 = vld [vmem:[%s822 + $0x178] sm:$0xff]
        %s1000 = scalar_lea.vmem [#allocation2], 72
        %v1001 = vld [vmem:[%s1000] sm:$0xff]
        %v1002 = vld [vmem:[%s1000 + $0x8] sm:$0xff]
        %v1003 = vld [vmem:[%s1000 + $0x10] sm:$0xff]
        %v1004 = vld [vmem:[%s1000 + $0x18] sm:$0xff]
        %v1005 = vld [vmem:[%s1000 + $0x20] sm:$0xff]
        %v1006 = vld [vmem:[%s1000 + $0x28] sm:$0xff]
        %v1007 = vld [vmem:[%s1000 + $0x30] sm:$0xff]
        %v1008 = vld [vmem:[%s1000 + $0x38] sm:$0xff]
        %v1009 = vld [vmem:[%s1000 + $0x40] sm:$0xff]
        %v1010 = vld [vmem:[%s1000 + $0x48] sm:$0xff]
        %v1011 = vld [vmem:[%s1000 + $0x50] sm:$0xff]
        %v1012 = vld [vmem:[%s1000 + $0x58] sm:$0xff]
        %v1013 = vld [vmem:[%s1000 + $0x60] sm:$0xff]
        %v1014 = vld [vmem:[%s1000 + $0x68] sm:$0xff]
        %v1015 = vld [vmem:[%s1000 + $0x70] sm:$0xff]
        %v1016 = vld [vmem:[%s1000 + $0x78] sm:$0xff]
        %v1017 = vld [vmem:[%s1000 + $0x80] sm:$0xff]
        %v1018 = vld [vmem:[%s1000 + $0x88] sm:$0xff]
        %v1019 = vld [vmem:[%s1000 + $0x90] sm:$0xff]
        %v1020 = vld [vmem:[%s1000 + $0x98] sm:$0xff]
        %v1021 = vld [vmem:[%s1000 + $0xa0] sm:$0xff]
        %v1022 = vld [vmem:[%s1000 + $0xa8] sm:$0xff]
        %v1023 = vld [vmem:[%s1000 + $0xb0] sm:$0xff]
        %v1024 = vld [vmem:[%s1000 + $0xb8] sm:$0xff]
        %v1025 = vld [vmem:[%s1000 + $0xc0] sm:$0xff]
        %v1026 = vld [vmem:[%s1000 + $0xc8] sm:$0xff]
        %v1027 = vld [vmem:[%s1000 + $0xd0] sm:$0xff]
        %v1028 = vld [vmem:[%s1000 + $0xd8] sm:$0xff]
        %v1029 = vld [vmem:[%s1000 + $0xe0] sm:$0xff]
        %v1030 = vld [vmem:[%s1000 + $0xe8] sm:$0xff]
        %v1031 = vld [vmem:[%s1000 + $0xf0] sm:$0xff]
        %v1032 = vld [vmem:[%s1000 + $0xf8] sm:$0xff]
        %v1033 = vld [vmem:[%s1000 + $0x100] sm:$0xff]
        %v1034 = vld [vmem:[%s1000 + $0x108] sm:$0xff]
        %v1035 = vld [vmem:[%s1000 + $0x110] sm:$0xff]
        %v1036 = vld [vmem:[%s1000 + $0x118] sm:$0xff]
        %v1037 = vld [vmem:[%s1000 + $0x120] sm:$0xff]
        %v1038 = vld [vmem:[%s1000 + $0x128] sm:$0xff]
        %v1039 = vld [vmem:[%s1000 + $0x130] sm:$0xff]
        %v1040 = vld [vmem:[%s1000 + $0x138] sm:$0xff]
        %v1041 = vld [vmem:[%s1000 + $0x140] sm:$0xff]
        %v1042 = vld [vmem:[%s1000 + $0x148] sm:$0xff]
        %v1043 = vld [vmem:[%s1000 + $0x150] sm:$0xff]
        %v1044 = vld [vmem:[%s1000 + $0x158] sm:$0xff]
        %v1045 = vld [vmem:[%s1000 + $0x160] sm:$0xff]
        %v1046 = vld [vmem:[%s1000 + $0x168] sm:$0xff]
        %v1047 = vld [vmem:[%s1000 + $0x170] sm:$0xff]
        %v1048 = vld [vmem:[%s1000 + $0x178] sm:$0xff]
        %s1049 = scalar_lea.vmem [#allocation2], 96
        %v1050 = vld [vmem:[%s1049] sm:$0xff]
        %v1051 = vld [vmem:[%s1049 + $0x8] sm:$0xff]
        %v1052 = vld [vmem:[%s1049 + $0x10] sm:$0xff]
        %v1053 = vld [vmem:[%s1049 + $0x18] sm:$0xff]
        %v1054 = vld [vmem:[%s1049 + $0x20] sm:$0xff]
        %v1055 = vld [vmem:[%s1049 + $0x28] sm:$0xff]
        %v1056 = vld [vmem:[%s1049 + $0x30] sm:$0xff]
        %v1057 = vld [vmem:[%s1049 + $0x38] sm:$0xff]
        %v1058 = vld [vmem:[%s1049 + $0x40] sm:$0xff]
        %v1059 = vld [vmem:[%s1049 + $0x48] sm:$0xff]
        %v1060 = vld [vmem:[%s1049 + $0x50] sm:$0xff]
        %v1061 = vld [vmem:[%s1049 + $0x58] sm:$0xff]
        %v1062 = vld [vmem:[%s1049 + $0x60] sm:$0xff]
        %v1063 = vld [vmem:[%s1049 + $0x68] sm:$0xff]
        %v1064 = vld [vmem:[%s1049 + $0x70] sm:$0xff]
        %v1065 = vld [vmem:[%s1049 + $0x78] sm:$0xff]
        %v1066 = vld [vmem:[%s1049 + $0x80] sm:$0xff]
        %v1067 = vld [vmem:[%s1049 + $0x88] sm:$0xff]
        %v1068 = vld [vmem:[%s1049 + $0x90] sm:$0xff]
        %v1069 = vld [vmem:[%s1049 + $0x98] sm:$0xff]
        %v1070 = vld [vmem:[%s1049 + $0xa0] sm:$0xff]
        %v1071 = vld [vmem:[%s1049 + $0xa8] sm:$0xff]
        %v1072 = vld [vmem:[%s1049 + $0xb0] sm:$0xff]
        %v1073 = vld [vmem:[%s1049 + $0xb8] sm:$0xff]
        %v1074 = vld [vmem:[%s1049 + $0xc0] sm:$0xff]
        %v1075 = vld [vmem:[%s1049 + $0xc8] sm:$0xff]
        %v1076 = vld [vmem:[%s1049 + $0xd0] sm:$0xff]
        %v1077 = vld [vmem:[%s1049 + $0xd8] sm:$0xff]
        %v1078 = vld [vmem:[%s1049 + $0xe0] sm:$0xff]
        %v1079 = vld [vmem:[%s1049 + $0xe8] sm:$0xff]
        %v1080 = vld [vmem:[%s1049 + $0xf0] sm:$0xff]
        %v1081 = vld [vmem:[%s1049 + $0xf8] sm:$0xff]
        %v1082 = vld [vmem:[%s1049 + $0x100] sm:$0xff]
        %v1083 = vld [vmem:[%s1049 + $0x108] sm:$0xff]
        %v1084 = vld [vmem:[%s1049 + $0x110] sm:$0xff]
        %v1085 = vld [vmem:[%s1049 + $0x118] sm:$0xff]
        %v1086 = vld [vmem:[%s1049 + $0x120] sm:$0xff]
        %v1087 = vld [vmem:[%s1049 + $0x128] sm:$0xff]
        %v1088 = vld [vmem:[%s1049 + $0x130] sm:$0xff]
        %v1089 = vld [vmem:[%s1049 + $0x138] sm:$0xff]
        %v1090 = vld [vmem:[%s1049 + $0x140] sm:$0xff]
        %v1091 = vld [vmem:[%s1049 + $0x148] sm:$0xff]
        %v1092 = vld [vmem:[%s1049 + $0x150] sm:$0xff]
        %v1093 = vld [vmem:[%s1049 + $0x158] sm:$0xff]
        %v1094 = vld [vmem:[%s1049 + $0x160] sm:$0xff]
        %v1095 = vld [vmem:[%s1049 + $0x168] sm:$0xff]
        %v1096 = vld [vmem:[%s1049 + $0x170] sm:$0xff]
        %v1097 = vld [vmem:[%s1049 + $0x178] sm:$0xff]
        %1146 = vrot.lane.b32.xlu0 %v904, 32
        %v1147 = vpop.permute.xlu0 %1146
        %1148 = vrot.lane.b32.xlu0 %v905, 32
        %v1149 = vpop.permute.xlu0 %1148
        %1150 = vrot.lane.b32.xlu0 %v906, 32
        %v1151 = vpop.permute.xlu0 %1150
        %1152 = vrot.lane.b32.xlu0 %v907, 32
        %v1153 = vpop.permute.xlu0 %1152
        %1154 = vrot.lane.b32.xlu0 %v908, 32
        %v1155 = vpop.permute.xlu0 %1154
        %1156 = vrot.lane.b32.xlu0 %v909, 32
        %v1157 = vpop.permute.xlu0 %1156
        %1158 = vrot.lane.b32.xlu0 %v910, 32
        %v1159 = vpop.permute.xlu0 %1158
        %1160 = vrot.lane.b32.xlu0 %v911, 32
        %v1161 = vpop.permute.xlu0 %1160
        %1162 = vrot.lane.b32.xlu0 %v912, 32
        %v1163 = vpop.permute.xlu0 %1162
        %1164 = vrot.lane.b32.xlu0 %v913, 32
        %v1165 = vpop.permute.xlu0 %1164
        %1166 = vrot.lane.b32.xlu0 %v914, 32
        %v1167 = vpop.permute.xlu0 %1166
        %1168 = vrot.lane.b32.xlu0 %v915, 32
        %v1169 = vpop.permute.xlu0 %1168
        %1170 = vrot.lane.b32.xlu0 %v916, 32
        %v1171 = vpop.permute.xlu0 %1170
        %1172 = vrot.lane.b32.xlu0 %v917, 32
        %v1173 = vpop.permute.xlu0 %1172
        %1174 = vrot.lane.b32.xlu0 %v918, 32
        %v1175 = vpop.permute.xlu0 %1174
        %1176 = vrot.lane.b32.xlu0 %v919, 32
        %v1177 = vpop.permute.xlu0 %1176
        %1178 = vrot.lane.b32.xlu0 %v920, 32
        %v1179 = vpop.permute.xlu0 %1178
        %1180 = vrot.lane.b32.xlu0 %v921, 32
        %v1181 = vpop.permute.xlu0 %1180
        %1182 = vrot.lane.b32.xlu0 %v922, 32
        %v1183 = vpop.permute.xlu0 %1182
        %1184 = vrot.lane.b32.xlu0 %v923, 32
        %v1185 = vpop.permute.xlu0 %1184
        %1186 = vrot.lane.b32.xlu0 %v924, 32
        %v1187 = vpop.permute.xlu0 %1186
        %1188 = vrot.lane.b32.xlu0 %v925, 32
        %v1189 = vpop.permute.xlu0 %1188
        %1190 = vrot.lane.b32.xlu0 %v926, 32
        %v1191 = vpop.permute.xlu0 %1190
        %1192 = vrot.lane.b32.xlu0 %v927, 32
        %v1193 = vpop.permute.xlu0 %1192
        %1194 = vrot.lane.b32.xlu0 %v928, 32
        %v1195 = vpop.permute.xlu0 %1194
        %1196 = vrot.lane.b32.xlu0 %v929, 32
        %v1197 = vpop.permute.xlu0 %1196
        %1198 = vrot.lane.b32.xlu0 %v930, 32
        %v1199 = vpop.permute.xlu0 %1198
        %1200 = vrot.lane.b32.xlu0 %v931, 32
        %v1201 = vpop.permute.xlu0 %1200
        %1202 = vrot.lane.b32.xlu0 %v932, 32
        %v1203 = vpop.permute.xlu0 %1202
        %1204 = vrot.lane.b32.xlu0 %v933, 32
        %v1205 = vpop.permute.xlu0 %1204
        %1206 = vrot.lane.b32.xlu0 %v934, 32
        %v1207 = vpop.permute.xlu0 %1206
        %1208 = vrot.lane.b32.xlu0 %v935, 32
        %v1209 = vpop.permute.xlu0 %1208
        %1210 = vrot.lane.b32.xlu0 %v936, 32
        %v1211 = vpop.permute.xlu0 %1210
        %1212 = vrot.lane.b32.xlu0 %v937, 32
        %v1213 = vpop.permute.xlu0 %1212
        %1214 = vrot.lane.b32.xlu0 %v938, 32
        %v1215 = vpop.permute.xlu0 %1214
        %1216 = vrot.lane.b32.xlu0 %v939, 32
        %v1217 = vpop.permute.xlu0 %1216
        %1218 = vrot.lane.b32.xlu0 %v940, 32
        %v1219 = vpop.permute.xlu0 %1218
        %1220 = vrot.lane.b32.xlu0 %v941, 32
        %v1221 = vpop.permute.xlu0 %1220
        %1222 = vrot.lane.b32.xlu0 %v942, 32
        %v1223 = vpop.permute.xlu0 %1222
        %1224 = vrot.lane.b32.xlu0 %v943, 32
        %v1225 = vpop.permute.xlu0 %1224
        %1226 = vrot.lane.b32.xlu0 %v944, 32
        %v1227 = vpop.permute.xlu0 %1226
        %1228 = vrot.lane.b32.xlu0 %v945, 32
        %v1229 = vpop.permute.xlu0 %1228
        %1230 = vrot.lane.b32.xlu0 %v946, 32
        %v1231 = vpop.permute.xlu0 %1230
        %1232 = vrot.lane.b32.xlu0 %v947, 32
        %v1233 = vpop.permute.xlu0 %1232
        %1234 = vrot.lane.b32.xlu0 %v948, 32
        %v1235 = vpop.permute.xlu0 %1234
        %1236 = vrot.lane.b32.xlu0 %v949, 32
        %v1237 = vpop.permute.xlu0 %1236
        %1238 = vrot.lane.b32.xlu0 %v950, 32
        %v1239 = vpop.permute.xlu0 %1238
        %1240 = vrot.lane.b32.xlu0 %v951, 32
        %v1241 = vpop.permute.xlu0 %1240
        %1338 = vrot.lane.b32.xlu0 %v952, 64
        %v1339 = vpop.permute.xlu0 %1338
        %1340 = vrot.lane.b32.xlu0 %v953, 64
        %v1341 = vpop.permute.xlu0 %1340
        %1342 = vrot.lane.b32.xlu0 %v954, 64
        %v1343 = vpop.permute.xlu0 %1342
        %1344 = vrot.lane.b32.xlu0 %v955, 64
        %v1345 = vpop.permute.xlu0 %1344
        %1346 = vrot.lane.b32.xlu0 %v956, 64
        %v1347 = vpop.permute.xlu0 %1346
        %1348 = vrot.lane.b32.xlu0 %v957, 64
        %v1349 = vpop.permute.xlu0 %1348
        %1350 = vrot.lane.b32.xlu0 %v958, 64
        %v1351 = vpop.permute.xlu0 %1350
        %1352 = vrot.lane.b32.xlu0 %v959, 64
        %v1353 = vpop.permute.xlu0 %1352
        %1354 = vrot.lane.b32.xlu0 %v960, 64
        %v1355 = vpop.permute.xlu0 %1354
        %1356 = vrot.lane.b32.xlu0 %v961, 64
        %v1357 = vpop.permute.xlu0 %1356
        %1358 = vrot.lane.b32.xlu0 %v962, 64
        %v1359 = vpop.permute.xlu0 %1358
        %1360 = vrot.lane.b32.xlu0 %v963, 64
        %v1361 = vpop.permute.xlu0 %1360
        %1362 = vrot.lane.b32.xlu0 %v964, 64
        %v1363 = vpop.permute.xlu0 %1362
        %1364 = vrot.lane.b32.xlu0 %v965, 64
        %v1365 = vpop.permute.xlu0 %1364
        %1366 = vrot.lane.b32.xlu0 %v966, 64
        %v1367 = vpop.permute.xlu0 %1366
        %1368 = vrot.lane.b32.xlu0 %v967, 64
        %v1369 = vpop.permute.xlu0 %1368
        %1370 = vrot.lane.b32.xlu0 %v968, 64
        %v1371 = vpop.permute.xlu0 %1370
        %1372 = vrot.lane.b32.xlu0 %v969, 64
        %v1373 = vpop.permute.xlu0 %1372
        %1374 = vrot.lane.b32.xlu0 %v970, 64
        %v1375 = vpop.permute.xlu0 %1374
        %1376 = vrot.lane.b32.xlu0 %v971, 64
        %v1377 = vpop.permute.xlu0 %1376
        %1378 = vrot.lane.b32.xlu0 %v972, 64
        %v1379 = vpop.permute.xlu0 %1378
        %1380 = vrot.lane.b32.xlu0 %v973, 64
        %v1381 = vpop.permute.xlu0 %1380
        %1382 = vrot.lane.b32.xlu0 %v974, 64
        %v1383 = vpop.permute.xlu0 %1382
        %1384 = vrot.lane.b32.xlu0 %v975, 64
        %v1385 = vpop.permute.xlu0 %1384
        %1386 = vrot.lane.b32.xlu0 %v976, 64
        %v1387 = vpop.permute.xlu0 %1386
        %1388 = vrot.lane.b32.xlu0 %v977, 64
        %v1389 = vpop.permute.xlu0 %1388
        %1390 = vrot.lane.b32.xlu0 %v978, 64
        %v1391 = vpop.permute.xlu0 %1390
        %1392 = vrot.lane.b32.xlu0 %v979, 64
        %v1393 = vpop.permute.xlu0 %1392
        %1394 = vrot.lane.b32.xlu0 %v980, 64
        %v1395 = vpop.permute.xlu0 %1394
        %1396 = vrot.lane.b32.xlu0 %v981, 64
        %v1397 = vpop.permute.xlu0 %1396
        %1398 = vrot.lane.b32.xlu0 %v982, 64
        %v1399 = vpop.permute.xlu0 %1398
        %1400 = vrot.lane.b32.xlu0 %v983, 64
        %v1401 = vpop.permute.xlu0 %1400
        %1402 = vrot.lane.b32.xlu0 %v984, 64
        %v1403 = vpop.permute.xlu0 %1402
        %1404 = vrot.lane.b32.xlu0 %v985, 64
        %v1405 = vpop.permute.xlu0 %1404
        %1406 = vrot.lane.b32.xlu0 %v986, 64
        %v1407 = vpop.permute.xlu0 %1406
        %1408 = vrot.lane.b32.xlu0 %v987, 64
        %v1409 = vpop.permute.xlu0 %1408
        %1410 = vrot.lane.b32.xlu0 %v988, 64
        %v1411 = vpop.permute.xlu0 %1410
        %1412 = vrot.lane.b32.xlu0 %v989, 64
        %v1413 = vpop.permute.xlu0 %1412
        %1414 = vrot.lane.b32.xlu0 %v990, 64
        %v1415 = vpop.permute.xlu0 %1414
        %1416 = vrot.lane.b32.xlu0 %v991, 64
        %v1417 = vpop.permute.xlu0 %1416
        %1418 = vrot.lane.b32.xlu0 %v992, 64
        %v1419 = vpop.permute.xlu0 %1418
        %1420 = vrot.lane.b32.xlu0 %v993, 64
        %v1421 = vpop.permute.xlu0 %1420
        %1422 = vrot.lane.b32.xlu0 %v994, 64
        %v1423 = vpop.permute.xlu0 %1422
        %1424 = vrot.lane.b32.xlu0 %v995, 64
        %v1425 = vpop.permute.xlu0 %1424
        %1426 = vrot.lane.b32.xlu0 %v996, 64
        %v1427 = vpop.permute.xlu0 %1426
        %1428 = vrot.lane.b32.xlu0 %v997, 64
        %v1429 = vpop.permute.xlu0 %1428
        %1430 = vrot.lane.b32.xlu0 %v998, 64
        %v1431 = vpop.permute.xlu0 %1430
        %1432 = vrot.lane.b32.xlu0 %v999, 64
        %v1433 = vpop.permute.xlu0 %1432
        %1530 = vrot.lane.b32.xlu0 %v1001, 96
        %v1531 = vpop.permute.xlu0 %1530
        %1532 = vrot.lane.b32.xlu0 %v1002, 96
        %v1533 = vpop.permute.xlu0 %1532
        %1534 = vrot.lane.b32.xlu0 %v1003, 96
        %v1535 = vpop.permute.xlu0 %1534
        %1536 = vrot.lane.b32.xlu0 %v1004, 96
        %v1537 = vpop.permute.xlu0 %1536
        %1538 = vrot.lane.b32.xlu0 %v1005, 96
        %v1539 = vpop.permute.xlu0 %1538
        %1540 = vrot.lane.b32.xlu0 %v1006, 96
        %v1541 = vpop.permute.xlu0 %1540
        %1542 = vrot.lane.b32.xlu0 %v1007, 96
        %v1543 = vpop.permute.xlu0 %1542
        %1544 = vrot.lane.b32.xlu0 %v1008, 96
        %v1545 = vpop.permute.xlu0 %1544
        %1546 = vrot.lane.b32.xlu0 %v1009, 96
        %v1547 = vpop.permute.xlu0 %1546
        %1548 = vrot.lane.b32.xlu0 %v1010, 96
        %v1549 = vpop.permute.xlu0 %1548
        %1550 = vrot.lane.b32.xlu0 %v1011, 96
        %v1551 = vpop.permute.xlu0 %1550
        %1552 = vrot.lane.b32.xlu0 %v1012, 96
        %v1553 = vpop.permute.xlu0 %1552
        %1554 = vrot.lane.b32.xlu0 %v1013, 96
        %v1555 = vpop.permute.xlu0 %1554
        %1556 = vrot.lane.b32.xlu0 %v1014, 96
        %v1557 = vpop.permute.xlu0 %1556
        %1558 = vrot.lane.b32.xlu0 %v1015, 96
        %v1559 = vpop.permute.xlu0 %1558
        %1560 = vrot.lane.b32.xlu0 %v1016, 96
        %v1561 = vpop.permute.xlu0 %1560
        %1562 = vrot.lane.b32.xlu0 %v1017, 96
        %v1563 = vpop.permute.xlu0 %1562
        %1564 = vrot.lane.b32.xlu0 %v1018, 96
        %v1565 = vpop.permute.xlu0 %1564
        %1566 = vrot.lane.b32.xlu0 %v1019, 96
        %v1567 = vpop.permute.xlu0 %1566
        %1568 = vrot.lane.b32.xlu0 %v1020, 96
        %v1569 = vpop.permute.xlu0 %1568
        %1570 = vrot.lane.b32.xlu0 %v1021, 96
        %v1571 = vpop.permute.xlu0 %1570
        %1572 = vrot.lane.b32.xlu0 %v1022, 96
        %v1573 = vpop.permute.xlu0 %1572
        %1574 = vrot.lane.b32.xlu0 %v1023, 96
        %v1575 = vpop.permute.xlu0 %1574
        %1576 = vrot.lane.b32.xlu0 %v1024, 96
        %v1577 = vpop.permute.xlu0 %1576
        %1578 = vrot.lane.b32.xlu0 %v1025, 96
        %v1579 = vpop.permute.xlu0 %1578
        %1580 = vrot.lane.b32.xlu0 %v1026, 96
        %v1581 = vpop.permute.xlu0 %1580
        %1582 = vrot.lane.b32.xlu0 %v1027, 96
        %v1583 = vpop.permute.xlu0 %1582
        %1584 = vrot.lane.b32.xlu0 %v1028, 96
        %v1585 = vpop.permute.xlu0 %1584
        %1586 = vrot.lane.b32.xlu0 %v1029, 96
        %v1587 = vpop.permute.xlu0 %1586
        %1588 = vrot.lane.b32.xlu0 %v1030, 96
        %v1589 = vpop.permute.xlu0 %1588
        %1590 = vrot.lane.b32.xlu0 %v1031, 96
        %v1591 = vpop.permute.xlu0 %1590
        %1592 = vrot.lane.b32.xlu0 %v1032, 96
        %v1593 = vpop.permute.xlu0 %1592
        %1594 = vrot.lane.b32.xlu0 %v1033, 96
        %v1595 = vpop.permute.xlu0 %1594
        %1596 = vrot.lane.b32.xlu0 %v1034, 96
        %v1597 = vpop.permute.xlu0 %1596
        %1598 = vrot.lane.b32.xlu0 %v1035, 96
        %v1599 = vpop.permute.xlu0 %1598
        %1600 = vrot.lane.b32.xlu0 %v1036, 96
        %v1601 = vpop.permute.xlu0 %1600
        %1602 = vrot.lane.b32.xlu0 %v1037, 96
        %v1603 = vpop.permute.xlu0 %1602
        %1604 = vrot.lane.b32.xlu0 %v1038, 96
        %v1605 = vpop.permute.xlu0 %1604
        %1606 = vrot.lane.b32.xlu0 %v1039, 96
        %v1607 = vpop.permute.xlu0 %1606
        %1608 = vrot.lane.b32.xlu0 %v1040, 96
        %v1609 = vpop.permute.xlu0 %1608
        %1610 = vrot.lane.b32.xlu0 %v1041, 96
        %v1611 = vpop.permute.xlu0 %1610
        %1612 = vrot.lane.b32.xlu0 %v1042, 96
        %v1613 = vpop.permute.xlu0 %1612
        %1614 = vrot.lane.b32.xlu0 %v1043, 96
        %v1615 = vpop.permute.xlu0 %1614
        %1616 = vrot.lane.b32.xlu0 %v1044, 96
        %v1617 = vpop.permute.xlu0 %1616
        %1618 = vrot.lane.b32.xlu0 %v1045, 96
        %v1619 = vpop.permute.xlu0 %1618
        %1620 = vrot.lane.b32.xlu0 %v1046, 96
        %v1621 = vpop.permute.xlu0 %1620
        %1622 = vrot.lane.b32.xlu0 %v1047, 96
        %v1623 = vpop.permute.xlu0 %1622
        %1624 = vrot.lane.b32.xlu0 %v1048, 96
        %v1625 = vpop.permute.xlu0 %1624
        %v1674 = vsel %vm224, %v855, %v1147
        %v1675 = vsel %vm224, %v856, %v1149
        %v1676 = vsel %vm224, %v857, %v1151
        %v1677 = vsel %vm224, %v858, %v1153
        %v1678 = vsel %vm224, %v859, %v1155
        %v1679 = vsel %vm224, %v860, %v1157
        %v1680 = vsel %vm224, %v861, %v1159
        %v1681 = vsel %vm224, %v862, %v1161
        %v1682 = vsel %vm224, %v863, %v1163
        %v1683 = vsel %vm224, %v864, %v1165
        %v1684 = vsel %vm224, %v865, %v1167
        %v1685 = vsel %vm224, %v866, %v1169
        %v1686 = vsel %vm224, %v867, %v1171
        %v1687 = vsel %vm224, %v868, %v1173
        %v1688 = vsel %vm224, %v869, %v1175
        %v1689 = vsel %vm224, %v870, %v1177
        %v1690 = vsel %vm224, %v871, %v1179
        %v1691 = vsel %vm224, %v872, %v1181
        %v1692 = vsel %vm224, %v873, %v1183
        %v1693 = vsel %vm224, %v874, %v1185
        %v1694 = vsel %vm224, %v875, %v1187
        %v1695 = vsel %vm224, %v876, %v1189
        %v1696 = vsel %vm224, %v877, %v1191
        %v1697 = vsel %vm224, %v878, %v1193
        %v1698 = vsel %vm224, %v879, %v1195
        %v1699 = vsel %vm224, %v880, %v1197
        %v1700 = vsel %vm224, %v881, %v1199
        %v1701 = vsel %vm224, %v882, %v1201
        %v1702 = vsel %vm224, %v883, %v1203
        %v1703 = vsel %vm224, %v884, %v1205
        %v1704 = vsel %vm224, %v885, %v1207
        %v1705 = vsel %vm224, %v886, %v1209
        %v1706 = vsel %vm224, %v887, %v1211
        %v1707 = vsel %vm224, %v888, %v1213
        %v1708 = vsel %vm224, %v889, %v1215
        %v1709 = vsel %vm224, %v890, %v1217
        %v1710 = vsel %vm224, %v891, %v1219
        %v1711 = vsel %vm224, %v892, %v1221
        %v1712 = vsel %vm224, %v893, %v1223
        %v1713 = vsel %vm224, %v894, %v1225
        %v1714 = vsel %vm224, %v895, %v1227
        %v1715 = vsel %vm224, %v896, %v1229
        %v1716 = vsel %vm224, %v897, %v1231
        %v1717 = vsel %vm224, %v898, %v1233
        %v1718 = vsel %vm224, %v899, %v1235
        %v1719 = vsel %vm224, %v900, %v1237
        %v1720 = vsel %vm224, %v901, %v1239
        %v1721 = vsel %vm224, %v902, %v1241
        %vm1722 = vcmask 523264
        %v1723 = vsel %vm1722, %v1674, %v1339
        %v1724 = vsel %vm1722, %v1675, %v1341
        %v1725 = vsel %vm1722, %v1676, %v1343
        %v1726 = vsel %vm1722, %v1677, %v1345
        %v1727 = vsel %vm1722, %v1678, %v1347
        %v1728 = vsel %vm1722, %v1679, %v1349
        %v1729 = vsel %vm1722, %v1680, %v1351
        %v1730 = vsel %vm1722, %v1681, %v1353
        %v1731 = vsel %vm1722, %v1682, %v1355
        %v1732 = vsel %vm1722, %v1683, %v1357
        %v1733 = vsel %vm1722, %v1684, %v1359
        %v1734 = vsel %vm1722, %v1685, %v1361
        %v1735 = vsel %vm1722, %v1686, %v1363
        %v1736 = vsel %vm1722, %v1687, %v1365
        %v1737 = vsel %vm1722, %v1688, %v1367
        %v1738 = vsel %vm1722, %v1689, %v1369
        %v1739 = vsel %vm1722, %v1690, %v1371
        %v1740 = vsel %vm1722, %v1691, %v1373
        %v1741 = vsel %vm1722, %v1692, %v1375
        %v1742 = vsel %vm1722, %v1693, %v1377
        %v1743 = vsel %vm1722, %v1694, %v1379
        %v1744 = vsel %vm1722, %v1695, %v1381
        %v1745 = vsel %vm1722, %v1696, %v1383
        %v1746 = vsel %vm1722, %v1697, %v1385
        %v1747 = vsel %vm1722, %v1698, %v1387
        %v1748 = vsel %vm1722, %v1699, %v1389
        %v1749 = vsel %vm1722, %v1700, %v1391
        %v1750 = vsel %vm1722, %v1701, %v1393
        %v1751 = vsel %vm1722, %v1702, %v1395
        %v1752 = vsel %vm1722, %v1703, %v1397
        %v1753 = vsel %vm1722, %v1704, %v1399
        %v1754 = vsel %vm1722, %v1705, %v1401
        %v1755 = vsel %vm1722, %v1706, %v1403
        %v1756 = vsel %vm1722, %v1707, %v1405
        %v1757 = vsel %vm1722, %v1708, %v1407
        %v1758 = vsel %vm1722, %v1709, %v1409
        %v1759 = vsel %vm1722, %v1710, %v1411
        %v1760 = vsel %vm1722, %v1711, %v1413
        %v1761 = vsel %vm1722, %v1712, %v1415
        %v1762 = vsel %vm1722, %v1713, %v1417
        %v1763 = vsel %vm1722, %v1714, %v1419
        %v1764 = vsel %vm1722, %v1715, %v1421
        %v1765 = vsel %vm1722, %v1716, %v1423
        %v1766 = vsel %vm1722, %v1717, %v1425
        %v1767 = vsel %vm1722, %v1718, %v1427
        %v1768 = vsel %vm1722, %v1719, %v1429
        %v1769 = vsel %vm1722, %v1720, %v1431
        %v1770 = vsel %vm1722, %v1721, %v1433
        %vm1771 = vcmask 785408
        %v1772 = vsel %vm1771, %v1723, %v1531
        %v1773 = vsel %vm1771, %v1724, %v1533
        %v1774 = vsel %vm1771, %v1725, %v1535
        %v1775 = vsel %vm1771, %v1726, %v1537
        %v1776 = vsel %vm1771, %v1727, %v1539
        %v1777 = vsel %vm1771, %v1728, %v1541
        %v1778 = vsel %vm1771, %v1729, %v1543
        %v1779 = vsel %vm1771, %v1730, %v1545
        %v1780 = vsel %vm1771, %v1731, %v1547
        %v1781 = vsel %vm1771, %v1732, %v1549
        %v1782 = vsel %vm1771, %v1733, %v1551
        %v1783 = vsel %vm1771, %v1734, %v1553
        %v1784 = vsel %vm1771, %v1735, %v1555
        %v1785 = vsel %vm1771, %v1736, %v1557
        %v1786 = vsel %vm1771, %v1737, %v1559
        %v1787 = vsel %vm1771, %v1738, %v1561
        %v1788 = vsel %vm1771, %v1739, %v1563
        %v1789 = vsel %vm1771, %v1740, %v1565
        %v1790 = vsel %vm1771, %v1741, %v1567
        %v1791 = vsel %vm1771, %v1742, %v1569
        %v1792 = vsel %vm1771, %v1743, %v1571
        %v1793 = vsel %vm1771, %v1744, %v1573
        %v1794 = vsel %vm1771, %v1745, %v1575
        %v1795 = vsel %vm1771, %v1746, %v1577
        %v1796 = vsel %vm1771, %v1747, %v1579
        %v1797 = vsel %vm1771, %v1748, %v1581
        %v1798 = vsel %vm1771, %v1749, %v1583
        %v1799 = vsel %vm1771, %v1750, %v1585
        %v1800 = vsel %vm1771, %v1751, %v1587
        %v1801 = vsel %vm1771, %v1752, %v1589
        %v1802 = vsel %vm1771, %v1753, %v1591
        %v1803 = vsel %vm1771, %v1754, %v1593
        %v1804 = vsel %vm1771, %v1755, %v1595
        %v1805 = vsel %vm1771, %v1756, %v1597
        %v1806 = vsel %vm1771, %v1757, %v1599
        %v1807 = vsel %vm1771, %v1758, %v1601
        %v1808 = vsel %vm1771, %v1759, %v1603
        %v1809 = vsel %vm1771, %v1760, %v1605
        %v1810 = vsel %vm1771, %v1761, %v1607
        %v1811 = vsel %vm1771, %v1762, %v1609
        %v1812 = vsel %vm1771, %v1763, %v1611
        %v1813 = vsel %vm1771, %v1764, %v1613
        %v1814 = vsel %vm1771, %v1765, %v1615
        %v1815 = vsel %vm1771, %v1766, %v1617
        %v1816 = vsel %vm1771, %v1767, %v1619
        %v1817 = vsel %vm1771, %v1768, %v1621
        %v1818 = vsel %vm1771, %v1769, %v1623
        %v1819 = vsel %vm1771, %v1770, %v1625
        %v1820 = vld [vmem:[#allocation6] sm:$0xff]
        %v1821 = vld [vmem:[#allocation6 + $0x8] sm:$0xff]
        %v1822 = vld [vmem:[#allocation6 + $0x10] sm:$0xff]
        %v1823 = vld [vmem:[#allocation6 + $0x18] sm:$0xff]
        %v1824 = vld [vmem:[#allocation6 + $0x20] sm:$0xff]
        %v1825 = vld [vmem:[#allocation6 + $0x28] sm:$0xff]
        %v1826 = vld [vmem:[#allocation6 + $0x30] sm:$0xff]
        %v1827 = vld [vmem:[#allocation6 + $0x38] sm:$0xff]
        %v1828 = vld [vmem:[#allocation6 + $0x40] sm:$0xff]
        %v1829 = vld [vmem:[#allocation6 + $0x48] sm:$0xff]
        %v1830 = vld [vmem:[#allocation6 + $0x50] sm:$0xff]
        %v1831 = vld [vmem:[#allocation6 + $0x58] sm:$0xff]
        %v1832 = vld [vmem:[#allocation6 + $0x60] sm:$0xff]
        %v1833 = vld [vmem:[#allocation6 + $0x68] sm:$0xff]
        %v1834 = vld [vmem:[#allocation6 + $0x70] sm:$0xff]
        %v1835 = vld [vmem:[#allocation6 + $0x78] sm:$0xff]
        %v1836 = vld [vmem:[#allocation6 + $0x80] sm:$0xff]
        %v1837 = vld [vmem:[#allocation6 + $0x88] sm:$0xff]
        %v1838 = vld [vmem:[#allocation6 + $0x90] sm:$0xff]
        %v1839 = vld [vmem:[#allocation6 + $0x98] sm:$0xff]
        %v1840 = vld [vmem:[#allocation6 + $0xa0] sm:$0xff]
        %v1841 = vld [vmem:[#allocation6 + $0xa8] sm:$0xff]
        %v1842 = vld [vmem:[#allocation6 + $0xb0] sm:$0xff]
        %v1843 = vld [vmem:[#allocation6 + $0xb8] sm:$0xff]
        %v1844 = vld [vmem:[#allocation6 + $0xc0] sm:$0xff]
        %v1845 = vld [vmem:[#allocation6 + $0xc8] sm:$0xff]
        %v1846 = vld [vmem:[#allocation6 + $0xd0] sm:$0xff]
        %v1847 = vld [vmem:[#allocation6 + $0xd8] sm:$0xff]
        %v1848 = vld [vmem:[#allocation6 + $0xe0] sm:$0xff]
        %v1849 = vld [vmem:[#allocation6 + $0xe8] sm:$0xff]
        %v1850 = vld [vmem:[#allocation6 + $0xf0] sm:$0xff]
        %v1851 = vld [vmem:[#allocation6 + $0xf8] sm:$0xff]
        %v1852 = vld [vmem:[#allocation6 + $0x100] sm:$0xff]
        %v1853 = vld [vmem:[#allocation6 + $0x108] sm:$0xff]
        %v1854 = vld [vmem:[#allocation6 + $0x110] sm:$0xff]
        %v1855 = vld [vmem:[#allocation6 + $0x118] sm:$0xff]
        %v1856 = vld [vmem:[#allocation6 + $0x120] sm:$0xff]
        %v1857 = vld [vmem:[#allocation6 + $0x128] sm:$0xff]
        %v1858 = vld [vmem:[#allocation6 + $0x130] sm:$0xff]
        %v1859 = vld [vmem:[#allocation6 + $0x138] sm:$0xff]
        %v1861 = vsel %vm224, %v1050, 0
        %v1864 = vsel %vm224, %v1051, 0
        %v1867 = vsel %vm224, %v1052, 0
        %v1870 = vsel %vm224, %v1053, 0
        %v1873 = vsel %vm224, %v1054, 0
        %v1876 = vsel %vm224, %v1055, 0
        %v1879 = vsel %vm224, %v1056, 0
        %v1882 = vsel %vm224, %v1057, 0
        %v1885 = vsel %vm224, %v1058, 0
        %v1888 = vsel %vm224, %v1059, 0
        %v1891 = vsel %vm224, %v1060, 0
        %v1894 = vsel %vm224, %v1061, 0
        %v1897 = vsel %vm224, %v1062, 0
        %v1900 = vsel %vm224, %v1063, 0
        %v1903 = vsel %vm224, %v1064, 0
        %v1906 = vsel %vm224, %v1065, 0
        %v1909 = vsel %vm224, %v1066, 0
        %v1912 = vsel %vm224, %v1067, 0
        %v1915 = vsel %vm224, %v1068, 0
        %v1918 = vsel %vm224, %v1069, 0
        %v1921 = vsel %vm224, %v1070, 0
        %v1924 = vsel %vm224, %v1071, 0
        %v1927 = vsel %vm224, %v1072, 0
        %v1930 = vsel %vm224, %v1073, 0
        %v1933 = vsel %vm224, %v1074, 0
        %v1936 = vsel %vm224, %v1075, 0
        %v1939 = vsel %vm224, %v1076, 0
        %v1942 = vsel %vm224, %v1077, 0
        %v1945 = vsel %vm224, %v1078, 0
        %v1948 = vsel %vm224, %v1079, 0
        %v1951 = vsel %vm224, %v1080, 0
        %v1954 = vsel %vm224, %v1081, 0
        %v1957 = vsel %vm224, %v1082, 0
        %v1960 = vsel %vm224, %v1083, 0
        %v1963 = vsel %vm224, %v1084, 0
        %v1966 = vsel %vm224, %v1085, 0
        %v1969 = vsel %vm224, %v1086, 0
        %v1972 = vsel %vm224, %v1087, 0
        %v1975 = vsel %vm224, %v1088, 0
        %v1978 = vsel %vm224, %v1089, 0
        %v1981 = vsel %vm224, %v1090, 0
        %v1984 = vsel %vm224, %v1091, 0
        %v1987 = vsel %vm224, %v1092, 0
        %v1990 = vsel %vm224, %v1093, 0
        %v1993 = vsel %vm224, %v1094, 0
        %v1996 = vsel %vm224, %v1095, 0
        %v1999 = vsel %vm224, %v1096, 0
        %v2002 = vsel %vm224, %v1097, 0
        %2004 = vmatpush.msra.mxu0 %v1850
        %2005 = vmatpush.msra.mxu0 %v1848
        %2006 = vmatpush.msra.mxu0 %v1846
        %2007 = vmatpush.msra.mxu0 %v1844
        %2008 = vmatpush.msra.mxu0 %v1842
        %2009 = vmatpush.msra.mxu0 %v1840
        %2010 = vmatpush.msra.mxu0 %v1838
        %2011 = vmatpush.msra.mxu0 %v1836
        %2012 = vmatpush.msra.mxu0 %v1834
        %2013 = vmatpush.msra.mxu0 %v1832
        %2014 = vmatpush.msra.mxu0 %v1830
        %2015 = vmatpush.msra.mxu0 %v1828
        %2016 = vmatpush.msra.mxu0 %v1826
        %2017 = vmatpush.msra.mxu0 %v1824
        %2018 = vmatpush.msra.mxu0 %v1822
        %2019 = vmatpush.msra.mxu0 %v1820
        %2020 = vmatmul.f32.gmra.mxu0 %v1772
        %v2021 = vpop.f32.mrf.mxu0
        %v2022 = vadd.f32 0.0, %v2021
        %2023 = vmatmul.f32.gmra.mxu0 %v1773
        %v2024 = vpop.f32.mrf.mxu0
        %v2025 = vadd.f32 0.0, %v2024
        %2026 = vmatmul.f32.gmra.mxu0 %v1774
        %v2027 = vpop.f32.mrf.mxu0
        %v2028 = vadd.f32 0.0, %v2027
        %2029 = vmatmul.f32.gmra.mxu0 %v1775
        %v2030 = vpop.f32.mrf.mxu0
        %v2031 = vadd.f32 0.0, %v2030
        %2032 = vmatmul.f32.gmra.mxu0 %v1776
        %v2033 = vpop.f32.mrf.mxu0
        %v2034 = vadd.f32 0.0, %v2033
        %2035 = vmatmul.f32.gmra.mxu0 %v1777
        %v2036 = vpop.f32.mrf.mxu0
        %v2037 = vadd.f32 0.0, %v2036
        %2038 = vmatmul.f32.gmra.mxu0 %v1778
        %v2039 = vpop.f32.mrf.mxu0
        %v2040 = vadd.f32 0.0, %v2039
        %2041 = vmatmul.f32.gmra.mxu0 %v1779
        %v2042 = vpop.f32.mrf.mxu0
        %v2043 = vadd.f32 0.0, %v2042
        %2044 = vmatmul.f32.gmra.mxu0 %v1780
        %v2045 = vpop.f32.mrf.mxu0
        %v2046 = vadd.f32 0.0, %v2045
        %2047 = vmatmul.f32.gmra.mxu0 %v1781
        %v2048 = vpop.f32.mrf.mxu0
        %v2049 = vadd.f32 0.0, %v2048
        %2050 = vmatmul.f32.gmra.mxu0 %v1782
        %v2051 = vpop.f32.mrf.mxu0
        %v2052 = vadd.f32 0.0, %v2051
        %2053 = vmatmul.f32.gmra.mxu0 %v1783
        %v2054 = vpop.f32.mrf.mxu0
        %v2055 = vadd.f32 0.0, %v2054
        %2056 = vmatmul.f32.gmra.mxu0 %v1784
        %v2057 = vpop.f32.mrf.mxu0
        %v2058 = vadd.f32 0.0, %v2057
        %2059 = vmatmul.f32.gmra.mxu0 %v1785
        %v2060 = vpop.f32.mrf.mxu0
        %v2061 = vadd.f32 0.0, %v2060
        %2062 = vmatmul.f32.gmra.mxu0 %v1786
        %v2063 = vpop.f32.mrf.mxu0
        %v2064 = vadd.f32 0.0, %v2063
        %2065 = vmatmul.f32.gmra.mxu0 %v1787
        %v2066 = vpop.f32.mrf.mxu0
        %v2067 = vadd.f32 0.0, %v2066
        %2068 = vmatmul.f32.gmra.mxu0 %v1788
        %v2069 = vpop.f32.mrf.mxu0
        %v2070 = vadd.f32 0.0, %v2069
        %2071 = vmatmul.f32.gmra.mxu0 %v1789
        %v2072 = vpop.f32.mrf.mxu0
        %v2073 = vadd.f32 0.0, %v2072
        %2074 = vmatmul.f32.gmra.mxu0 %v1790
        %v2075 = vpop.f32.mrf.mxu0
        %v2076 = vadd.f32 0.0, %v2075
        %2077 = vmatmul.f32.gmra.mxu0 %v1791
        %v2078 = vpop.f32.mrf.mxu0
        %v2079 = vadd.f32 0.0, %v2078
        %2080 = vmatmul.f32.gmra.mxu0 %v1792
        %v2081 = vpop.f32.mrf.mxu0
        %v2082 = vadd.f32 0.0, %v2081
        %2083 = vmatmul.f32.gmra.mxu0 %v1793
        %v2084 = vpop.f32.mrf.mxu0
        %v2085 = vadd.f32 0.0, %v2084
        %2086 = vmatmul.f32.gmra.mxu0 %v1794
        %v2087 = vpop.f32.mrf.mxu0
        %v2088 = vadd.f32 0.0, %v2087
        %2089 = vmatmul.f32.gmra.mxu0 %v1795
        %v2090 = vpop.f32.mrf.mxu0
        %v2091 = vadd.f32 0.0, %v2090
        %2092 = vmatmul.f32.gmra.mxu0 %v1796
        %v2093 = vpop.f32.mrf.mxu0
        %v2094 = vadd.f32 0.0, %v2093
        %2095 = vmatmul.f32.gmra.mxu0 %v1797
        %v2096 = vpop.f32.mrf.mxu0
        %v2097 = vadd.f32 0.0, %v2096
        %2098 = vmatmul.f32.gmra.mxu0 %v1798
        %v2099 = vpop.f32.mrf.mxu0
        %v2100 = vadd.f32 0.0, %v2099
        %2101 = vmatmul.f32.gmra.mxu0 %v1799
        %v2102 = vpop.f32.mrf.mxu0
        %v2103 = vadd.f32 0.0, %v2102
        %2104 = vmatmul.f32.gmra.mxu0 %v1800
        %v2105 = vpop.f32.mrf.mxu0
        %v2106 = vadd.f32 0.0, %v2105
        %2107 = vmatmul.f32.gmra.mxu0 %v1801
        %v2108 = vpop.f32.mrf.mxu0
        %v2109 = vadd.f32 0.0, %v2108
        %2110 = vmatmul.f32.gmra.mxu0 %v1802
        %v2111 = vpop.f32.mrf.mxu0
        %v2112 = vadd.f32 0.0, %v2111
        %2113 = vmatmul.f32.gmra.mxu0 %v1803
        %v2114 = vpop.f32.mrf.mxu0
        %v2115 = vadd.f32 0.0, %v2114
        %2116 = vmatmul.f32.gmra.mxu0 %v1804
        %v2117 = vpop.f32.mrf.mxu0
        %v2118 = vadd.f32 0.0, %v2117
        %2119 = vmatmul.f32.gmra.mxu0 %v1805
        %v2120 = vpop.f32.mrf.mxu0
        %v2121 = vadd.f32 0.0, %v2120
        %2122 = vmatmul.f32.gmra.mxu0 %v1806
        %v2123 = vpop.f32.mrf.mxu0
        %v2124 = vadd.f32 0.0, %v2123
        %2125 = vmatmul.f32.gmra.mxu0 %v1807
        %v2126 = vpop.f32.mrf.mxu0
        %v2127 = vadd.f32 0.0, %v2126
        %2128 = vmatmul.f32.gmra.mxu0 %v1808
        %v2129 = vpop.f32.mrf.mxu0
        %v2130 = vadd.f32 0.0, %v2129
        %2131 = vmatmul.f32.gmra.mxu0 %v1809
        %v2132 = vpop.f32.mrf.mxu0
        %v2133 = vadd.f32 0.0, %v2132
        %2134 = vmatmul.f32.gmra.mxu0 %v1810
        %v2135 = vpop.f32.mrf.mxu0
        %v2136 = vadd.f32 0.0, %v2135
        %2137 = vmatmul.f32.gmra.mxu0 %v1811
        %v2138 = vpop.f32.mrf.mxu0
        %v2139 = vadd.f32 0.0, %v2138
        %2140 = vmatmul.f32.gmra.mxu0 %v1812
        %v2141 = vpop.f32.mrf.mxu0
        %v2142 = vadd.f32 0.0, %v2141
        %2143 = vmatmul.f32.gmra.mxu0 %v1813
        %v2144 = vpop.f32.mrf.mxu0
        %v2145 = vadd.f32 0.0, %v2144
        %2146 = vmatmul.f32.gmra.mxu0 %v1814
        %v2147 = vpop.f32.mrf.mxu0
        %v2148 = vadd.f32 0.0, %v2147
        %2149 = vmatmul.f32.gmra.mxu0 %v1815
        %v2150 = vpop.f32.mrf.mxu0
        %v2151 = vadd.f32 0.0, %v2150
        %2152 = vmatmul.f32.gmra.mxu0 %v1816
        %v2153 = vpop.f32.mrf.mxu0
        %v2154 = vadd.f32 0.0, %v2153
        %2155 = vmatmul.f32.gmra.mxu0 %v1817
        %v2156 = vpop.f32.mrf.mxu0
        %v2157 = vadd.f32 0.0, %v2156
        %2158 = vmatmul.f32.gmra.mxu0 %v1818
        %v2159 = vpop.f32.mrf.mxu0
        %v2160 = vadd.f32 0.0, %v2159
        %2161 = vmatmul.f32.gmra.mxu0 %v1819
        %v2162 = vpop.f32.mrf.mxu0
        %v2163 = vadd.f32 0.0, %v2162
        %2164 = vdwg.mxu0
        %2165 = vmatpush.msra.mxu0 0.0
        %2166 = vmatpush.msra.mxu0 0.0
        %2167 = vmatpush.msra.mxu0 0.0
        %2168 = vmatpush.msra.mxu0 0.0
        %2169 = vmatpush.msra.mxu0 0.0
        %2170 = vmatpush.msra.mxu0 0.0
        %2171 = vmatpush.msra.mxu0 0.0
        %2172 = vmatpush.msra.mxu0 0.0
        %2173 = vmatpush.msra.mxu0 0.0
        %2174 = vmatpush.msra.mxu0 0.0
        %2175 = vmatpush.msra.mxu0 0.0
        %2176 = vmatpush.msra.mxu0 0.0
        %2177 = vmatpush.msra.mxu0 %v1858
        %2178 = vmatpush.msra.mxu0 %v1856
        %2179 = vmatpush.msra.mxu0 %v1854
        %2180 = vmatpush.msra.mxu0 %v1852
        %2181 = vmatmul.f32.gmra.mxu0 %v1861
        %v2182 = vpop.f32.mrf.mxu0
        %v2183 = vadd.f32 %v2022, %v2182
        %2184 = vmatmul.f32.gmra.mxu0 %v1864
        %v2185 = vpop.f32.mrf.mxu0
        %v2186 = vadd.f32 %v2025, %v2185
        %2187 = vmatmul.f32.gmra.mxu0 %v1867
        %v2188 = vpop.f32.mrf.mxu0
        %v2189 = vadd.f32 %v2028, %v2188
        %2190 = vmatmul.f32.gmra.mxu0 %v1870
        %v2191 = vpop.f32.mrf.mxu0
        %v2192 = vadd.f32 %v2031, %v2191
        %2193 = vmatmul.f32.gmra.mxu0 %v1873
        %v2194 = vpop.f32.mrf.mxu0
        %v2195 = vadd.f32 %v2034, %v2194
        %2196 = vmatmul.f32.gmra.mxu0 %v1876
        %v2197 = vpop.f32.mrf.mxu0
        %v2198 = vadd.f32 %v2037, %v2197
        %2199 = vmatmul.f32.gmra.mxu0 %v1879
        %v2200 = vpop.f32.mrf.mxu0
        %v2201 = vadd.f32 %v2040, %v2200
        %2202 = vmatmul.f32.gmra.mxu0 %v1882
        %v2203 = vpop.f32.mrf.mxu0
        %v2204 = vadd.f32 %v2043, %v2203
        %2205 = vmatmul.f32.gmra.mxu0 %v1885
        %v2206 = vpop.f32.mrf.mxu0
        %v2207 = vadd.f32 %v2046, %v2206
        %2208 = vmatmul.f32.gmra.mxu0 %v1888
        %v2209 = vpop.f32.mrf.mxu0
        %v2210 = vadd.f32 %v2049, %v2209
        %2211 = vmatmul.f32.gmra.mxu0 %v1891
        %v2212 = vpop.f32.mrf.mxu0
        %v2213 = vadd.f32 %v2052, %v2212
        %2214 = vmatmul.f32.gmra.mxu0 %v1894
        %v2215 = vpop.f32.mrf.mxu0
        %v2216 = vadd.f32 %v2055, %v2215
        %2217 = vmatmul.f32.gmra.mxu0 %v1897
        %v2218 = vpop.f32.mrf.mxu0
        %v2219 = vadd.f32 %v2058, %v2218
        %2220 = vmatmul.f32.gmra.mxu0 %v1900
        %v2221 = vpop.f32.mrf.mxu0
        %v2222 = vadd.f32 %v2061, %v2221
        %2223 = vmatmul.f32.gmra.mxu0 %v1903
        %v2224 = vpop.f32.mrf.mxu0
        %v2225 = vadd.f32 %v2064, %v2224
        %2226 = vmatmul.f32.gmra.mxu0 %v1906
        %v2227 = vpop.f32.mrf.mxu0
        %v2228 = vadd.f32 %v2067, %v2227
        %2229 = vmatmul.f32.gmra.mxu0 %v1909
        %v2230 = vpop.f32.mrf.mxu0
        %v2231 = vadd.f32 %v2070, %v2230
        %2232 = vmatmul.f32.gmra.mxu0 %v1912
        %v2233 = vpop.f32.mrf.mxu0
        %v2234 = vadd.f32 %v2073, %v2233
        %2235 = vmatmul.f32.gmra.mxu0 %v1915
        %v2236 = vpop.f32.mrf.mxu0
        %v2237 = vadd.f32 %v2076, %v2236
        %2238 = vmatmul.f32.gmra.mxu0 %v1918
        %v2239 = vpop.f32.mrf.mxu0
        %v2240 = vadd.f32 %v2079, %v2239
        %2241 = vmatmul.f32.gmra.mxu0 %v1921
        %v2242 = vpop.f32.mrf.mxu0
        %v2243 = vadd.f32 %v2082, %v2242
        %2244 = vmatmul.f32.gmra.mxu0 %v1924
        %v2245 = vpop.f32.mrf.mxu0
        %v2246 = vadd.f32 %v2085, %v2245
        %2247 = vmatmul.f32.gmra.mxu0 %v1927
        %v2248 = vpop.f32.mrf.mxu0
        %v2249 = vadd.f32 %v2088, %v2248
        %2250 = vmatmul.f32.gmra.mxu0 %v1930
        %v2251 = vpop.f32.mrf.mxu0
        %v2252 = vadd.f32 %v2091, %v2251
        %2253 = vmatmul.f32.gmra.mxu0 %v1933
        %v2254 = vpop.f32.mrf.mxu0
        %v2255 = vadd.f32 %v2094, %v2254
        %2256 = vmatmul.f32.gmra.mxu0 %v1936
        %v2257 = vpop.f32.mrf.mxu0
        %v2258 = vadd.f32 %v2097, %v2257
        %2259 = vmatmul.f32.gmra.mxu0 %v1939
        %v2260 = vpop.f32.mrf.mxu0
        %v2261 = vadd.f32 %v2100, %v2260
        %2262 = vmatmul.f32.gmra.mxu0 %v1942
        %v2263 = vpop.f32.mrf.mxu0
        %v2264 = vadd.f32 %v2103, %v2263
        %2265 = vmatmul.f32.gmra.mxu0 %v1945
        %v2266 = vpop.f32.mrf.mxu0
        %v2267 = vadd.f32 %v2106, %v2266
        %2268 = vmatmul.f32.gmra.mxu0 %v1948
        %v2269 = vpop.f32.mrf.mxu0
        %v2270 = vadd.f32 %v2109, %v2269
        %2271 = vmatmul.f32.gmra.mxu0 %v1951
        %v2272 = vpop.f32.mrf.mxu0
        %v2273 = vadd.f32 %v2112, %v2272
        %2274 = vmatmul.f32.gmra.mxu0 %v1954
        %v2275 = vpop.f32.mrf.mxu0
        %v2276 = vadd.f32 %v2115, %v2275
        %2277 = vmatmul.f32.gmra.mxu0 %v1957
        %v2278 = vpop.f32.mrf.mxu0
        %v2279 = vadd.f32 %v2118, %v2278
        %2280 = vmatmul.f32.gmra.mxu0 %v1960
        %v2281 = vpop.f32.mrf.mxu0
        %v2282 = vadd.f32 %v2121, %v2281
        %2283 = vmatmul.f32.gmra.mxu0 %v1963
        %v2284 = vpop.f32.mrf.mxu0
        %v2285 = vadd.f32 %v2124, %v2284
        %2286 = vmatmul.f32.gmra.mxu0 %v1966
        %v2287 = vpop.f32.mrf.mxu0
        %v2288 = vadd.f32 %v2127, %v2287
        %2289 = vmatmul.f32.gmra.mxu0 %v1969
        %v2290 = vpop.f32.mrf.mxu0
        %v2291 = vadd.f32 %v2130, %v2290
        %2292 = vmatmul.f32.gmra.mxu0 %v1972
        %v2293 = vpop.f32.mrf.mxu0
        %v2294 = vadd.f32 %v2133, %v2293
        %2295 = vmatmul.f32.gmra.mxu0 %v1975
        %v2296 = vpop.f32.mrf.mxu0
        %v2297 = vadd.f32 %v2136, %v2296
        %2298 = vmatmul.f32.gmra.mxu0 %v1978
        %v2299 = vpop.f32.mrf.mxu0
        %v2300 = vadd.f32 %v2139, %v2299
        %2301 = vmatmul.f32.gmra.mxu0 %v1981
        %v2302 = vpop.f32.mrf.mxu0
        %v2303 = vadd.f32 %v2142, %v2302
        %2304 = vmatmul.f32.gmra.mxu0 %v1984
        %v2305 = vpop.f32.mrf.mxu0
        %v2306 = vadd.f32 %v2145, %v2305
        %2307 = vmatmul.f32.gmra.mxu0 %v1987
        %v2308 = vpop.f32.mrf.mxu0
        %v2309 = vadd.f32 %v2148, %v2308
        %2310 = vmatmul.f32.gmra.mxu0 %v1990
        %v2311 = vpop.f32.mrf.mxu0
        %v2312 = vadd.f32 %v2151, %v2311
        %2313 = vmatmul.f32.gmra.mxu0 %v1993
        %v2314 = vpop.f32.mrf.mxu0
        %v2315 = vadd.f32 %v2154, %v2314
        %2316 = vmatmul.f32.gmra.mxu0 %v1996
        %v2317 = vpop.f32.mrf.mxu0
        %v2318 = vadd.f32 %v2157, %v2317
        %2319 = vmatmul.f32.gmra.mxu0 %v1999
        %v2320 = vpop.f32.mrf.mxu0
        %v2321 = vadd.f32 %v2160, %v2320
        %2322 = vmatmul.f32.gmra.mxu0 %v2002
        %v2323 = vpop.f32.mrf.mxu0
        %v2324 = vadd.f32 %v2163, %v2323
        %2325 = vdwg.mxu0
        %2326 = vmatpush.msra.mxu0 %v1851
        %2327 = vmatpush.msra.mxu0 %v1849
        %2328 = vmatpush.msra.mxu0 %v1847
        %2329 = vmatpush.msra.mxu0 %v1845
        %2330 = vmatpush.msra.mxu0 %v1843
        %2331 = vmatpush.msra.mxu0 %v1841
        %2332 = vmatpush.msra.mxu0 %v1839
        %2333 = vmatpush.msra.mxu0 %v1837
        %2334 = vmatpush.msra.mxu0 %v1835
        %2335 = vmatpush.msra.mxu0 %v1833
        %2336 = vmatpush.msra.mxu0 %v1831
        %2337 = vmatpush.msra.mxu0 %v1829
        %2338 = vmatpush.msra.mxu0 %v1827
        %2339 = vmatpush.msra.mxu0 %v1825
        %2340 = vmatpush.msra.mxu0 %v1823
        %2341 = vmatpush.msra.mxu0 %v1821
        %2342 = vmatmul.f32.gmra.mxu0 %v1772
        %v2343 = vpop.f32.mrf.mxu0
        %v2344 = vadd.f32 0.0, %v2343
        %2345 = vmatmul.f32.gmra.mxu0 %v1773
        %v2346 = vpop.f32.mrf.mxu0
        %v2347 = vadd.f32 0.0, %v2346
        %2348 = vmatmul.f32.gmra.mxu0 %v1774
        %v2349 = vpop.f32.mrf.mxu0
        %v2350 = vadd.f32 0.0, %v2349
        %2351 = vmatmul.f32.gmra.mxu0 %v1775
        %v2352 = vpop.f32.mrf.mxu0
        %v2353 = vadd.f32 0.0, %v2352
        %2354 = vmatmul.f32.gmra.mxu0 %v1776
        %v2355 = vpop.f32.mrf.mxu0
        %v2356 = vadd.f32 0.0, %v2355
        %2357 = vmatmul.f32.gmra.mxu0 %v1777
        %v2358 = vpop.f32.mrf.mxu0
        %v2359 = vadd.f32 0.0, %v2358
        %2360 = vmatmul.f32.gmra.mxu0 %v1778
        %v2361 = vpop.f32.mrf.mxu0
        %v2362 = vadd.f32 0.0, %v2361
        %2363 = vmatmul.f32.gmra.mxu0 %v1779
        %v2364 = vpop.f32.mrf.mxu0
        %v2365 = vadd.f32 0.0, %v2364
        %2366 = vmatmul.f32.gmra.mxu0 %v1780
        %v2367 = vpop.f32.mrf.mxu0
        %v2368 = vadd.f32 0.0, %v2367
        %2369 = vmatmul.f32.gmra.mxu0 %v1781
        %v2370 = vpop.f32.mrf.mxu0
        %v2371 = vadd.f32 0.0, %v2370
        %2372 = vmatmul.f32.gmra.mxu0 %v1782
        %v2373 = vpop.f32.mrf.mxu0
        %v2374 = vadd.f32 0.0, %v2373
        %2375 = vmatmul.f32.gmra.mxu0 %v1783
        %v2376 = vpop.f32.mrf.mxu0
        %v2377 = vadd.f32 0.0, %v2376
        %2378 = vmatmul.f32.gmra.mxu0 %v1784
        %v2379 = vpop.f32.mrf.mxu0
        %v2380 = vadd.f32 0.0, %v2379
        %2381 = vmatmul.f32.gmra.mxu0 %v1785
        %v2382 = vpop.f32.mrf.mxu0
        %v2383 = vadd.f32 0.0, %v2382
        %2384 = vmatmul.f32.gmra.mxu0 %v1786
        %v2385 = vpop.f32.mrf.mxu0
        %v2386 = vadd.f32 0.0, %v2385
        %2387 = vmatmul.f32.gmra.mxu0 %v1787
        %v2388 = vpop.f32.mrf.mxu0
        %v2389 = vadd.f32 0.0, %v2388
        %2390 = vmatmul.f32.gmra.mxu0 %v1788
        %v2391 = vpop.f32.mrf.mxu0
        %v2392 = vadd.f32 0.0, %v2391
        %2393 = vmatmul.f32.gmra.mxu0 %v1789
        %v2394 = vpop.f32.mrf.mxu0
        %v2395 = vadd.f32 0.0, %v2394
        %2396 = vmatmul.f32.gmra.mxu0 %v1790
        %v2397 = vpop.f32.mrf.mxu0
        %v2398 = vadd.f32 0.0, %v2397
        %2399 = vmatmul.f32.gmra.mxu0 %v1791
        %v2400 = vpop.f32.mrf.mxu0
        %v2401 = vadd.f32 0.0, %v2400
        %2402 = vmatmul.f32.gmra.mxu0 %v1792
        %v2403 = vpop.f32.mrf.mxu0
        %v2404 = vadd.f32 0.0, %v2403
        %2405 = vmatmul.f32.gmra.mxu0 %v1793
        %v2406 = vpop.f32.mrf.mxu0
        %v2407 = vadd.f32 0.0, %v2406
        %2408 = vmatmul.f32.gmra.mxu0 %v1794
        %v2409 = vpop.f32.mrf.mxu0
        %v2410 = vadd.f32 0.0, %v2409
        %2411 = vmatmul.f32.gmra.mxu0 %v1795
        %v2412 = vpop.f32.mrf.mxu0
        %v2413 = vadd.f32 0.0, %v2412
        %2414 = vmatmul.f32.gmra.mxu0 %v1796
        %v2415 = vpop.f32.mrf.mxu0
        %v2416 = vadd.f32 0.0, %v2415
        %2417 = vmatmul.f32.gmra.mxu0 %v1797
        %v2418 = vpop.f32.mrf.mxu0
        %v2419 = vadd.f32 0.0, %v2418
        %2420 = vmatmul.f32.gmra.mxu0 %v1798
        %v2421 = vpop.f32.mrf.mxu0
        %v2422 = vadd.f32 0.0, %v2421
        %2423 = vmatmul.f32.gmra.mxu0 %v1799
        %v2424 = vpop.f32.mrf.mxu0
        %v2425 = vadd.f32 0.0, %v2424
        %2426 = vmatmul.f32.gmra.mxu0 %v1800
        %v2427 = vpop.f32.mrf.mxu0
        %v2428 = vadd.f32 0.0, %v2427
        %2429 = vmatmul.f32.gmra.mxu0 %v1801
        %v2430 = vpop.f32.mrf.mxu0
        %v2431 = vadd.f32 0.0, %v2430
        %2432 = vmatmul.f32.gmra.mxu0 %v1802
        %v2433 = vpop.f32.mrf.mxu0
        %v2434 = vadd.f32 0.0, %v2433
        %2435 = vmatmul.f32.gmra.mxu0 %v1803
        %v2436 = vpop.f32.mrf.mxu0
        %v2437 = vadd.f32 0.0, %v2436
        %2438 = vmatmul.f32.gmra.mxu0 %v1804
        %v2439 = vpop.f32.mrf.mxu0
        %v2440 = vadd.f32 0.0, %v2439
        %2441 = vmatmul.f32.gmra.mxu0 %v1805
        %v2442 = vpop.f32.mrf.mxu0
        %v2443 = vadd.f32 0.0, %v2442
        %2444 = vmatmul.f32.gmra.mxu0 %v1806
        %v2445 = vpop.f32.mrf.mxu0
        %v2446 = vadd.f32 0.0, %v2445
        %2447 = vmatmul.f32.gmra.mxu0 %v1807
        %v2448 = vpop.f32.mrf.mxu0
        %v2449 = vadd.f32 0.0, %v2448
        %2450 = vmatmul.f32.gmra.mxu0 %v1808
        %v2451 = vpop.f32.mrf.mxu0
        %v2452 = vadd.f32 0.0, %v2451
        %2453 = vmatmul.f32.gmra.mxu0 %v1809
        %v2454 = vpop.f32.mrf.mxu0
        %v2455 = vadd.f32 0.0, %v2454
        %2456 = vmatmul.f32.gmra.mxu0 %v1810
        %v2457 = vpop.f32.mrf.mxu0
        %v2458 = vadd.f32 0.0, %v2457
        %2459 = vmatmul.f32.gmra.mxu0 %v1811
        %v2460 = vpop.f32.mrf.mxu0
        %v2461 = vadd.f32 0.0, %v2460
        %2462 = vmatmul.f32.gmra.mxu0 %v1812
        %v2463 = vpop.f32.mrf.mxu0
        %v2464 = vadd.f32 0.0, %v2463
        %2465 = vmatmul.f32.gmra.mxu0 %v1813
        %v2466 = vpop.f32.mrf.mxu0
        %v2467 = vadd.f32 0.0, %v2466
        %2468 = vmatmul.f32.gmra.mxu0 %v1814
        %v2469 = vpop.f32.mrf.mxu0
        %v2470 = vadd.f32 0.0, %v2469
        %2471 = vmatmul.f32.gmra.mxu0 %v1815
        %v2472 = vpop.f32.mrf.mxu0
        %v2473 = vadd.f32 0.0, %v2472
        %2474 = vmatmul.f32.gmra.mxu0 %v1816
        %v2475 = vpop.f32.mrf.mxu0
        %v2476 = vadd.f32 0.0, %v2475
        %2477 = vmatmul.f32.gmra.mxu0 %v1817
        %v2478 = vpop.f32.mrf.mxu0
        %v2479 = vadd.f32 0.0, %v2478
        %2480 = vmatmul.f32.gmra.mxu0 %v1818
        %v2481 = vpop.f32.mrf.mxu0
        %v2482 = vadd.f32 0.0, %v2481
        %2483 = vmatmul.f32.gmra.mxu0 %v1819
        %v2484 = vpop.f32.mrf.mxu0
        %v2485 = vadd.f32 0.0, %v2484
        %2486 = vdwg.mxu0
        %2487 = vmatpush.msra.mxu0 0.0
        %2488 = vmatpush.msra.mxu0 0.0
        %2489 = vmatpush.msra.mxu0 0.0
        %2490 = vmatpush.msra.mxu0 0.0
        %2491 = vmatpush.msra.mxu0 0.0
        %2492 = vmatpush.msra.mxu0 0.0
        %2493 = vmatpush.msra.mxu0 0.0
        %2494 = vmatpush.msra.mxu0 0.0
        %2495 = vmatpush.msra.mxu0 0.0
        %2496 = vmatpush.msra.mxu0 0.0
        %2497 = vmatpush.msra.mxu0 0.0
        %2498 = vmatpush.msra.mxu0 0.0
        %2499 = vmatpush.msra.mxu0 %v1859
        %2500 = vmatpush.msra.mxu0 %v1857
        %2501 = vmatpush.msra.mxu0 %v1855
        %2502 = vmatpush.msra.mxu0 %v1853
        %2503 = vmatmul.f32.gmra.mxu0 %v1861
        %v2504 = vpop.f32.mrf.mxu0
        %v2505 = vadd.f32 %v2344, %v2504
        %2506 = vmatmul.f32.gmra.mxu0 %v1864
        %v2507 = vpop.f32.mrf.mxu0
        %v2508 = vadd.f32 %v2347, %v2507
        %2509 = vmatmul.f32.gmra.mxu0 %v1867
        %v2510 = vpop.f32.mrf.mxu0
        %v2511 = vadd.f32 %v2350, %v2510
        %2512 = vmatmul.f32.gmra.mxu0 %v1870
        %v2513 = vpop.f32.mrf.mxu0
        %v2514 = vadd.f32 %v2353, %v2513
        %2515 = vmatmul.f32.gmra.mxu0 %v1873
        %v2516 = vpop.f32.mrf.mxu0
        %v2517 = vadd.f32 %v2356, %v2516
        %2518 = vmatmul.f32.gmra.mxu0 %v1876
        %v2519 = vpop.f32.mrf.mxu0
        %v2520 = vadd.f32 %v2359, %v2519
        %2521 = vmatmul.f32.gmra.mxu0 %v1879
        %v2522 = vpop.f32.mrf.mxu0
        %v2523 = vadd.f32 %v2362, %v2522
        %2524 = vmatmul.f32.gmra.mxu0 %v1882
        %v2525 = vpop.f32.mrf.mxu0
        %v2526 = vadd.f32 %v2365, %v2525
        %2527 = vmatmul.f32.gmra.mxu0 %v1885
        %v2528 = vpop.f32.mrf.mxu0
        %v2529 = vadd.f32 %v2368, %v2528
        %2530 = vmatmul.f32.gmra.mxu0 %v1888
        %v2531 = vpop.f32.mrf.mxu0
        %v2532 = vadd.f32 %v2371, %v2531
        %2533 = vmatmul.f32.gmra.mxu0 %v1891
        %v2534 = vpop.f32.mrf.mxu0
        %v2535 = vadd.f32 %v2374, %v2534
        %2536 = vmatmul.f32.gmra.mxu0 %v1894
        %v2537 = vpop.f32.mrf.mxu0
        %v2538 = vadd.f32 %v2377, %v2537
        %2539 = vmatmul.f32.gmra.mxu0 %v1897
        %v2540 = vpop.f32.mrf.mxu0
        %v2541 = vadd.f32 %v2380, %v2540
        %2542 = vmatmul.f32.gmra.mxu0 %v1900
        %v2543 = vpop.f32.mrf.mxu0
        %v2544 = vadd.f32 %v2383, %v2543
        %2545 = vmatmul.f32.gmra.mxu0 %v1903
        %v2546 = vpop.f32.mrf.mxu0
        %v2547 = vadd.f32 %v2386, %v2546
        %2548 = vmatmul.f32.gmra.mxu0 %v1906
        %v2549 = vpop.f32.mrf.mxu0
        %v2550 = vadd.f32 %v2389, %v2549
        %2551 = vmatmul.f32.gmra.mxu0 %v1909
        %v2552 = vpop.f32.mrf.mxu0
        %v2553 = vadd.f32 %v2392, %v2552
        %2554 = vmatmul.f32.gmra.mxu0 %v1912
        %v2555 = vpop.f32.mrf.mxu0
        %v2556 = vadd.f32 %v2395, %v2555
        %2557 = vmatmul.f32.gmra.mxu0 %v1915
        %v2558 = vpop.f32.mrf.mxu0
        %v2559 = vadd.f32 %v2398, %v2558
        %2560 = vmatmul.f32.gmra.mxu0 %v1918
        %v2561 = vpop.f32.mrf.mxu0
        %v2562 = vadd.f32 %v2401, %v2561
        %2563 = vmatmul.f32.gmra.mxu0 %v1921
        %v2564 = vpop.f32.mrf.mxu0
        %v2565 = vadd.f32 %v2404, %v2564
        %2566 = vmatmul.f32.gmra.mxu0 %v1924
        %v2567 = vpop.f32.mrf.mxu0
        %v2568 = vadd.f32 %v2407, %v2567
        %2569 = vmatmul.f32.gmra.mxu0 %v1927
        %v2570 = vpop.f32.mrf.mxu0
        %v2571 = vadd.f32 %v2410, %v2570
        %2572 = vmatmul.f32.gmra.mxu0 %v1930
        %v2573 = vpop.f32.mrf.mxu0
        %v2574 = vadd.f32 %v2413, %v2573
        %2575 = vmatmul.f32.gmra.mxu0 %v1933
        %v2576 = vpop.f32.mrf.mxu0
        %v2577 = vadd.f32 %v2416, %v2576
        %2578 = vmatmul.f32.gmra.mxu0 %v1936
        %v2579 = vpop.f32.mrf.mxu0
        %v2580 = vadd.f32 %v2419, %v2579
        %2581 = vmatmul.f32.gmra.mxu0 %v1939
        %v2582 = vpop.f32.mrf.mxu0
        %v2583 = vadd.f32 %v2422, %v2582
        %2584 = vmatmul.f32.gmra.mxu0 %v1942
        %v2585 = vpop.f32.mrf.mxu0
        %v2586 = vadd.f32 %v2425, %v2585
        %2587 = vmatmul.f32.gmra.mxu0 %v1945
        %v2588 = vpop.f32.mrf.mxu0
        %v2589 = vadd.f32 %v2428, %v2588
        %2590 = vmatmul.f32.gmra.mxu0 %v1948
        %v2591 = vpop.f32.mrf.mxu0
        %v2592 = vadd.f32 %v2431, %v2591
        %2593 = vmatmul.f32.gmra.mxu0 %v1951
        %v2594 = vpop.f32.mrf.mxu0
        %v2595 = vadd.f32 %v2434, %v2594
        %2596 = vmatmul.f32.gmra.mxu0 %v1954
        %v2597 = vpop.f32.mrf.mxu0
        %v2598 = vadd.f32 %v2437, %v2597
        %2599 = vmatmul.f32.gmra.mxu0 %v1957
        %v2600 = vpop.f32.mrf.mxu0
        %v2601 = vadd.f32 %v2440, %v2600
        %2602 = vmatmul.f32.gmra.mxu0 %v1960
        %v2603 = vpop.f32.mrf.mxu0
        %v2604 = vadd.f32 %v2443, %v2603
        %2605 = vmatmul.f32.gmra.mxu0 %v1963
        %v2606 = vpop.f32.mrf.mxu0
        %v2607 = vadd.f32 %v2446, %v2606
        %2608 = vmatmul.f32.gmra.mxu0 %v1966
        %v2609 = vpop.f32.mrf.mxu0
        %v2610 = vadd.f32 %v2449, %v2609
        %2611 = vmatmul.f32.gmra.mxu0 %v1969
        %v2612 = vpop.f32.mrf.mxu0
        %v2613 = vadd.f32 %v2452, %v2612
        %2614 = vmatmul.f32.gmra.mxu0 %v1972
        %v2615 = vpop.f32.mrf.mxu0
        %v2616 = vadd.f32 %v2455, %v2615
        %2617 = vmatmul.f32.gmra.mxu0 %v1975
        %v2618 = vpop.f32.mrf.mxu0
        %v2619 = vadd.f32 %v2458, %v2618
        %2620 = vmatmul.f32.gmra.mxu0 %v1978
        %v2621 = vpop.f32.mrf.mxu0
        %v2622 = vadd.f32 %v2461, %v2621
        %2623 = vmatmul.f32.gmra.mxu0 %v1981
        %v2624 = vpop.f32.mrf.mxu0
        %v2625 = vadd.f32 %v2464, %v2624
        %2626 = vmatmul.f32.gmra.mxu0 %v1984
        %v2627 = vpop.f32.mrf.mxu0
        %v2628 = vadd.f32 %v2467, %v2627
        %2629 = vmatmul.f32.gmra.mxu0 %v1987
        %v2630 = vpop.f32.mrf.mxu0
        %v2631 = vadd.f32 %v2470, %v2630
        %2632 = vmatmul.f32.gmra.mxu0 %v1990
        %v2633 = vpop.f32.mrf.mxu0
        %v2634 = vadd.f32 %v2473, %v2633
        %2635 = vmatmul.f32.gmra.mxu0 %v1993
        %v2636 = vpop.f32.mrf.mxu0
        %v2637 = vadd.f32 %v2476, %v2636
        %2638 = vmatmul.f32.gmra.mxu0 %v1996
        %v2639 = vpop.f32.mrf.mxu0
        %v2640 = vadd.f32 %v2479, %v2639
        %2641 = vmatmul.f32.gmra.mxu0 %v1999
        %v2642 = vpop.f32.mrf.mxu0
        %v2643 = vadd.f32 %v2482, %v2642
        %2644 = vmatmul.f32.gmra.mxu0 %v2002
        %v2645 = vpop.f32.mrf.mxu0
        %v2646 = vadd.f32 %v2485, %v2645
        %2647 = vdwg.mxu0
        %v2648 = vld [vmem:[#allocation8] sm:$0x1]
        %v2650 = vperm.slane %v2648, 0
        %v2652 = vadd.f32 %v2650, %v2183
        %v2653 = vadd.f32 %v2650, %v2186
        %v2654 = vadd.f32 %v2650, %v2192
        %v2655 = vadd.f32 %v2650, %v2195
        %v2656 = vadd.f32 %v2650, %v2201
        %v2657 = vadd.f32 %v2650, %v2204
        %v2658 = vadd.f32 %v2650, %v2210
        %v2659 = vadd.f32 %v2650, %v2213
        %v2660 = vadd.f32 %v2650, %v2219
        %v2661 = vadd.f32 %v2650, %v2222
        %v2662 = vadd.f32 %v2650, %v2228
        %v2663 = vadd.f32 %v2650, %v2231
        %v2664 = vadd.f32 %v2650, %v2237
        %v2665 = vadd.f32 %v2650, %v2240
        %v2666 = vadd.f32 %v2650, %v2246
        %v2667 = vadd.f32 %v2650, %v2249
        %v2668 = vadd.f32 %v2650, %v2255
        %v2669 = vadd.f32 %v2650, %v2258
        %v2670 = vadd.f32 %v2650, %v2264
        %v2671 = vadd.f32 %v2650, %v2267
        %v2672 = vadd.f32 %v2650, %v2273
        %v2673 = vadd.f32 %v2650, %v2276
        %v2674 = vadd.f32 %v2650, %v2282
        %v2675 = vadd.f32 %v2650, %v2285
        %v2676 = vadd.f32 %v2650, %v2291
        %v2677 = vadd.f32 %v2650, %v2294
        %v2678 = vadd.f32 %v2650, %v2300
        %v2679 = vadd.f32 %v2650, %v2303
        %v2680 = vadd.f32 %v2650, %v2309
        %v2681 = vadd.f32 %v2650, %v2312
        %v2682 = vadd.f32 %v2650, %v2318
        %v2683 = vadd.f32 %v2650, %v2321
        %vm2732 = vcmask 1046528
        %v2733 = vrot.slane %v2183, 1
        %v2734 = vrot.slane %v2186, 1
        %v2735 = vsel %vm2732, %v2733, %v2734
        %v2736 = vrot.slane %v2189, 1
        %v2737 = vsel %vm2732, %v2734, %v2736
        %v2738 = vrot.slane %v2192, 1
        %v2739 = vrot.slane %v2195, 1
        %v2740 = vsel %vm2732, %v2738, %v2739
        %v2741 = vrot.slane %v2198, 1
        %v2742 = vsel %vm2732, %v2739, %v2741
        %v2743 = vrot.slane %v2201, 1
        %v2744 = vrot.slane %v2204, 1
        %v2745 = vsel %vm2732, %v2743, %v2744
        %v2746 = vrot.slane %v2207, 1
        %v2747 = vsel %vm2732, %v2744, %v2746
        %v2748 = vrot.slane %v2210, 1
        %v2749 = vrot.slane %v2213, 1
        %v2750 = vsel %vm2732, %v2748, %v2749
        %v2751 = vrot.slane %v2216, 1
        %v2752 = vsel %vm2732, %v2749, %v2751
        %v2753 = vrot.slane %v2219, 1
        %v2754 = vrot.slane %v2222, 1
        %v2755 = vsel %vm2732, %v2753, %v2754
        %v2756 = vrot.slane %v2225, 1
        %v2757 = vsel %vm2732, %v2754, %v2756
        %v2758 = vrot.slane %v2228, 1
        %v2759 = vrot.slane %v2231, 1
        %v2760 = vsel %vm2732, %v2758, %v2759
        %v2761 = vrot.slane %v2234, 1
        %v2762 = vsel %vm2732, %v2759, %v2761
        %v2763 = vrot.slane %v2237, 1
        %v2764 = vrot.slane %v2240, 1
        %v2765 = vsel %vm2732, %v2763, %v2764
        %v2766 = vrot.slane %v2243, 1
        %v2767 = vsel %vm2732, %v2764, %v2766
        %v2768 = vrot.slane %v2246, 1
        %v2769 = vrot.slane %v2249, 1
        %v2770 = vsel %vm2732, %v2768, %v2769
        %v2771 = vrot.slane %v2252, 1
        %v2772 = vsel %vm2732, %v2769, %v2771
        %v2773 = vrot.slane %v2255, 1
        %v2774 = vrot.slane %v2258, 1
        %v2775 = vsel %vm2732, %v2773, %v2774
        %v2776 = vrot.slane %v2261, 1
        %v2777 = vsel %vm2732, %v2774, %v2776
        %v2778 = vrot.slane %v2264, 1
        %v2779 = vrot.slane %v2267, 1
        %v2780 = vsel %vm2732, %v2778, %v2779
        %v2781 = vrot.slane %v2270, 1
        %v2782 = vsel %vm2732, %v2779, %v2781
        %v2783 = vrot.slane %v2273, 1
        %v2784 = vrot.slane %v2276, 1
        %v2785 = vsel %vm2732, %v2783, %v2784
        %v2786 = vrot.slane %v2279, 1
        %v2787 = vsel %vm2732, %v2784, %v2786
        %v2788 = vrot.slane %v2282, 1
        %v2789 = vrot.slane %v2285, 1
        %v2790 = vsel %vm2732, %v2788, %v2789
        %v2791 = vrot.slane %v2288, 1
        %v2792 = vsel %vm2732, %v2789, %v2791
        %v2793 = vrot.slane %v2291, 1
        %v2794 = vrot.slane %v2294, 1
        %v2795 = vsel %vm2732, %v2793, %v2794
        %v2796 = vrot.slane %v2297, 1
        %v2797 = vsel %vm2732, %v2794, %v2796
        %v2798 = vrot.slane %v2300, 1
        %v2799 = vrot.slane %v2303, 1
        %v2800 = vsel %vm2732, %v2798, %v2799
        %v2801 = vrot.slane %v2306, 1
        %v2802 = vsel %vm2732, %v2799, %v2801
        %v2803 = vrot.slane %v2309, 1
        %v2804 = vrot.slane %v2312, 1
        %v2805 = vsel %vm2732, %v2803, %v2804
        %v2806 = vrot.slane %v2315, 1
        %v2807 = vsel %vm2732, %v2804, %v2806
        %v2808 = vrot.slane %v2318, 1
        %v2809 = vrot.slane %v2321, 1
        %v2810 = vsel %vm2732, %v2808, %v2809
        %v2811 = vrot.slane %v2324, 1
        %v2812 = vsel %vm2732, %v2809, %v2811
        %2813 = vrot.lane.b32.xlu0 %v2735, 96
        %v2814 = vpop.permute.xlu0 %2813
        %2815 = vrot.lane.b32.xlu0 %v2737, 96
        %v2816 = vpop.permute.xlu0 %2815
        %2817 = vrot.lane.b32.xlu0 %v2740, 96
        %v2818 = vpop.permute.xlu0 %2817
        %2819 = vrot.lane.b32.xlu0 %v2742, 96
        %v2820 = vpop.permute.xlu0 %2819
        %2821 = vrot.lane.b32.xlu0 %v2745, 96
        %v2822 = vpop.permute.xlu0 %2821
        %2823 = vrot.lane.b32.xlu0 %v2747, 96
        %v2824 = vpop.permute.xlu0 %2823
        %2825 = vrot.lane.b32.xlu0 %v2750, 96
        %v2826 = vpop.permute.xlu0 %2825
        %2827 = vrot.lane.b32.xlu0 %v2752, 96
        %v2828 = vpop.permute.xlu0 %2827
        %2829 = vrot.lane.b32.xlu0 %v2755, 96
        %v2830 = vpop.permute.xlu0 %2829
        %2831 = vrot.lane.b32.xlu0 %v2757, 96
        %v2832 = vpop.permute.xlu0 %2831
        %2833 = vrot.lane.b32.xlu0 %v2760, 96
        %v2834 = vpop.permute.xlu0 %2833
        %2835 = vrot.lane.b32.xlu0 %v2762, 96
        %v2836 = vpop.permute.xlu0 %2835
        %2837 = vrot.lane.b32.xlu0 %v2765, 96
        %v2838 = vpop.permute.xlu0 %2837
        %2839 = vrot.lane.b32.xlu0 %v2767, 96
        %v2840 = vpop.permute.xlu0 %2839
        %2841 = vrot.lane.b32.xlu0 %v2770, 96
        %v2842 = vpop.permute.xlu0 %2841
        %2843 = vrot.lane.b32.xlu0 %v2772, 96
        %v2844 = vpop.permute.xlu0 %2843
        %2845 = vrot.lane.b32.xlu0 %v2775, 96
        %v2846 = vpop.permute.xlu0 %2845
        %2847 = vrot.lane.b32.xlu0 %v2777, 96
        %v2848 = vpop.permute.xlu0 %2847
        %2849 = vrot.lane.b32.xlu0 %v2780, 96
        %v2850 = vpop.permute.xlu0 %2849
        %2851 = vrot.lane.b32.xlu0 %v2782, 96
        %v2852 = vpop.permute.xlu0 %2851
        %2853 = vrot.lane.b32.xlu0 %v2785, 96
        %v2854 = vpop.permute.xlu0 %2853
        %2855 = vrot.lane.b32.xlu0 %v2787, 96
        %v2856 = vpop.permute.xlu0 %2855
        %2857 = vrot.lane.b32.xlu0 %v2790, 96
        %v2858 = vpop.permute.xlu0 %2857
        %2859 = vrot.lane.b32.xlu0 %v2792, 96
        %v2860 = vpop.permute.xlu0 %2859
        %2861 = vrot.lane.b32.xlu0 %v2795, 96
        %v2862 = vpop.permute.xlu0 %2861
        %2863 = vrot.lane.b32.xlu0 %v2797, 96
        %v2864 = vpop.permute.xlu0 %2863
        %2865 = vrot.lane.b32.xlu0 %v2800, 96
        %v2866 = vpop.permute.xlu0 %2865
        %2867 = vrot.lane.b32.xlu0 %v2802, 96
        %v2868 = vpop.permute.xlu0 %2867
        %2869 = vrot.lane.b32.xlu0 %v2805, 96
        %v2870 = vpop.permute.xlu0 %2869
        %2871 = vrot.lane.b32.xlu0 %v2807, 96
        %v2872 = vpop.permute.xlu0 %2871
        %2873 = vrot.lane.b32.xlu0 %v2810, 96
        %v2874 = vpop.permute.xlu0 %2873
        %2875 = vrot.lane.b32.xlu0 %v2812, 96
        %v2876 = vpop.permute.xlu0 %2875
        %v2909 = vadd.f32 %v2652, %v2814
        %v2910 = vadd.f32 %v2653, %v2816
        %v2911 = vadd.f32 %v2654, %v2818
        %v2912 = vadd.f32 %v2655, %v2820
        %v2913 = vadd.f32 %v2656, %v2822
        %v2914 = vadd.f32 %v2657, %v2824
        %v2915 = vadd.f32 %v2658, %v2826
        %v2916 = vadd.f32 %v2659, %v2828
        %v2917 = vadd.f32 %v2660, %v2830
        %v2918 = vadd.f32 %v2661, %v2832
        %v2919 = vadd.f32 %v2662, %v2834
        %v2920 = vadd.f32 %v2663, %v2836
        %v2921 = vadd.f32 %v2664, %v2838
        %v2922 = vadd.f32 %v2665, %v2840
        %v2923 = vadd.f32 %v2666, %v2842
        %v2924 = vadd.f32 %v2667, %v2844
        %v2925 = vadd.f32 %v2668, %v2846
        %v2926 = vadd.f32 %v2669, %v2848
        %v2927 = vadd.f32 %v2670, %v2850
        %v2928 = vadd.f32 %v2671, %v2852
        %v2929 = vadd.f32 %v2672, %v2854
        %v2930 = vadd.f32 %v2673, %v2856
        %v2931 = vadd.f32 %v2674, %v2858
        %v2932 = vadd.f32 %v2675, %v2860
        %v2933 = vadd.f32 %v2676, %v2862
        %v2934 = vadd.f32 %v2677, %v2864
        %v2935 = vadd.f32 %v2678, %v2866
        %v2936 = vadd.f32 %v2679, %v2868
        %v2937 = vadd.f32 %v2680, %v2870
        %v2938 = vadd.f32 %v2681, %v2872
        %v2939 = vadd.f32 %v2682, %v2874
        %v2940 = vadd.f32 %v2683, %v2876
        %vm2941 = vcmask 1045504
        %v2942 = vrot.slane %v2183, 2
        %v2943 = vrot.slane %v2186, 2
        %v2944 = vsel %vm2941, %v2942, %v2943
        %v2945 = vrot.slane %v2189, 2
        %v2946 = vsel %vm2941, %v2943, %v2945
        %v2947 = vrot.slane %v2192, 2
        %v2948 = vrot.slane %v2195, 2
        %v2949 = vsel %vm2941, %v2947, %v2948
        %v2950 = vrot.slane %v2198, 2
        %v2951 = vsel %vm2941, %v2948, %v2950
        %v2952 = vrot.slane %v2201, 2
        %v2953 = vrot.slane %v2204, 2
        %v2954 = vsel %vm2941, %v2952, %v2953
        %v2955 = vrot.slane %v2207, 2
        %v2956 = vsel %vm2941, %v2953, %v2955
        %v2957 = vrot.slane %v2210, 2
        %v2958 = vrot.slane %v2213, 2
        %v2959 = vsel %vm2941, %v2957, %v2958
        %v2960 = vrot.slane %v2216, 2
        %v2961 = vsel %vm2941, %v2958, %v2960
        %v2962 = vrot.slane %v2219, 2
        %v2963 = vrot.slane %v2222, 2
        %v2964 = vsel %vm2941, %v2962, %v2963
        %v2965 = vrot.slane %v2225, 2
        %v2966 = vsel %vm2941, %v2963, %v2965
        %v2967 = vrot.slane %v2228, 2
        %v2968 = vrot.slane %v2231, 2
        %v2969 = vsel %vm2941, %v2967, %v2968
        %v2970 = vrot.slane %v2234, 2
        %v2971 = vsel %vm2941, %v2968, %v2970
        %v2972 = vrot.slane %v2237, 2
        %v2973 = vrot.slane %v2240, 2
        %v2974 = vsel %vm2941, %v2972, %v2973
        %v2975 = vrot.slane %v2243, 2
        %v2976 = vsel %vm2941, %v2973, %v2975
        %v2977 = vrot.slane %v2246, 2
        %v2978 = vrot.slane %v2249, 2
        %v2979 = vsel %vm2941, %v2977, %v2978
        %v2980 = vrot.slane %v2252, 2
        %v2981 = vsel %vm2941, %v2978, %v2980
        %v2982 = vrot.slane %v2255, 2
        %v2983 = vrot.slane %v2258, 2
        %v2984 = vsel %vm2941, %v2982, %v2983
        %v2985 = vrot.slane %v2261, 2
        %v2986 = vsel %vm2941, %v2983, %v2985
        %v2987 = vrot.slane %v2264, 2
        %v2988 = vrot.slane %v2267, 2
        %v2989 = vsel %vm2941, %v2987, %v2988
        %v2990 = vrot.slane %v2270, 2
        %v2991 = vsel %vm2941, %v2988, %v2990
        %v2992 = vrot.slane %v2273, 2
        %v2993 = vrot.slane %v2276, 2
        %v2994 = vsel %vm2941, %v2992, %v2993
        %v2995 = vrot.slane %v2279, 2
        %v2996 = vsel %vm2941, %v2993, %v2995
        %v2997 = vrot.slane %v2282, 2
        %v2998 = vrot.slane %v2285, 2
        %v2999 = vsel %vm2941, %v2997, %v2998
        %v3000 = vrot.slane %v2288, 2
        %v3001 = vsel %vm2941, %v2998, %v3000
        %v3002 = vrot.slane %v2291, 2
        %v3003 = vrot.slane %v2294, 2
        %v3004 = vsel %vm2941, %v3002, %v3003
        %v3005 = vrot.slane %v2297, 2
        %v3006 = vsel %vm2941, %v3003, %v3005
        %v3007 = vrot.slane %v2300, 2
        %v3008 = vrot.slane %v2303, 2
        %v3009 = vsel %vm2941, %v3007, %v3008
        %v3010 = vrot.slane %v2306, 2
        %v3011 = vsel %vm2941, %v3008, %v3010
        %v3012 = vrot.slane %v2309, 2
        %v3013 = vrot.slane %v2312, 2
        %v3014 = vsel %vm2941, %v3012, %v3013
        %v3015 = vrot.slane %v2315, 2
        %v3016 = vsel %vm2941, %v3013, %v3015
        %v3017 = vrot.slane %v2318, 2
        %v3018 = vrot.slane %v2321, 2
        %v3019 = vsel %vm2941, %v3017, %v3018
        %v3020 = vrot.slane %v2324, 2
        %v3021 = vsel %vm2941, %v3018, %v3020
        %3022 = vrot.lane.b32.xlu0 %v2944, 64
        %v3023 = vpop.permute.xlu0 %3022
        %3024 = vrot.lane.b32.xlu0 %v2946, 64
        %v3025 = vpop.permute.xlu0 %3024
        %3026 = vrot.lane.b32.xlu0 %v2949, 64
        %v3027 = vpop.permute.xlu0 %3026
        %3028 = vrot.lane.b32.xlu0 %v2951, 64
        %v3029 = vpop.permute.xlu0 %3028
        %3030 = vrot.lane.b32.xlu0 %v2954, 64
        %v3031 = vpop.permute.xlu0 %3030
        %3032 = vrot.lane.b32.xlu0 %v2956, 64
        %v3033 = vpop.permute.xlu0 %3032
        %3034 = vrot.lane.b32.xlu0 %v2959, 64
        %v3035 = vpop.permute.xlu0 %3034
        %3036 = vrot.lane.b32.xlu0 %v2961, 64
        %v3037 = vpop.permute.xlu0 %3036
        %3038 = vrot.lane.b32.xlu0 %v2964, 64
        %v3039 = vpop.permute.xlu0 %3038
        %3040 = vrot.lane.b32.xlu0 %v2966, 64
        %v3041 = vpop.permute.xlu0 %3040
        %3042 = vrot.lane.b32.xlu0 %v2969, 64
        %v3043 = vpop.permute.xlu0 %3042
        %3044 = vrot.lane.b32.xlu0 %v2971, 64
        %v3045 = vpop.permute.xlu0 %3044
        %3046 = vrot.lane.b32.xlu0 %v2974, 64
        %v3047 = vpop.permute.xlu0 %3046
        %3048 = vrot.lane.b32.xlu0 %v2976, 64
        %v3049 = vpop.permute.xlu0 %3048
        %3050 = vrot.lane.b32.xlu0 %v2979, 64
        %v3051 = vpop.permute.xlu0 %3050
        %3052 = vrot.lane.b32.xlu0 %v2981, 64
        %v3053 = vpop.permute.xlu0 %3052
        %3054 = vrot.lane.b32.xlu0 %v2984, 64
        %v3055 = vpop.permute.xlu0 %3054
        %3056 = vrot.lane.b32.xlu0 %v2986, 64
        %v3057 = vpop.permute.xlu0 %3056
        %3058 = vrot.lane.b32.xlu0 %v2989, 64
        %v3059 = vpop.permute.xlu0 %3058
        %3060 = vrot.lane.b32.xlu0 %v2991, 64
        %v3061 = vpop.permute.xlu0 %3060
        %3062 = vrot.lane.b32.xlu0 %v2994, 64
        %v3063 = vpop.permute.xlu0 %3062
        %3064 = vrot.lane.b32.xlu0 %v2996, 64
        %v3065 = vpop.permute.xlu0 %3064
        %3066 = vrot.lane.b32.xlu0 %v2999, 64
        %v3067 = vpop.permute.xlu0 %3066
        %3068 = vrot.lane.b32.xlu0 %v3001, 64
        %v3069 = vpop.permute.xlu0 %3068
        %3070 = vrot.lane.b32.xlu0 %v3004, 64
        %v3071 = vpop.permute.xlu0 %3070
        %3072 = vrot.lane.b32.xlu0 %v3006, 64
        %v3073 = vpop.permute.xlu0 %3072
        %3074 = vrot.lane.b32.xlu0 %v3009, 64
        %v3075 = vpop.permute.xlu0 %3074
        %3076 = vrot.lane.b32.xlu0 %v3011, 64
        %v3077 = vpop.permute.xlu0 %3076
        %3078 = vrot.lane.b32.xlu0 %v3014, 64
        %v3079 = vpop.permute.xlu0 %3078
        %3080 = vrot.lane.b32.xlu0 %v3016, 64
        %v3081 = vpop.permute.xlu0 %3080
        %3082 = vrot.lane.b32.xlu0 %v3019, 64
        %v3083 = vpop.permute.xlu0 %3082
        %3084 = vrot.lane.b32.xlu0 %v3021, 64
        %v3085 = vpop.permute.xlu0 %3084
        %v3118 = vadd.f32 %v2909, %v3023
        %v3119 = vadd.f32 %v2910, %v3025
        %v3120 = vadd.f32 %v2911, %v3027
        %v3121 = vadd.f32 %v2912, %v3029
        %v3122 = vadd.f32 %v2913, %v3031
        %v3123 = vadd.f32 %v2914, %v3033
        %v3124 = vadd.f32 %v2915, %v3035
        %v3125 = vadd.f32 %v2916, %v3037
        %v3126 = vadd.f32 %v2917, %v3039
        %v3127 = vadd.f32 %v2918, %v3041
        %v3128 = vadd.f32 %v2919, %v3043
        %v3129 = vadd.f32 %v2920, %v3045
        %v3130 = vadd.f32 %v2921, %v3047
        %v3131 = vadd.f32 %v2922, %v3049
        %v3132 = vadd.f32 %v2923, %v3051
        %v3133 = vadd.f32 %v2924, %v3053
        %v3134 = vadd.f32 %v2925, %v3055
        %v3135 = vadd.f32 %v2926, %v3057
        %v3136 = vadd.f32 %v2927, %v3059
        %v3137 = vadd.f32 %v2928, %v3061
        %v3138 = vadd.f32 %v2929, %v3063
        %v3139 = vadd.f32 %v2930, %v3065
        %v3140 = vadd.f32 %v2931, %v3067
        %v3141 = vadd.f32 %v2932, %v3069
        %v3142 = vadd.f32 %v2933, %v3071
        %v3143 = vadd.f32 %v2934, %v3073
        %v3144 = vadd.f32 %v2935, %v3075
        %v3145 = vadd.f32 %v2936, %v3077
        %v3146 = vadd.f32 %v2937, %v3079
        %v3147 = vadd.f32 %v2938, %v3081
        %v3148 = vadd.f32 %v2939, %v3083
        %v3149 = vadd.f32 %v2940, %v3085
        %vm3150 = vcmask 1044480
        %v3151 = vrot.slane %v2183, 3
        %v3152 = vrot.slane %v2186, 3
        %v3153 = vsel %vm3150, %v3151, %v3152
        %v3154 = vrot.slane %v2189, 3
        %v3155 = vsel %vm3150, %v3152, %v3154
        %v3156 = vrot.slane %v2192, 3
        %v3157 = vrot.slane %v2195, 3
        %v3158 = vsel %vm3150, %v3156, %v3157
        %v3159 = vrot.slane %v2198, 3
        %v3160 = vsel %vm3150, %v3157, %v3159
        %v3161 = vrot.slane %v2201, 3
        %v3162 = vrot.slane %v2204, 3
        %v3163 = vsel %vm3150, %v3161, %v3162
        %v3164 = vrot.slane %v2207, 3
        %v3165 = vsel %vm3150, %v3162, %v3164
        %v3166 = vrot.slane %v2210, 3
        %v3167 = vrot.slane %v2213, 3
        %v3168 = vsel %vm3150, %v3166, %v3167
        %v3169 = vrot.slane %v2216, 3
        %v3170 = vsel %vm3150, %v3167, %v3169
        %v3171 = vrot.slane %v2219, 3
        %v3172 = vrot.slane %v2222, 3
        %v3173 = vsel %vm3150, %v3171, %v3172
        %v3174 = vrot.slane %v2225, 3
        %v3175 = vsel %vm3150, %v3172, %v3174
        %v3176 = vrot.slane %v2228, 3
        %v3177 = vrot.slane %v2231, 3
        %v3178 = vsel %vm3150, %v3176, %v3177
        %v3179 = vrot.slane %v2234, 3
        %v3180 = vsel %vm3150, %v3177, %v3179
        %v3181 = vrot.slane %v2237, 3
        %v3182 = vrot.slane %v2240, 3
        %v3183 = vsel %vm3150, %v3181, %v3182
        %v3184 = vrot.slane %v2243, 3
        %v3185 = vsel %vm3150, %v3182, %v3184
        %v3186 = vrot.slane %v2246, 3
        %v3187 = vrot.slane %v2249, 3
        %v3188 = vsel %vm3150, %v3186, %v3187
        %v3189 = vrot.slane %v2252, 3
        %v3190 = vsel %vm3150, %v3187, %v3189
        %v3191 = vrot.slane %v2255, 3
        %v3192 = vrot.slane %v2258, 3
        %v3193 = vsel %vm3150, %v3191, %v3192
        %v3194 = vrot.slane %v2261, 3
        %v3195 = vsel %vm3150, %v3192, %v3194
        %v3196 = vrot.slane %v2264, 3
        %v3197 = vrot.slane %v2267, 3
        %v3198 = vsel %vm3150, %v3196, %v3197
        %v3199 = vrot.slane %v2270, 3
        %v3200 = vsel %vm3150, %v3197, %v3199
        %v3201 = vrot.slane %v2273, 3
        %v3202 = vrot.slane %v2276, 3
        %v3203 = vsel %vm3150, %v3201, %v3202
        %v3204 = vrot.slane %v2279, 3
        %v3205 = vsel %vm3150, %v3202, %v3204
        %v3206 = vrot.slane %v2282, 3
        %v3207 = vrot.slane %v2285, 3
        %v3208 = vsel %vm3150, %v3206, %v3207
        %v3209 = vrot.slane %v2288, 3
        %v3210 = vsel %vm3150, %v3207, %v3209
        %v3211 = vrot.slane %v2291, 3
        %v3212 = vrot.slane %v2294, 3
        %v3213 = vsel %vm3150, %v3211, %v3212
        %v3214 = vrot.slane %v2297, 3
        %v3215 = vsel %vm3150, %v3212, %v3214
        %v3216 = vrot.slane %v2300, 3
        %v3217 = vrot.slane %v2303, 3
        %v3218 = vsel %vm3150, %v3216, %v3217
        %v3219 = vrot.slane %v2306, 3
        %v3220 = vsel %vm3150, %v3217, %v3219
        %v3221 = vrot.slane %v2309, 3
        %v3222 = vrot.slane %v2312, 3
        %v3223 = vsel %vm3150, %v3221, %v3222
        %v3224 = vrot.slane %v2315, 3
        %v3225 = vsel %vm3150, %v3222, %v3224
        %v3226 = vrot.slane %v2318, 3
        %v3227 = vrot.slane %v2321, 3
        %v3228 = vsel %vm3150, %v3226, %v3227
        %v3229 = vrot.slane %v2324, 3
        %v3230 = vsel %vm3150, %v3227, %v3229
        %3231 = vrot.lane.b32.xlu0 %v3153, 32
        %v3232 = vpop.permute.xlu0 %3231
        %3233 = vrot.lane.b32.xlu0 %v3155, 32
        %v3234 = vpop.permute.xlu0 %3233
        %3235 = vrot.lane.b32.xlu0 %v3158, 32
        %v3236 = vpop.permute.xlu0 %3235
        %3237 = vrot.lane.b32.xlu0 %v3160, 32
        %v3238 = vpop.permute.xlu0 %3237
        %3239 = vrot.lane.b32.xlu0 %v3163, 32
        %v3240 = vpop.permute.xlu0 %3239
        %3241 = vrot.lane.b32.xlu0 %v3165, 32
        %v3242 = vpop.permute.xlu0 %3241
        %3243 = vrot.lane.b32.xlu0 %v3168, 32
        %v3244 = vpop.permute.xlu0 %3243
        %3245 = vrot.lane.b32.xlu0 %v3170, 32
        %v3246 = vpop.permute.xlu0 %3245
        %3247 = vrot.lane.b32.xlu0 %v3173, 32
        %v3248 = vpop.permute.xlu0 %3247
        %3249 = vrot.lane.b32.xlu0 %v3175, 32
        %v3250 = vpop.permute.xlu0 %3249
        %3251 = vrot.lane.b32.xlu0 %v3178, 32
        %v3252 = vpop.permute.xlu0 %3251
        %3253 = vrot.lane.b32.xlu0 %v3180, 32
        %v3254 = vpop.permute.xlu0 %3253
        %3255 = vrot.lane.b32.xlu0 %v3183, 32
        %v3256 = vpop.permute.xlu0 %3255
        %3257 = vrot.lane.b32.xlu0 %v3185, 32
        %v3258 = vpop.permute.xlu0 %3257
        %3259 = vrot.lane.b32.xlu0 %v3188, 32
        %v3260 = vpop.permute.xlu0 %3259
        %3261 = vrot.lane.b32.xlu0 %v3190, 32
        %v3262 = vpop.permute.xlu0 %3261
        %3263 = vrot.lane.b32.xlu0 %v3193, 32
        %v3264 = vpop.permute.xlu0 %3263
        %3265 = vrot.lane.b32.xlu0 %v3195, 32
        %v3266 = vpop.permute.xlu0 %3265
        %3267 = vrot.lane.b32.xlu0 %v3198, 32
        %v3268 = vpop.permute.xlu0 %3267
        %3269 = vrot.lane.b32.xlu0 %v3200, 32
        %v3270 = vpop.permute.xlu0 %3269
        %3271 = vrot.lane.b32.xlu0 %v3203, 32
        %v3272 = vpop.permute.xlu0 %3271
        %3273 = vrot.lane.b32.xlu0 %v3205, 32
        %v3274 = vpop.permute.xlu0 %3273
        %3275 = vrot.lane.b32.xlu0 %v3208, 32
        %v3276 = vpop.permute.xlu0 %3275
        %3277 = vrot.lane.b32.xlu0 %v3210, 32
        %v3278 = vpop.permute.xlu0 %3277
        %3279 = vrot.lane.b32.xlu0 %v3213, 32
        %v3280 = vpop.permute.xlu0 %3279
        %3281 = vrot.lane.b32.xlu0 %v3215, 32
        %v3282 = vpop.permute.xlu0 %3281
        %3283 = vrot.lane.b32.xlu0 %v3218, 32
        %v3284 = vpop.permute.xlu0 %3283
        %3285 = vrot.lane.b32.xlu0 %v3220, 32
        %v3286 = vpop.permute.xlu0 %3285
        %3287 = vrot.lane.b32.xlu0 %v3223, 32
        %v3288 = vpop.permute.xlu0 %3287
        %3289 = vrot.lane.b32.xlu0 %v3225, 32
        %v3290 = vpop.permute.xlu0 %3289
        %3291 = vrot.lane.b32.xlu0 %v3228, 32
        %v3292 = vpop.permute.xlu0 %3291
        %3293 = vrot.lane.b32.xlu0 %v3230, 32
        %v3294 = vpop.permute.xlu0 %3293
        %v3327 = vadd.f32 %v3118, %v3232
        %v3328 = vadd.f32 %v3119, %v3234
        %v3329 = vadd.f32 %v3120, %v3236
        %v3330 = vadd.f32 %v3121, %v3238
        %v3331 = vadd.f32 %v3122, %v3240
        %v3332 = vadd.f32 %v3123, %v3242
        %v3333 = vadd.f32 %v3124, %v3244
        %v3334 = vadd.f32 %v3125, %v3246
        %v3335 = vadd.f32 %v3126, %v3248
        %v3336 = vadd.f32 %v3127, %v3250
        %v3337 = vadd.f32 %v3128, %v3252
        %v3338 = vadd.f32 %v3129, %v3254
        %v3339 = vadd.f32 %v3130, %v3256
        %v3340 = vadd.f32 %v3131, %v3258
        %v3341 = vadd.f32 %v3132, %v3260
        %v3342 = vadd.f32 %v3133, %v3262
        %v3343 = vadd.f32 %v3134, %v3264
        %v3344 = vadd.f32 %v3135, %v3266
        %v3345 = vadd.f32 %v3136, %v3268
        %v3346 = vadd.f32 %v3137, %v3270
        %v3347 = vadd.f32 %v3138, %v3272
        %v3348 = vadd.f32 %v3139, %v3274
        %v3349 = vadd.f32 %v3140, %v3276
        %v3350 = vadd.f32 %v3141, %v3278
        %v3351 = vadd.f32 %v3142, %v3280
        %v3352 = vadd.f32 %v3143, %v3282
        %v3353 = vadd.f32 %v3144, %v3284
        %v3354 = vadd.f32 %v3145, %v3286
        %v3355 = vadd.f32 %v3146, %v3288
        %v3356 = vadd.f32 %v3147, %v3290
        %v3357 = vadd.f32 %v3148, %v3292
        %v3358 = vadd.f32 %v3149, %v3294
        %vm3407 = vcmask 1043456
        %v3408 = vrot.slane %v2505, 4
        %v3409 = vrot.slane %v2508, 4
        %v3410 = vsel %vm3407, %v3408, %v3409
        %v3411 = vrot.slane %v2511, 4
        %v3412 = vsel %vm3407, %v3409, %v3411
        %v3413 = vrot.slane %v2514, 4
        %v3414 = vrot.slane %v2517, 4
        %v3415 = vsel %vm3407, %v3413, %v3414
        %v3416 = vrot.slane %v2520, 4
        %v3417 = vsel %vm3407, %v3414, %v3416
        %v3418 = vrot.slane %v2523, 4
        %v3419 = vrot.slane %v2526, 4
        %v3420 = vsel %vm3407, %v3418, %v3419
        %v3421 = vrot.slane %v2529, 4
        %v3422 = vsel %vm3407, %v3419, %v3421
        %v3423 = vrot.slane %v2532, 4
        %v3424 = vrot.slane %v2535, 4
        %v3425 = vsel %vm3407, %v3423, %v3424
        %v3426 = vrot.slane %v2538, 4
        %v3427 = vsel %vm3407, %v3424, %v3426
        %v3428 = vrot.slane %v2541, 4
        %v3429 = vrot.slane %v2544, 4
        %v3430 = vsel %vm3407, %v3428, %v3429
        %v3431 = vrot.slane %v2547, 4
        %v3432 = vsel %vm3407, %v3429, %v3431
        %v3433 = vrot.slane %v2550, 4
        %v3434 = vrot.slane %v2553, 4
        %v3435 = vsel %vm3407, %v3433, %v3434
        %v3436 = vrot.slane %v2556, 4
        %v3437 = vsel %vm3407, %v3434, %v3436
        %v3438 = vrot.slane %v2559, 4
        %v3439 = vrot.slane %v2562, 4
        %v3440 = vsel %vm3407, %v3438, %v3439
        %v3441 = vrot.slane %v2565, 4
        %v3442 = vsel %vm3407, %v3439, %v3441
        %v3443 = vrot.slane %v2568, 4
        %v3444 = vrot.slane %v2571, 4
        %v3445 = vsel %vm3407, %v3443, %v3444
        %v3446 = vrot.slane %v2574, 4
        %v3447 = vsel %vm3407, %v3444, %v3446
        %v3448 = vrot.slane %v2577, 4
        %v3449 = vrot.slane %v2580, 4
        %v3450 = vsel %vm3407, %v3448, %v3449
        %v3451 = vrot.slane %v2583, 4
        %v3452 = vsel %vm3407, %v3449, %v3451
        %v3453 = vrot.slane %v2586, 4
        %v3454 = vrot.slane %v2589, 4
        %v3455 = vsel %vm3407, %v3453, %v3454
        %v3456 = vrot.slane %v2592, 4
        %v3457 = vsel %vm3407, %v3454, %v3456
        %v3458 = vrot.slane %v2595, 4
        %v3459 = vrot.slane %v2598, 4
        %v3460 = vsel %vm3407, %v3458, %v3459
        %v3461 = vrot.slane %v2601, 4
        %v3462 = vsel %vm3407, %v3459, %v3461
        %v3463 = vrot.slane %v2604, 4
        %v3464 = vrot.slane %v2607, 4
        %v3465 = vsel %vm3407, %v3463, %v3464
        %v3466 = vrot.slane %v2610, 4
        %v3467 = vsel %vm3407, %v3464, %v3466
        %v3468 = vrot.slane %v2613, 4
        %v3469 = vrot.slane %v2616, 4
        %v3470 = vsel %vm3407, %v3468, %v3469
        %v3471 = vrot.slane %v2619, 4
        %v3472 = vsel %vm3407, %v3469, %v3471
        %v3473 = vrot.slane %v2622, 4
        %v3474 = vrot.slane %v2625, 4
        %v3475 = vsel %vm3407, %v3473, %v3474
        %v3476 = vrot.slane %v2628, 4
        %v3477 = vsel %vm3407, %v3474, %v3476
        %v3478 = vrot.slane %v2631, 4
        %v3479 = vrot.slane %v2634, 4
        %v3480 = vsel %vm3407, %v3478, %v3479
        %v3481 = vrot.slane %v2637, 4
        %v3482 = vsel %vm3407, %v3479, %v3481
        %v3483 = vrot.slane %v2640, 4
        %v3484 = vrot.slane %v2643, 4
        %v3485 = vsel %vm3407, %v3483, %v3484
        %v3486 = vrot.slane %v2646, 4
        %v3487 = vsel %vm3407, %v3484, %v3486
        %v3520 = vadd.f32 %v3327, %v3410
        %v3521 = vadd.f32 %v3328, %v3412
        %v3522 = vadd.f32 %v3329, %v3415
        %v3523 = vadd.f32 %v3330, %v3417
        %v3524 = vadd.f32 %v3331, %v3420
        %v3525 = vadd.f32 %v3332, %v3422
        %v3526 = vadd.f32 %v3333, %v3425
        %v3527 = vadd.f32 %v3334, %v3427
        %v3528 = vadd.f32 %v3335, %v3430
        %v3529 = vadd.f32 %v3336, %v3432
        %v3530 = vadd.f32 %v3337, %v3435
        %v3531 = vadd.f32 %v3338, %v3437
        %v3532 = vadd.f32 %v3339, %v3440
        %v3533 = vadd.f32 %v3340, %v3442
        %v3534 = vadd.f32 %v3341, %v3445
        %v3535 = vadd.f32 %v3342, %v3447
        %v3536 = vadd.f32 %v3343, %v3450
        %v3537 = vadd.f32 %v3344, %v3452
        %v3538 = vadd.f32 %v3345, %v3455
        %v3539 = vadd.f32 %v3346, %v3457
        %v3540 = vadd.f32 %v3347, %v3460
        %v3541 = vadd.f32 %v3348, %v3462
        %v3542 = vadd.f32 %v3349, %v3465
        %v3543 = vadd.f32 %v3350, %v3467
        %v3544 = vadd.f32 %v3351, %v3470
        %v3545 = vadd.f32 %v3352, %v3472
        %v3546 = vadd.f32 %v3353, %v3475
        %v3547 = vadd.f32 %v3354, %v3477
        %v3548 = vadd.f32 %v3355, %v3480
        %v3549 = vadd.f32 %v3356, %v3482
        %v3550 = vadd.f32 %v3357, %v3485
        %v3551 = vadd.f32 %v3358, %v3487
        %v3552 = vmax.f32 %v3520, 0.0
        %v3553 = vmax.f32 %v3521, 0.0
        %v3554 = vmax.f32 %v3522, 0.0
        %v3555 = vmax.f32 %v3523, 0.0
        %v3556 = vmax.f32 %v3524, 0.0
        %v3557 = vmax.f32 %v3525, 0.0
        %v3558 = vmax.f32 %v3526, 0.0
        %v3559 = vmax.f32 %v3527, 0.0
        %v3560 = vmax.f32 %v3528, 0.0
        %v3561 = vmax.f32 %v3529, 0.0
        %v3562 = vmax.f32 %v3530, 0.0
        %v3563 = vmax.f32 %v3531, 0.0
        %v3564 = vmax.f32 %v3532, 0.0
        %v3565 = vmax.f32 %v3533, 0.0
        %v3566 = vmax.f32 %v3534, 0.0
        %v3567 = vmax.f32 %v3535, 0.0
        %v3568 = vmax.f32 %v3536, 0.0
        %v3569 = vmax.f32 %v3537, 0.0
        %v3570 = vmax.f32 %v3538, 0.0
        %v3571 = vmax.f32 %v3539, 0.0
        %v3572 = vmax.f32 %v3540, 0.0
        %v3573 = vmax.f32 %v3541, 0.0
        %v3574 = vmax.f32 %v3542, 0.0
        %v3575 = vmax.f32 %v3543, 0.0
        %v3576 = vmax.f32 %v3544, 0.0
        %v3577 = vmax.f32 %v3545, 0.0
        %v3578 = vmax.f32 %v3546, 0.0
        %v3579 = vmax.f32 %v3547, 0.0
        %v3580 = vmax.f32 %v3548, 0.0
        %v3581 = vmax.f32 %v3549, 0.0
        %v3582 = vmax.f32 %v3550, 0.0
        %v3583 = vmax.f32 %v3551, 0.0
        %3584 = vst.msk [vmem:[%s822 + $0x2] sm:$0xff] %vm224, %v3552
        %3585 = vst.msk [vmem:[%s822 + $0xa] sm:$0xff] %vm224, %v3553
        %3586 = vst.msk [vmem:[%s822 + $0x1a] sm:$0xff] %vm224, %v3554
        %3587 = vst.msk [vmem:[%s822 + $0x22] sm:$0xff] %vm224, %v3555
        %3588 = vst.msk [vmem:[%s822 + $0x32] sm:$0xff] %vm224, %v3556
        %3589 = vst.msk [vmem:[%s822 + $0x3a] sm:$0xff] %vm224, %v3557
        %3590 = vst.msk [vmem:[%s822 + $0x4a] sm:$0xff] %vm224, %v3558
        %3591 = vst.msk [vmem:[%s822 + $0x52] sm:$0xff] %vm224, %v3559
        %3592 = vst.msk [vmem:[%s822 + $0x62] sm:$0xff] %vm224, %v3560
        %3593 = vst.msk [vmem:[%s822 + $0x6a] sm:$0xff] %vm224, %v3561
        %3594 = vst.msk [vmem:[%s822 + $0x7a] sm:$0xff] %vm224, %v3562
        %3595 = vst.msk [vmem:[%s822 + $0x82] sm:$0xff] %vm224, %v3563
        %3596 = vst.msk [vmem:[%s822 + $0x92] sm:$0xff] %vm224, %v3564
        %3597 = vst.msk [vmem:[%s822 + $0x9a] sm:$0xff] %vm224, %v3565
        %3598 = vst.msk [vmem:[%s822 + $0xaa] sm:$0xff] %vm224, %v3566
        %3599 = vst.msk [vmem:[%s822 + $0xb2] sm:$0xff] %vm224, %v3567
        %3600 = vst.msk [vmem:[%s822 + $0xc2] sm:$0xff] %vm224, %v3568
        %3601 = vst.msk [vmem:[%s822 + $0xca] sm:$0xff] %vm224, %v3569
        %3602 = vst.msk [vmem:[%s822 + $0xda] sm:$0xff] %vm224, %v3570
        %3603 = vst.msk [vmem:[%s822 + $0xe2] sm:$0xff] %vm224, %v3571
        %3604 = vst.msk [vmem:[%s822 + $0xf2] sm:$0xff] %vm224, %v3572
        %3605 = vst.msk [vmem:[%s822 + $0xfa] sm:$0xff] %vm224, %v3573
        %3606 = vst.msk [vmem:[%s822 + $0x10a] sm:$0xff] %vm224, %v3574
        %3607 = vst.msk [vmem:[%s822 + $0x112] sm:$0xff] %vm224, %v3575
        %3608 = vst.msk [vmem:[%s822 + $0x122] sm:$0xff] %vm224, %v3576
        %3609 = vst.msk [vmem:[%s822 + $0x12a] sm:$0xff] %vm224, %v3577
        %3610 = vst.msk [vmem:[%s822 + $0x13a] sm:$0xff] %vm224, %v3578
        %3611 = vst.msk [vmem:[%s822 + $0x142] sm:$0xff] %vm224, %v3579
        %3612 = vst.msk [vmem:[%s822 + $0x152] sm:$0xff] %vm224, %v3580
        %3613 = vst.msk [vmem:[%s822 + $0x15a] sm:$0xff] %vm224, %v3581
        %3614 = vst.msk [vmem:[%s822 + $0x16a] sm:$0xff] %vm224, %v3582
        %3615 = vst.msk [vmem:[%s822 + $0x172] sm:$0xff] %vm224, %v3583
        %v3616 = vld [vmem:[#allocation2] sm:$0xff]
        %v3617 = vld [vmem:[#allocation2 + $0x8] sm:$0xff]
        %v3618 = vld [vmem:[#allocation2 + $0x10] sm:$0xff]
        %v3619 = vld [vmem:[#allocation2 + $0x18] sm:$0xff]
        %v3620 = vld [vmem:[#allocation2 + $0x20] sm:$0xff]
        %v3621 = vld [vmem:[#allocation2 + $0x28] sm:$0xff]
        %v3622 = vld [vmem:[#allocation2 + $0x30] sm:$0xff]
        %v3623 = vld [vmem:[#allocation2 + $0x38] sm:$0xff]
        %v3624 = vld [vmem:[#allocation2 + $0x40] sm:$0xff]
        %v3625 = vld [vmem:[#allocation2 + $0x48] sm:$0xff]
        %v3626 = vld [vmem:[#allocation2 + $0x50] sm:$0xff]
        %v3627 = vld [vmem:[#allocation2 + $0x58] sm:$0xff]
        %v3628 = vld [vmem:[#allocation2 + $0x60] sm:$0xff]
        %v3629 = vld [vmem:[#allocation2 + $0x68] sm:$0xff]
        %v3630 = vld [vmem:[#allocation2 + $0x70] sm:$0xff]
        %v3631 = vld [vmem:[#allocation2 + $0x78] sm:$0xff]
        %v3632 = vld [vmem:[#allocation2 + $0x80] sm:$0xff]
        %v3633 = vld [vmem:[#allocation2 + $0x88] sm:$0xff]
        %v3634 = vld [vmem:[#allocation2 + $0x90] sm:$0xff]
        %v3635 = vld [vmem:[#allocation2 + $0x98] sm:$0xff]
        %v3636 = vld [vmem:[#allocation2 + $0xa0] sm:$0xff]
        %v3637 = vld [vmem:[#allocation2 + $0xa8] sm:$0xff]
        %v3638 = vld [vmem:[#allocation2 + $0xb0] sm:$0xff]
        %v3639 = vld [vmem:[#allocation2 + $0xb8] sm:$0xff]
        %v3640 = vld [vmem:[#allocation2 + $0xc0] sm:$0xff]
        %v3641 = vld [vmem:[#allocation2 + $0xc8] sm:$0xff]
        %v3642 = vld [vmem:[#allocation2 + $0xd0] sm:$0xff]
        %v3643 = vld [vmem:[#allocation2 + $0xd8] sm:$0xff]
        %v3644 = vld [vmem:[#allocation2 + $0xe0] sm:$0xff]
        %v3645 = vld [vmem:[#allocation2 + $0xe8] sm:$0xff]
        %v3646 = vld [vmem:[#allocation2 + $0xf0] sm:$0xff]
        %v3647 = vld [vmem:[#allocation2 + $0xf8] sm:$0xff]
        %v3648 = vld [vmem:[#allocation2 + $0x100] sm:$0xff]
        %v3649 = vld [vmem:[#allocation2 + $0x108] sm:$0xff]
        %v3650 = vld [vmem:[#allocation2 + $0x110] sm:$0xff]
        %v3651 = vld [vmem:[#allocation2 + $0x118] sm:$0xff]
        %v3652 = vld [vmem:[#allocation2 + $0x120] sm:$0xff]
        %v3653 = vld [vmem:[#allocation2 + $0x128] sm:$0xff]
        %v3654 = vld [vmem:[#allocation2 + $0x130] sm:$0xff]
        %v3655 = vld [vmem:[#allocation2 + $0x138] sm:$0xff]
        %v3656 = vld [vmem:[#allocation2 + $0x140] sm:$0xff]
        %v3657 = vld [vmem:[#allocation2 + $0x148] sm:$0xff]
        %v3658 = vld [vmem:[#allocation2 + $0x150] sm:$0xff]
        %v3659 = vld [vmem:[#allocation2 + $0x158] sm:$0xff]
        %v3660 = vld [vmem:[#allocation2 + $0x160] sm:$0xff]
        %v3661 = vld [vmem:[#allocation2 + $0x168] sm:$0xff]
        %v3662 = vld [vmem:[#allocation2 + $0x170] sm:$0xff]
        %v3663 = vld [vmem:[#allocation2 + $0x178] sm:$0xff]
        %v3664 = vld [vmem:[%s903] sm:$0xff]
        %v3665 = vld [vmem:[%s903 + $0x8] sm:$0xff]
        %v3666 = vld [vmem:[%s903 + $0x10] sm:$0xff]
        %v3667 = vld [vmem:[%s903 + $0x18] sm:$0xff]
        %v3668 = vld [vmem:[%s903 + $0x20] sm:$0xff]
        %v3669 = vld [vmem:[%s903 + $0x28] sm:$0xff]
        %v3670 = vld [vmem:[%s903 + $0x30] sm:$0xff]
        %v3671 = vld [vmem:[%s903 + $0x38] sm:$0xff]
        %v3672 = vld [vmem:[%s903 + $0x40] sm:$0xff]
        %v3673 = vld [vmem:[%s903 + $0x48] sm:$0xff]
        %v3674 = vld [vmem:[%s903 + $0x50] sm:$0xff]
        %v3675 = vld [vmem:[%s903 + $0x58] sm:$0xff]
        %v3676 = vld [vmem:[%s903 + $0x60] sm:$0xff]
        %v3677 = vld [vmem:[%s903 + $0x68] sm:$0xff]
        %v3678 = vld [vmem:[%s903 + $0x70] sm:$0xff]
        %v3679 = vld [vmem:[%s903 + $0x78] sm:$0xff]
        %v3680 = vld [vmem:[%s903 + $0x80] sm:$0xff]
        %v3681 = vld [vmem:[%s903 + $0x88] sm:$0xff]
        %v3682 = vld [vmem:[%s903 + $0x90] sm:$0xff]
        %v3683 = vld [vmem:[%s903 + $0x98] sm:$0xff]
        %v3684 = vld [vmem:[%s903 + $0xa0] sm:$0xff]
        %v3685 = vld [vmem:[%s903 + $0xa8] sm:$0xff]
        %v3686 = vld [vmem:[%s903 + $0xb0] sm:$0xff]
        %v3687 = vld [vmem:[%s903 + $0xb8] sm:$0xff]
        %v3688 = vld [vmem:[%s903 + $0xc0] sm:$0xff]
        %v3689 = vld [vmem:[%s903 + $0xc8] sm:$0xff]
        %v3690 = vld [vmem:[%s903 + $0xd0] sm:$0xff]
        %v3691 = vld [vmem:[%s903 + $0xd8] sm:$0xff]
        %v3692 = vld [vmem:[%s903 + $0xe0] sm:$0xff]
        %v3693 = vld [vmem:[%s903 + $0xe8] sm:$0xff]
        %v3694 = vld [vmem:[%s903 + $0xf0] sm:$0xff]
        %v3695 = vld [vmem:[%s903 + $0xf8] sm:$0xff]
        %v3696 = vld [vmem:[%s903 + $0x100] sm:$0xff]
        %v3697 = vld [vmem:[%s903 + $0x108] sm:$0xff]
        %v3698 = vld [vmem:[%s903 + $0x110] sm:$0xff]
        %v3699 = vld [vmem:[%s903 + $0x118] sm:$0xff]
        %v3700 = vld [vmem:[%s903 + $0x120] sm:$0xff]
        %v3701 = vld [vmem:[%s903 + $0x128] sm:$0xff]
        %v3702 = vld [vmem:[%s903 + $0x130] sm:$0xff]
        %v3703 = vld [vmem:[%s903 + $0x138] sm:$0xff]
        %v3704 = vld [vmem:[%s903 + $0x140] sm:$0xff]
        %v3705 = vld [vmem:[%s903 + $0x148] sm:$0xff]
        %v3706 = vld [vmem:[%s903 + $0x150] sm:$0xff]
        %v3707 = vld [vmem:[%s903 + $0x158] sm:$0xff]
        %v3708 = vld [vmem:[%s903 + $0x160] sm:$0xff]
        %v3709 = vld [vmem:[%s903 + $0x168] sm:$0xff]
        %v3710 = vld [vmem:[%s903 + $0x170] sm:$0xff]
        %v3711 = vld [vmem:[%s903 + $0x178] sm:$0xff]
        %v3712 = vld [vmem:[%s822] sm:$0xff]
        %v3713 = vld [vmem:[%s822 + $0x8] sm:$0xff]
        %v3714 = vld [vmem:[%s822 + $0x10] sm:$0xff]
        %v3715 = vld [vmem:[%s822 + $0x18] sm:$0xff]
        %v3716 = vld [vmem:[%s822 + $0x20] sm:$0xff]
        %v3717 = vld [vmem:[%s822 + $0x28] sm:$0xff]
        %v3718 = vld [vmem:[%s822 + $0x30] sm:$0xff]
        %v3719 = vld [vmem:[%s822 + $0x38] sm:$0xff]
        %v3720 = vld [vmem:[%s822 + $0x40] sm:$0xff]
        %v3721 = vld [vmem:[%s822 + $0x48] sm:$0xff]
        %v3722 = vld [vmem:[%s822 + $0x50] sm:$0xff]
        %v3723 = vld [vmem:[%s822 + $0x58] sm:$0xff]
        %v3724 = vld [vmem:[%s822 + $0x60] sm:$0xff]
        %v3725 = vld [vmem:[%s822 + $0x68] sm:$0xff]
        %v3726 = vld [vmem:[%s822 + $0x70] sm:$0xff]
        %v3727 = vld [vmem:[%s822 + $0x78] sm:$0xff]
        %v3728 = vld [vmem:[%s822 + $0x80] sm:$0xff]
        %v3729 = vld [vmem:[%s822 + $0x88] sm:$0xff]
        %v3730 = vld [vmem:[%s822 + $0x90] sm:$0xff]
        %v3731 = vld [vmem:[%s822 + $0x98] sm:$0xff]
        %v3732 = vld [vmem:[%s822 + $0xa0] sm:$0xff]
        %v3733 = vld [vmem:[%s822 + $0xa8] sm:$0xff]
        %v3734 = vld [vmem:[%s822 + $0xb0] sm:$0xff]
        %v3735 = vld [vmem:[%s822 + $0xb8] sm:$0xff]
        %v3736 = vld [vmem:[%s822 + $0xc0] sm:$0xff]
        %v3737 = vld [vmem:[%s822 + $0xc8] sm:$0xff]
        %v3738 = vld [vmem:[%s822 + $0xd0] sm:$0xff]
        %v3739 = vld [vmem:[%s822 + $0xd8] sm:$0xff]
        %v3740 = vld [vmem:[%s822 + $0xe0] sm:$0xff]
        %v3741 = vld [vmem:[%s822 + $0xe8] sm:$0xff]
        %v3742 = vld [vmem:[%s822 + $0xf0] sm:$0xff]
        %v3743 = vld [vmem:[%s822 + $0xf8] sm:$0xff]
        %v3744 = vld [vmem:[%s822 + $0x100] sm:$0xff]
        %v3745 = vld [vmem:[%s822 + $0x108] sm:$0xff]
        %v3746 = vld [vmem:[%s822 + $0x110] sm:$0xff]
        %v3747 = vld [vmem:[%s822 + $0x118] sm:$0xff]
        %v3748 = vld [vmem:[%s822 + $0x120] sm:$0xff]
        %v3749 = vld [vmem:[%s822 + $0x128] sm:$0xff]
        %v3750 = vld [vmem:[%s822 + $0x130] sm:$0xff]
        %v3751 = vld [vmem:[%s822 + $0x138] sm:$0xff]
        %v3752 = vld [vmem:[%s822 + $0x140] sm:$0xff]
        %v3753 = vld [vmem:[%s822 + $0x148] sm:$0xff]
        %v3754 = vld [vmem:[%s822 + $0x150] sm:$0xff]
        %v3755 = vld [vmem:[%s822 + $0x158] sm:$0xff]
        %v3756 = vld [vmem:[%s822 + $0x160] sm:$0xff]
        %v3757 = vld [vmem:[%s822 + $0x168] sm:$0xff]
        %v3758 = vld [vmem:[%s822 + $0x170] sm:$0xff]
        %v3759 = vld [vmem:[%s822 + $0x178] sm:$0xff]
        %v3760 = vld [vmem:[%s1000] sm:$0xff]
        %v3761 = vld [vmem:[%s1000 + $0x8] sm:$0xff]
        %v3762 = vld [vmem:[%s1000 + $0x10] sm:$0xff]
        %v3763 = vld [vmem:[%s1000 + $0x18] sm:$0xff]
        %v3764 = vld [vmem:[%s1000 + $0x20] sm:$0xff]
        %v3765 = vld [vmem:[%s1000 + $0x28] sm:$0xff]
        %v3766 = vld [vmem:[%s1000 + $0x30] sm:$0xff]
        %v3767 = vld [vmem:[%s1000 + $0x38] sm:$0xff]
        %v3768 = vld [vmem:[%s1000 + $0x40] sm:$0xff]
        %v3769 = vld [vmem:[%s1000 + $0x48] sm:$0xff]
        %v3770 = vld [vmem:[%s1000 + $0x50] sm:$0xff]
        %v3771 = vld [vmem:[%s1000 + $0x58] sm:$0xff]
        %v3772 = vld [vmem:[%s1000 + $0x60] sm:$0xff]
        %v3773 = vld [vmem:[%s1000 + $0x68] sm:$0xff]
        %v3774 = vld [vmem:[%s1000 + $0x70] sm:$0xff]
        %v3775 = vld [vmem:[%s1000 + $0x78] sm:$0xff]
        %v3776 = vld [vmem:[%s1000 + $0x80] sm:$0xff]
        %v3777 = vld [vmem:[%s1000 + $0x88] sm:$0xff]
        %v3778 = vld [vmem:[%s1000 + $0x90] sm:$0xff]
        %v3779 = vld [vmem:[%s1000 + $0x98] sm:$0xff]
        %v3780 = vld [vmem:[%s1000 + $0xa0] sm:$0xff]
        %v3781 = vld [vmem:[%s1000 + $0xa8] sm:$0xff]
        %v3782 = vld [vmem:[%s1000 + $0xb0] sm:$0xff]
        %v3783 = vld [vmem:[%s1000 + $0xb8] sm:$0xff]
        %v3784 = vld [vmem:[%s1000 + $0xc0] sm:$0xff]
        %v3785 = vld [vmem:[%s1000 + $0xc8] sm:$0xff]
        %v3786 = vld [vmem:[%s1000 + $0xd0] sm:$0xff]
        %v3787 = vld [vmem:[%s1000 + $0xd8] sm:$0xff]
        %v3788 = vld [vmem:[%s1000 + $0xe0] sm:$0xff]
        %v3789 = vld [vmem:[%s1000 + $0xe8] sm:$0xff]
        %v3790 = vld [vmem:[%s1000 + $0xf0] sm:$0xff]
        %v3791 = vld [vmem:[%s1000 + $0xf8] sm:$0xff]
        %v3792 = vld [vmem:[%s1000 + $0x100] sm:$0xff]
        %v3793 = vld [vmem:[%s1000 + $0x108] sm:$0xff]
        %v3794 = vld [vmem:[%s1000 + $0x110] sm:$0xff]
        %v3795 = vld [vmem:[%s1000 + $0x118] sm:$0xff]
        %v3796 = vld [vmem:[%s1000 + $0x120] sm:$0xff]
        %v3797 = vld [vmem:[%s1000 + $0x128] sm:$0xff]
        %v3798 = vld [vmem:[%s1000 + $0x130] sm:$0xff]
        %v3799 = vld [vmem:[%s1000 + $0x138] sm:$0xff]
        %v3800 = vld [vmem:[%s1000 + $0x140] sm:$0xff]
        %v3801 = vld [vmem:[%s1000 + $0x148] sm:$0xff]
        %v3802 = vld [vmem:[%s1000 + $0x150] sm:$0xff]
        %v3803 = vld [vmem:[%s1000 + $0x158] sm:$0xff]
        %v3804 = vld [vmem:[%s1000 + $0x160] sm:$0xff]
        %v3805 = vld [vmem:[%s1000 + $0x168] sm:$0xff]
        %v3806 = vld [vmem:[%s1000 + $0x170] sm:$0xff]
        %v3807 = vld [vmem:[%s1000 + $0x178] sm:$0xff]
        %v3808 = vld [vmem:[%s1049] sm:$0xff]
        %v3809 = vld [vmem:[%s1049 + $0x8] sm:$0xff]
        %v3810 = vld [vmem:[%s1049 + $0x10] sm:$0xff]
        %v3811 = vld [vmem:[%s1049 + $0x18] sm:$0xff]
        %v3812 = vld [vmem:[%s1049 + $0x20] sm:$0xff]
        %v3813 = vld [vmem:[%s1049 + $0x28] sm:$0xff]
        %v3814 = vld [vmem:[%s1049 + $0x30] sm:$0xff]
        %v3815 = vld [vmem:[%s1049 + $0x38] sm:$0xff]
        %v3816 = vld [vmem:[%s1049 + $0x40] sm:$0xff]
        %v3817 = vld [vmem:[%s1049 + $0x48] sm:$0xff]
        %v3818 = vld [vmem:[%s1049 + $0x50] sm:$0xff]
        %v3819 = vld [vmem:[%s1049 + $0x58] sm:$0xff]
        %v3820 = vld [vmem:[%s1049 + $0x60] sm:$0xff]
        %v3821 = vld [vmem:[%s1049 + $0x68] sm:$0xff]
        %v3822 = vld [vmem:[%s1049 + $0x70] sm:$0xff]
        %v3823 = vld [vmem:[%s1049 + $0x78] sm:$0xff]
        %v3824 = vld [vmem:[%s1049 + $0x80] sm:$0xff]
        %v3825 = vld [vmem:[%s1049 + $0x88] sm:$0xff]
        %v3826 = vld [vmem:[%s1049 + $0x90] sm:$0xff]
        %v3827 = vld [vmem:[%s1049 + $0x98] sm:$0xff]
        %v3828 = vld [vmem:[%s1049 + $0xa0] sm:$0xff]
        %v3829 = vld [vmem:[%s1049 + $0xa8] sm:$0xff]
        %v3830 = vld [vmem:[%s1049 + $0xb0] sm:$0xff]
        %v3831 = vld [vmem:[%s1049 + $0xb8] sm:$0xff]
        %v3832 = vld [vmem:[%s1049 + $0xc0] sm:$0xff]
        %v3833 = vld [vmem:[%s1049 + $0xc8] sm:$0xff]
        %v3834 = vld [vmem:[%s1049 + $0xd0] sm:$0xff]
        %v3835 = vld [vmem:[%s1049 + $0xd8] sm:$0xff]
        %v3836 = vld [vmem:[%s1049 + $0xe0] sm:$0xff]
        %v3837 = vld [vmem:[%s1049 + $0xe8] sm:$0xff]
        %v3838 = vld [vmem:[%s1049 + $0xf0] sm:$0xff]
        %v3839 = vld [vmem:[%s1049 + $0xf8] sm:$0xff]
        %v3840 = vld [vmem:[%s1049 + $0x100] sm:$0xff]
        %v3841 = vld [vmem:[%s1049 + $0x108] sm:$0xff]
        %v3842 = vld [vmem:[%s1049 + $0x110] sm:$0xff]
        %v3843 = vld [vmem:[%s1049 + $0x118] sm:$0xff]
        %v3844 = vld [vmem:[%s1049 + $0x120] sm:$0xff]
        %v3845 = vld [vmem:[%s1049 + $0x128] sm:$0xff]
        %v3846 = vld [vmem:[%s1049 + $0x130] sm:$0xff]
        %v3847 = vld [vmem:[%s1049 + $0x138] sm:$0xff]
        %v3848 = vld [vmem:[%s1049 + $0x140] sm:$0xff]
        %v3849 = vld [vmem:[%s1049 + $0x148] sm:$0xff]
        %v3850 = vld [vmem:[%s1049 + $0x150] sm:$0xff]
        %v3851 = vld [vmem:[%s1049 + $0x158] sm:$0xff]
        %v3852 = vld [vmem:[%s1049 + $0x160] sm:$0xff]
        %v3853 = vld [vmem:[%s1049 + $0x168] sm:$0xff]
        %v3854 = vld [vmem:[%s1049 + $0x170] sm:$0xff]
        %v3855 = vld [vmem:[%s1049 + $0x178] sm:$0xff]
        %3904 = vrot.lane.b32.xlu0 %v3664, 32
        %v3905 = vpop.permute.xlu0 %3904
        %3906 = vrot.lane.b32.xlu0 %v3665, 32
        %v3907 = vpop.permute.xlu0 %3906
        %3908 = vrot.lane.b32.xlu0 %v3666, 32
        %v3909 = vpop.permute.xlu0 %3908
        %3910 = vrot.lane.b32.xlu0 %v3667, 32
        %v3911 = vpop.permute.xlu0 %3910
        %3912 = vrot.lane.b32.xlu0 %v3668, 32
        %v3913 = vpop.permute.xlu0 %3912
        %3914 = vrot.lane.b32.xlu0 %v3669, 32
        %v3915 = vpop.permute.xlu0 %3914
        %3916 = vrot.lane.b32.xlu0 %v3670, 32
        %v3917 = vpop.permute.xlu0 %3916
        %3918 = vrot.lane.b32.xlu0 %v3671, 32
        %v3919 = vpop.permute.xlu0 %3918
        %3920 = vrot.lane.b32.xlu0 %v3672, 32
        %v3921 = vpop.permute.xlu0 %3920
        %3922 = vrot.lane.b32.xlu0 %v3673, 32
        %v3923 = vpop.permute.xlu0 %3922
        %3924 = vrot.lane.b32.xlu0 %v3674, 32
        %v3925 = vpop.permute.xlu0 %3924
        %3926 = vrot.lane.b32.xlu0 %v3675, 32
        %v3927 = vpop.permute.xlu0 %3926
        %3928 = vrot.lane.b32.xlu0 %v3676, 32
        %v3929 = vpop.permute.xlu0 %3928
        %3930 = vrot.lane.b32.xlu0 %v3677, 32
        %v3931 = vpop.permute.xlu0 %3930
        %3932 = vrot.lane.b32.xlu0 %v3678, 32
        %v3933 = vpop.permute.xlu0 %3932
        %3934 = vrot.lane.b32.xlu0 %v3679, 32
        %v3935 = vpop.permute.xlu0 %3934
        %3936 = vrot.lane.b32.xlu0 %v3680, 32
        %v3937 = vpop.permute.xlu0 %3936
        %3938 = vrot.lane.b32.xlu0 %v3681, 32
        %v3939 = vpop.permute.xlu0 %3938
        %3940 = vrot.lane.b32.xlu0 %v3682, 32
        %v3941 = vpop.permute.xlu0 %3940
        %3942 = vrot.lane.b32.xlu0 %v3683, 32
        %v3943 = vpop.permute.xlu0 %3942
        %3944 = vrot.lane.b32.xlu0 %v3684, 32
        %v3945 = vpop.permute.xlu0 %3944
        %3946 = vrot.lane.b32.xlu0 %v3685, 32
        %v3947 = vpop.permute.xlu0 %3946
        %3948 = vrot.lane.b32.xlu0 %v3686, 32
        %v3949 = vpop.permute.xlu0 %3948
        %3950 = vrot.lane.b32.xlu0 %v3687, 32
        %v3951 = vpop.permute.xlu0 %3950
        %3952 = vrot.lane.b32.xlu0 %v3688, 32
        %v3953 = vpop.permute.xlu0 %3952
        %3954 = vrot.lane.b32.xlu0 %v3689, 32
        %v3955 = vpop.permute.xlu0 %3954
        %3956 = vrot.lane.b32.xlu0 %v3690, 32
        %v3957 = vpop.permute.xlu0 %3956
        %3958 = vrot.lane.b32.xlu0 %v3691, 32
        %v3959 = vpop.permute.xlu0 %3958
        %3960 = vrot.lane.b32.xlu0 %v3692, 32
        %v3961 = vpop.permute.xlu0 %3960
        %3962 = vrot.lane.b32.xlu0 %v3693, 32
        %v3963 = vpop.permute.xlu0 %3962
        %3964 = vrot.lane.b32.xlu0 %v3694, 32
        %v3965 = vpop.permute.xlu0 %3964
        %3966 = vrot.lane.b32.xlu0 %v3695, 32
        %v3967 = vpop.permute.xlu0 %3966
        %3968 = vrot.lane.b32.xlu0 %v3696, 32
        %v3969 = vpop.permute.xlu0 %3968
        %3970 = vrot.lane.b32.xlu0 %v3697, 32
        %v3971 = vpop.permute.xlu0 %3970
        %3972 = vrot.lane.b32.xlu0 %v3698, 32
        %v3973 = vpop.permute.xlu0 %3972
        %3974 = vrot.lane.b32.xlu0 %v3699, 32
        %v3975 = vpop.permute.xlu0 %3974
        %3976 = vrot.lane.b32.xlu0 %v3700, 32
        %v3977 = vpop.permute.xlu0 %3976
        %3978 = vrot.lane.b32.xlu0 %v3701, 32
        %v3979 = vpop.permute.xlu0 %3978
        %3980 = vrot.lane.b32.xlu0 %v3702, 32
        %v3981 = vpop.permute.xlu0 %3980
        %3982 = vrot.lane.b32.xlu0 %v3703, 32
        %v3983 = vpop.permute.xlu0 %3982
        %3984 = vrot.lane.b32.xlu0 %v3704, 32
        %v3985 = vpop.permute.xlu0 %3984
        %3986 = vrot.lane.b32.xlu0 %v3705, 32
        %v3987 = vpop.permute.xlu0 %3986
        %3988 = vrot.lane.b32.xlu0 %v3706, 32
        %v3989 = vpop.permute.xlu0 %3988
        %3990 = vrot.lane.b32.xlu0 %v3707, 32
        %v3991 = vpop.permute.xlu0 %3990
        %3992 = vrot.lane.b32.xlu0 %v3708, 32
        %v3993 = vpop.permute.xlu0 %3992
        %3994 = vrot.lane.b32.xlu0 %v3709, 32
        %v3995 = vpop.permute.xlu0 %3994
        %3996 = vrot.lane.b32.xlu0 %v3710, 32
        %v3997 = vpop.permute.xlu0 %3996
        %3998 = vrot.lane.b32.xlu0 %v3711, 32
        %v3999 = vpop.permute.xlu0 %3998
        %4096 = vrot.lane.b32.xlu0 %v3712, 64
        %v4097 = vpop.permute.xlu0 %4096
        %4098 = vrot.lane.b32.xlu0 %v3713, 64
        %v4099 = vpop.permute.xlu0 %4098
        %4100 = vrot.lane.b32.xlu0 %v3714, 64
        %v4101 = vpop.permute.xlu0 %4100
        %4102 = vrot.lane.b32.xlu0 %v3715, 64
        %v4103 = vpop.permute.xlu0 %4102
        %4104 = vrot.lane.b32.xlu0 %v3716, 64
        %v4105 = vpop.permute.xlu0 %4104
        %4106 = vrot.lane.b32.xlu0 %v3717, 64
        %v4107 = vpop.permute.xlu0 %4106
        %4108 = vrot.lane.b32.xlu0 %v3718, 64
        %v4109 = vpop.permute.xlu0 %4108
        %4110 = vrot.lane.b32.xlu0 %v3719, 64
        %v4111 = vpop.permute.xlu0 %4110
        %4112 = vrot.lane.b32.xlu0 %v3720, 64
        %v4113 = vpop.permute.xlu0 %4112
        %4114 = vrot.lane.b32.xlu0 %v3721, 64
        %v4115 = vpop.permute.xlu0 %4114
        %4116 = vrot.lane.b32.xlu0 %v3722, 64
        %v4117 = vpop.permute.xlu0 %4116
        %4118 = vrot.lane.b32.xlu0 %v3723, 64
        %v4119 = vpop.permute.xlu0 %4118
        %4120 = vrot.lane.b32.xlu0 %v3724, 64
        %v4121 = vpop.permute.xlu0 %4120
        %4122 = vrot.lane.b32.xlu0 %v3725, 64
        %v4123 = vpop.permute.xlu0 %4122
        %4124 = vrot.lane.b32.xlu0 %v3726, 64
        %v4125 = vpop.permute.xlu0 %4124
        %4126 = vrot.lane.b32.xlu0 %v3727, 64
        %v4127 = vpop.permute.xlu0 %4126
        %4128 = vrot.lane.b32.xlu0 %v3728, 64
        %v4129 = vpop.permute.xlu0 %4128
        %4130 = vrot.lane.b32.xlu0 %v3729, 64
        %v4131 = vpop.permute.xlu0 %4130
        %4132 = vrot.lane.b32.xlu0 %v3730, 64
        %v4133 = vpop.permute.xlu0 %4132
        %4134 = vrot.lane.b32.xlu0 %v3731, 64
        %v4135 = vpop.permute.xlu0 %4134
        %4136 = vrot.lane.b32.xlu0 %v3732, 64
        %v4137 = vpop.permute.xlu0 %4136
        %4138 = vrot.lane.b32.xlu0 %v3733, 64
        %v4139 = vpop.permute.xlu0 %4138
        %4140 = vrot.lane.b32.xlu0 %v3734, 64
        %v4141 = vpop.permute.xlu0 %4140
        %4142 = vrot.lane.b32.xlu0 %v3735, 64
        %v4143 = vpop.permute.xlu0 %4142
        %4144 = vrot.lane.b32.xlu0 %v3736, 64
        %v4145 = vpop.permute.xlu0 %4144
        %4146 = vrot.lane.b32.xlu0 %v3737, 64
        %v4147 = vpop.permute.xlu0 %4146
        %4148 = vrot.lane.b32.xlu0 %v3738, 64
        %v4149 = vpop.permute.xlu0 %4148
        %4150 = vrot.lane.b32.xlu0 %v3739, 64
        %v4151 = vpop.permute.xlu0 %4150
        %4152 = vrot.lane.b32.xlu0 %v3740, 64
        %v4153 = vpop.permute.xlu0 %4152
        %4154 = vrot.lane.b32.xlu0 %v3741, 64
        %v4155 = vpop.permute.xlu0 %4154
        %4156 = vrot.lane.b32.xlu0 %v3742, 64
        %v4157 = vpop.permute.xlu0 %4156
        %4158 = vrot.lane.b32.xlu0 %v3743, 64
        %v4159 = vpop.permute.xlu0 %4158
        %4160 = vrot.lane.b32.xlu0 %v3744, 64
        %v4161 = vpop.permute.xlu0 %4160
        %4162 = vrot.lane.b32.xlu0 %v3745, 64
        %v4163 = vpop.permute.xlu0 %4162
        %4164 = vrot.lane.b32.xlu0 %v3746, 64
        %v4165 = vpop.permute.xlu0 %4164
        %4166 = vrot.lane.b32.xlu0 %v3747, 64
        %v4167 = vpop.permute.xlu0 %4166
        %4168 = vrot.lane.b32.xlu0 %v3748, 64
        %v4169 = vpop.permute.xlu0 %4168
        %4170 = vrot.lane.b32.xlu0 %v3749, 64
        %v4171 = vpop.permute.xlu0 %4170
        %4172 = vrot.lane.b32.xlu0 %v3750, 64
        %v4173 = vpop.permute.xlu0 %4172
        %4174 = vrot.lane.b32.xlu0 %v3751, 64
        %v4175 = vpop.permute.xlu0 %4174
        %4176 = vrot.lane.b32.xlu0 %v3752, 64
        %v4177 = vpop.permute.xlu0 %4176
        %4178 = vrot.lane.b32.xlu0 %v3753, 64
        %v4179 = vpop.permute.xlu0 %4178
        %4180 = vrot.lane.b32.xlu0 %v3754, 64
        %v4181 = vpop.permute.xlu0 %4180
        %4182 = vrot.lane.b32.xlu0 %v3755, 64
        %v4183 = vpop.permute.xlu0 %4182
        %4184 = vrot.lane.b32.xlu0 %v3756, 64
        %v4185 = vpop.permute.xlu0 %4184
        %4186 = vrot.lane.b32.xlu0 %v3757, 64
        %v4187 = vpop.permute.xlu0 %4186
        %4188 = vrot.lane.b32.xlu0 %v3758, 64
        %v4189 = vpop.permute.xlu0 %4188
        %4190 = vrot.lane.b32.xlu0 %v3759, 64
        %v4191 = vpop.permute.xlu0 %4190
        %4288 = vrot.lane.b32.xlu0 %v3760, 96
        %v4289 = vpop.permute.xlu0 %4288
        %4290 = vrot.lane.b32.xlu0 %v3761, 96
        %v4291 = vpop.permute.xlu0 %4290
        %4292 = vrot.lane.b32.xlu0 %v3762, 96
        %v4293 = vpop.permute.xlu0 %4292
        %4294 = vrot.lane.b32.xlu0 %v3763, 96
        %v4295 = vpop.permute.xlu0 %4294
        %4296 = vrot.lane.b32.xlu0 %v3764, 96
        %v4297 = vpop.permute.xlu0 %4296
        %4298 = vrot.lane.b32.xlu0 %v3765, 96
        %v4299 = vpop.permute.xlu0 %4298
        %4300 = vrot.lane.b32.xlu0 %v3766, 96
        %v4301 = vpop.permute.xlu0 %4300
        %4302 = vrot.lane.b32.xlu0 %v3767, 96
        %v4303 = vpop.permute.xlu0 %4302
        %4304 = vrot.lane.b32.xlu0 %v3768, 96
        %v4305 = vpop.permute.xlu0 %4304
        %4306 = vrot.lane.b32.xlu0 %v3769, 96
        %v4307 = vpop.permute.xlu0 %4306
        %4308 = vrot.lane.b32.xlu0 %v3770, 96
        %v4309 = vpop.permute.xlu0 %4308
        %4310 = vrot.lane.b32.xlu0 %v3771, 96
        %v4311 = vpop.permute.xlu0 %4310
        %4312 = vrot.lane.b32.xlu0 %v3772, 96
        %v4313 = vpop.permute.xlu0 %4312
        %4314 = vrot.lane.b32.xlu0 %v3773, 96
        %v4315 = vpop.permute.xlu0 %4314
        %4316 = vrot.lane.b32.xlu0 %v3774, 96
        %v4317 = vpop.permute.xlu0 %4316
        %4318 = vrot.lane.b32.xlu0 %v3775, 96
        %v4319 = vpop.permute.xlu0 %4318
        %4320 = vrot.lane.b32.xlu0 %v3776, 96
        %v4321 = vpop.permute.xlu0 %4320
        %4322 = vrot.lane.b32.xlu0 %v3777, 96
        %v4323 = vpop.permute.xlu0 %4322
        %4324 = vrot.lane.b32.xlu0 %v3778, 96
        %v4325 = vpop.permute.xlu0 %4324
        %4326 = vrot.lane.b32.xlu0 %v3779, 96
        %v4327 = vpop.permute.xlu0 %4326
        %4328 = vrot.lane.b32.xlu0 %v3780, 96
        %v4329 = vpop.permute.xlu0 %4328
        %4330 = vrot.lane.b32.xlu0 %v3781, 96
        %v4331 = vpop.permute.xlu0 %4330
        %4332 = vrot.lane.b32.xlu0 %v3782, 96
        %v4333 = vpop.permute.xlu0 %4332
        %4334 = vrot.lane.b32.xlu0 %v3783, 96
        %v4335 = vpop.permute.xlu0 %4334
        %4336 = vrot.lane.b32.xlu0 %v3784, 96
        %v4337 = vpop.permute.xlu0 %4336
        %4338 = vrot.lane.b32.xlu0 %v3785, 96
        %v4339 = vpop.permute.xlu0 %4338
        %4340 = vrot.lane.b32.xlu0 %v3786, 96
        %v4341 = vpop.permute.xlu0 %4340
        %4342 = vrot.lane.b32.xlu0 %v3787, 96
        %v4343 = vpop.permute.xlu0 %4342
        %4344 = vrot.lane.b32.xlu0 %v3788, 96
        %v4345 = vpop.permute.xlu0 %4344
        %4346 = vrot.lane.b32.xlu0 %v3789, 96
        %v4347 = vpop.permute.xlu0 %4346
        %4348 = vrot.lane.b32.xlu0 %v3790, 96
        %v4349 = vpop.permute.xlu0 %4348
        %4350 = vrot.lane.b32.xlu0 %v3791, 96
        %v4351 = vpop.permute.xlu0 %4350
        %4352 = vrot.lane.b32.xlu0 %v3792, 96
        %v4353 = vpop.permute.xlu0 %4352
        %4354 = vrot.lane.b32.xlu0 %v3793, 96
        %v4355 = vpop.permute.xlu0 %4354
        %4356 = vrot.lane.b32.xlu0 %v3794, 96
        %v4357 = vpop.permute.xlu0 %4356
        %4358 = vrot.lane.b32.xlu0 %v3795, 96
        %v4359 = vpop.permute.xlu0 %4358
        %4360 = vrot.lane.b32.xlu0 %v3796, 96
        %v4361 = vpop.permute.xlu0 %4360
        %4362 = vrot.lane.b32.xlu0 %v3797, 96
        %v4363 = vpop.permute.xlu0 %4362
        %4364 = vrot.lane.b32.xlu0 %v3798, 96
        %v4365 = vpop.permute.xlu0 %4364
        %4366 = vrot.lane.b32.xlu0 %v3799, 96
        %v4367 = vpop.permute.xlu0 %4366
        %4368 = vrot.lane.b32.xlu0 %v3800, 96
        %v4369 = vpop.permute.xlu0 %4368
        %4370 = vrot.lane.b32.xlu0 %v3801, 96
        %v4371 = vpop.permute.xlu0 %4370
        %4372 = vrot.lane.b32.xlu0 %v3802, 96
        %v4373 = vpop.permute.xlu0 %4372
        %4374 = vrot.lane.b32.xlu0 %v3803, 96
        %v4375 = vpop.permute.xlu0 %4374
        %4376 = vrot.lane.b32.xlu0 %v3804, 96
        %v4377 = vpop.permute.xlu0 %4376
        %4378 = vrot.lane.b32.xlu0 %v3805, 96
        %v4379 = vpop.permute.xlu0 %4378
        %4380 = vrot.lane.b32.xlu0 %v3806, 96
        %v4381 = vpop.permute.xlu0 %4380
        %4382 = vrot.lane.b32.xlu0 %v3807, 96
        %v4383 = vpop.permute.xlu0 %4382
        %v4432 = vsel %vm224, %v3616, %v3905
        %v4433 = vsel %vm224, %v3617, %v3907
        %v4434 = vsel %vm224, %v3618, %v3909
        %v4435 = vsel %vm224, %v3619, %v3911
        %v4436 = vsel %vm224, %v3620, %v3913
        %v4437 = vsel %vm224, %v3621, %v3915
        %v4438 = vsel %vm224, %v3622, %v3917
        %v4439 = vsel %vm224, %v3623, %v3919
        %v4440 = vsel %vm224, %v3624, %v3921
        %v4441 = vsel %vm224, %v3625, %v3923
        %v4442 = vsel %vm224, %v3626, %v3925
        %v4443 = vsel %vm224, %v3627, %v3927
        %v4444 = vsel %vm224, %v3628, %v3929
        %v4445 = vsel %vm224, %v3629, %v3931
        %v4446 = vsel %vm224, %v3630, %v3933
        %v4447 = vsel %vm224, %v3631, %v3935
        %v4448 = vsel %vm224, %v3632, %v3937
        %v4449 = vsel %vm224, %v3633, %v3939
        %v4450 = vsel %vm224, %v3634, %v3941
        %v4451 = vsel %vm224, %v3635, %v3943
        %v4452 = vsel %vm224, %v3636, %v3945
        %v4453 = vsel %vm224, %v3637, %v3947
        %v4454 = vsel %vm224, %v3638, %v3949
        %v4455 = vsel %vm224, %v3639, %v3951
        %v4456 = vsel %vm224, %v3640, %v3953
        %v4457 = vsel %vm224, %v3641, %v3955
        %v4458 = vsel %vm224, %v3642, %v3957
        %v4459 = vsel %vm224, %v3643, %v3959
        %v4460 = vsel %vm224, %v3644, %v3961
        %v4461 = vsel %vm224, %v3645, %v3963
        %v4462 = vsel %vm224, %v3646, %v3965
        %v4463 = vsel %vm224, %v3647, %v3967
        %v4464 = vsel %vm224, %v3648, %v3969
        %v4465 = vsel %vm224, %v3649, %v3971
        %v4466 = vsel %vm224, %v3650, %v3973
        %v4467 = vsel %vm224, %v3651, %v3975
        %v4468 = vsel %vm224, %v3652, %v3977
        %v4469 = vsel %vm224, %v3653, %v3979
        %v4470 = vsel %vm224, %v3654, %v3981
        %v4471 = vsel %vm224, %v3655, %v3983
        %v4472 = vsel %vm224, %v3656, %v3985
        %v4473 = vsel %vm224, %v3657, %v3987
        %v4474 = vsel %vm224, %v3658, %v3989
        %v4475 = vsel %vm224, %v3659, %v3991
        %v4476 = vsel %vm224, %v3660, %v3993
        %v4477 = vsel %vm224, %v3661, %v3995
        %v4478 = vsel %vm224, %v3662, %v3997
        %v4479 = vsel %vm224, %v3663, %v3999
        %v4480 = vsel %vm1722, %v4432, %v4097
        %v4481 = vsel %vm1722, %v4433, %v4099
        %v4482 = vsel %vm1722, %v4434, %v4101
        %v4483 = vsel %vm1722, %v4435, %v4103
        %v4484 = vsel %vm1722, %v4436, %v4105
        %v4485 = vsel %vm1722, %v4437, %v4107
        %v4486 = vsel %vm1722, %v4438, %v4109
        %v4487 = vsel %vm1722, %v4439, %v4111
        %v4488 = vsel %vm1722, %v4440, %v4113
        %v4489 = vsel %vm1722, %v4441, %v4115
        %v4490 = vsel %vm1722, %v4442, %v4117
        %v4491 = vsel %vm1722, %v4443, %v4119
        %v4492 = vsel %vm1722, %v4444, %v4121
        %v4493 = vsel %vm1722, %v4445, %v4123
        %v4494 = vsel %vm1722, %v4446, %v4125
        %v4495 = vsel %vm1722, %v4447, %v4127
        %v4496 = vsel %vm1722, %v4448, %v4129
        %v4497 = vsel %vm1722, %v4449, %v4131
        %v4498 = vsel %vm1722, %v4450, %v4133
        %v4499 = vsel %vm1722, %v4451, %v4135
        %v4500 = vsel %vm1722, %v4452, %v4137
        %v4501 = vsel %vm1722, %v4453, %v4139
        %v4502 = vsel %vm1722, %v4454, %v4141
        %v4503 = vsel %vm1722, %v4455, %v4143
        %v4504 = vsel %vm1722, %v4456, %v4145
        %v4505 = vsel %vm1722, %v4457, %v4147
        %v4506 = vsel %vm1722, %v4458, %v4149
        %v4507 = vsel %vm1722, %v4459, %v4151
        %v4508 = vsel %vm1722, %v4460, %v4153
        %v4509 = vsel %vm1722, %v4461, %v4155
        %v4510 = vsel %vm1722, %v4462, %v4157
        %v4511 = vsel %vm1722, %v4463, %v4159
        %v4512 = vsel %vm1722, %v4464, %v4161
        %v4513 = vsel %vm1722, %v4465, %v4163
        %v4514 = vsel %vm1722, %v4466, %v4165
        %v4515 = vsel %vm1722, %v4467, %v4167
        %v4516 = vsel %vm1722, %v4468, %v4169
        %v4517 = vsel %vm1722, %v4469, %v4171
        %v4518 = vsel %vm1722, %v4470, %v4173
        %v4519 = vsel %vm1722, %v4471, %v4175
        %v4520 = vsel %vm1722, %v4472, %v4177
        %v4521 = vsel %vm1722, %v4473, %v4179
        %v4522 = vsel %vm1722, %v4474, %v4181
        %v4523 = vsel %vm1722, %v4475, %v4183
        %v4524 = vsel %vm1722, %v4476, %v4185
        %v4525 = vsel %vm1722, %v4477, %v4187
        %v4526 = vsel %vm1722, %v4478, %v4189
        %v4527 = vsel %vm1722, %v4479, %v4191
        %v4528 = vsel %vm1771, %v4480, %v4289
        %v4529 = vsel %vm1771, %v4481, %v4291
        %v4530 = vsel %vm1771, %v4482, %v4293
        %v4531 = vsel %vm1771, %v4483, %v4295
        %v4532 = vsel %vm1771, %v4484, %v4297
        %v4533 = vsel %vm1771, %v4485, %v4299
        %v4534 = vsel %vm1771, %v4486, %v4301
        %v4535 = vsel %vm1771, %v4487, %v4303
        %v4536 = vsel %vm1771, %v4488, %v4305
        %v4537 = vsel %vm1771, %v4489, %v4307
        %v4538 = vsel %vm1771, %v4490, %v4309
        %v4539 = vsel %vm1771, %v4491, %v4311
        %v4540 = vsel %vm1771, %v4492, %v4313
        %v4541 = vsel %vm1771, %v4493, %v4315
        %v4542 = vsel %vm1771, %v4494, %v4317
        %v4543 = vsel %vm1771, %v4495, %v4319
        %v4544 = vsel %vm1771, %v4496, %v4321
        %v4545 = vsel %vm1771, %v4497, %v4323
        %v4546 = vsel %vm1771, %v4498, %v4325
        %v4547 = vsel %vm1771, %v4499, %v4327
        %v4548 = vsel %vm1771, %v4500, %v4329
        %v4549 = vsel %vm1771, %v4501, %v4331
        %v4550 = vsel %vm1771, %v4502, %v4333
        %v4551 = vsel %vm1771, %v4503, %v4335
        %v4552 = vsel %vm1771, %v4504, %v4337
        %v4553 = vsel %vm1771, %v4505, %v4339
        %v4554 = vsel %vm1771, %v4506, %v4341
        %v4555 = vsel %vm1771, %v4507, %v4343
        %v4556 = vsel %vm1771, %v4508, %v4345
        %v4557 = vsel %vm1771, %v4509, %v4347
        %v4558 = vsel %vm1771, %v4510, %v4349
        %v4559 = vsel %vm1771, %v4511, %v4351
        %v4560 = vsel %vm1771, %v4512, %v4353
        %v4561 = vsel %vm1771, %v4513, %v4355
        %v4562 = vsel %vm1771, %v4514, %v4357
        %v4563 = vsel %vm1771, %v4515, %v4359
        %v4564 = vsel %vm1771, %v4516, %v4361
        %v4565 = vsel %vm1771, %v4517, %v4363
        %v4566 = vsel %vm1771, %v4518, %v4365
        %v4567 = vsel %vm1771, %v4519, %v4367
        %v4568 = vsel %vm1771, %v4520, %v4369
        %v4569 = vsel %vm1771, %v4521, %v4371
        %v4570 = vsel %vm1771, %v4522, %v4373
        %v4571 = vsel %vm1771, %v4523, %v4375
        %v4572 = vsel %vm1771, %v4524, %v4377
        %v4573 = vsel %vm1771, %v4525, %v4379
        %v4574 = vsel %vm1771, %v4526, %v4381
        %v4575 = vsel %vm1771, %v4527, %v4383
        %s4576 = scalar_lea.vmem [#allocation6], 320
        %v4577 = vld [vmem:[%s4576] sm:$0xff]
        %v4578 = vld [vmem:[%s4576 + $0x8] sm:$0xff]
        %v4579 = vld [vmem:[%s4576 + $0x10] sm:$0xff]
        %v4580 = vld [vmem:[%s4576 + $0x18] sm:$0xff]
        %v4581 = vld [vmem:[%s4576 + $0x20] sm:$0xff]
        %v4582 = vld [vmem:[%s4576 + $0x28] sm:$0xff]
        %v4583 = vld [vmem:[%s4576 + $0x30] sm:$0xff]
        %v4584 = vld [vmem:[%s4576 + $0x38] sm:$0xff]
        %v4585 = vld [vmem:[%s4576 + $0x40] sm:$0xff]
        %v4586 = vld [vmem:[%s4576 + $0x48] sm:$0xff]
        %v4587 = vld [vmem:[%s4576 + $0x50] sm:$0xff]
        %v4588 = vld [vmem:[%s4576 + $0x58] sm:$0xff]
        %v4589 = vld [vmem:[%s4576 + $0x60] sm:$0xff]
        %v4590 = vld [vmem:[%s4576 + $0x68] sm:$0xff]
        %v4591 = vld [vmem:[%s4576 + $0x70] sm:$0xff]
        %v4592 = vld [vmem:[%s4576 + $0x78] sm:$0xff]
        %v4593 = vld [vmem:[%s4576 + $0x80] sm:$0xff]
        %v4594 = vld [vmem:[%s4576 + $0x88] sm:$0xff]
        %v4595 = vld [vmem:[%s4576 + $0x90] sm:$0xff]
        %v4596 = vld [vmem:[%s4576 + $0x98] sm:$0xff]
        %v4597 = vld [vmem:[%s4576 + $0xa0] sm:$0xff]
        %v4598 = vld [vmem:[%s4576 + $0xa8] sm:$0xff]
        %v4599 = vld [vmem:[%s4576 + $0xb0] sm:$0xff]
        %v4600 = vld [vmem:[%s4576 + $0xb8] sm:$0xff]
        %v4601 = vld [vmem:[%s4576 + $0xc0] sm:$0xff]
        %v4602 = vld [vmem:[%s4576 + $0xc8] sm:$0xff]
        %v4603 = vld [vmem:[%s4576 + $0xd0] sm:$0xff]
        %v4604 = vld [vmem:[%s4576 + $0xd8] sm:$0xff]
        %v4605 = vld [vmem:[%s4576 + $0xe0] sm:$0xff]
        %v4606 = vld [vmem:[%s4576 + $0xe8] sm:$0xff]
        %v4607 = vld [vmem:[%s4576 + $0xf0] sm:$0xff]
        %v4608 = vld [vmem:[%s4576 + $0xf8] sm:$0xff]
        %v4609 = vld [vmem:[%s4576 + $0x100] sm:$0xff]
        %v4610 = vld [vmem:[%s4576 + $0x108] sm:$0xff]
        %v4611 = vld [vmem:[%s4576 + $0x110] sm:$0xff]
        %v4612 = vld [vmem:[%s4576 + $0x118] sm:$0xff]
        %v4613 = vld [vmem:[%s4576 + $0x120] sm:$0xff]
        %v4614 = vld [vmem:[%s4576 + $0x128] sm:$0xff]
        %v4615 = vld [vmem:[%s4576 + $0x130] sm:$0xff]
        %v4616 = vld [vmem:[%s4576 + $0x138] sm:$0xff]
        %v4618 = vsel %vm224, %v3808, 0
        %v4621 = vsel %vm224, %v3809, 0
        %v4624 = vsel %vm224, %v3810, 0
        %v4627 = vsel %vm224, %v3811, 0
        %v4630 = vsel %vm224, %v3812, 0
        %v4633 = vsel %vm224, %v3813, 0
        %v4636 = vsel %vm224, %v3814, 0
        %v4639 = vsel %vm224, %v3815, 0
        %v4642 = vsel %vm224, %v3816, 0
        %v4645 = vsel %vm224, %v3817, 0
        %v4648 = vsel %vm224, %v3818, 0
        %v4651 = vsel %vm224, %v3819, 0
        %v4654 = vsel %vm224, %v3820, 0
        %v4657 = vsel %vm224, %v3821, 0
        %v4660 = vsel %vm224, %v3822, 0
        %v4663 = vsel %vm224, %v3823, 0
        %v4666 = vsel %vm224, %v3824, 0
        %v4669 = vsel %vm224, %v3825, 0
        %v4672 = vsel %vm224, %v3826, 0
        %v4675 = vsel %vm224, %v3827, 0
        %v4678 = vsel %vm224, %v3828, 0
        %v4681 = vsel %vm224, %v3829, 0
        %v4684 = vsel %vm224, %v3830, 0
        %v4687 = vsel %vm224, %v3831, 0
        %v4690 = vsel %vm224, %v3832, 0
        %v4693 = vsel %vm224, %v3833, 0
        %v4696 = vsel %vm224, %v3834, 0
        %v4699 = vsel %vm224, %v3835, 0
        %v4702 = vsel %vm224, %v3836, 0
        %v4705 = vsel %vm224, %v3837, 0
        %v4708 = vsel %vm224, %v3838, 0
        %v4711 = vsel %vm224, %v3839, 0
        %v4714 = vsel %vm224, %v3840, 0
        %v4717 = vsel %vm224, %v3841, 0
        %v4720 = vsel %vm224, %v3842, 0
        %v4723 = vsel %vm224, %v3843, 0
        %v4726 = vsel %vm224, %v3844, 0
        %v4729 = vsel %vm224, %v3845, 0
        %v4732 = vsel %vm224, %v3846, 0
        %v4735 = vsel %vm224, %v3847, 0
        %v4738 = vsel %vm224, %v3848, 0
        %v4741 = vsel %vm224, %v3849, 0
        %v4744 = vsel %vm224, %v3850, 0
        %v4747 = vsel %vm224, %v3851, 0
        %v4750 = vsel %vm224, %v3852, 0
        %v4753 = vsel %vm224, %v3853, 0
        %v4756 = vsel %vm224, %v3854, 0
        %v4759 = vsel %vm224, %v3855, 0
        %4761 = vmatpush.msra.mxu0 %v4607
        %4762 = vmatpush.msra.mxu0 %v4605
        %4763 = vmatpush.msra.mxu0 %v4603
        %4764 = vmatpush.msra.mxu0 %v4601
        %4765 = vmatpush.msra.mxu0 %v4599
        %4766 = vmatpush.msra.mxu0 %v4597
        %4767 = vmatpush.msra.mxu0 %v4595
        %4768 = vmatpush.msra.mxu0 %v4593
        %4769 = vmatpush.msra.mxu0 %v4591
        %4770 = vmatpush.msra.mxu0 %v4589
        %4771 = vmatpush.msra.mxu0 %v4587
        %4772 = vmatpush.msra.mxu0 %v4585
        %4773 = vmatpush.msra.mxu0 %v4583
        %4774 = vmatpush.msra.mxu0 %v4581
        %4775 = vmatpush.msra.mxu0 %v4579
        %4776 = vmatpush.msra.mxu0 %v4577
        %4777 = vmatmul.f32.gmra.mxu0 %v4528
        %v4778 = vpop.f32.mrf.mxu0
        %v4779 = vadd.f32 0.0, %v4778
        %4780 = vmatmul.f32.gmra.mxu0 %v4529
        %v4781 = vpop.f32.mrf.mxu0
        %v4782 = vadd.f32 0.0, %v4781
        %4783 = vmatmul.f32.gmra.mxu0 %v4530
        %v4784 = vpop.f32.mrf.mxu0
        %v4785 = vadd.f32 0.0, %v4784
        %4786 = vmatmul.f32.gmra.mxu0 %v4531
        %v4787 = vpop.f32.mrf.mxu0
        %v4788 = vadd.f32 0.0, %v4787
        %4789 = vmatmul.f32.gmra.mxu0 %v4532
        %v4790 = vpop.f32.mrf.mxu0
        %v4791 = vadd.f32 0.0, %v4790
        %4792 = vmatmul.f32.gmra.mxu0 %v4533
        %v4793 = vpop.f32.mrf.mxu0
        %v4794 = vadd.f32 0.0, %v4793
        %4795 = vmatmul.f32.gmra.mxu0 %v4534
        %v4796 = vpop.f32.mrf.mxu0
        %v4797 = vadd.f32 0.0, %v4796
        %4798 = vmatmul.f32.gmra.mxu0 %v4535
        %v4799 = vpop.f32.mrf.mxu0
        %v4800 = vadd.f32 0.0, %v4799
        %4801 = vmatmul.f32.gmra.mxu0 %v4536
        %v4802 = vpop.f32.mrf.mxu0
        %v4803 = vadd.f32 0.0, %v4802
        %4804 = vmatmul.f32.gmra.mxu0 %v4537
        %v4805 = vpop.f32.mrf.mxu0
        %v4806 = vadd.f32 0.0, %v4805
        %4807 = vmatmul.f32.gmra.mxu0 %v4538
        %v4808 = vpop.f32.mrf.mxu0
        %v4809 = vadd.f32 0.0, %v4808
        %4810 = vmatmul.f32.gmra.mxu0 %v4539
        %v4811 = vpop.f32.mrf.mxu0
        %v4812 = vadd.f32 0.0, %v4811
        %4813 = vmatmul.f32.gmra.mxu0 %v4540
        %v4814 = vpop.f32.mrf.mxu0
        %v4815 = vadd.f32 0.0, %v4814
        %4816 = vmatmul.f32.gmra.mxu0 %v4541
        %v4817 = vpop.f32.mrf.mxu0
        %v4818 = vadd.f32 0.0, %v4817
        %4819 = vmatmul.f32.gmra.mxu0 %v4542
        %v4820 = vpop.f32.mrf.mxu0
        %v4821 = vadd.f32 0.0, %v4820
        %4822 = vmatmul.f32.gmra.mxu0 %v4543
        %v4823 = vpop.f32.mrf.mxu0
        %v4824 = vadd.f32 0.0, %v4823
        %4825 = vmatmul.f32.gmra.mxu0 %v4544
        %v4826 = vpop.f32.mrf.mxu0
        %v4827 = vadd.f32 0.0, %v4826
        %4828 = vmatmul.f32.gmra.mxu0 %v4545
        %v4829 = vpop.f32.mrf.mxu0
        %v4830 = vadd.f32 0.0, %v4829
        %4831 = vmatmul.f32.gmra.mxu0 %v4546
        %v4832 = vpop.f32.mrf.mxu0
        %v4833 = vadd.f32 0.0, %v4832
        %4834 = vmatmul.f32.gmra.mxu0 %v4547
        %v4835 = vpop.f32.mrf.mxu0
        %v4836 = vadd.f32 0.0, %v4835
        %4837 = vmatmul.f32.gmra.mxu0 %v4548
        %v4838 = vpop.f32.mrf.mxu0
        %v4839 = vadd.f32 0.0, %v4838
        %4840 = vmatmul.f32.gmra.mxu0 %v4549
        %v4841 = vpop.f32.mrf.mxu0
        %v4842 = vadd.f32 0.0, %v4841
        %4843 = vmatmul.f32.gmra.mxu0 %v4550
        %v4844 = vpop.f32.mrf.mxu0
        %v4845 = vadd.f32 0.0, %v4844
        %4846 = vmatmul.f32.gmra.mxu0 %v4551
        %v4847 = vpop.f32.mrf.mxu0
        %v4848 = vadd.f32 0.0, %v4847
        %4849 = vmatmul.f32.gmra.mxu0 %v4552
        %v4850 = vpop.f32.mrf.mxu0
        %v4851 = vadd.f32 0.0, %v4850
        %4852 = vmatmul.f32.gmra.mxu0 %v4553
        %v4853 = vpop.f32.mrf.mxu0
        %v4854 = vadd.f32 0.0, %v4853
        %4855 = vmatmul.f32.gmra.mxu0 %v4554
        %v4856 = vpop.f32.mrf.mxu0
        %v4857 = vadd.f32 0.0, %v4856
        %4858 = vmatmul.f32.gmra.mxu0 %v4555
        %v4859 = vpop.f32.mrf.mxu0
        %v4860 = vadd.f32 0.0, %v4859
        %4861 = vmatmul.f32.gmra.mxu0 %v4556
        %v4862 = vpop.f32.mrf.mxu0
        %v4863 = vadd.f32 0.0, %v4862
        %4864 = vmatmul.f32.gmra.mxu0 %v4557
        %v4865 = vpop.f32.mrf.mxu0
        %v4866 = vadd.f32 0.0, %v4865
        %4867 = vmatmul.f32.gmra.mxu0 %v4558
        %v4868 = vpop.f32.mrf.mxu0
        %v4869 = vadd.f32 0.0, %v4868
        %4870 = vmatmul.f32.gmra.mxu0 %v4559
        %v4871 = vpop.f32.mrf.mxu0
        %v4872 = vadd.f32 0.0, %v4871
        %4873 = vmatmul.f32.gmra.mxu0 %v4560
        %v4874 = vpop.f32.mrf.mxu0
        %v4875 = vadd.f32 0.0, %v4874
        %4876 = vmatmul.f32.gmra.mxu0 %v4561
        %v4877 = vpop.f32.mrf.mxu0
        %v4878 = vadd.f32 0.0, %v4877
        %4879 = vmatmul.f32.gmra.mxu0 %v4562
        %v4880 = vpop.f32.mrf.mxu0
        %v4881 = vadd.f32 0.0, %v4880
        %4882 = vmatmul.f32.gmra.mxu0 %v4563
        %v4883 = vpop.f32.mrf.mxu0
        %v4884 = vadd.f32 0.0, %v4883
        %4885 = vmatmul.f32.gmra.mxu0 %v4564
        %v4886 = vpop.f32.mrf.mxu0
        %v4887 = vadd.f32 0.0, %v4886
        %4888 = vmatmul.f32.gmra.mxu0 %v4565
        %v4889 = vpop.f32.mrf.mxu0
        %v4890 = vadd.f32 0.0, %v4889
        %4891 = vmatmul.f32.gmra.mxu0 %v4566
        %v4892 = vpop.f32.mrf.mxu0
        %v4893 = vadd.f32 0.0, %v4892
        %4894 = vmatmul.f32.gmra.mxu0 %v4567
        %v4895 = vpop.f32.mrf.mxu0
        %v4896 = vadd.f32 0.0, %v4895
        %4897 = vmatmul.f32.gmra.mxu0 %v4568
        %v4898 = vpop.f32.mrf.mxu0
        %v4899 = vadd.f32 0.0, %v4898
        %4900 = vmatmul.f32.gmra.mxu0 %v4569
        %v4901 = vpop.f32.mrf.mxu0
        %v4902 = vadd.f32 0.0, %v4901
        %4903 = vmatmul.f32.gmra.mxu0 %v4570
        %v4904 = vpop.f32.mrf.mxu0
        %v4905 = vadd.f32 0.0, %v4904
        %4906 = vmatmul.f32.gmra.mxu0 %v4571
        %v4907 = vpop.f32.mrf.mxu0
        %v4908 = vadd.f32 0.0, %v4907
        %4909 = vmatmul.f32.gmra.mxu0 %v4572
        %v4910 = vpop.f32.mrf.mxu0
        %v4911 = vadd.f32 0.0, %v4910
        %4912 = vmatmul.f32.gmra.mxu0 %v4573
        %v4913 = vpop.f32.mrf.mxu0
        %v4914 = vadd.f32 0.0, %v4913
        %4915 = vmatmul.f32.gmra.mxu0 %v4574
        %v4916 = vpop.f32.mrf.mxu0
        %v4917 = vadd.f32 0.0, %v4916
        %4918 = vmatmul.f32.gmra.mxu0 %v4575
        %v4919 = vpop.f32.mrf.mxu0
        %v4920 = vadd.f32 0.0, %v4919
        %4921 = vdwg.mxu0
        %4922 = vmatpush.msra.mxu0 0.0
        %4923 = vmatpush.msra.mxu0 0.0
        %4924 = vmatpush.msra.mxu0 0.0
        %4925 = vmatpush.msra.mxu0 0.0
        %4926 = vmatpush.msra.mxu0 0.0
        %4927 = vmatpush.msra.mxu0 0.0
        %4928 = vmatpush.msra.mxu0 0.0
        %4929 = vmatpush.msra.mxu0 0.0
        %4930 = vmatpush.msra.mxu0 0.0
        %4931 = vmatpush.msra.mxu0 0.0
        %4932 = vmatpush.msra.mxu0 0.0
        %4933 = vmatpush.msra.mxu0 0.0
        %4934 = vmatpush.msra.mxu0 %v4615
        %4935 = vmatpush.msra.mxu0 %v4613
        %4936 = vmatpush.msra.mxu0 %v4611
        %4937 = vmatpush.msra.mxu0 %v4609
        %4938 = vmatmul.f32.gmra.mxu0 %v4618
        %v4939 = vpop.f32.mrf.mxu0
        %v4940 = vadd.f32 %v4779, %v4939
        %4941 = vmatmul.f32.gmra.mxu0 %v4621
        %v4942 = vpop.f32.mrf.mxu0
        %v4943 = vadd.f32 %v4782, %v4942
        %4944 = vmatmul.f32.gmra.mxu0 %v4624
        %v4945 = vpop.f32.mrf.mxu0
        %v4946 = vadd.f32 %v4785, %v4945
        %4947 = vmatmul.f32.gmra.mxu0 %v4627
        %v4948 = vpop.f32.mrf.mxu0
        %v4949 = vadd.f32 %v4788, %v4948
        %4950 = vmatmul.f32.gmra.mxu0 %v4630
        %v4951 = vpop.f32.mrf.mxu0
        %v4952 = vadd.f32 %v4791, %v4951
        %4953 = vmatmul.f32.gmra.mxu0 %v4633
        %v4954 = vpop.f32.mrf.mxu0
        %v4955 = vadd.f32 %v4794, %v4954
        %4956 = vmatmul.f32.gmra.mxu0 %v4636
        %v4957 = vpop.f32.mrf.mxu0
        %v4958 = vadd.f32 %v4797, %v4957
        %4959 = vmatmul.f32.gmra.mxu0 %v4639
        %v4960 = vpop.f32.mrf.mxu0
        %v4961 = vadd.f32 %v4800, %v4960
        %4962 = vmatmul.f32.gmra.mxu0 %v4642
        %v4963 = vpop.f32.mrf.mxu0
        %v4964 = vadd.f32 %v4803, %v4963
        %4965 = vmatmul.f32.gmra.mxu0 %v4645
        %v4966 = vpop.f32.mrf.mxu0
        %v4967 = vadd.f32 %v4806, %v4966
        %4968 = vmatmul.f32.gmra.mxu0 %v4648
        %v4969 = vpop.f32.mrf.mxu0
        %v4970 = vadd.f32 %v4809, %v4969
        %4971 = vmatmul.f32.gmra.mxu0 %v4651
        %v4972 = vpop.f32.mrf.mxu0
        %v4973 = vadd.f32 %v4812, %v4972
        %4974 = vmatmul.f32.gmra.mxu0 %v4654
        %v4975 = vpop.f32.mrf.mxu0
        %v4976 = vadd.f32 %v4815, %v4975
        %4977 = vmatmul.f32.gmra.mxu0 %v4657
        %v4978 = vpop.f32.mrf.mxu0
        %v4979 = vadd.f32 %v4818, %v4978
        %4980 = vmatmul.f32.gmra.mxu0 %v4660
        %v4981 = vpop.f32.mrf.mxu0
        %v4982 = vadd.f32 %v4821, %v4981
        %4983 = vmatmul.f32.gmra.mxu0 %v4663
        %v4984 = vpop.f32.mrf.mxu0
        %v4985 = vadd.f32 %v4824, %v4984
        %4986 = vmatmul.f32.gmra.mxu0 %v4666
        %v4987 = vpop.f32.mrf.mxu0
        %v4988 = vadd.f32 %v4827, %v4987
        %4989 = vmatmul.f32.gmra.mxu0 %v4669
        %v4990 = vpop.f32.mrf.mxu0
        %v4991 = vadd.f32 %v4830, %v4990
        %4992 = vmatmul.f32.gmra.mxu0 %v4672
        %v4993 = vpop.f32.mrf.mxu0
        %v4994 = vadd.f32 %v4833, %v4993
        %4995 = vmatmul.f32.gmra.mxu0 %v4675
        %v4996 = vpop.f32.mrf.mxu0
        %v4997 = vadd.f32 %v4836, %v4996
        %4998 = vmatmul.f32.gmra.mxu0 %v4678
        %v4999 = vpop.f32.mrf.mxu0
        %v5000 = vadd.f32 %v4839, %v4999
        %5001 = vmatmul.f32.gmra.mxu0 %v4681
        %v5002 = vpop.f32.mrf.mxu0
        %v5003 = vadd.f32 %v4842, %v5002
        %5004 = vmatmul.f32.gmra.mxu0 %v4684
        %v5005 = vpop.f32.mrf.mxu0
        %v5006 = vadd.f32 %v4845, %v5005
        %5007 = vmatmul.f32.gmra.mxu0 %v4687
        %v5008 = vpop.f32.mrf.mxu0
        %v5009 = vadd.f32 %v4848, %v5008
        %5010 = vmatmul.f32.gmra.mxu0 %v4690
        %v5011 = vpop.f32.mrf.mxu0
        %v5012 = vadd.f32 %v4851, %v5011
        %5013 = vmatmul.f32.gmra.mxu0 %v4693
        %v5014 = vpop.f32.mrf.mxu0
        %v5015 = vadd.f32 %v4854, %v5014
        %5016 = vmatmul.f32.gmra.mxu0 %v4696
        %v5017 = vpop.f32.mrf.mxu0
        %v5018 = vadd.f32 %v4857, %v5017
        %5019 = vmatmul.f32.gmra.mxu0 %v4699
        %v5020 = vpop.f32.mrf.mxu0
        %v5021 = vadd.f32 %v4860, %v5020
        %5022 = vmatmul.f32.gmra.mxu0 %v4702
        %v5023 = vpop.f32.mrf.mxu0
        %v5024 = vadd.f32 %v4863, %v5023
        %5025 = vmatmul.f32.gmra.mxu0 %v4705
        %v5026 = vpop.f32.mrf.mxu0
        %v5027 = vadd.f32 %v4866, %v5026
        %5028 = vmatmul.f32.gmra.mxu0 %v4708
        %v5029 = vpop.f32.mrf.mxu0
        %v5030 = vadd.f32 %v4869, %v5029
        %5031 = vmatmul.f32.gmra.mxu0 %v4711
        %v5032 = vpop.f32.mrf.mxu0
        %v5033 = vadd.f32 %v4872, %v5032
        %5034 = vmatmul.f32.gmra.mxu0 %v4714
        %v5035 = vpop.f32.mrf.mxu0
        %v5036 = vadd.f32 %v4875, %v5035
        %5037 = vmatmul.f32.gmra.mxu0 %v4717
        %v5038 = vpop.f32.mrf.mxu0
        %v5039 = vadd.f32 %v4878, %v5038
        %5040 = vmatmul.f32.gmra.mxu0 %v4720
        %v5041 = vpop.f32.mrf.mxu0
        %v5042 = vadd.f32 %v4881, %v5041
        %5043 = vmatmul.f32.gmra.mxu0 %v4723
        %v5044 = vpop.f32.mrf.mxu0
        %v5045 = vadd.f32 %v4884, %v5044
        %5046 = vmatmul.f32.gmra.mxu0 %v4726
        %v5047 = vpop.f32.mrf.mxu0
        %v5048 = vadd.f32 %v4887, %v5047
        %5049 = vmatmul.f32.gmra.mxu0 %v4729
        %v5050 = vpop.f32.mrf.mxu0
        %v5051 = vadd.f32 %v4890, %v5050
        %5052 = vmatmul.f32.gmra.mxu0 %v4732
        %v5053 = vpop.f32.mrf.mxu0
        %v5054 = vadd.f32 %v4893, %v5053
        %5055 = vmatmul.f32.gmra.mxu0 %v4735
        %v5056 = vpop.f32.mrf.mxu0
        %v5057 = vadd.f32 %v4896, %v5056
        %5058 = vmatmul.f32.gmra.mxu0 %v4738
        %v5059 = vpop.f32.mrf.mxu0
        %v5060 = vadd.f32 %v4899, %v5059
        %5061 = vmatmul.f32.gmra.mxu0 %v4741
        %v5062 = vpop.f32.mrf.mxu0
        %v5063 = vadd.f32 %v4902, %v5062
        %5064 = vmatmul.f32.gmra.mxu0 %v4744
        %v5065 = vpop.f32.mrf.mxu0
        %v5066 = vadd.f32 %v4905, %v5065
        %5067 = vmatmul.f32.gmra.mxu0 %v4747
        %v5068 = vpop.f32.mrf.mxu0
        %v5069 = vadd.f32 %v4908, %v5068
        %5070 = vmatmul.f32.gmra.mxu0 %v4750
        %v5071 = vpop.f32.mrf.mxu0
        %v5072 = vadd.f32 %v4911, %v5071
        %5073 = vmatmul.f32.gmra.mxu0 %v4753
        %v5074 = vpop.f32.mrf.mxu0
        %v5075 = vadd.f32 %v4914, %v5074
        %5076 = vmatmul.f32.gmra.mxu0 %v4756
        %v5077 = vpop.f32.mrf.mxu0
        %v5078 = vadd.f32 %v4917, %v5077
        %5079 = vmatmul.f32.gmra.mxu0 %v4759
        %v5080 = vpop.f32.mrf.mxu0
        %v5081 = vadd.f32 %v4920, %v5080
        %5082 = vdwg.mxu0
        %5083 = vmatpush.msra.mxu0 %v4608
        %5084 = vmatpush.msra.mxu0 %v4606
        %5085 = vmatpush.msra.mxu0 %v4604
        %5086 = vmatpush.msra.mxu0 %v4602
        %5087 = vmatpush.msra.mxu0 %v4600
        %5088 = vmatpush.msra.mxu0 %v4598
        %5089 = vmatpush.msra.mxu0 %v4596
        %5090 = vmatpush.msra.mxu0 %v4594
        %5091 = vmatpush.msra.mxu0 %v4592
        %5092 = vmatpush.msra.mxu0 %v4590
        %5093 = vmatpush.msra.mxu0 %v4588
        %5094 = vmatpush.msra.mxu0 %v4586
        %5095 = vmatpush.msra.mxu0 %v4584
        %5096 = vmatpush.msra.mxu0 %v4582
        %5097 = vmatpush.msra.mxu0 %v4580
        %5098 = vmatpush.msra.mxu0 %v4578
        %5099 = vmatmul.f32.gmra.mxu0 %v4528
        %v5100 = vpop.f32.mrf.mxu0
        %v5101 = vadd.f32 0.0, %v5100
        %5102 = vmatmul.f32.gmra.mxu0 %v4529
        %v5103 = vpop.f32.mrf.mxu0
        %v5104 = vadd.f32 0.0, %v5103
        %5105 = vmatmul.f32.gmra.mxu0 %v4530
        %v5106 = vpop.f32.mrf.mxu0
        %v5107 = vadd.f32 0.0, %v5106
        %5108 = vmatmul.f32.gmra.mxu0 %v4531
        %v5109 = vpop.f32.mrf.mxu0
        %v5110 = vadd.f32 0.0, %v5109
        %5111 = vmatmul.f32.gmra.mxu0 %v4532
        %v5112 = vpop.f32.mrf.mxu0
        %v5113 = vadd.f32 0.0, %v5112
        %5114 = vmatmul.f32.gmra.mxu0 %v4533
        %v5115 = vpop.f32.mrf.mxu0
        %v5116 = vadd.f32 0.0, %v5115
        %5117 = vmatmul.f32.gmra.mxu0 %v4534
        %v5118 = vpop.f32.mrf.mxu0
        %v5119 = vadd.f32 0.0, %v5118
        %5120 = vmatmul.f32.gmra.mxu0 %v4535
        %v5121 = vpop.f32.mrf.mxu0
        %v5122 = vadd.f32 0.0, %v5121
        %5123 = vmatmul.f32.gmra.mxu0 %v4536
        %v5124 = vpop.f32.mrf.mxu0
        %v5125 = vadd.f32 0.0, %v5124
        %5126 = vmatmul.f32.gmra.mxu0 %v4537
        %v5127 = vpop.f32.mrf.mxu0
        %v5128 = vadd.f32 0.0, %v5127
        %5129 = vmatmul.f32.gmra.mxu0 %v4538
        %v5130 = vpop.f32.mrf.mxu0
        %v5131 = vadd.f32 0.0, %v5130
        %5132 = vmatmul.f32.gmra.mxu0 %v4539
        %v5133 = vpop.f32.mrf.mxu0
        %v5134 = vadd.f32 0.0, %v5133
        %5135 = vmatmul.f32.gmra.mxu0 %v4540
        %v5136 = vpop.f32.mrf.mxu0
        %v5137 = vadd.f32 0.0, %v5136
        %5138 = vmatmul.f32.gmra.mxu0 %v4541
        %v5139 = vpop.f32.mrf.mxu0
        %v5140 = vadd.f32 0.0, %v5139
        %5141 = vmatmul.f32.gmra.mxu0 %v4542
        %v5142 = vpop.f32.mrf.mxu0
        %v5143 = vadd.f32 0.0, %v5142
        %5144 = vmatmul.f32.gmra.mxu0 %v4543
        %v5145 = vpop.f32.mrf.mxu0
        %v5146 = vadd.f32 0.0, %v5145
        %5147 = vmatmul.f32.gmra.mxu0 %v4544
        %v5148 = vpop.f32.mrf.mxu0
        %v5149 = vadd.f32 0.0, %v5148
        %5150 = vmatmul.f32.gmra.mxu0 %v4545
        %v5151 = vpop.f32.mrf.mxu0
        %v5152 = vadd.f32 0.0, %v5151
        %5153 = vmatmul.f32.gmra.mxu0 %v4546
        %v5154 = vpop.f32.mrf.mxu0
        %v5155 = vadd.f32 0.0, %v5154
        %5156 = vmatmul.f32.gmra.mxu0 %v4547
        %v5157 = vpop.f32.mrf.mxu0
        %v5158 = vadd.f32 0.0, %v5157
        %5159 = vmatmul.f32.gmra.mxu0 %v4548
        %v5160 = vpop.f32.mrf.mxu0
        %v5161 = vadd.f32 0.0, %v5160
        %5162 = vmatmul.f32.gmra.mxu0 %v4549
        %v5163 = vpop.f32.mrf.mxu0
        %v5164 = vadd.f32 0.0, %v5163
        %5165 = vmatmul.f32.gmra.mxu0 %v4550
        %v5166 = vpop.f32.mrf.mxu0
        %v5167 = vadd.f32 0.0, %v5166
        %5168 = vmatmul.f32.gmra.mxu0 %v4551
        %v5169 = vpop.f32.mrf.mxu0
        %v5170 = vadd.f32 0.0, %v5169
        %5171 = vmatmul.f32.gmra.mxu0 %v4552
        %v5172 = vpop.f32.mrf.mxu0
        %v5173 = vadd.f32 0.0, %v5172
        %5174 = vmatmul.f32.gmra.mxu0 %v4553
        %v5175 = vpop.f32.mrf.mxu0
        %v5176 = vadd.f32 0.0, %v5175
        %5177 = vmatmul.f32.gmra.mxu0 %v4554
        %v5178 = vpop.f32.mrf.mxu0
        %v5179 = vadd.f32 0.0, %v5178
        %5180 = vmatmul.f32.gmra.mxu0 %v4555
        %v5181 = vpop.f32.mrf.mxu0
        %v5182 = vadd.f32 0.0, %v5181
        %5183 = vmatmul.f32.gmra.mxu0 %v4556
        %v5184 = vpop.f32.mrf.mxu0
        %v5185 = vadd.f32 0.0, %v5184
        %5186 = vmatmul.f32.gmra.mxu0 %v4557
        %v5187 = vpop.f32.mrf.mxu0
        %v5188 = vadd.f32 0.0, %v5187
        %5189 = vmatmul.f32.gmra.mxu0 %v4558
        %v5190 = vpop.f32.mrf.mxu0
        %v5191 = vadd.f32 0.0, %v5190
        %5192 = vmatmul.f32.gmra.mxu0 %v4559
        %v5193 = vpop.f32.mrf.mxu0
        %v5194 = vadd.f32 0.0, %v5193
        %5195 = vmatmul.f32.gmra.mxu0 %v4560
        %v5196 = vpop.f32.mrf.mxu0
        %v5197 = vadd.f32 0.0, %v5196
        %5198 = vmatmul.f32.gmra.mxu0 %v4561
        %v5199 = vpop.f32.mrf.mxu0
        %v5200 = vadd.f32 0.0, %v5199
        %5201 = vmatmul.f32.gmra.mxu0 %v4562
        %v5202 = vpop.f32.mrf.mxu0
        %v5203 = vadd.f32 0.0, %v5202
        %5204 = vmatmul.f32.gmra.mxu0 %v4563
        %v5205 = vpop.f32.mrf.mxu0
        %v5206 = vadd.f32 0.0, %v5205
        %5207 = vmatmul.f32.gmra.mxu0 %v4564
        %v5208 = vpop.f32.mrf.mxu0
        %v5209 = vadd.f32 0.0, %v5208
        %5210 = vmatmul.f32.gmra.mxu0 %v4565
        %v5211 = vpop.f32.mrf.mxu0
        %v5212 = vadd.f32 0.0, %v5211
        %5213 = vmatmul.f32.gmra.mxu0 %v4566
        %v5214 = vpop.f32.mrf.mxu0
        %v5215 = vadd.f32 0.0, %v5214
        %5216 = vmatmul.f32.gmra.mxu0 %v4567
        %v5217 = vpop.f32.mrf.mxu0
        %v5218 = vadd.f32 0.0, %v5217
        %5219 = vmatmul.f32.gmra.mxu0 %v4568
        %v5220 = vpop.f32.mrf.mxu0
        %v5221 = vadd.f32 0.0, %v5220
        %5222 = vmatmul.f32.gmra.mxu0 %v4569
        %v5223 = vpop.f32.mrf.mxu0
        %v5224 = vadd.f32 0.0, %v5223
        %5225 = vmatmul.f32.gmra.mxu0 %v4570
        %v5226 = vpop.f32.mrf.mxu0
        %v5227 = vadd.f32 0.0, %v5226
        %5228 = vmatmul.f32.gmra.mxu0 %v4571
        %v5229 = vpop.f32.mrf.mxu0
        %v5230 = vadd.f32 0.0, %v5229
        %5231 = vmatmul.f32.gmra.mxu0 %v4572
        %v5232 = vpop.f32.mrf.mxu0
        %v5233 = vadd.f32 0.0, %v5232
        %5234 = vmatmul.f32.gmra.mxu0 %v4573
        %v5235 = vpop.f32.mrf.mxu0
        %v5236 = vadd.f32 0.0, %v5235
        %5237 = vmatmul.f32.gmra.mxu0 %v4574
        %v5238 = vpop.f32.mrf.mxu0
        %v5239 = vadd.f32 0.0, %v5238
        %5240 = vmatmul.f32.gmra.mxu0 %v4575
        %v5241 = vpop.f32.mrf.mxu0
        %v5242 = vadd.f32 0.0, %v5241
        %5243 = vdwg.mxu0
        %5244 = vmatpush.msra.mxu0 0.0
        %5245 = vmatpush.msra.mxu0 0.0
        %5246 = vmatpush.msra.mxu0 0.0
        %5247 = vmatpush.msra.mxu0 0.0
        %5248 = vmatpush.msra.mxu0 0.0
        %5249 = vmatpush.msra.mxu0 0.0
        %5250 = vmatpush.msra.mxu0 0.0
        %5251 = vmatpush.msra.mxu0 0.0
        %5252 = vmatpush.msra.mxu0 0.0
        %5253 = vmatpush.msra.mxu0 0.0
        %5254 = vmatpush.msra.mxu0 0.0
        %5255 = vmatpush.msra.mxu0 0.0
        %5256 = vmatpush.msra.mxu0 %v4616
        %5257 = vmatpush.msra.mxu0 %v4614
        %5258 = vmatpush.msra.mxu0 %v4612
        %5259 = vmatpush.msra.mxu0 %v4610
        %5260 = vmatmul.f32.gmra.mxu0 %v4618
        %v5261 = vpop.f32.mrf.mxu0
        %v5262 = vadd.f32 %v5101, %v5261
        %5263 = vmatmul.f32.gmra.mxu0 %v4621
        %v5264 = vpop.f32.mrf.mxu0
        %v5265 = vadd.f32 %v5104, %v5264
        %5266 = vmatmul.f32.gmra.mxu0 %v4624
        %v5267 = vpop.f32.mrf.mxu0
        %v5268 = vadd.f32 %v5107, %v5267
        %5269 = vmatmul.f32.gmra.mxu0 %v4627
        %v5270 = vpop.f32.mrf.mxu0
        %v5271 = vadd.f32 %v5110, %v5270
        %5272 = vmatmul.f32.gmra.mxu0 %v4630
        %v5273 = vpop.f32.mrf.mxu0
        %v5274 = vadd.f32 %v5113, %v5273
        %5275 = vmatmul.f32.gmra.mxu0 %v4633
        %v5276 = vpop.f32.mrf.mxu0
        %v5277 = vadd.f32 %v5116, %v5276
        %5278 = vmatmul.f32.gmra.mxu0 %v4636
        %v5279 = vpop.f32.mrf.mxu0
        %v5280 = vadd.f32 %v5119, %v5279
        %5281 = vmatmul.f32.gmra.mxu0 %v4639
        %v5282 = vpop.f32.mrf.mxu0
        %v5283 = vadd.f32 %v5122, %v5282
        %5284 = vmatmul.f32.gmra.mxu0 %v4642
        %v5285 = vpop.f32.mrf.mxu0
        %v5286 = vadd.f32 %v5125, %v5285
        %5287 = vmatmul.f32.gmra.mxu0 %v4645
        %v5288 = vpop.f32.mrf.mxu0
        %v5289 = vadd.f32 %v5128, %v5288
        %5290 = vmatmul.f32.gmra.mxu0 %v4648
        %v5291 = vpop.f32.mrf.mxu0
        %v5292 = vadd.f32 %v5131, %v5291
        %5293 = vmatmul.f32.gmra.mxu0 %v4651
        %v5294 = vpop.f32.mrf.mxu0
        %v5295 = vadd.f32 %v5134, %v5294
        %5296 = vmatmul.f32.gmra.mxu0 %v4654
        %v5297 = vpop.f32.mrf.mxu0
        %v5298 = vadd.f32 %v5137, %v5297
        %5299 = vmatmul.f32.gmra.mxu0 %v4657
        %v5300 = vpop.f32.mrf.mxu0
        %v5301 = vadd.f32 %v5140, %v5300
        %5302 = vmatmul.f32.gmra.mxu0 %v4660
        %v5303 = vpop.f32.mrf.mxu0
        %v5304 = vadd.f32 %v5143, %v5303
        %5305 = vmatmul.f32.gmra.mxu0 %v4663
        %v5306 = vpop.f32.mrf.mxu0
        %v5307 = vadd.f32 %v5146, %v5306
        %5308 = vmatmul.f32.gmra.mxu0 %v4666
        %v5309 = vpop.f32.mrf.mxu0
        %v5310 = vadd.f32 %v5149, %v5309
        %5311 = vmatmul.f32.gmra.mxu0 %v4669
        %v5312 = vpop.f32.mrf.mxu0
        %v5313 = vadd.f32 %v5152, %v5312
        %5314 = vmatmul.f32.gmra.mxu0 %v4672
        %v5315 = vpop.f32.mrf.mxu0
        %v5316 = vadd.f32 %v5155, %v5315
        %5317 = vmatmul.f32.gmra.mxu0 %v4675
        %v5318 = vpop.f32.mrf.mxu0
        %v5319 = vadd.f32 %v5158, %v5318
        %5320 = vmatmul.f32.gmra.mxu0 %v4678
        %v5321 = vpop.f32.mrf.mxu0
        %v5322 = vadd.f32 %v5161, %v5321
        %5323 = vmatmul.f32.gmra.mxu0 %v4681
        %v5324 = vpop.f32.mrf.mxu0
        %v5325 = vadd.f32 %v5164, %v5324
        %5326 = vmatmul.f32.gmra.mxu0 %v4684
        %v5327 = vpop.f32.mrf.mxu0
        %v5328 = vadd.f32 %v5167, %v5327
        %5329 = vmatmul.f32.gmra.mxu0 %v4687
        %v5330 = vpop.f32.mrf.mxu0
        %v5331 = vadd.f32 %v5170, %v5330
        %5332 = vmatmul.f32.gmra.mxu0 %v4690
        %v5333 = vpop.f32.mrf.mxu0
        %v5334 = vadd.f32 %v5173, %v5333
        %5335 = vmatmul.f32.gmra.mxu0 %v4693
        %v5336 = vpop.f32.mrf.mxu0
        %v5337 = vadd.f32 %v5176, %v5336
        %5338 = vmatmul.f32.gmra.mxu0 %v4696
        %v5339 = vpop.f32.mrf.mxu0
        %v5340 = vadd.f32 %v5179, %v5339
        %5341 = vmatmul.f32.gmra.mxu0 %v4699
        %v5342 = vpop.f32.mrf.mxu0
        %v5343 = vadd.f32 %v5182, %v5342
        %5344 = vmatmul.f32.gmra.mxu0 %v4702
        %v5345 = vpop.f32.mrf.mxu0
        %v5346 = vadd.f32 %v5185, %v5345
        %5347 = vmatmul.f32.gmra.mxu0 %v4705
        %v5348 = vpop.f32.mrf.mxu0
        %v5349 = vadd.f32 %v5188, %v5348
        %5350 = vmatmul.f32.gmra.mxu0 %v4708
        %v5351 = vpop.f32.mrf.mxu0
        %v5352 = vadd.f32 %v5191, %v5351
        %5353 = vmatmul.f32.gmra.mxu0 %v4711
        %v5354 = vpop.f32.mrf.mxu0
        %v5355 = vadd.f32 %v5194, %v5354
        %5356 = vmatmul.f32.gmra.mxu0 %v4714
        %v5357 = vpop.f32.mrf.mxu0
        %v5358 = vadd.f32 %v5197, %v5357
        %5359 = vmatmul.f32.gmra.mxu0 %v4717
        %v5360 = vpop.f32.mrf.mxu0
        %v5361 = vadd.f32 %v5200, %v5360
        %5362 = vmatmul.f32.gmra.mxu0 %v4720
        %v5363 = vpop.f32.mrf.mxu0
        %v5364 = vadd.f32 %v5203, %v5363
        %5365 = vmatmul.f32.gmra.mxu0 %v4723
        %v5366 = vpop.f32.mrf.mxu0
        %v5367 = vadd.f32 %v5206, %v5366
        %5368 = vmatmul.f32.gmra.mxu0 %v4726
        %v5369 = vpop.f32.mrf.mxu0
        %v5370 = vadd.f32 %v5209, %v5369
        %5371 = vmatmul.f32.gmra.mxu0 %v4729
        %v5372 = vpop.f32.mrf.mxu0
        %v5373 = vadd.f32 %v5212, %v5372
        %5374 = vmatmul.f32.gmra.mxu0 %v4732
        %v5375 = vpop.f32.mrf.mxu0
        %v5376 = vadd.f32 %v5215, %v5375
        %5377 = vmatmul.f32.gmra.mxu0 %v4735
        %v5378 = vpop.f32.mrf.mxu0
        %v5379 = vadd.f32 %v5218, %v5378
        %5380 = vmatmul.f32.gmra.mxu0 %v4738
        %v5381 = vpop.f32.mrf.mxu0
        %v5382 = vadd.f32 %v5221, %v5381
        %5383 = vmatmul.f32.gmra.mxu0 %v4741
        %v5384 = vpop.f32.mrf.mxu0
        %v5385 = vadd.f32 %v5224, %v5384
        %5386 = vmatmul.f32.gmra.mxu0 %v4744
        %v5387 = vpop.f32.mrf.mxu0
        %v5388 = vadd.f32 %v5227, %v5387
        %5389 = vmatmul.f32.gmra.mxu0 %v4747
        %v5390 = vpop.f32.mrf.mxu0
        %v5391 = vadd.f32 %v5230, %v5390
        %5392 = vmatmul.f32.gmra.mxu0 %v4750
        %v5393 = vpop.f32.mrf.mxu0
        %v5394 = vadd.f32 %v5233, %v5393
        %5395 = vmatmul.f32.gmra.mxu0 %v4753
        %v5396 = vpop.f32.mrf.mxu0
        %v5397 = vadd.f32 %v5236, %v5396
        %5398 = vmatmul.f32.gmra.mxu0 %v4756
        %v5399 = vpop.f32.mrf.mxu0
        %v5400 = vadd.f32 %v5239, %v5399
        %5401 = vmatmul.f32.gmra.mxu0 %v4759
        %v5402 = vpop.f32.mrf.mxu0
        %v5403 = vadd.f32 %v5242, %v5402
        %5404 = vdwg.mxu0
        %s5405 = scalar_lea.vmem [#allocation8], 1
        %v5406 = vld [vmem:[%s5405] sm:$0x1]
        %v5408 = vperm.slane %v5406, 0
        %v5410 = vadd.f32 %v5408, %v4940
        %v5411 = vadd.f32 %v5408, %v4943
        %v5412 = vadd.f32 %v5408, %v4949
        %v5413 = vadd.f32 %v5408, %v4952
        %v5414 = vadd.f32 %v5408, %v4958
        %v5415 = vadd.f32 %v5408, %v4961
        %v5416 = vadd.f32 %v5408, %v4967
        %v5417 = vadd.f32 %v5408, %v4970
        %v5418 = vadd.f32 %v5408, %v4976
        %v5419 = vadd.f32 %v5408, %v4979
        %v5420 = vadd.f32 %v5408, %v4985
        %v5421 = vadd.f32 %v5408, %v4988
        %v5422 = vadd.f32 %v5408, %v4994
        %v5423 = vadd.f32 %v5408, %v4997
        %v5424 = vadd.f32 %v5408, %v5003
        %v5425 = vadd.f32 %v5408, %v5006
        %v5426 = vadd.f32 %v5408, %v5012
        %v5427 = vadd.f32 %v5408, %v5015
        %v5428 = vadd.f32 %v5408, %v5021
        %v5429 = vadd.f32 %v5408, %v5024
        %v5430 = vadd.f32 %v5408, %v5030
        %v5431 = vadd.f32 %v5408, %v5033
        %v5432 = vadd.f32 %v5408, %v5039
        %v5433 = vadd.f32 %v5408, %v5042
        %v5434 = vadd.f32 %v5408, %v5048
        %v5435 = vadd.f32 %v5408, %v5051
        %v5436 = vadd.f32 %v5408, %v5057
        %v5437 = vadd.f32 %v5408, %v5060
        %v5438 = vadd.f32 %v5408, %v5066
        %v5439 = vadd.f32 %v5408, %v5069
        %v5440 = vadd.f32 %v5408, %v5075
        %v5441 = vadd.f32 %v5408, %v5078
        %v5490 = vrot.slane %v4940, 1
        %v5491 = vrot.slane %v4943, 1
        %v5492 = vsel %vm2732, %v5490, %v5491
        %v5493 = vrot.slane %v4946, 1
        %v5494 = vsel %vm2732, %v5491, %v5493
        %v5495 = vrot.slane %v4949, 1
        %v5496 = vrot.slane %v4952, 1
        %v5497 = vsel %vm2732, %v5495, %v5496
        %v5498 = vrot.slane %v4955, 1
        %v5499 = vsel %vm2732, %v5496, %v5498
        %v5500 = vrot.slane %v4958, 1
        %v5501 = vrot.slane %v4961, 1
        %v5502 = vsel %vm2732, %v5500, %v5501
        %v5503 = vrot.slane %v4964, 1
        %v5504 = vsel %vm2732, %v5501, %v5503
        %v5505 = vrot.slane %v4967, 1
        %v5506 = vrot.slane %v4970, 1
        %v5507 = vsel %vm2732, %v5505, %v5506
        %v5508 = vrot.slane %v4973, 1
        %v5509 = vsel %vm2732, %v5506, %v5508
        %v5510 = vrot.slane %v4976, 1
        %v5511 = vrot.slane %v4979, 1
        %v5512 = vsel %vm2732, %v5510, %v5511
        %v5513 = vrot.slane %v4982, 1
        %v5514 = vsel %vm2732, %v5511, %v5513
        %v5515 = vrot.slane %v4985, 1
        %v5516 = vrot.slane %v4988, 1
        %v5517 = vsel %vm2732, %v5515, %v5516
        %v5518 = vrot.slane %v4991, 1
        %v5519 = vsel %vm2732, %v5516, %v5518
        %v5520 = vrot.slane %v4994, 1
        %v5521 = vrot.slane %v4997, 1
        %v5522 = vsel %vm2732, %v5520, %v5521
        %v5523 = vrot.slane %v5000, 1
        %v5524 = vsel %vm2732, %v5521, %v5523
        %v5525 = vrot.slane %v5003, 1
        %v5526 = vrot.slane %v5006, 1
        %v5527 = vsel %vm2732, %v5525, %v5526
        %v5528 = vrot.slane %v5009, 1
        %v5529 = vsel %vm2732, %v5526, %v5528
        %v5530 = vrot.slane %v5012, 1
        %v5531 = vrot.slane %v5015, 1
        %v5532 = vsel %vm2732, %v5530, %v5531
        %v5533 = vrot.slane %v5018, 1
        %v5534 = vsel %vm2732, %v5531, %v5533
        %v5535 = vrot.slane %v5021, 1
        %v5536 = vrot.slane %v5024, 1
        %v5537 = vsel %vm2732, %v5535, %v5536
        %v5538 = vrot.slane %v5027, 1
        %v5539 = vsel %vm2732, %v5536, %v5538
        %v5540 = vrot.slane %v5030, 1
        %v5541 = vrot.slane %v5033, 1
        %v5542 = vsel %vm2732, %v5540, %v5541
        %v5543 = vrot.slane %v5036, 1
        %v5544 = vsel %vm2732, %v5541, %v5543
        %v5545 = vrot.slane %v5039, 1
        %v5546 = vrot.slane %v5042, 1
        %v5547 = vsel %vm2732, %v5545, %v5546
        %v5548 = vrot.slane %v5045, 1
        %v5549 = vsel %vm2732, %v5546, %v5548
        %v5550 = vrot.slane %v5048, 1
        %v5551 = vrot.slane %v5051, 1
        %v5552 = vsel %vm2732, %v5550, %v5551
        %v5553 = vrot.slane %v5054, 1
        %v5554 = vsel %vm2732, %v5551, %v5553
        %v5555 = vrot.slane %v5057, 1
        %v5556 = vrot.slane %v5060, 1
        %v5557 = vsel %vm2732, %v5555, %v5556
        %v5558 = vrot.slane %v5063, 1
        %v5559 = vsel %vm2732, %v5556, %v5558
        %v5560 = vrot.slane %v5066, 1
        %v5561 = vrot.slane %v5069, 1
        %v5562 = vsel %vm2732, %v5560, %v5561
        %v5563 = vrot.slane %v5072, 1
        %v5564 = vsel %vm2732, %v5561, %v5563
        %v5565 = vrot.slane %v5075, 1
        %v5566 = vrot.slane %v5078, 1
        %v5567 = vsel %vm2732, %v5565, %v5566
        %v5568 = vrot.slane %v5081, 1
        %v5569 = vsel %vm2732, %v5566, %v5568
        %5570 = vrot.lane.b32.xlu0 %v5492, 96
        %v5571 = vpop.permute.xlu0 %5570
        %5572 = vrot.lane.b32.xlu0 %v5494, 96
        %v5573 = vpop.permute.xlu0 %5572
        %5574 = vrot.lane.b32.xlu0 %v5497, 96
        %v5575 = vpop.permute.xlu0 %5574
        %5576 = vrot.lane.b32.xlu0 %v5499, 96
        %v5577 = vpop.permute.xlu0 %5576
        %5578 = vrot.lane.b32.xlu0 %v5502, 96
        %v5579 = vpop.permute.xlu0 %5578
        %5580 = vrot.lane.b32.xlu0 %v5504, 96
        %v5581 = vpop.permute.xlu0 %5580
        %5582 = vrot.lane.b32.xlu0 %v5507, 96
        %v5583 = vpop.permute.xlu0 %5582
        %5584 = vrot.lane.b32.xlu0 %v5509, 96
        %v5585 = vpop.permute.xlu0 %5584
        %5586 = vrot.lane.b32.xlu0 %v5512, 96
        %v5587 = vpop.permute.xlu0 %5586
        %5588 = vrot.lane.b32.xlu0 %v5514, 96
        %v5589 = vpop.permute.xlu0 %5588
        %5590 = vrot.lane.b32.xlu0 %v5517, 96
        %v5591 = vpop.permute.xlu0 %5590
        %5592 = vrot.lane.b32.xlu0 %v5519, 96
        %v5593 = vpop.permute.xlu0 %5592
        %5594 = vrot.lane.b32.xlu0 %v5522, 96
        %v5595 = vpop.permute.xlu0 %5594
        %5596 = vrot.lane.b32.xlu0 %v5524, 96
        %v5597 = vpop.permute.xlu0 %5596
        %5598 = vrot.lane.b32.xlu0 %v5527, 96
        %v5599 = vpop.permute.xlu0 %5598
        %5600 = vrot.lane.b32.xlu0 %v5529, 96
        %v5601 = vpop.permute.xlu0 %5600
        %5602 = vrot.lane.b32.xlu0 %v5532, 96
        %v5603 = vpop.permute.xlu0 %5602
        %5604 = vrot.lane.b32.xlu0 %v5534, 96
        %v5605 = vpop.permute.xlu0 %5604
        %5606 = vrot.lane.b32.xlu0 %v5537, 96
        %v5607 = vpop.permute.xlu0 %5606
        %5608 = vrot.lane.b32.xlu0 %v5539, 96
        %v5609 = vpop.permute.xlu0 %5608
        %5610 = vrot.lane.b32.xlu0 %v5542, 96
        %v5611 = vpop.permute.xlu0 %5610
        %5612 = vrot.lane.b32.xlu0 %v5544, 96
        %v5613 = vpop.permute.xlu0 %5612
        %5614 = vrot.lane.b32.xlu0 %v5547, 96
        %v5615 = vpop.permute.xlu0 %5614
        %5616 = vrot.lane.b32.xlu0 %v5549, 96
        %v5617 = vpop.permute.xlu0 %5616
        %5618 = vrot.lane.b32.xlu0 %v5552, 96
        %v5619 = vpop.permute.xlu0 %5618
        %5620 = vrot.lane.b32.xlu0 %v5554, 96
        %v5621 = vpop.permute.xlu0 %5620
        %5622 = vrot.lane.b32.xlu0 %v5557, 96
        %v5623 = vpop.permute.xlu0 %5622
        %5624 = vrot.lane.b32.xlu0 %v5559, 96
        %v5625 = vpop.permute.xlu0 %5624
        %5626 = vrot.lane.b32.xlu0 %v5562, 96
        %v5627 = vpop.permute.xlu0 %5626
        %5628 = vrot.lane.b32.xlu0 %v5564, 96
        %v5629 = vpop.permute.xlu0 %5628
        %5630 = vrot.lane.b32.xlu0 %v5567, 96
        %v5631 = vpop.permute.xlu0 %5630
        %5632 = vrot.lane.b32.xlu0 %v5569, 96
        %v5633 = vpop.permute.xlu0 %5632
        %v5666 = vadd.f32 %v5410, %v5571
        %v5667 = vadd.f32 %v5411, %v5573
        %v5668 = vadd.f32 %v5412, %v5575
        %v5669 = vadd.f32 %v5413, %v5577
        %v5670 = vadd.f32 %v5414, %v5579
        %v5671 = vadd.f32 %v5415, %v5581
        %v5672 = vadd.f32 %v5416, %v5583
        %v5673 = vadd.f32 %v5417, %v5585
        %v5674 = vadd.f32 %v5418, %v5587
        %v5675 = vadd.f32 %v5419, %v5589
        %v5676 = vadd.f32 %v5420, %v5591
        %v5677 = vadd.f32 %v5421, %v5593
        %v5678 = vadd.f32 %v5422, %v5595
        %v5679 = vadd.f32 %v5423, %v5597
        %v5680 = vadd.f32 %v5424, %v5599
        %v5681 = vadd.f32 %v5425, %v5601
        %v5682 = vadd.f32 %v5426, %v5603
        %v5683 = vadd.f32 %v5427, %v5605
        %v5684 = vadd.f32 %v5428, %v5607
        %v5685 = vadd.f32 %v5429, %v5609
        %v5686 = vadd.f32 %v5430, %v5611
        %v5687 = vadd.f32 %v5431, %v5613
        %v5688 = vadd.f32 %v5432, %v5615
        %v5689 = vadd.f32 %v5433, %v5617
        %v5690 = vadd.f32 %v5434, %v5619
        %v5691 = vadd.f32 %v5435, %v5621
        %v5692 = vadd.f32 %v5436, %v5623
        %v5693 = vadd.f32 %v5437, %v5625
        %v5694 = vadd.f32 %v5438, %v5627
        %v5695 = vadd.f32 %v5439, %v5629
        %v5696 = vadd.f32 %v5440, %v5631
        %v5697 = vadd.f32 %v5441, %v5633
        %v5698 = vrot.slane %v4940, 2
        %v5699 = vrot.slane %v4943, 2
        %v5700 = vsel %vm2941, %v5698, %v5699
        %v5701 = vrot.slane %v4946, 2
        %v5702 = vsel %vm2941, %v5699, %v5701
        %v5703 = vrot.slane %v4949, 2
        %v5704 = vrot.slane %v4952, 2
        %v5705 = vsel %vm2941, %v5703, %v5704
        %v5706 = vrot.slane %v4955, 2
        %v5707 = vsel %vm2941, %v5704, %v5706
        %v5708 = vrot.slane %v4958, 2
        %v5709 = vrot.slane %v4961, 2
        %v5710 = vsel %vm2941, %v5708, %v5709
        %v5711 = vrot.slane %v4964, 2
        %v5712 = vsel %vm2941, %v5709, %v5711
        %v5713 = vrot.slane %v4967, 2
        %v5714 = vrot.slane %v4970, 2
        %v5715 = vsel %vm2941, %v5713, %v5714
        %v5716 = vrot.slane %v4973, 2
        %v5717 = vsel %vm2941, %v5714, %v5716
        %v5718 = vrot.slane %v4976, 2
        %v5719 = vrot.slane %v4979, 2
        %v5720 = vsel %vm2941, %v5718, %v5719
        %v5721 = vrot.slane %v4982, 2
        %v5722 = vsel %vm2941, %v5719, %v5721
        %v5723 = vrot.slane %v4985, 2
        %v5724 = vrot.slane %v4988, 2
        %v5725 = vsel %vm2941, %v5723, %v5724
        %v5726 = vrot.slane %v4991, 2
        %v5727 = vsel %vm2941, %v5724, %v5726
        %v5728 = vrot.slane %v4994, 2
        %v5729 = vrot.slane %v4997, 2
        %v5730 = vsel %vm2941, %v5728, %v5729
        %v5731 = vrot.slane %v5000, 2
        %v5732 = vsel %vm2941, %v5729, %v5731
        %v5733 = vrot.slane %v5003, 2
        %v5734 = vrot.slane %v5006, 2
        %v5735 = vsel %vm2941, %v5733, %v5734
        %v5736 = vrot.slane %v5009, 2
        %v5737 = vsel %vm2941, %v5734, %v5736
        %v5738 = vrot.slane %v5012, 2
        %v5739 = vrot.slane %v5015, 2
        %v5740 = vsel %vm2941, %v5738, %v5739
        %v5741 = vrot.slane %v5018, 2
        %v5742 = vsel %vm2941, %v5739, %v5741
        %v5743 = vrot.slane %v5021, 2
        %v5744 = vrot.slane %v5024, 2
        %v5745 = vsel %vm2941, %v5743, %v5744
        %v5746 = vrot.slane %v5027, 2
        %v5747 = vsel %vm2941, %v5744, %v5746
        %v5748 = vrot.slane %v5030, 2
        %v5749 = vrot.slane %v5033, 2
        %v5750 = vsel %vm2941, %v5748, %v5749
        %v5751 = vrot.slane %v5036, 2
        %v5752 = vsel %vm2941, %v5749, %v5751
        %v5753 = vrot.slane %v5039, 2
        %v5754 = vrot.slane %v5042, 2
        %v5755 = vsel %vm2941, %v5753, %v5754
        %v5756 = vrot.slane %v5045, 2
        %v5757 = vsel %vm2941, %v5754, %v5756
        %v5758 = vrot.slane %v5048, 2
        %v5759 = vrot.slane %v5051, 2
        %v5760 = vsel %vm2941, %v5758, %v5759
        %v5761 = vrot.slane %v5054, 2
        %v5762 = vsel %vm2941, %v5759, %v5761
        %v5763 = vrot.slane %v5057, 2
        %v5764 = vrot.slane %v5060, 2
        %v5765 = vsel %vm2941, %v5763, %v5764
        %v5766 = vrot.slane %v5063, 2
        %v5767 = vsel %vm2941, %v5764, %v5766
        %v5768 = vrot.slane %v5066, 2
        %v5769 = vrot.slane %v5069, 2
        %v5770 = vsel %vm2941, %v5768, %v5769
        %v5771 = vrot.slane %v5072, 2
        %v5772 = vsel %vm2941, %v5769, %v5771
        %v5773 = vrot.slane %v5075, 2
        %v5774 = vrot.slane %v5078, 2
        %v5775 = vsel %vm2941, %v5773, %v5774
        %v5776 = vrot.slane %v5081, 2
        %v5777 = vsel %vm2941, %v5774, %v5776
        %5778 = vrot.lane.b32.xlu0 %v5700, 64
        %v5779 = vpop.permute.xlu0 %5778
        %5780 = vrot.lane.b32.xlu0 %v5702, 64
        %v5781 = vpop.permute.xlu0 %5780
        %5782 = vrot.lane.b32.xlu0 %v5705, 64
        %v5783 = vpop.permute.xlu0 %5782
        %5784 = vrot.lane.b32.xlu0 %v5707, 64
        %v5785 = vpop.permute.xlu0 %5784
        %5786 = vrot.lane.b32.xlu0 %v5710, 64
        %v5787 = vpop.permute.xlu0 %5786
        %5788 = vrot.lane.b32.xlu0 %v5712, 64
        %v5789 = vpop.permute.xlu0 %5788
        %5790 = vrot.lane.b32.xlu0 %v5715, 64
        %v5791 = vpop.permute.xlu0 %5790
        %5792 = vrot.lane.b32.xlu0 %v5717, 64
        %v5793 = vpop.permute.xlu0 %5792
        %5794 = vrot.lane.b32.xlu0 %v5720, 64
        %v5795 = vpop.permute.xlu0 %5794
        %5796 = vrot.lane.b32.xlu0 %v5722, 64
        %v5797 = vpop.permute.xlu0 %5796
        %5798 = vrot.lane.b32.xlu0 %v5725, 64
        %v5799 = vpop.permute.xlu0 %5798
        %5800 = vrot.lane.b32.xlu0 %v5727, 64
        %v5801 = vpop.permute.xlu0 %5800
        %5802 = vrot.lane.b32.xlu0 %v5730, 64
        %v5803 = vpop.permute.xlu0 %5802
        %5804 = vrot.lane.b32.xlu0 %v5732, 64
        %v5805 = vpop.permute.xlu0 %5804
        %5806 = vrot.lane.b32.xlu0 %v5735, 64
        %v5807 = vpop.permute.xlu0 %5806
        %5808 = vrot.lane.b32.xlu0 %v5737, 64
        %v5809 = vpop.permute.xlu0 %5808
        %5810 = vrot.lane.b32.xlu0 %v5740, 64
        %v5811 = vpop.permute.xlu0 %5810
        %5812 = vrot.lane.b32.xlu0 %v5742, 64
        %v5813 = vpop.permute.xlu0 %5812
        %5814 = vrot.lane.b32.xlu0 %v5745, 64
        %v5815 = vpop.permute.xlu0 %5814
        %5816 = vrot.lane.b32.xlu0 %v5747, 64
        %v5817 = vpop.permute.xlu0 %5816
        %5818 = vrot.lane.b32.xlu0 %v5750, 64
        %v5819 = vpop.permute.xlu0 %5818
        %5820 = vrot.lane.b32.xlu0 %v5752, 64
        %v5821 = vpop.permute.xlu0 %5820
        %5822 = vrot.lane.b32.xlu0 %v5755, 64
        %v5823 = vpop.permute.xlu0 %5822
        %5824 = vrot.lane.b32.xlu0 %v5757, 64
        %v5825 = vpop.permute.xlu0 %5824
        %5826 = vrot.lane.b32.xlu0 %v5760, 64
        %v5827 = vpop.permute.xlu0 %5826
        %5828 = vrot.lane.b32.xlu0 %v5762, 64
        %v5829 = vpop.permute.xlu0 %5828
        %5830 = vrot.lane.b32.xlu0 %v5765, 64
        %v5831 = vpop.permute.xlu0 %5830
        %5832 = vrot.lane.b32.xlu0 %v5767, 64
        %v5833 = vpop.permute.xlu0 %5832
        %5834 = vrot.lane.b32.xlu0 %v5770, 64
        %v5835 = vpop.permute.xlu0 %5834
        %5836 = vrot.lane.b32.xlu0 %v5772, 64
        %v5837 = vpop.permute.xlu0 %5836
        %5838 = vrot.lane.b32.xlu0 %v5775, 64
        %v5839 = vpop.permute.xlu0 %5838
        %5840 = vrot.lane.b32.xlu0 %v5777, 64
        %v5841 = vpop.permute.xlu0 %5840
        %v5874 = vadd.f32 %v5666, %v5779
        %v5875 = vadd.f32 %v5667, %v5781
        %v5876 = vadd.f32 %v5668, %v5783
        %v5877 = vadd.f32 %v5669, %v5785
        %v5878 = vadd.f32 %v5670, %v5787
        %v5879 = vadd.f32 %v5671, %v5789
        %v5880 = vadd.f32 %v5672, %v5791
        %v5881 = vadd.f32 %v5673, %v5793
        %v5882 = vadd.f32 %v5674, %v5795
        %v5883 = vadd.f32 %v5675, %v5797
        %v5884 = vadd.f32 %v5676, %v5799
        %v5885 = vadd.f32 %v5677, %v5801
        %v5886 = vadd.f32 %v5678, %v5803
        %v5887 = vadd.f32 %v5679, %v5805
        %v5888 = vadd.f32 %v5680, %v5807
        %v5889 = vadd.f32 %v5681, %v5809
        %v5890 = vadd.f32 %v5682, %v5811
        %v5891 = vadd.f32 %v5683, %v5813
        %v5892 = vadd.f32 %v5684, %v5815
        %v5893 = vadd.f32 %v5685, %v5817
        %v5894 = vadd.f32 %v5686, %v5819
        %v5895 = vadd.f32 %v5687, %v5821
        %v5896 = vadd.f32 %v5688, %v5823
        %v5897 = vadd.f32 %v5689, %v5825
        %v5898 = vadd.f32 %v5690, %v5827
        %v5899 = vadd.f32 %v5691, %v5829
        %v5900 = vadd.f32 %v5692, %v5831
        %v5901 = vadd.f32 %v5693, %v5833
        %v5902 = vadd.f32 %v5694, %v5835
        %v5903 = vadd.f32 %v5695, %v5837
        %v5904 = vadd.f32 %v5696, %v5839
        %v5905 = vadd.f32 %v5697, %v5841
        %v5906 = vrot.slane %v4940, 3
        %v5907 = vrot.slane %v4943, 3
        %v5908 = vsel %vm3150, %v5906, %v5907
        %v5909 = vrot.slane %v4946, 3
        %v5910 = vsel %vm3150, %v5907, %v5909
        %v5911 = vrot.slane %v4949, 3
        %v5912 = vrot.slane %v4952, 3
        %v5913 = vsel %vm3150, %v5911, %v5912
        %v5914 = vrot.slane %v4955, 3
        %v5915 = vsel %vm3150, %v5912, %v5914
        %v5916 = vrot.slane %v4958, 3
        %v5917 = vrot.slane %v4961, 3
        %v5918 = vsel %vm3150, %v5916, %v5917
        %v5919 = vrot.slane %v4964, 3
        %v5920 = vsel %vm3150, %v5917, %v5919
        %v5921 = vrot.slane %v4967, 3
        %v5922 = vrot.slane %v4970, 3
        %v5923 = vsel %vm3150, %v5921, %v5922
        %v5924 = vrot.slane %v4973, 3
        %v5925 = vsel %vm3150, %v5922, %v5924
        %v5926 = vrot.slane %v4976, 3
        %v5927 = vrot.slane %v4979, 3
        %v5928 = vsel %vm3150, %v5926, %v5927
        %v5929 = vrot.slane %v4982, 3
        %v5930 = vsel %vm3150, %v5927, %v5929
        %v5931 = vrot.slane %v4985, 3
        %v5932 = vrot.slane %v4988, 3
        %v5933 = vsel %vm3150, %v5931, %v5932
        %v5934 = vrot.slane %v4991, 3
        %v5935 = vsel %vm3150, %v5932, %v5934
        %v5936 = vrot.slane %v4994, 3
        %v5937 = vrot.slane %v4997, 3
        %v5938 = vsel %vm3150, %v5936, %v5937
        %v5939 = vrot.slane %v5000, 3
        %v5940 = vsel %vm3150, %v5937, %v5939
        %v5941 = vrot.slane %v5003, 3
        %v5942 = vrot.slane %v5006, 3
        %v5943 = vsel %vm3150, %v5941, %v5942
        %v5944 = vrot.slane %v5009, 3
        %v5945 = vsel %vm3150, %v5942, %v5944
        %v5946 = vrot.slane %v5012, 3
        %v5947 = vrot.slane %v5015, 3
        %v5948 = vsel %vm3150, %v5946, %v5947
        %v5949 = vrot.slane %v5018, 3
        %v5950 = vsel %vm3150, %v5947, %v5949
        %v5951 = vrot.slane %v5021, 3
        %v5952 = vrot.slane %v5024, 3
        %v5953 = vsel %vm3150, %v5951, %v5952
        %v5954 = vrot.slane %v5027, 3
        %v5955 = vsel %vm3150, %v5952, %v5954
        %v5956 = vrot.slane %v5030, 3
        %v5957 = vrot.slane %v5033, 3
        %v5958 = vsel %vm3150, %v5956, %v5957
        %v5959 = vrot.slane %v5036, 3
        %v5960 = vsel %vm3150, %v5957, %v5959
        %v5961 = vrot.slane %v5039, 3
        %v5962 = vrot.slane %v5042, 3
        %v5963 = vsel %vm3150, %v5961, %v5962
        %v5964 = vrot.slane %v5045, 3
        %v5965 = vsel %vm3150, %v5962, %v5964
        %v5966 = vrot.slane %v5048, 3
        %v5967 = vrot.slane %v5051, 3
        %v5968 = vsel %vm3150, %v5966, %v5967
        %v5969 = vrot.slane %v5054, 3
        %v5970 = vsel %vm3150, %v5967, %v5969
        %v5971 = vrot.slane %v5057, 3
        %v5972 = vrot.slane %v5060, 3
        %v5973 = vsel %vm3150, %v5971, %v5972
        %v5974 = vrot.slane %v5063, 3
        %v5975 = vsel %vm3150, %v5972, %v5974
        %v5976 = vrot.slane %v5066, 3
        %v5977 = vrot.slane %v5069, 3
        %v5978 = vsel %vm3150, %v5976, %v5977
        %v5979 = vrot.slane %v5072, 3
        %v5980 = vsel %vm3150, %v5977, %v5979
        %v5981 = vrot.slane %v5075, 3
        %v5982 = vrot.slane %v5078, 3
        %v5983 = vsel %vm3150, %v5981, %v5982
        %v5984 = vrot.slane %v5081, 3
        %v5985 = vsel %vm3150, %v5982, %v5984
        %5986 = vrot.lane.b32.xlu0 %v5908, 32
        %v5987 = vpop.permute.xlu0 %5986
        %5988 = vrot.lane.b32.xlu0 %v5910, 32
        %v5989 = vpop.permute.xlu0 %5988
        %5990 = vrot.lane.b32.xlu0 %v5913, 32
        %v5991 = vpop.permute.xlu0 %5990
        %5992 = vrot.lane.b32.xlu0 %v5915, 32
        %v5993 = vpop.permute.xlu0 %5992
        %5994 = vrot.lane.b32.xlu0 %v5918, 32
        %v5995 = vpop.permute.xlu0 %5994
        %5996 = vrot.lane.b32.xlu0 %v5920, 32
        %v5997 = vpop.permute.xlu0 %5996
        %5998 = vrot.lane.b32.xlu0 %v5923, 32
        %v5999 = vpop.permute.xlu0 %5998
        %6000 = vrot.lane.b32.xlu0 %v5925, 32
        %v6001 = vpop.permute.xlu0 %6000
        %6002 = vrot.lane.b32.xlu0 %v5928, 32
        %v6003 = vpop.permute.xlu0 %6002
        %6004 = vrot.lane.b32.xlu0 %v5930, 32
        %v6005 = vpop.permute.xlu0 %6004
        %6006 = vrot.lane.b32.xlu0 %v5933, 32
        %v6007 = vpop.permute.xlu0 %6006
        %6008 = vrot.lane.b32.xlu0 %v5935, 32
        %v6009 = vpop.permute.xlu0 %6008
        %6010 = vrot.lane.b32.xlu0 %v5938, 32
        %v6011 = vpop.permute.xlu0 %6010
        %6012 = vrot.lane.b32.xlu0 %v5940, 32
        %v6013 = vpop.permute.xlu0 %6012
        %6014 = vrot.lane.b32.xlu0 %v5943, 32
        %v6015 = vpop.permute.xlu0 %6014
        %6016 = vrot.lane.b32.xlu0 %v5945, 32
        %v6017 = vpop.permute.xlu0 %6016
        %6018 = vrot.lane.b32.xlu0 %v5948, 32
        %v6019 = vpop.permute.xlu0 %6018
        %6020 = vrot.lane.b32.xlu0 %v5950, 32
        %v6021 = vpop.permute.xlu0 %6020
        %6022 = vrot.lane.b32.xlu0 %v5953, 32
        %v6023 = vpop.permute.xlu0 %6022
        %6024 = vrot.lane.b32.xlu0 %v5955, 32
        %v6025 = vpop.permute.xlu0 %6024
        %6026 = vrot.lane.b32.xlu0 %v5958, 32
        %v6027 = vpop.permute.xlu0 %6026
        %6028 = vrot.lane.b32.xlu0 %v5960, 32
        %v6029 = vpop.permute.xlu0 %6028
        %6030 = vrot.lane.b32.xlu0 %v5963, 32
        %v6031 = vpop.permute.xlu0 %6030
        %6032 = vrot.lane.b32.xlu0 %v5965, 32
        %v6033 = vpop.permute.xlu0 %6032
        %6034 = vrot.lane.b32.xlu0 %v5968, 32
        %v6035 = vpop.permute.xlu0 %6034
        %6036 = vrot.lane.b32.xlu0 %v5970, 32
        %v6037 = vpop.permute.xlu0 %6036
        %6038 = vrot.lane.b32.xlu0 %v5973, 32
        %v6039 = vpop.permute.xlu0 %6038
        %6040 = vrot.lane.b32.xlu0 %v5975, 32
        %v6041 = vpop.permute.xlu0 %6040
        %6042 = vrot.lane.b32.xlu0 %v5978, 32
        %v6043 = vpop.permute.xlu0 %6042
        %6044 = vrot.lane.b32.xlu0 %v5980, 32
        %v6045 = vpop.permute.xlu0 %6044
        %6046 = vrot.lane.b32.xlu0 %v5983, 32
        %v6047 = vpop.permute.xlu0 %6046
        %6048 = vrot.lane.b32.xlu0 %v5985, 32
        %v6049 = vpop.permute.xlu0 %6048
        %v6082 = vadd.f32 %v5874, %v5987
        %v6083 = vadd.f32 %v5875, %v5989
        %v6084 = vadd.f32 %v5876, %v5991
        %v6085 = vadd.f32 %v5877, %v5993
        %v6086 = vadd.f32 %v5878, %v5995
        %v6087 = vadd.f32 %v5879, %v5997
        %v6088 = vadd.f32 %v5880, %v5999
        %v6089 = vadd.f32 %v5881, %v6001
        %v6090 = vadd.f32 %v5882, %v6003
        %v6091 = vadd.f32 %v5883, %v6005
        %v6092 = vadd.f32 %v5884, %v6007
        %v6093 = vadd.f32 %v5885, %v6009
        %v6094 = vadd.f32 %v5886, %v6011
        %v6095 = vadd.f32 %v5887, %v6013
        %v6096 = vadd.f32 %v5888, %v6015
        %v6097 = vadd.f32 %v5889, %v6017
        %v6098 = vadd.f32 %v5890, %v6019
        %v6099 = vadd.f32 %v5891, %v6021
        %v6100 = vadd.f32 %v5892, %v6023
        %v6101 = vadd.f32 %v5893, %v6025
        %v6102 = vadd.f32 %v5894, %v6027
        %v6103 = vadd.f32 %v5895, %v6029
        %v6104 = vadd.f32 %v5896, %v6031
        %v6105 = vadd.f32 %v5897, %v6033
        %v6106 = vadd.f32 %v5898, %v6035
        %v6107 = vadd.f32 %v5899, %v6037
        %v6108 = vadd.f32 %v5900, %v6039
        %v6109 = vadd.f32 %v5901, %v6041
        %v6110 = vadd.f32 %v5902, %v6043
        %v6111 = vadd.f32 %v5903, %v6045
        %v6112 = vadd.f32 %v5904, %v6047
        %v6113 = vadd.f32 %v5905, %v6049
        %v6162 = vrot.slane %v5262, 4
        %v6163 = vrot.slane %v5265, 4
        %v6164 = vsel %vm3407, %v6162, %v6163
        %v6165 = vrot.slane %v5268, 4
        %v6166 = vsel %vm3407, %v6163, %v6165
        %v6167 = vrot.slane %v5271, 4
        %v6168 = vrot.slane %v5274, 4
        %v6169 = vsel %vm3407, %v6167, %v6168
        %v6170 = vrot.slane %v5277, 4
        %v6171 = vsel %vm3407, %v6168, %v6170
        %v6172 = vrot.slane %v5280, 4
        %v6173 = vrot.slane %v5283, 4
        %v6174 = vsel %vm3407, %v6172, %v6173
        %v6175 = vrot.slane %v5286, 4
        %v6176 = vsel %vm3407, %v6173, %v6175
        %v6177 = vrot.slane %v5289, 4
        %v6178 = vrot.slane %v5292, 4
        %v6179 = vsel %vm3407, %v6177, %v6178
        %v6180 = vrot.slane %v5295, 4
        %v6181 = vsel %vm3407, %v6178, %v6180
        %v6182 = vrot.slane %v5298, 4
        %v6183 = vrot.slane %v5301, 4
        %v6184 = vsel %vm3407, %v6182, %v6183
        %v6185 = vrot.slane %v5304, 4
        %v6186 = vsel %vm3407, %v6183, %v6185
        %v6187 = vrot.slane %v5307, 4
        %v6188 = vrot.slane %v5310, 4
        %v6189 = vsel %vm3407, %v6187, %v6188
        %v6190 = vrot.slane %v5313, 4
        %v6191 = vsel %vm3407, %v6188, %v6190
        %v6192 = vrot.slane %v5316, 4
        %v6193 = vrot.slane %v5319, 4
        %v6194 = vsel %vm3407, %v6192, %v6193
        %v6195 = vrot.slane %v5322, 4
        %v6196 = vsel %vm3407, %v6193, %v6195
        %v6197 = vrot.slane %v5325, 4
        %v6198 = vrot.slane %v5328, 4
        %v6199 = vsel %vm3407, %v6197, %v6198
        %v6200 = vrot.slane %v5331, 4
        %v6201 = vsel %vm3407, %v6198, %v6200
        %v6202 = vrot.slane %v5334, 4
        %v6203 = vrot.slane %v5337, 4
        %v6204 = vsel %vm3407, %v6202, %v6203
        %v6205 = vrot.slane %v5340, 4
        %v6206 = vsel %vm3407, %v6203, %v6205
        %v6207 = vrot.slane %v5343, 4
        %v6208 = vrot.slane %v5346, 4
        %v6209 = vsel %vm3407, %v6207, %v6208
        %v6210 = vrot.slane %v5349, 4
        %v6211 = vsel %vm3407, %v6208, %v6210
        %v6212 = vrot.slane %v5352, 4
        %v6213 = vrot.slane %v5355, 4
        %v6214 = vsel %vm3407, %v6212, %v6213
        %v6215 = vrot.slane %v5358, 4
        %v6216 = vsel %vm3407, %v6213, %v6215
        %v6217 = vrot.slane %v5361, 4
        %v6218 = vrot.slane %v5364, 4
        %v6219 = vsel %vm3407, %v6217, %v6218
        %v6220 = vrot.slane %v5367, 4
        %v6221 = vsel %vm3407, %v6218, %v6220
        %v6222 = vrot.slane %v5370, 4
        %v6223 = vrot.slane %v5373, 4
        %v6224 = vsel %vm3407, %v6222, %v6223
        %v6225 = vrot.slane %v5376, 4
        %v6226 = vsel %vm3407, %v6223, %v6225
        %v6227 = vrot.slane %v5379, 4
        %v6228 = vrot.slane %v5382, 4
        %v6229 = vsel %vm3407, %v6227, %v6228
        %v6230 = vrot.slane %v5385, 4
        %v6231 = vsel %vm3407, %v6228, %v6230
        %v6232 = vrot.slane %v5388, 4
        %v6233 = vrot.slane %v5391, 4
        %v6234 = vsel %vm3407, %v6232, %v6233
        %v6235 = vrot.slane %v5394, 4
        %v6236 = vsel %vm3407, %v6233, %v6235
        %v6237 = vrot.slane %v5397, 4
        %v6238 = vrot.slane %v5400, 4
        %v6239 = vsel %vm3407, %v6237, %v6238
        %v6240 = vrot.slane %v5403, 4
        %v6241 = vsel %vm3407, %v6238, %v6240
        %v6274 = vadd.f32 %v6082, %v6164
        %v6275 = vadd.f32 %v6083, %v6166
        %v6276 = vadd.f32 %v6084, %v6169
        %v6277 = vadd.f32 %v6085, %v6171
        %v6278 = vadd.f32 %v6086, %v6174
        %v6279 = vadd.f32 %v6087, %v6176
        %v6280 = vadd.f32 %v6088, %v6179
        %v6281 = vadd.f32 %v6089, %v6181
        %v6282 = vadd.f32 %v6090, %v6184
        %v6283 = vadd.f32 %v6091, %v6186
        %v6284 = vadd.f32 %v6092, %v6189
        %v6285 = vadd.f32 %v6093, %v6191
        %v6286 = vadd.f32 %v6094, %v6194
        %v6287 = vadd.f32 %v6095, %v6196
        %v6288 = vadd.f32 %v6096, %v6199
        %v6289 = vadd.f32 %v6097, %v6201
        %v6290 = vadd.f32 %v6098, %v6204
        %v6291 = vadd.f32 %v6099, %v6206
        %v6292 = vadd.f32 %v6100, %v6209
        %v6293 = vadd.f32 %v6101, %v6211
        %v6294 = vadd.f32 %v6102, %v6214
        %v6295 = vadd.f32 %v6103, %v6216
        %v6296 = vadd.f32 %v6104, %v6219
        %v6297 = vadd.f32 %v6105, %v6221
        %v6298 = vadd.f32 %v6106, %v6224
        %v6299 = vadd.f32 %v6107, %v6226
        %v6300 = vadd.f32 %v6108, %v6229
        %v6301 = vadd.f32 %v6109, %v6231
        %v6302 = vadd.f32 %v6110, %v6234
        %v6303 = vadd.f32 %v6111, %v6236
        %v6304 = vadd.f32 %v6112, %v6239
        %v6305 = vadd.f32 %v6113, %v6241
        %v6306 = vmax.f32 %v6274, 0.0
        %v6307 = vmax.f32 %v6275, 0.0
        %v6308 = vmax.f32 %v6276, 0.0
        %v6309 = vmax.f32 %v6277, 0.0
        %v6310 = vmax.f32 %v6278, 0.0
        %v6311 = vmax.f32 %v6279, 0.0
        %v6312 = vmax.f32 %v6280, 0.0
        %v6313 = vmax.f32 %v6281, 0.0
        %v6314 = vmax.f32 %v6282, 0.0
        %v6315 = vmax.f32 %v6283, 0.0
        %v6316 = vmax.f32 %v6284, 0.0
        %v6317 = vmax.f32 %v6285, 0.0
        %v6318 = vmax.f32 %v6286, 0.0
        %v6319 = vmax.f32 %v6287, 0.0
        %v6320 = vmax.f32 %v6288, 0.0
        %v6321 = vmax.f32 %v6289, 0.0
        %v6322 = vmax.f32 %v6290, 0.0
        %v6323 = vmax.f32 %v6291, 0.0
        %v6324 = vmax.f32 %v6292, 0.0
        %v6325 = vmax.f32 %v6293, 0.0
        %v6326 = vmax.f32 %v6294, 0.0
        %v6327 = vmax.f32 %v6295, 0.0
        %v6328 = vmax.f32 %v6296, 0.0
        %v6329 = vmax.f32 %v6297, 0.0
        %v6330 = vmax.f32 %v6298, 0.0
        %v6331 = vmax.f32 %v6299, 0.0
        %v6332 = vmax.f32 %v6300, 0.0
        %v6333 = vmax.f32 %v6301, 0.0
        %v6334 = vmax.f32 %v6302, 0.0
        %v6335 = vmax.f32 %v6303, 0.0
        %v6336 = vmax.f32 %v6304, 0.0
        %v6337 = vmax.f32 %v6305, 0.0
        %6338 = vst.msk [vmem:[%s822 + $0x2] sm:$0xff] %vm224, %v6306
        %6339 = vst.msk [vmem:[%s822 + $0xa] sm:$0xff] %vm224, %v6307
        %6340 = vst.msk [vmem:[%s822 + $0x1a] sm:$0xff] %vm224, %v6308
        %6341 = vst.msk [vmem:[%s822 + $0x22] sm:$0xff] %vm224, %v6309
        %6342 = vst.msk [vmem:[%s822 + $0x32] sm:$0xff] %vm224, %v6310
        %6343 = vst.msk [vmem:[%s822 + $0x3a] sm:$0xff] %vm224, %v6311
        %6344 = vst.msk [vmem:[%s822 + $0x4a] sm:$0xff] %vm224, %v6312
        %6345 = vst.msk [vmem:[%s822 + $0x52] sm:$0xff] %vm224, %v6313
        %6346 = vst.msk [vmem:[%s822 + $0x62] sm:$0xff] %vm224, %v6314
        %6347 = vst.msk [vmem:[%s822 + $0x6a] sm:$0xff] %vm224, %v6315
        %6348 = vst.msk [vmem:[%s822 + $0x7a] sm:$0xff] %vm224, %v6316
        %6349 = vst.msk [vmem:[%s822 + $0x82] sm:$0xff] %vm224, %v6317
        %6350 = vst.msk [vmem:[%s822 + $0x92] sm:$0xff] %vm224, %v6318
        %6351 = vst.msk [vmem:[%s822 + $0x9a] sm:$0xff] %vm224, %v6319
        %6352 = vst.msk [vmem:[%s822 + $0xaa] sm:$0xff] %vm224, %v6320
        %6353 = vst.msk [vmem:[%s822 + $0xb2] sm:$0xff] %vm224, %v6321
        %6354 = vst.msk [vmem:[%s822 + $0xc2] sm:$0xff] %vm224, %v6322
        %6355 = vst.msk [vmem:[%s822 + $0xca] sm:$0xff] %vm224, %v6323
        %6356 = vst.msk [vmem:[%s822 + $0xda] sm:$0xff] %vm224, %v6324
        %6357 = vst.msk [vmem:[%s822 + $0xe2] sm:$0xff] %vm224, %v6325
        %6358 = vst.msk [vmem:[%s822 + $0xf2] sm:$0xff] %vm224, %v6326
        %6359 = vst.msk [vmem:[%s822 + $0xfa] sm:$0xff] %vm224, %v6327
        %6360 = vst.msk [vmem:[%s822 + $0x10a] sm:$0xff] %vm224, %v6328
        %6361 = vst.msk [vmem:[%s822 + $0x112] sm:$0xff] %vm224, %v6329
        %6362 = vst.msk [vmem:[%s822 + $0x122] sm:$0xff] %vm224, %v6330
        %6363 = vst.msk [vmem:[%s822 + $0x12a] sm:$0xff] %vm224, %v6331
        %6364 = vst.msk [vmem:[%s822 + $0x13a] sm:$0xff] %vm224, %v6332
        %6365 = vst.msk [vmem:[%s822 + $0x142] sm:$0xff] %vm224, %v6333
        %6366 = vst.msk [vmem:[%s822 + $0x152] sm:$0xff] %vm224, %v6334
        %6367 = vst.msk [vmem:[%s822 + $0x15a] sm:$0xff] %vm224, %v6335
        %6368 = vst.msk [vmem:[%s822 + $0x16a] sm:$0xff] %vm224, %v6336
        %6369 = vst.msk [vmem:[%s822 + $0x172] sm:$0xff] %vm224, %v6337
        %v6370 = vld [vmem:[#allocation2] sm:$0xff]
        %v6371 = vld [vmem:[#allocation2 + $0x8] sm:$0xff]
        %v6372 = vld [vmem:[#allocation2 + $0x10] sm:$0xff]
        %v6373 = vld [vmem:[#allocation2 + $0x18] sm:$0xff]
        %v6374 = vld [vmem:[#allocation2 + $0x20] sm:$0xff]
        %v6375 = vld [vmem:[#allocation2 + $0x28] sm:$0xff]
        %v6376 = vld [vmem:[#allocation2 + $0x30] sm:$0xff]
        %v6377 = vld [vmem:[#allocation2 + $0x38] sm:$0xff]
        %v6378 = vld [vmem:[#allocation2 + $0x40] sm:$0xff]
        %v6379 = vld [vmem:[#allocation2 + $0x48] sm:$0xff]
        %v6380 = vld [vmem:[#allocation2 + $0x50] sm:$0xff]
        %v6381 = vld [vmem:[#allocation2 + $0x58] sm:$0xff]
        %v6382 = vld [vmem:[#allocation2 + $0x60] sm:$0xff]
        %v6383 = vld [vmem:[#allocation2 + $0x68] sm:$0xff]
        %v6384 = vld [vmem:[#allocation2 + $0x70] sm:$0xff]
        %v6385 = vld [vmem:[#allocation2 + $0x78] sm:$0xff]
        %v6386 = vld [vmem:[#allocation2 + $0x80] sm:$0xff]
        %v6387 = vld [vmem:[#allocation2 + $0x88] sm:$0xff]
        %v6388 = vld [vmem:[#allocation2 + $0x90] sm:$0xff]
        %v6389 = vld [vmem:[#allocation2 + $0x98] sm:$0xff]
        %v6390 = vld [vmem:[#allocation2 + $0xa0] sm:$0xff]
        %v6391 = vld [vmem:[#allocation2 + $0xa8] sm:$0xff]
        %v6392 = vld [vmem:[#allocation2 + $0xb0] sm:$0xff]
        %v6393 = vld [vmem:[#allocation2 + $0xb8] sm:$0xff]
        %v6394 = vld [vmem:[#allocation2 + $0xc0] sm:$0xff]
        %v6395 = vld [vmem:[#allocation2 + $0xc8] sm:$0xff]
        %v6396 = vld [vmem:[#allocation2 + $0xd0] sm:$0xff]
        %v6397 = vld [vmem:[#allocation2 + $0xd8] sm:$0xff]
        %v6398 = vld [vmem:[#allocation2 + $0xe0] sm:$0xff]
        %v6399 = vld [vmem:[#allocation2 + $0xe8] sm:$0xff]
        %v6400 = vld [vmem:[#allocation2 + $0xf0] sm:$0xff]
        %v6401 = vld [vmem:[#allocation2 + $0xf8] sm:$0xff]
        %v6402 = vld [vmem:[#allocation2 + $0x100] sm:$0xff]
        %v6403 = vld [vmem:[#allocation2 + $0x108] sm:$0xff]
        %v6404 = vld [vmem:[#allocation2 + $0x110] sm:$0xff]
        %v6405 = vld [vmem:[#allocation2 + $0x118] sm:$0xff]
        %v6406 = vld [vmem:[#allocation2 + $0x120] sm:$0xff]
        %v6407 = vld [vmem:[#allocation2 + $0x128] sm:$0xff]
        %v6408 = vld [vmem:[#allocation2 + $0x130] sm:$0xff]
        %v6409 = vld [vmem:[#allocation2 + $0x138] sm:$0xff]
        %v6410 = vld [vmem:[#allocation2 + $0x140] sm:$0xff]
        %v6411 = vld [vmem:[#allocation2 + $0x148] sm:$0xff]
        %v6412 = vld [vmem:[#allocation2 + $0x150] sm:$0xff]
        %v6413 = vld [vmem:[#allocation2 + $0x158] sm:$0xff]
        %v6414 = vld [vmem:[#allocation2 + $0x160] sm:$0xff]
        %v6415 = vld [vmem:[#allocation2 + $0x168] sm:$0xff]
        %v6416 = vld [vmem:[#allocation2 + $0x170] sm:$0xff]
        %v6417 = vld [vmem:[#allocation2 + $0x178] sm:$0xff]
        %v6418 = vld [vmem:[%s903] sm:$0xff]
        %v6419 = vld [vmem:[%s903 + $0x8] sm:$0xff]
        %v6420 = vld [vmem:[%s903 + $0x10] sm:$0xff]
        %v6421 = vld [vmem:[%s903 + $0x18] sm:$0xff]
        %v6422 = vld [vmem:[%s903 + $0x20] sm:$0xff]
        %v6423 = vld [vmem:[%s903 + $0x28] sm:$0xff]
        %v6424 = vld [vmem:[%s903 + $0x30] sm:$0xff]
        %v6425 = vld [vmem:[%s903 + $0x38] sm:$0xff]
        %v6426 = vld [vmem:[%s903 + $0x40] sm:$0xff]
        %v6427 = vld [vmem:[%s903 + $0x48] sm:$0xff]
        %v6428 = vld [vmem:[%s903 + $0x50] sm:$0xff]
        %v6429 = vld [vmem:[%s903 + $0x58] sm:$0xff]
        %v6430 = vld [vmem:[%s903 + $0x60] sm:$0xff]
        %v6431 = vld [vmem:[%s903 + $0x68] sm:$0xff]
        %v6432 = vld [vmem:[%s903 + $0x70] sm:$0xff]
        %v6433 = vld [vmem:[%s903 + $0x78] sm:$0xff]
        %v6434 = vld [vmem:[%s903 + $0x80] sm:$0xff]
        %v6435 = vld [vmem:[%s903 + $0x88] sm:$0xff]
        %v6436 = vld [vmem:[%s903 + $0x90] sm:$0xff]
        %v6437 = vld [vmem:[%s903 + $0x98] sm:$0xff]
        %v6438 = vld [vmem:[%s903 + $0xa0] sm:$0xff]
        %v6439 = vld [vmem:[%s903 + $0xa8] sm:$0xff]
        %v6440 = vld [vmem:[%s903 + $0xb0] sm:$0xff]
        %v6441 = vld [vmem:[%s903 + $0xb8] sm:$0xff]
        %v6442 = vld [vmem:[%s903 + $0xc0] sm:$0xff]
        %v6443 = vld [vmem:[%s903 + $0xc8] sm:$0xff]
        %v6444 = vld [vmem:[%s903 + $0xd0] sm:$0xff]
        %v6445 = vld [vmem:[%s903 + $0xd8] sm:$0xff]
        %v6446 = vld [vmem:[%s903 + $0xe0] sm:$0xff]
        %v6447 = vld [vmem:[%s903 + $0xe8] sm:$0xff]
        %v6448 = vld [vmem:[%s903 + $0xf0] sm:$0xff]
        %v6449 = vld [vmem:[%s903 + $0xf8] sm:$0xff]
        %v6450 = vld [vmem:[%s903 + $0x100] sm:$0xff]
        %v6451 = vld [vmem:[%s903 + $0x108] sm:$0xff]
        %v6452 = vld [vmem:[%s903 + $0x110] sm:$0xff]
        %v6453 = vld [vmem:[%s903 + $0x118] sm:$0xff]
        %v6454 = vld [vmem:[%s903 + $0x120] sm:$0xff]
        %v6455 = vld [vmem:[%s903 + $0x128] sm:$0xff]
        %v6456 = vld [vmem:[%s903 + $0x130] sm:$0xff]
        %v6457 = vld [vmem:[%s903 + $0x138] sm:$0xff]
        %v6458 = vld [vmem:[%s903 + $0x140] sm:$0xff]
        %v6459 = vld [vmem:[%s903 + $0x148] sm:$0xff]
        %v6460 = vld [vmem:[%s903 + $0x150] sm:$0xff]
        %v6461 = vld [vmem:[%s903 + $0x158] sm:$0xff]
        %v6462 = vld [vmem:[%s903 + $0x160] sm:$0xff]
        %v6463 = vld [vmem:[%s903 + $0x168] sm:$0xff]
        %v6464 = vld [vmem:[%s903 + $0x170] sm:$0xff]
        %v6465 = vld [vmem:[%s903 + $0x178] sm:$0xff]
        %v6466 = vld [vmem:[%s822] sm:$0xff]
        %v6467 = vld [vmem:[%s822 + $0x8] sm:$0xff]
        %v6468 = vld [vmem:[%s822 + $0x10] sm:$0xff]
        %v6469 = vld [vmem:[%s822 + $0x18] sm:$0xff]
        %v6470 = vld [vmem:[%s822 + $0x20] sm:$0xff]
        %v6471 = vld [vmem:[%s822 + $0x28] sm:$0xff]
        %v6472 = vld [vmem:[%s822 + $0x30] sm:$0xff]
        %v6473 = vld [vmem:[%s822 + $0x38] sm:$0xff]
        %v6474 = vld [vmem:[%s822 + $0x40] sm:$0xff]
        %v6475 = vld [vmem:[%s822 + $0x48] sm:$0xff]
        %v6476 = vld [vmem:[%s822 + $0x50] sm:$0xff]
        %v6477 = vld [vmem:[%s822 + $0x58] sm:$0xff]
        %v6478 = vld [vmem:[%s822 + $0x60] sm:$0xff]
        %v6479 = vld [vmem:[%s822 + $0x68] sm:$0xff]
        %v6480 = vld [vmem:[%s822 + $0x70] sm:$0xff]
        %v6481 = vld [vmem:[%s822 + $0x78] sm:$0xff]
        %v6482 = vld [vmem:[%s822 + $0x80] sm:$0xff]
        %v6483 = vld [vmem:[%s822 + $0x88] sm:$0xff]
        %v6484 = vld [vmem:[%s822 + $0x90] sm:$0xff]
        %v6485 = vld [vmem:[%s822 + $0x98] sm:$0xff]
        %v6486 = vld [vmem:[%s822 + $0xa0] sm:$0xff]
        %v6487 = vld [vmem:[%s822 + $0xa8] sm:$0xff]
        %v6488 = vld [vmem:[%s822 + $0xb0] sm:$0xff]
        %v6489 = vld [vmem:[%s822 + $0xb8] sm:$0xff]
        %v6490 = vld [vmem:[%s822 + $0xc0] sm:$0xff]
        %v6491 = vld [vmem:[%s822 + $0xc8] sm:$0xff]
        %v6492 = vld [vmem:[%s822 + $0xd0] sm:$0xff]
        %v6493 = vld [vmem:[%s822 + $0xd8] sm:$0xff]
        %v6494 = vld [vmem:[%s822 + $0xe0] sm:$0xff]
        %v6495 = vld [vmem:[%s822 + $0xe8] sm:$0xff]
        %v6496 = vld [vmem:[%s822 + $0xf0] sm:$0xff]
        %v6497 = vld [vmem:[%s822 + $0xf8] sm:$0xff]
        %v6498 = vld [vmem:[%s822 + $0x100] sm:$0xff]
        %v6499 = vld [vmem:[%s822 + $0x108] sm:$0xff]
        %v6500 = vld [vmem:[%s822 + $0x110] sm:$0xff]
        %v6501 = vld [vmem:[%s822 + $0x118] sm:$0xff]
        %v6502 = vld [vmem:[%s822 + $0x120] sm:$0xff]
        %v6503 = vld [vmem:[%s822 + $0x128] sm:$0xff]
        %v6504 = vld [vmem:[%s822 + $0x130] sm:$0xff]
        %v6505 = vld [vmem:[%s822 + $0x138] sm:$0xff]
        %v6506 = vld [vmem:[%s822 + $0x140] sm:$0xff]
        %v6507 = vld [vmem:[%s822 + $0x148] sm:$0xff]
        %v6508 = vld [vmem:[%s822 + $0x150] sm:$0xff]
        %v6509 = vld [vmem:[%s822 + $0x158] sm:$0xff]
        %v6510 = vld [vmem:[%s822 + $0x160] sm:$0xff]
        %v6511 = vld [vmem:[%s822 + $0x168] sm:$0xff]
        %v6512 = vld [vmem:[%s822 + $0x170] sm:$0xff]
        %v6513 = vld [vmem:[%s822 + $0x178] sm:$0xff]
        %v6514 = vld [vmem:[%s1000] sm:$0xff]
        %v6515 = vld [vmem:[%s1000 + $0x8] sm:$0xff]
        %v6516 = vld [vmem:[%s1000 + $0x10] sm:$0xff]
        %v6517 = vld [vmem:[%s1000 + $0x18] sm:$0xff]
        %v6518 = vld [vmem:[%s1000 + $0x20] sm:$0xff]
        %v6519 = vld [vmem:[%s1000 + $0x28] sm:$0xff]
        %v6520 = vld [vmem:[%s1000 + $0x30] sm:$0xff]
        %v6521 = vld [vmem:[%s1000 + $0x38] sm:$0xff]
        %v6522 = vld [vmem:[%s1000 + $0x40] sm:$0xff]
        %v6523 = vld [vmem:[%s1000 + $0x48] sm:$0xff]
        %v6524 = vld [vmem:[%s1000 + $0x50] sm:$0xff]
        %v6525 = vld [vmem:[%s1000 + $0x58] sm:$0xff]
        %v6526 = vld [vmem:[%s1000 + $0x60] sm:$0xff]
        %v6527 = vld [vmem:[%s1000 + $0x68] sm:$0xff]
        %v6528 = vld [vmem:[%s1000 + $0x70] sm:$0xff]
        %v6529 = vld [vmem:[%s1000 + $0x78] sm:$0xff]
        %v6530 = vld [vmem:[%s1000 + $0x80] sm:$0xff]
        %v6531 = vld [vmem:[%s1000 + $0x88] sm:$0xff]
        %v6532 = vld [vmem:[%s1000 + $0x90] sm:$0xff]
        %v6533 = vld [vmem:[%s1000 + $0x98] sm:$0xff]
        %v6534 = vld [vmem:[%s1000 + $0xa0] sm:$0xff]
        %v6535 = vld [vmem:[%s1000 + $0xa8] sm:$0xff]
        %v6536 = vld [vmem:[%s1000 + $0xb0] sm:$0xff]
        %v6537 = vld [vmem:[%s1000 + $0xb8] sm:$0xff]
        %v6538 = vld [vmem:[%s1000 + $0xc0] sm:$0xff]
        %v6539 = vld [vmem:[%s1000 + $0xc8] sm:$0xff]
        %v6540 = vld [vmem:[%s1000 + $0xd0] sm:$0xff]
        %v6541 = vld [vmem:[%s1000 + $0xd8] sm:$0xff]
        %v6542 = vld [vmem:[%s1000 + $0xe0] sm:$0xff]
        %v6543 = vld [vmem:[%s1000 + $0xe8] sm:$0xff]
        %v6544 = vld [vmem:[%s1000 + $0xf0] sm:$0xff]
        %v6545 = vld [vmem:[%s1000 + $0xf8] sm:$0xff]
        %v6546 = vld [vmem:[%s1000 + $0x100] sm:$0xff]
        %v6547 = vld [vmem:[%s1000 + $0x108] sm:$0xff]
        %v6548 = vld [vmem:[%s1000 + $0x110] sm:$0xff]
        %v6549 = vld [vmem:[%s1000 + $0x118] sm:$0xff]
        %v6550 = vld [vmem:[%s1000 + $0x120] sm:$0xff]
        %v6551 = vld [vmem:[%s1000 + $0x128] sm:$0xff]
        %v6552 = vld [vmem:[%s1000 + $0x130] sm:$0xff]
        %v6553 = vld [vmem:[%s1000 + $0x138] sm:$0xff]
        %v6554 = vld [vmem:[%s1000 + $0x140] sm:$0xff]
        %v6555 = vld [vmem:[%s1000 + $0x148] sm:$0xff]
        %v6556 = vld [vmem:[%s1000 + $0x150] sm:$0xff]
        %v6557 = vld [vmem:[%s1000 + $0x158] sm:$0xff]
        %v6558 = vld [vmem:[%s1000 + $0x160] sm:$0xff]
        %v6559 = vld [vmem:[%s1000 + $0x168] sm:$0xff]
        %v6560 = vld [vmem:[%s1000 + $0x170] sm:$0xff]
        %v6561 = vld [vmem:[%s1000 + $0x178] sm:$0xff]
        %v6562 = vld [vmem:[%s1049] sm:$0xff]
        %v6563 = vld [vmem:[%s1049 + $0x8] sm:$0xff]
        %v6564 = vld [vmem:[%s1049 + $0x10] sm:$0xff]
        %v6565 = vld [vmem:[%s1049 + $0x18] sm:$0xff]
        %v6566 = vld [vmem:[%s1049 + $0x20] sm:$0xff]
        %v6567 = vld [vmem:[%s1049 + $0x28] sm:$0xff]
        %v6568 = vld [vmem:[%s1049 + $0x30] sm:$0xff]
        %v6569 = vld [vmem:[%s1049 + $0x38] sm:$0xff]
        %v6570 = vld [vmem:[%s1049 + $0x40] sm:$0xff]
        %v6571 = vld [vmem:[%s1049 + $0x48] sm:$0xff]
        %v6572 = vld [vmem:[%s1049 + $0x50] sm:$0xff]
        %v6573 = vld [vmem:[%s1049 + $0x58] sm:$0xff]
        %v6574 = vld [vmem:[%s1049 + $0x60] sm:$0xff]
        %v6575 = vld [vmem:[%s1049 + $0x68] sm:$0xff]
        %v6576 = vld [vmem:[%s1049 + $0x70] sm:$0xff]
        %v6577 = vld [vmem:[%s1049 + $0x78] sm:$0xff]
        %v6578 = vld [vmem:[%s1049 + $0x80] sm:$0xff]
        %v6579 = vld [vmem:[%s1049 + $0x88] sm:$0xff]
        %v6580 = vld [vmem:[%s1049 + $0x90] sm:$0xff]
        %v6581 = vld [vmem:[%s1049 + $0x98] sm:$0xff]
        %v6582 = vld [vmem:[%s1049 + $0xa0] sm:$0xff]
        %v6583 = vld [vmem:[%s1049 + $0xa8] sm:$0xff]
        %v6584 = vld [vmem:[%s1049 + $0xb0] sm:$0xff]
        %v6585 = vld [vmem:[%s1049 + $0xb8] sm:$0xff]
        %v6586 = vld [vmem:[%s1049 + $0xc0] sm:$0xff]
        %v6587 = vld [vmem:[%s1049 + $0xc8] sm:$0xff]
        %v6588 = vld [vmem:[%s1049 + $0xd0] sm:$0xff]
        %v6589 = vld [vmem:[%s1049 + $0xd8] sm:$0xff]
        %v6590 = vld [vmem:[%s1049 + $0xe0] sm:$0xff]
        %v6591 = vld [vmem:[%s1049 + $0xe8] sm:$0xff]
        %v6592 = vld [vmem:[%s1049 + $0xf0] sm:$0xff]
        %v6593 = vld [vmem:[%s1049 + $0xf8] sm:$0xff]
        %v6594 = vld [vmem:[%s1049 + $0x100] sm:$0xff]
        %v6595 = vld [vmem:[%s1049 + $0x108] sm:$0xff]
        %v6596 = vld [vmem:[%s1049 + $0x110] sm:$0xff]
        %v6597 = vld [vmem:[%s1049 + $0x118] sm:$0xff]
        %v6598 = vld [vmem:[%s1049 + $0x120] sm:$0xff]
        %v6599 = vld [vmem:[%s1049 + $0x128] sm:$0xff]
        %v6600 = vld [vmem:[%s1049 + $0x130] sm:$0xff]
        %v6601 = vld [vmem:[%s1049 + $0x138] sm:$0xff]
        %v6602 = vld [vmem:[%s1049 + $0x140] sm:$0xff]
        %v6603 = vld [vmem:[%s1049 + $0x148] sm:$0xff]
        %v6604 = vld [vmem:[%s1049 + $0x150] sm:$0xff]
        %v6605 = vld [vmem:[%s1049 + $0x158] sm:$0xff]
        %v6606 = vld [vmem:[%s1049 + $0x160] sm:$0xff]
        %v6607 = vld [vmem:[%s1049 + $0x168] sm:$0xff]
        %v6608 = vld [vmem:[%s1049 + $0x170] sm:$0xff]
        %v6609 = vld [vmem:[%s1049 + $0x178] sm:$0xff]
        %6658 = vrot.lane.b32.xlu0 %v6418, 32
        %v6659 = vpop.permute.xlu0 %6658
        %6660 = vrot.lane.b32.xlu0 %v6419, 32
        %v6661 = vpop.permute.xlu0 %6660
        %6662 = vrot.lane.b32.xlu0 %v6420, 32
        %v6663 = vpop.permute.xlu0 %6662
        %6664 = vrot.lane.b32.xlu0 %v6421, 32
        %v6665 = vpop.permute.xlu0 %6664
        %6666 = vrot.lane.b32.xlu0 %v6422, 32
        %v6667 = vpop.permute.xlu0 %6666
        %6668 = vrot.lane.b32.xlu0 %v6423, 32
        %v6669 = vpop.permute.xlu0 %6668
        %6670 = vrot.lane.b32.xlu0 %v6424, 32
        %v6671 = vpop.permute.xlu0 %6670
        %6672 = vrot.lane.b32.xlu0 %v6425, 32
        %v6673 = vpop.permute.xlu0 %6672
        %6674 = vrot.lane.b32.xlu0 %v6426, 32
        %v6675 = vpop.permute.xlu0 %6674
        %6676 = vrot.lane.b32.xlu0 %v6427, 32
        %v6677 = vpop.permute.xlu0 %6676
        %6678 = vrot.lane.b32.xlu0 %v6428, 32
        %v6679 = vpop.permute.xlu0 %6678
        %6680 = vrot.lane.b32.xlu0 %v6429, 32
        %v6681 = vpop.permute.xlu0 %6680
        %6682 = vrot.lane.b32.xlu0 %v6430, 32
        %v6683 = vpop.permute.xlu0 %6682
        %6684 = vrot.lane.b32.xlu0 %v6431, 32
        %v6685 = vpop.permute.xlu0 %6684
        %6686 = vrot.lane.b32.xlu0 %v6432, 32
        %v6687 = vpop.permute.xlu0 %6686
        %6688 = vrot.lane.b32.xlu0 %v6433, 32
        %v6689 = vpop.permute.xlu0 %6688
        %6690 = vrot.lane.b32.xlu0 %v6434, 32
        %v6691 = vpop.permute.xlu0 %6690
        %6692 = vrot.lane.b32.xlu0 %v6435, 32
        %v6693 = vpop.permute.xlu0 %6692
        %6694 = vrot.lane.b32.xlu0 %v6436, 32
        %v6695 = vpop.permute.xlu0 %6694
        %6696 = vrot.lane.b32.xlu0 %v6437, 32
        %v6697 = vpop.permute.xlu0 %6696
        %6698 = vrot.lane.b32.xlu0 %v6438, 32
        %v6699 = vpop.permute.xlu0 %6698
        %6700 = vrot.lane.b32.xlu0 %v6439, 32
        %v6701 = vpop.permute.xlu0 %6700
        %6702 = vrot.lane.b32.xlu0 %v6440, 32
        %v6703 = vpop.permute.xlu0 %6702
        %6704 = vrot.lane.b32.xlu0 %v6441, 32
        %v6705 = vpop.permute.xlu0 %6704
        %6706 = vrot.lane.b32.xlu0 %v6442, 32
        %v6707 = vpop.permute.xlu0 %6706
        %6708 = vrot.lane.b32.xlu0 %v6443, 32
        %v6709 = vpop.permute.xlu0 %6708
        %6710 = vrot.lane.b32.xlu0 %v6444, 32
        %v6711 = vpop.permute.xlu0 %6710
        %6712 = vrot.lane.b32.xlu0 %v6445, 32
        %v6713 = vpop.permute.xlu0 %6712
        %6714 = vrot.lane.b32.xlu0 %v6446, 32
        %v6715 = vpop.permute.xlu0 %6714
        %6716 = vrot.lane.b32.xlu0 %v6447, 32
        %v6717 = vpop.permute.xlu0 %6716
        %6718 = vrot.lane.b32.xlu0 %v6448, 32
        %v6719 = vpop.permute.xlu0 %6718
        %6720 = vrot.lane.b32.xlu0 %v6449, 32
        %v6721 = vpop.permute.xlu0 %6720
        %6722 = vrot.lane.b32.xlu0 %v6450, 32
        %v6723 = vpop.permute.xlu0 %6722
        %6724 = vrot.lane.b32.xlu0 %v6451, 32
        %v6725 = vpop.permute.xlu0 %6724
        %6726 = vrot.lane.b32.xlu0 %v6452, 32
        %v6727 = vpop.permute.xlu0 %6726
        %6728 = vrot.lane.b32.xlu0 %v6453, 32
        %v6729 = vpop.permute.xlu0 %6728
        %6730 = vrot.lane.b32.xlu0 %v6454, 32
        %v6731 = vpop.permute.xlu0 %6730
        %6732 = vrot.lane.b32.xlu0 %v6455, 32
        %v6733 = vpop.permute.xlu0 %6732
        %6734 = vrot.lane.b32.xlu0 %v6456, 32
        %v6735 = vpop.permute.xlu0 %6734
        %6736 = vrot.lane.b32.xlu0 %v6457, 32
        %v6737 = vpop.permute.xlu0 %6736
        %6738 = vrot.lane.b32.xlu0 %v6458, 32
        %v6739 = vpop.permute.xlu0 %6738
        %6740 = vrot.lane.b32.xlu0 %v6459, 32
        %v6741 = vpop.permute.xlu0 %6740
        %6742 = vrot.lane.b32.xlu0 %v6460, 32
        %v6743 = vpop.permute.xlu0 %6742
        %6744 = vrot.lane.b32.xlu0 %v6461, 32
        %v6745 = vpop.permute.xlu0 %6744
        %6746 = vrot.lane.b32.xlu0 %v6462, 32
        %v6747 = vpop.permute.xlu0 %6746
        %6748 = vrot.lane.b32.xlu0 %v6463, 32
        %v6749 = vpop.permute.xlu0 %6748
        %6750 = vrot.lane.b32.xlu0 %v6464, 32
        %v6751 = vpop.permute.xlu0 %6750
        %6752 = vrot.lane.b32.xlu0 %v6465, 32
        %v6753 = vpop.permute.xlu0 %6752
        %6850 = vrot.lane.b32.xlu0 %v6466, 64
        %v6851 = vpop.permute.xlu0 %6850
        %6852 = vrot.lane.b32.xlu0 %v6467, 64
        %v6853 = vpop.permute.xlu0 %6852
        %6854 = vrot.lane.b32.xlu0 %v6468, 64
        %v6855 = vpop.permute.xlu0 %6854
        %6856 = vrot.lane.b32.xlu0 %v6469, 64
        %v6857 = vpop.permute.xlu0 %6856
        %6858 = vrot.lane.b32.xlu0 %v6470, 64
        %v6859 = vpop.permute.xlu0 %6858
        %6860 = vrot.lane.b32.xlu0 %v6471, 64
        %v6861 = vpop.permute.xlu0 %6860
        %6862 = vrot.lane.b32.xlu0 %v6472, 64
        %v6863 = vpop.permute.xlu0 %6862
        %6864 = vrot.lane.b32.xlu0 %v6473, 64
        %v6865 = vpop.permute.xlu0 %6864
        %6866 = vrot.lane.b32.xlu0 %v6474, 64
        %v6867 = vpop.permute.xlu0 %6866
        %6868 = vrot.lane.b32.xlu0 %v6475, 64
        %v6869 = vpop.permute.xlu0 %6868
        %6870 = vrot.lane.b32.xlu0 %v6476, 64
        %v6871 = vpop.permute.xlu0 %6870
        %6872 = vrot.lane.b32.xlu0 %v6477, 64
        %v6873 = vpop.permute.xlu0 %6872
        %6874 = vrot.lane.b32.xlu0 %v6478, 64
        %v6875 = vpop.permute.xlu0 %6874
        %6876 = vrot.lane.b32.xlu0 %v6479, 64
        %v6877 = vpop.permute.xlu0 %6876
        %6878 = vrot.lane.b32.xlu0 %v6480, 64
        %v6879 = vpop.permute.xlu0 %6878
        %6880 = vrot.lane.b32.xlu0 %v6481, 64
        %v6881 = vpop.permute.xlu0 %6880
        %6882 = vrot.lane.b32.xlu0 %v6482, 64
        %v6883 = vpop.permute.xlu0 %6882
        %6884 = vrot.lane.b32.xlu0 %v6483, 64
        %v6885 = vpop.permute.xlu0 %6884
        %6886 = vrot.lane.b32.xlu0 %v6484, 64
        %v6887 = vpop.permute.xlu0 %6886
        %6888 = vrot.lane.b32.xlu0 %v6485, 64
        %v6889 = vpop.permute.xlu0 %6888
        %6890 = vrot.lane.b32.xlu0 %v6486, 64
        %v6891 = vpop.permute.xlu0 %6890
        %6892 = vrot.lane.b32.xlu0 %v6487, 64
        %v6893 = vpop.permute.xlu0 %6892
        %6894 = vrot.lane.b32.xlu0 %v6488, 64
        %v6895 = vpop.permute.xlu0 %6894
        %6896 = vrot.lane.b32.xlu0 %v6489, 64
        %v6897 = vpop.permute.xlu0 %6896
        %6898 = vrot.lane.b32.xlu0 %v6490, 64
        %v6899 = vpop.permute.xlu0 %6898
        %6900 = vrot.lane.b32.xlu0 %v6491, 64
        %v6901 = vpop.permute.xlu0 %6900
        %6902 = vrot.lane.b32.xlu0 %v6492, 64
        %v6903 = vpop.permute.xlu0 %6902
        %6904 = vrot.lane.b32.xlu0 %v6493, 64
        %v6905 = vpop.permute.xlu0 %6904
        %6906 = vrot.lane.b32.xlu0 %v6494, 64
        %v6907 = vpop.permute.xlu0 %6906
        %6908 = vrot.lane.b32.xlu0 %v6495, 64
        %v6909 = vpop.permute.xlu0 %6908
        %6910 = vrot.lane.b32.xlu0 %v6496, 64
        %v6911 = vpop.permute.xlu0 %6910
        %6912 = vrot.lane.b32.xlu0 %v6497, 64
        %v6913 = vpop.permute.xlu0 %6912
        %6914 = vrot.lane.b32.xlu0 %v6498, 64
        %v6915 = vpop.permute.xlu0 %6914
        %6916 = vrot.lane.b32.xlu0 %v6499, 64
        %v6917 = vpop.permute.xlu0 %6916
        %6918 = vrot.lane.b32.xlu0 %v6500, 64
        %v6919 = vpop.permute.xlu0 %6918
        %6920 = vrot.lane.b32.xlu0 %v6501, 64
        %v6921 = vpop.permute.xlu0 %6920
        %6922 = vrot.lane.b32.xlu0 %v6502, 64
        %v6923 = vpop.permute.xlu0 %6922
        %6924 = vrot.lane.b32.xlu0 %v6503, 64
        %v6925 = vpop.permute.xlu0 %6924
        %6926 = vrot.lane.b32.xlu0 %v6504, 64
        %v6927 = vpop.permute.xlu0 %6926
        %6928 = vrot.lane.b32.xlu0 %v6505, 64
        %v6929 = vpop.permute.xlu0 %6928
        %6930 = vrot.lane.b32.xlu0 %v6506, 64
        %v6931 = vpop.permute.xlu0 %6930
        %6932 = vrot.lane.b32.xlu0 %v6507, 64
        %v6933 = vpop.permute.xlu0 %6932
        %6934 = vrot.lane.b32.xlu0 %v6508, 64
        %v6935 = vpop.permute.xlu0 %6934
        %6936 = vrot.lane.b32.xlu0 %v6509, 64
        %v6937 = vpop.permute.xlu0 %6936
        %6938 = vrot.lane.b32.xlu0 %v6510, 64
        %v6939 = vpop.permute.xlu0 %6938
        %6940 = vrot.lane.b32.xlu0 %v6511, 64
        %v6941 = vpop.permute.xlu0 %6940
        %6942 = vrot.lane.b32.xlu0 %v6512, 64
        %v6943 = vpop.permute.xlu0 %6942
        %6944 = vrot.lane.b32.xlu0 %v6513, 64
        %v6945 = vpop.permute.xlu0 %6944
        %7042 = vrot.lane.b32.xlu0 %v6514, 96
        %v7043 = vpop.permute.xlu0 %7042
        %7044 = vrot.lane.b32.xlu0 %v6515, 96
        %v7045 = vpop.permute.xlu0 %7044
        %7046 = vrot.lane.b32.xlu0 %v6516, 96
        %v7047 = vpop.permute.xlu0 %7046
        %7048 = vrot.lane.b32.xlu0 %v6517, 96
        %v7049 = vpop.permute.xlu0 %7048
        %7050 = vrot.lane.b32.xlu0 %v6518, 96
        %v7051 = vpop.permute.xlu0 %7050
        %7052 = vrot.lane.b32.xlu0 %v6519, 96
        %v7053 = vpop.permute.xlu0 %7052
        %7054 = vrot.lane.b32.xlu0 %v6520, 96
        %v7055 = vpop.permute.xlu0 %7054
        %7056 = vrot.lane.b32.xlu0 %v6521, 96
        %v7057 = vpop.permute.xlu0 %7056
        %7058 = vrot.lane.b32.xlu0 %v6522, 96
        %v7059 = vpop.permute.xlu0 %7058
        %7060 = vrot.lane.b32.xlu0 %v6523, 96
        %v7061 = vpop.permute.xlu0 %7060
        %7062 = vrot.lane.b32.xlu0 %v6524, 96
        %v7063 = vpop.permute.xlu0 %7062
        %7064 = vrot.lane.b32.xlu0 %v6525, 96
        %v7065 = vpop.permute.xlu0 %7064
        %7066 = vrot.lane.b32.xlu0 %v6526, 96
        %v7067 = vpop.permute.xlu0 %7066
        %7068 = vrot.lane.b32.xlu0 %v6527, 96
        %v7069 = vpop.permute.xlu0 %7068
        %7070 = vrot.lane.b32.xlu0 %v6528, 96
        %v7071 = vpop.permute.xlu0 %7070
        %7072 = vrot.lane.b32.xlu0 %v6529, 96
        %v7073 = vpop.permute.xlu0 %7072
        %7074 = vrot.lane.b32.xlu0 %v6530, 96
        %v7075 = vpop.permute.xlu0 %7074
        %7076 = vrot.lane.b32.xlu0 %v6531, 96
        %v7077 = vpop.permute.xlu0 %7076
        %7078 = vrot.lane.b32.xlu0 %v6532, 96
        %v7079 = vpop.permute.xlu0 %7078
        %7080 = vrot.lane.b32.xlu0 %v6533, 96
        %v7081 = vpop.permute.xlu0 %7080
        %7082 = vrot.lane.b32.xlu0 %v6534, 96
        %v7083 = vpop.permute.xlu0 %7082
        %7084 = vrot.lane.b32.xlu0 %v6535, 96
        %v7085 = vpop.permute.xlu0 %7084
        %7086 = vrot.lane.b32.xlu0 %v6536, 96
        %v7087 = vpop.permute.xlu0 %7086
        %7088 = vrot.lane.b32.xlu0 %v6537, 96
        %v7089 = vpop.permute.xlu0 %7088
        %7090 = vrot.lane.b32.xlu0 %v6538, 96
        %v7091 = vpop.permute.xlu0 %7090
        %7092 = vrot.lane.b32.xlu0 %v6539, 96
        %v7093 = vpop.permute.xlu0 %7092
        %7094 = vrot.lane.b32.xlu0 %v6540, 96
        %v7095 = vpop.permute.xlu0 %7094
        %7096 = vrot.lane.b32.xlu0 %v6541, 96
        %v7097 = vpop.permute.xlu0 %7096
        %7098 = vrot.lane.b32.xlu0 %v6542, 96
        %v7099 = vpop.permute.xlu0 %7098
        %7100 = vrot.lane.b32.xlu0 %v6543, 96
        %v7101 = vpop.permute.xlu0 %7100
        %7102 = vrot.lane.b32.xlu0 %v6544, 96
        %v7103 = vpop.permute.xlu0 %7102
        %7104 = vrot.lane.b32.xlu0 %v6545, 96
        %v7105 = vpop.permute.xlu0 %7104
        %7106 = vrot.lane.b32.xlu0 %v6546, 96
        %v7107 = vpop.permute.xlu0 %7106
        %7108 = vrot.lane.b32.xlu0 %v6547, 96
        %v7109 = vpop.permute.xlu0 %7108
        %7110 = vrot.lane.b32.xlu0 %v6548, 96
        %v7111 = vpop.permute.xlu0 %7110
        %7112 = vrot.lane.b32.xlu0 %v6549, 96
        %v7113 = vpop.permute.xlu0 %7112
        %7114 = vrot.lane.b32.xlu0 %v6550, 96
        %v7115 = vpop.permute.xlu0 %7114
        %7116 = vrot.lane.b32.xlu0 %v6551, 96
        %v7117 = vpop.permute.xlu0 %7116
        %7118 = vrot.lane.b32.xlu0 %v6552, 96
        %v7119 = vpop.permute.xlu0 %7118
        %7120 = vrot.lane.b32.xlu0 %v6553, 96
        %v7121 = vpop.permute.xlu0 %7120
        %7122 = vrot.lane.b32.xlu0 %v6554, 96
        %v7123 = vpop.permute.xlu0 %7122
        %7124 = vrot.lane.b32.xlu0 %v6555, 96
        %v7125 = vpop.permute.xlu0 %7124
        %7126 = vrot.lane.b32.xlu0 %v6556, 96
        %v7127 = vpop.permute.xlu0 %7126
        %7128 = vrot.lane.b32.xlu0 %v6557, 96
        %v7129 = vpop.permute.xlu0 %7128
        %7130 = vrot.lane.b32.xlu0 %v6558, 96
        %v7131 = vpop.permute.xlu0 %7130
        %7132 = vrot.lane.b32.xlu0 %v6559, 96
        %v7133 = vpop.permute.xlu0 %7132
        %7134 = vrot.lane.b32.xlu0 %v6560, 96
        %v7135 = vpop.permute.xlu0 %7134
        %7136 = vrot.lane.b32.xlu0 %v6561, 96
        %v7137 = vpop.permute.xlu0 %7136
        %v7186 = vsel %vm224, %v6370, %v6659
        %v7187 = vsel %vm224, %v6371, %v6661
        %v7188 = vsel %vm224, %v6372, %v6663
        %v7189 = vsel %vm224, %v6373, %v6665
        %v7190 = vsel %vm224, %v6374, %v6667
        %v7191 = vsel %vm224, %v6375, %v6669
        %v7192 = vsel %vm224, %v6376, %v6671
        %v7193 = vsel %vm224, %v6377, %v6673
        %v7194 = vsel %vm224, %v6378, %v6675
        %v7195 = vsel %vm224, %v6379, %v6677
        %v7196 = vsel %vm224, %v6380, %v6679
        %v7197 = vsel %vm224, %v6381, %v6681
        %v7198 = vsel %vm224, %v6382, %v6683
        %v7199 = vsel %vm224, %v6383, %v6685
        %v7200 = vsel %vm224, %v6384, %v6687
        %v7201 = vsel %vm224, %v6385, %v6689
        %v7202 = vsel %vm224, %v6386, %v6691
        %v7203 = vsel %vm224, %v6387, %v6693
        %v7204 = vsel %vm224, %v6388, %v6695
        %v7205 = vsel %vm224, %v6389, %v6697
        %v7206 = vsel %vm224, %v6390, %v6699
        %v7207 = vsel %vm224, %v6391, %v6701
        %v7208 = vsel %vm224, %v6392, %v6703
        %v7209 = vsel %vm224, %v6393, %v6705
        %v7210 = vsel %vm224, %v6394, %v6707
        %v7211 = vsel %vm224, %v6395, %v6709
        %v7212 = vsel %vm224, %v6396, %v6711
        %v7213 = vsel %vm224, %v6397, %v6713
        %v7214 = vsel %vm224, %v6398, %v6715
        %v7215 = vsel %vm224, %v6399, %v6717
        %v7216 = vsel %vm224, %v6400, %v6719
        %v7217 = vsel %vm224, %v6401, %v6721
        %v7218 = vsel %vm224, %v6402, %v6723
        %v7219 = vsel %vm224, %v6403, %v6725
        %v7220 = vsel %vm224, %v6404, %v6727
        %v7221 = vsel %vm224, %v6405, %v6729
        %v7222 = vsel %vm224, %v6406, %v6731
        %v7223 = vsel %vm224, %v6407, %v6733
        %v7224 = vsel %vm224, %v6408, %v6735
        %v7225 = vsel %vm224, %v6409, %v6737
        %v7226 = vsel %vm224, %v6410, %v6739
        %v7227 = vsel %vm224, %v6411, %v6741
        %v7228 = vsel %vm224, %v6412, %v6743
        %v7229 = vsel %vm224, %v6413, %v6745
        %v7230 = vsel %vm224, %v6414, %v6747
        %v7231 = vsel %vm224, %v6415, %v6749
        %v7232 = vsel %vm224, %v6416, %v6751
        %v7233 = vsel %vm224, %v6417, %v6753
        %v7234 = vsel %vm1722, %v7186, %v6851
        %v7235 = vsel %vm1722, %v7187, %v6853
        %v7236 = vsel %vm1722, %v7188, %v6855
        %v7237 = vsel %vm1722, %v7189, %v6857
        %v7238 = vsel %vm1722, %v7190, %v6859
        %v7239 = vsel %vm1722, %v7191, %v6861
        %v7240 = vsel %vm1722, %v7192, %v6863
        %v7241 = vsel %vm1722, %v7193, %v6865
        %v7242 = vsel %vm1722, %v7194, %v6867
        %v7243 = vsel %vm1722, %v7195, %v6869
        %v7244 = vsel %vm1722, %v7196, %v6871
        %v7245 = vsel %vm1722, %v7197, %v6873
        %v7246 = vsel %vm1722, %v7198, %v6875
        %v7247 = vsel %vm1722, %v7199, %v6877
        %v7248 = vsel %vm1722, %v7200, %v6879
        %v7249 = vsel %vm1722, %v7201, %v6881
        %v7250 = vsel %vm1722, %v7202, %v6883
        %v7251 = vsel %vm1722, %v7203, %v6885
        %v7252 = vsel %vm1722, %v7204, %v6887
        %v7253 = vsel %vm1722, %v7205, %v6889
        %v7254 = vsel %vm1722, %v7206, %v6891
        %v7255 = vsel %vm1722, %v7207, %v6893
        %v7256 = vsel %vm1722, %v7208, %v6895
        %v7257 = vsel %vm1722, %v7209, %v6897
        %v7258 = vsel %vm1722, %v7210, %v6899
        %v7259 = vsel %vm1722, %v7211, %v6901
        %v7260 = vsel %vm1722, %v7212, %v6903
        %v7261 = vsel %vm1722, %v7213, %v6905
        %v7262 = vsel %vm1722, %v7214, %v6907
        %v7263 = vsel %vm1722, %v7215, %v6909
        %v7264 = vsel %vm1722, %v7216, %v6911
        %v7265 = vsel %vm1722, %v7217, %v6913
        %v7266 = vsel %vm1722, %v7218, %v6915
        %v7267 = vsel %vm1722, %v7219, %v6917
        %v7268 = vsel %vm1722, %v7220, %v6919
        %v7269 = vsel %vm1722, %v7221, %v6921
        %v7270 = vsel %vm1722, %v7222, %v6923
        %v7271 = vsel %vm1722, %v7223, %v6925
        %v7272 = vsel %vm1722, %v7224, %v6927
        %v7273 = vsel %vm1722, %v7225, %v6929
        %v7274 = vsel %vm1722, %v7226, %v6931
        %v7275 = vsel %vm1722, %v7227, %v6933
        %v7276 = vsel %vm1722, %v7228, %v6935
        %v7277 = vsel %vm1722, %v7229, %v6937
        %v7278 = vsel %vm1722, %v7230, %v6939
        %v7279 = vsel %vm1722, %v7231, %v6941
        %v7280 = vsel %vm1722, %v7232, %v6943
        %v7281 = vsel %vm1722, %v7233, %v6945
        %v7282 = vsel %vm1771, %v7234, %v7043
        %v7283 = vsel %vm1771, %v7235, %v7045
        %v7284 = vsel %vm1771, %v7236, %v7047
        %v7285 = vsel %vm1771, %v7237, %v7049
        %v7286 = vsel %vm1771, %v7238, %v7051
        %v7287 = vsel %vm1771, %v7239, %v7053
        %v7288 = vsel %vm1771, %v7240, %v7055
        %v7289 = vsel %vm1771, %v7241, %v7057
        %v7290 = vsel %vm1771, %v7242, %v7059
        %v7291 = vsel %vm1771, %v7243, %v7061
        %v7292 = vsel %vm1771, %v7244, %v7063
        %v7293 = vsel %vm1771, %v7245, %v7065
        %v7294 = vsel %vm1771, %v7246, %v7067
        %v7295 = vsel %vm1771, %v7247, %v7069
        %v7296 = vsel %vm1771, %v7248, %v7071
        %v7297 = vsel %vm1771, %v7249, %v7073
        %v7298 = vsel %vm1771, %v7250, %v7075
        %v7299 = vsel %vm1771, %v7251, %v7077
        %v7300 = vsel %vm1771, %v7252, %v7079
        %v7301 = vsel %vm1771, %v7253, %v7081
        %v7302 = vsel %vm1771, %v7254, %v7083
        %v7303 = vsel %vm1771, %v7255, %v7085
        %v7304 = vsel %vm1771, %v7256, %v7087
        %v7305 = vsel %vm1771, %v7257, %v7089
        %v7306 = vsel %vm1771, %v7258, %v7091
        %v7307 = vsel %vm1771, %v7259, %v7093
        %v7308 = vsel %vm1771, %v7260, %v7095
        %v7309 = vsel %vm1771, %v7261, %v7097
        %v7310 = vsel %vm1771, %v7262, %v7099
        %v7311 = vsel %vm1771, %v7263, %v7101
        %v7312 = vsel %vm1771, %v7264, %v7103
        %v7313 = vsel %vm1771, %v7265, %v7105
        %v7314 = vsel %vm1771, %v7266, %v7107
        %v7315 = vsel %vm1771, %v7267, %v7109
        %v7316 = vsel %vm1771, %v7268, %v7111
        %v7317 = vsel %vm1771, %v7269, %v7113
        %v7318 = vsel %vm1771, %v7270, %v7115
        %v7319 = vsel %vm1771, %v7271, %v7117
        %v7320 = vsel %vm1771, %v7272, %v7119
        %v7321 = vsel %vm1771, %v7273, %v7121
        %v7322 = vsel %vm1771, %v7274, %v7123
        %v7323 = vsel %vm1771, %v7275, %v7125
        %v7324 = vsel %vm1771, %v7276, %v7127
        %v7325 = vsel %vm1771, %v7277, %v7129
        %v7326 = vsel %vm1771, %v7278, %v7131
        %v7327 = vsel %vm1771, %v7279, %v7133
        %v7328 = vsel %vm1771, %v7280, %v7135
        %v7329 = vsel %vm1771, %v7281, %v7137
        %s7330 = scalar_lea.vmem [#allocation6], 640
        %v7331 = vld [vmem:[%s7330] sm:$0xff]
        %v7332 = vld [vmem:[%s7330 + $0x8] sm:$0xff]
        %v7333 = vld [vmem:[%s7330 + $0x10] sm:$0xff]
        %v7334 = vld [vmem:[%s7330 + $0x18] sm:$0xff]
        %v7335 = vld [vmem:[%s7330 + $0x20] sm:$0xff]
        %v7336 = vld [vmem:[%s7330 + $0x28] sm:$0xff]
        %v7337 = vld [vmem:[%s7330 + $0x30] sm:$0xff]
        %v7338 = vld [vmem:[%s7330 + $0x38] sm:$0xff]
        %v7339 = vld [vmem:[%s7330 + $0x40] sm:$0xff]
        %v7340 = vld [vmem:[%s7330 + $0x48] sm:$0xff]
        %v7341 = vld [vmem:[%s7330 + $0x50] sm:$0xff]
        %v7342 = vld [vmem:[%s7330 + $0x58] sm:$0xff]
        %v7343 = vld [vmem:[%s7330 + $0x60] sm:$0xff]
        %v7344 = vld [vmem:[%s7330 + $0x68] sm:$0xff]
        %v7345 = vld [vmem:[%s7330 + $0x70] sm:$0xff]
        %v7346 = vld [vmem:[%s7330 + $0x78] sm:$0xff]
        %v7347 = vld [vmem:[%s7330 + $0x80] sm:$0xff]
        %v7348 = vld [vmem:[%s7330 + $0x88] sm:$0xff]
        %v7349 = vld [vmem:[%s7330 + $0x90] sm:$0xff]
        %v7350 = vld [vmem:[%s7330 + $0x98] sm:$0xff]
        %v7351 = vld [vmem:[%s7330 + $0xa0] sm:$0xff]
        %v7352 = vld [vmem:[%s7330 + $0xa8] sm:$0xff]
        %v7353 = vld [vmem:[%s7330 + $0xb0] sm:$0xff]
        %v7354 = vld [vmem:[%s7330 + $0xb8] sm:$0xff]
        %v7355 = vld [vmem:[%s7330 + $0xc0] sm:$0xff]
        %v7356 = vld [vmem:[%s7330 + $0xc8] sm:$0xff]
        %v7357 = vld [vmem:[%s7330 + $0xd0] sm:$0xff]
        %v7358 = vld [vmem:[%s7330 + $0xd8] sm:$0xff]
        %v7359 = vld [vmem:[%s7330 + $0xe0] sm:$0xff]
        %v7360 = vld [vmem:[%s7330 + $0xe8] sm:$0xff]
        %v7361 = vld [vmem:[%s7330 + $0xf0] sm:$0xff]
        %v7362 = vld [vmem:[%s7330 + $0xf8] sm:$0xff]
        %v7363 = vld [vmem:[%s7330 + $0x100] sm:$0xff]
        %v7364 = vld [vmem:[%s7330 + $0x108] sm:$0xff]
        %v7365 = vld [vmem:[%s7330 + $0x110] sm:$0xff]
        %v7366 = vld [vmem:[%s7330 + $0x118] sm:$0xff]
        %v7367 = vld [vmem:[%s7330 + $0x120] sm:$0xff]
        %v7368 = vld [vmem:[%s7330 + $0x128] sm:$0xff]
        %v7369 = vld [vmem:[%s7330 + $0x130] sm:$0xff]
        %v7370 = vld [vmem:[%s7330 + $0x138] sm:$0xff]
        %v7372 = vsel %vm224, %v6562, 0
        %v7375 = vsel %vm224, %v6563, 0
        %v7378 = vsel %vm224, %v6564, 0
        %v7381 = vsel %vm224, %v6565, 0
        %v7384 = vsel %vm224, %v6566, 0
        %v7387 = vsel %vm224, %v6567, 0
        %v7390 = vsel %vm224, %v6568, 0
        %v7393 = vsel %vm224, %v6569, 0
        %v7396 = vsel %vm224, %v6570, 0
        %v7399 = vsel %vm224, %v6571, 0
        %v7402 = vsel %vm224, %v6572, 0
        %v7405 = vsel %vm224, %v6573, 0
        %v7408 = vsel %vm224, %v6574, 0
        %v7411 = vsel %vm224, %v6575, 0
        %v7414 = vsel %vm224, %v6576, 0
        %v7417 = vsel %vm224, %v6577, 0
        %v7420 = vsel %vm224, %v6578, 0
        %v7423 = vsel %vm224, %v6579, 0
        %v7426 = vsel %vm224, %v6580, 0
        %v7429 = vsel %vm224, %v6581, 0
        %v7432 = vsel %vm224, %v6582, 0
        %v7435 = vsel %vm224, %v6583, 0
        %v7438 = vsel %vm224, %v6584, 0
        %v7441 = vsel %vm224, %v6585, 0
        %v7444 = vsel %vm224, %v6586, 0
        %v7447 = vsel %vm224, %v6587, 0
        %v7450 = vsel %vm224, %v6588, 0
        %v7453 = vsel %vm224, %v6589, 0
        %v7456 = vsel %vm224, %v6590, 0
        %v7459 = vsel %vm224, %v6591, 0
        %v7462 = vsel %vm224, %v6592, 0
        %v7465 = vsel %vm224, %v6593, 0
        %v7468 = vsel %vm224, %v6594, 0
        %v7471 = vsel %vm224, %v6595, 0
        %v7474 = vsel %vm224, %v6596, 0
        %v7477 = vsel %vm224, %v6597, 0
        %v7480 = vsel %vm224, %v6598, 0
        %v7483 = vsel %vm224, %v6599, 0
        %v7486 = vsel %vm224, %v6600, 0
        %v7489 = vsel %vm224, %v6601, 0
        %v7492 = vsel %vm224, %v6602, 0
        %v7495 = vsel %vm224, %v6603, 0
        %v7498 = vsel %vm224, %v6604, 0
        %v7501 = vsel %vm224, %v6605, 0
        %v7504 = vsel %vm224, %v6606, 0
        %v7507 = vsel %vm224, %v6607, 0
        %v7510 = vsel %vm224, %v6608, 0
        %v7513 = vsel %vm224, %v6609, 0
        %7515 = vmatpush.msra.mxu0 %v7361
        %7516 = vmatpush.msra.mxu0 %v7359
        %7517 = vmatpush.msra.mxu0 %v7357
        %7518 = vmatpush.msra.mxu0 %v7355
        %7519 = vmatpush.msra.mxu0 %v7353
        %7520 = vmatpush.msra.mxu0 %v7351
        %7521 = vmatpush.msra.mxu0 %v7349
        %7522 = vmatpush.msra.mxu0 %v7347
        %7523 = vmatpush.msra.mxu0 %v7345
        %7524 = vmatpush.msra.mxu0 %v7343
        %7525 = vmatpush.msra.mxu0 %v7341
        %7526 = vmatpush.msra.mxu0 %v7339
        %7527 = vmatpush.msra.mxu0 %v7337
        %7528 = vmatpush.msra.mxu0 %v7335
        %7529 = vmatpush.msra.mxu0 %v7333
        %7530 = vmatpush.msra.mxu0 %v7331
        %7531 = vmatmul.f32.gmra.mxu0 %v7282
        %v7532 = vpop.f32.mrf.mxu0
        %v7533 = vadd.f32 0.0, %v7532
        %7534 = vmatmul.f32.gmra.mxu0 %v7283
        %v7535 = vpop.f32.mrf.mxu0
        %v7536 = vadd.f32 0.0, %v7535
        %7537 = vmatmul.f32.gmra.mxu0 %v7284
        %v7538 = vpop.f32.mrf.mxu0
        %v7539 = vadd.f32 0.0, %v7538
        %7540 = vmatmul.f32.gmra.mxu0 %v7285
        %v7541 = vpop.f32.mrf.mxu0
        %v7542 = vadd.f32 0.0, %v7541
        %7543 = vmatmul.f32.gmra.mxu0 %v7286
        %v7544 = vpop.f32.mrf.mxu0
        %v7545 = vadd.f32 0.0, %v7544
        %7546 = vmatmul.f32.gmra.mxu0 %v7287
        %v7547 = vpop.f32.mrf.mxu0
        %v7548 = vadd.f32 0.0, %v7547
        %7549 = vmatmul.f32.gmra.mxu0 %v7288
        %v7550 = vpop.f32.mrf.mxu0
        %v7551 = vadd.f32 0.0, %v7550
        %7552 = vmatmul.f32.gmra.mxu0 %v7289
        %v7553 = vpop.f32.mrf.mxu0
        %v7554 = vadd.f32 0.0, %v7553
        %7555 = vmatmul.f32.gmra.mxu0 %v7290
        %v7556 = vpop.f32.mrf.mxu0
        %v7557 = vadd.f32 0.0, %v7556
        %7558 = vmatmul.f32.gmra.mxu0 %v7291
        %v7559 = vpop.f32.mrf.mxu0
        %v7560 = vadd.f32 0.0, %v7559
        %7561 = vmatmul.f32.gmra.mxu0 %v7292
        %v7562 = vpop.f32.mrf.mxu0
        %v7563 = vadd.f32 0.0, %v7562
        %7564 = vmatmul.f32.gmra.mxu0 %v7293
        %v7565 = vpop.f32.mrf.mxu0
        %v7566 = vadd.f32 0.0, %v7565
        %7567 = vmatmul.f32.gmra.mxu0 %v7294
        %v7568 = vpop.f32.mrf.mxu0
        %v7569 = vadd.f32 0.0, %v7568
        %7570 = vmatmul.f32.gmra.mxu0 %v7295
        %v7571 = vpop.f32.mrf.mxu0
        %v7572 = vadd.f32 0.0, %v7571
        %7573 = vmatmul.f32.gmra.mxu0 %v7296
        %v7574 = vpop.f32.mrf.mxu0
        %v7575 = vadd.f32 0.0, %v7574
        %7576 = vmatmul.f32.gmra.mxu0 %v7297
        %v7577 = vpop.f32.mrf.mxu0
        %v7578 = vadd.f32 0.0, %v7577
        %7579 = vmatmul.f32.gmra.mxu0 %v7298
        %v7580 = vpop.f32.mrf.mxu0
        %v7581 = vadd.f32 0.0, %v7580
        %7582 = vmatmul.f32.gmra.mxu0 %v7299
        %v7583 = vpop.f32.mrf.mxu0
        %v7584 = vadd.f32 0.0, %v7583
        %7585 = vmatmul.f32.gmra.mxu0 %v7300
        %v7586 = vpop.f32.mrf.mxu0
        %v7587 = vadd.f32 0.0, %v7586
        %7588 = vmatmul.f32.gmra.mxu0 %v7301
        %v7589 = vpop.f32.mrf.mxu0
        %v7590 = vadd.f32 0.0, %v7589
        %7591 = vmatmul.f32.gmra.mxu0 %v7302
        %v7592 = vpop.f32.mrf.mxu0
        %v7593 = vadd.f32 0.0, %v7592
        %7594 = vmatmul.f32.gmra.mxu0 %v7303
        %v7595 = vpop.f32.mrf.mxu0
        %v7596 = vadd.f32 0.0, %v7595
        %7597 = vmatmul.f32.gmra.mxu0 %v7304
        %v7598 = vpop.f32.mrf.mxu0
        %v7599 = vadd.f32 0.0, %v7598
        %7600 = vmatmul.f32.gmra.mxu0 %v7305
        %v7601 = vpop.f32.mrf.mxu0
        %v7602 = vadd.f32 0.0, %v7601
        %7603 = vmatmul.f32.gmra.mxu0 %v7306
        %v7604 = vpop.f32.mrf.mxu0
        %v7605 = vadd.f32 0.0, %v7604
        %7606 = vmatmul.f32.gmra.mxu0 %v7307
        %v7607 = vpop.f32.mrf.mxu0
        %v7608 = vadd.f32 0.0, %v7607
        %7609 = vmatmul.f32.gmra.mxu0 %v7308
        %v7610 = vpop.f32.mrf.mxu0
        %v7611 = vadd.f32 0.0, %v7610
        %7612 = vmatmul.f32.gmra.mxu0 %v7309
        %v7613 = vpop.f32.mrf.mxu0
        %v7614 = vadd.f32 0.0, %v7613
        %7615 = vmatmul.f32.gmra.mxu0 %v7310
        %v7616 = vpop.f32.mrf.mxu0
        %v7617 = vadd.f32 0.0, %v7616
        %7618 = vmatmul.f32.gmra.mxu0 %v7311
        %v7619 = vpop.f32.mrf.mxu0
        %v7620 = vadd.f32 0.0, %v7619
        %7621 = vmatmul.f32.gmra.mxu0 %v7312
        %v7622 = vpop.f32.mrf.mxu0
        %v7623 = vadd.f32 0.0, %v7622
        %7624 = vmatmul.f32.gmra.mxu0 %v7313
        %v7625 = vpop.f32.mrf.mxu0
        %v7626 = vadd.f32 0.0, %v7625
        %7627 = vmatmul.f32.gmra.mxu0 %v7314
        %v7628 = vpop.f32.mrf.mxu0
        %v7629 = vadd.f32 0.0, %v7628
        %7630 = vmatmul.f32.gmra.mxu0 %v7315
        %v7631 = vpop.f32.mrf.mxu0
        %v7632 = vadd.f32 0.0, %v7631
        %7633 = vmatmul.f32.gmra.mxu0 %v7316
        %v7634 = vpop.f32.mrf.mxu0
        %v7635 = vadd.f32 0.0, %v7634
        %7636 = vmatmul.f32.gmra.mxu0 %v7317
        %v7637 = vpop.f32.mrf.mxu0
        %v7638 = vadd.f32 0.0, %v7637
        %7639 = vmatmul.f32.gmra.mxu0 %v7318
        %v7640 = vpop.f32.mrf.mxu0
        %v7641 = vadd.f32 0.0, %v7640
        %7642 = vmatmul.f32.gmra.mxu0 %v7319
        %v7643 = vpop.f32.mrf.mxu0
        %v7644 = vadd.f32 0.0, %v7643
        %7645 = vmatmul.f32.gmra.mxu0 %v7320
        %v7646 = vpop.f32.mrf.mxu0
        %v7647 = vadd.f32 0.0, %v7646
        %7648 = vmatmul.f32.gmra.mxu0 %v7321
        %v7649 = vpop.f32.mrf.mxu0
        %v7650 = vadd.f32 0.0, %v7649
        %7651 = vmatmul.f32.gmra.mxu0 %v7322
        %v7652 = vpop.f32.mrf.mxu0
        %v7653 = vadd.f32 0.0, %v7652
        %7654 = vmatmul.f32.gmra.mxu0 %v7323
        %v7655 = vpop.f32.mrf.mxu0
        %v7656 = vadd.f32 0.0, %v7655
        %7657 = vmatmul.f32.gmra.mxu0 %v7324
        %v7658 = vpop.f32.mrf.mxu0
        %v7659 = vadd.f32 0.0, %v7658
        %7660 = vmatmul.f32.gmra.mxu0 %v7325
        %v7661 = vpop.f32.mrf.mxu0
        %v7662 = vadd.f32 0.0, %v7661
        %7663 = vmatmul.f32.gmra.mxu0 %v7326
        %v7664 = vpop.f32.mrf.mxu0
        %v7665 = vadd.f32 0.0, %v7664
        %7666 = vmatmul.f32.gmra.mxu0 %v7327
        %v7667 = vpop.f32.mrf.mxu0
        %v7668 = vadd.f32 0.0, %v7667
        %7669 = vmatmul.f32.gmra.mxu0 %v7328
        %v7670 = vpop.f32.mrf.mxu0
        %v7671 = vadd.f32 0.0, %v7670
        %7672 = vmatmul.f32.gmra.mxu0 %v7329
        %v7673 = vpop.f32.mrf.mxu0
        %v7674 = vadd.f32 0.0, %v7673
        %7675 = vdwg.mxu0
        %7676 = vmatpush.msra.mxu0 0.0
        %7677 = vmatpush.msra.mxu0 0.0
        %7678 = vmatpush.msra.mxu0 0.0
        %7679 = vmatpush.msra.mxu0 0.0
        %7680 = vmatpush.msra.mxu0 0.0
        %7681 = vmatpush.msra.mxu0 0.0
        %7682 = vmatpush.msra.mxu0 0.0
        %7683 = vmatpush.msra.mxu0 0.0
        %7684 = vmatpush.msra.mxu0 0.0
        %7685 = vmatpush.msra.mxu0 0.0
        %7686 = vmatpush.msra.mxu0 0.0
        %7687 = vmatpush.msra.mxu0 0.0
        %7688 = vmatpush.msra.mxu0 %v7369
        %7689 = vmatpush.msra.mxu0 %v7367
        %7690 = vmatpush.msra.mxu0 %v7365
        %7691 = vmatpush.msra.mxu0 %v7363
        %7692 = vmatmul.f32.gmra.mxu0 %v7372
        %v7693 = vpop.f32.mrf.mxu0
        %v7694 = vadd.f32 %v7533, %v7693
        %7695 = vmatmul.f32.gmra.mxu0 %v7375
        %v7696 = vpop.f32.mrf.mxu0
        %v7697 = vadd.f32 %v7536, %v7696
        %7698 = vmatmul.f32.gmra.mxu0 %v7378
        %v7699 = vpop.f32.mrf.mxu0
        %v7700 = vadd.f32 %v7539, %v7699
        %7701 = vmatmul.f32.gmra.mxu0 %v7381
        %v7702 = vpop.f32.mrf.mxu0
        %v7703 = vadd.f32 %v7542, %v7702
        %7704 = vmatmul.f32.gmra.mxu0 %v7384
        %v7705 = vpop.f32.mrf.mxu0
        %v7706 = vadd.f32 %v7545, %v7705
        %7707 = vmatmul.f32.gmra.mxu0 %v7387
        %v7708 = vpop.f32.mrf.mxu0
        %v7709 = vadd.f32 %v7548, %v7708
        %7710 = vmatmul.f32.gmra.mxu0 %v7390
        %v7711 = vpop.f32.mrf.mxu0
        %v7712 = vadd.f32 %v7551, %v7711
        %7713 = vmatmul.f32.gmra.mxu0 %v7393
        %v7714 = vpop.f32.mrf.mxu0
        %v7715 = vadd.f32 %v7554, %v7714
        %7716 = vmatmul.f32.gmra.mxu0 %v7396
        %v7717 = vpop.f32.mrf.mxu0
        %v7718 = vadd.f32 %v7557, %v7717
        %7719 = vmatmul.f32.gmra.mxu0 %v7399
        %v7720 = vpop.f32.mrf.mxu0
        %v7721 = vadd.f32 %v7560, %v7720
        %7722 = vmatmul.f32.gmra.mxu0 %v7402
        %v7723 = vpop.f32.mrf.mxu0
        %v7724 = vadd.f32 %v7563, %v7723
        %7725 = vmatmul.f32.gmra.mxu0 %v7405
        %v7726 = vpop.f32.mrf.mxu0
        %v7727 = vadd.f32 %v7566, %v7726
        %7728 = vmatmul.f32.gmra.mxu0 %v7408
        %v7729 = vpop.f32.mrf.mxu0
        %v7730 = vadd.f32 %v7569, %v7729
        %7731 = vmatmul.f32.gmra.mxu0 %v7411
        %v7732 = vpop.f32.mrf.mxu0
        %v7733 = vadd.f32 %v7572, %v7732
        %7734 = vmatmul.f32.gmra.mxu0 %v7414
        %v7735 = vpop.f32.mrf.mxu0
        %v7736 = vadd.f32 %v7575, %v7735
        %7737 = vmatmul.f32.gmra.mxu0 %v7417
        %v7738 = vpop.f32.mrf.mxu0
        %v7739 = vadd.f32 %v7578, %v7738
        %7740 = vmatmul.f32.gmra.mxu0 %v7420
        %v7741 = vpop.f32.mrf.mxu0
        %v7742 = vadd.f32 %v7581, %v7741
        %7743 = vmatmul.f32.gmra.mxu0 %v7423
        %v7744 = vpop.f32.mrf.mxu0
        %v7745 = vadd.f32 %v7584, %v7744
        %7746 = vmatmul.f32.gmra.mxu0 %v7426
        %v7747 = vpop.f32.mrf.mxu0
        %v7748 = vadd.f32 %v7587, %v7747
        %7749 = vmatmul.f32.gmra.mxu0 %v7429
        %v7750 = vpop.f32.mrf.mxu0
        %v7751 = vadd.f32 %v7590, %v7750
        %7752 = vmatmul.f32.gmra.mxu0 %v7432
        %v7753 = vpop.f32.mrf.mxu0
        %v7754 = vadd.f32 %v7593, %v7753
        %7755 = vmatmul.f32.gmra.mxu0 %v7435
        %v7756 = vpop.f32.mrf.mxu0
        %v7757 = vadd.f32 %v7596, %v7756
        %7758 = vmatmul.f32.gmra.mxu0 %v7438
        %v7759 = vpop.f32.mrf.mxu0
        %v7760 = vadd.f32 %v7599, %v7759
        %7761 = vmatmul.f32.gmra.mxu0 %v7441
        %v7762 = vpop.f32.mrf.mxu0
        %v7763 = vadd.f32 %v7602, %v7762
        %7764 = vmatmul.f32.gmra.mxu0 %v7444
        %v7765 = vpop.f32.mrf.mxu0
        %v7766 = vadd.f32 %v7605, %v7765
        %7767 = vmatmul.f32.gmra.mxu0 %v7447
        %v7768 = vpop.f32.mrf.mxu0
        %v7769 = vadd.f32 %v7608, %v7768
        %7770 = vmatmul.f32.gmra.mxu0 %v7450
        %v7771 = vpop.f32.mrf.mxu0
        %v7772 = vadd.f32 %v7611, %v7771
        %7773 = vmatmul.f32.gmra.mxu0 %v7453
        %v7774 = vpop.f32.mrf.mxu0
        %v7775 = vadd.f32 %v7614, %v7774
        %7776 = vmatmul.f32.gmra.mxu0 %v7456
        %v7777 = vpop.f32.mrf.mxu0
        %v7778 = vadd.f32 %v7617, %v7777
        %7779 = vmatmul.f32.gmra.mxu0 %v7459
        %v7780 = vpop.f32.mrf.mxu0
        %v7781 = vadd.f32 %v7620, %v7780
        %7782 = vmatmul.f32.gmra.mxu0 %v7462
        %v7783 = vpop.f32.mrf.mxu0
        %v7784 = vadd.f32 %v7623, %v7783
        %7785 = vmatmul.f32.gmra.mxu0 %v7465
        %v7786 = vpop.f32.mrf.mxu0
        %v7787 = vadd.f32 %v7626, %v7786
        %7788 = vmatmul.f32.gmra.mxu0 %v7468
        %v7789 = vpop.f32.mrf.mxu0
        %v7790 = vadd.f32 %v7629, %v7789
        %7791 = vmatmul.f32.gmra.mxu0 %v7471
        %v7792 = vpop.f32.mrf.mxu0
        %v7793 = vadd.f32 %v7632, %v7792
        %7794 = vmatmul.f32.gmra.mxu0 %v7474
        %v7795 = vpop.f32.mrf.mxu0
        %v7796 = vadd.f32 %v7635, %v7795
        %7797 = vmatmul.f32.gmra.mxu0 %v7477
        %v7798 = vpop.f32.mrf.mxu0
        %v7799 = vadd.f32 %v7638, %v7798
        %7800 = vmatmul.f32.gmra.mxu0 %v7480
        %v7801 = vpop.f32.mrf.mxu0
        %v7802 = vadd.f32 %v7641, %v7801
        %7803 = vmatmul.f32.gmra.mxu0 %v7483
        %v7804 = vpop.f32.mrf.mxu0
        %v7805 = vadd.f32 %v7644, %v7804
        %7806 = vmatmul.f32.gmra.mxu0 %v7486
        %v7807 = vpop.f32.mrf.mxu0
        %v7808 = vadd.f32 %v7647, %v7807
        %7809 = vmatmul.f32.gmra.mxu0 %v7489
        %v7810 = vpop.f32.mrf.mxu0
        %v7811 = vadd.f32 %v7650, %v7810
        %7812 = vmatmul.f32.gmra.mxu0 %v7492
        %v7813 = vpop.f32.mrf.mxu0
        %v7814 = vadd.f32 %v7653, %v7813
        %7815 = vmatmul.f32.gmra.mxu0 %v7495
        %v7816 = vpop.f32.mrf.mxu0
        %v7817 = vadd.f32 %v7656, %v7816
        %7818 = vmatmul.f32.gmra.mxu0 %v7498
        %v7819 = vpop.f32.mrf.mxu0
        %v7820 = vadd.f32 %v7659, %v7819
        %7821 = vmatmul.f32.gmra.mxu0 %v7501
        %v7822 = vpop.f32.mrf.mxu0
        %v7823 = vadd.f32 %v7662, %v7822
        %7824 = vmatmul.f32.gmra.mxu0 %v7504
        %v7825 = vpop.f32.mrf.mxu0
        %v7826 = vadd.f32 %v7665, %v7825
        %7827 = vmatmul.f32.gmra.mxu0 %v7507
        %v7828 = vpop.f32.mrf.mxu0
        %v7829 = vadd.f32 %v7668, %v7828
        %7830 = vmatmul.f32.gmra.mxu0 %v7510
        %v7831 = vpop.f32.mrf.mxu0
        %v7832 = vadd.f32 %v7671, %v7831
        %7833 = vmatmul.f32.gmra.mxu0 %v7513
        %v7834 = vpop.f32.mrf.mxu0
        %v7835 = vadd.f32 %v7674, %v7834
        %7836 = vdwg.mxu0
        %7837 = vmatpush.msra.mxu0 %v7362
        %7838 = vmatpush.msra.mxu0 %v7360
        %7839 = vmatpush.msra.mxu0 %v7358
        %7840 = vmatpush.msra.mxu0 %v7356
        %7841 = vmatpush.msra.mxu0 %v7354
        %7842 = vmatpush.msra.mxu0 %v7352
        %7843 = vmatpush.msra.mxu0 %v7350
        %7844 = vmatpush.msra.mxu0 %v7348
        %7845 = vmatpush.msra.mxu0 %v7346
        %7846 = vmatpush.msra.mxu0 %v7344
        %7847 = vmatpush.msra.mxu0 %v7342
        %7848 = vmatpush.msra.mxu0 %v7340
        %7849 = vmatpush.msra.mxu0 %v7338
        %7850 = vmatpush.msra.mxu0 %v7336
        %7851 = vmatpush.msra.mxu0 %v7334
        %7852 = vmatpush.msra.mxu0 %v7332
        %7853 = vmatmul.f32.gmra.mxu0 %v7282
        %v7854 = vpop.f32.mrf.mxu0
        %v7855 = vadd.f32 0.0, %v7854
        %7856 = vmatmul.f32.gmra.mxu0 %v7283
        %v7857 = vpop.f32.mrf.mxu0
        %v7858 = vadd.f32 0.0, %v7857
        %7859 = vmatmul.f32.gmra.mxu0 %v7284
        %v7860 = vpop.f32.mrf.mxu0
        %v7861 = vadd.f32 0.0, %v7860
        %7862 = vmatmul.f32.gmra.mxu0 %v7285
        %v7863 = vpop.f32.mrf.mxu0
        %v7864 = vadd.f32 0.0, %v7863
        %7865 = vmatmul.f32.gmra.mxu0 %v7286
        %v7866 = vpop.f32.mrf.mxu0
        %v7867 = vadd.f32 0.0, %v7866
        %7868 = vmatmul.f32.gmra.mxu0 %v7287
        %v7869 = vpop.f32.mrf.mxu0
        %v7870 = vadd.f32 0.0, %v7869
        %7871 = vmatmul.f32.gmra.mxu0 %v7288
        %v7872 = vpop.f32.mrf.mxu0
        %v7873 = vadd.f32 0.0, %v7872
        %7874 = vmatmul.f32.gmra.mxu0 %v7289
        %v7875 = vpop.f32.mrf.mxu0
        %v7876 = vadd.f32 0.0, %v7875
        %7877 = vmatmul.f32.gmra.mxu0 %v7290
        %v7878 = vpop.f32.mrf.mxu0
        %v7879 = vadd.f32 0.0, %v7878
        %7880 = vmatmul.f32.gmra.mxu0 %v7291
        %v7881 = vpop.f32.mrf.mxu0
        %v7882 = vadd.f32 0.0, %v7881
        %7883 = vmatmul.f32.gmra.mxu0 %v7292
        %v7884 = vpop.f32.mrf.mxu0
        %v7885 = vadd.f32 0.0, %v7884
        %7886 = vmatmul.f32.gmra.mxu0 %v7293
        %v7887 = vpop.f32.mrf.mxu0
        %v7888 = vadd.f32 0.0, %v7887
        %7889 = vmatmul.f32.gmra.mxu0 %v7294
        %v7890 = vpop.f32.mrf.mxu0
        %v7891 = vadd.f32 0.0, %v7890
        %7892 = vmatmul.f32.gmra.mxu0 %v7295
        %v7893 = vpop.f32.mrf.mxu0
        %v7894 = vadd.f32 0.0, %v7893
        %7895 = vmatmul.f32.gmra.mxu0 %v7296
        %v7896 = vpop.f32.mrf.mxu0
        %v7897 = vadd.f32 0.0, %v7896
        %7898 = vmatmul.f32.gmra.mxu0 %v7297
        %v7899 = vpop.f32.mrf.mxu0
        %v7900 = vadd.f32 0.0, %v7899
        %7901 = vmatmul.f32.gmra.mxu0 %v7298
        %v7902 = vpop.f32.mrf.mxu0
        %v7903 = vadd.f32 0.0, %v7902
        %7904 = vmatmul.f32.gmra.mxu0 %v7299
        %v7905 = vpop.f32.mrf.mxu0
        %v7906 = vadd.f32 0.0, %v7905
        %7907 = vmatmul.f32.gmra.mxu0 %v7300
        %v7908 = vpop.f32.mrf.mxu0
        %v7909 = vadd.f32 0.0, %v7908
        %7910 = vmatmul.f32.gmra.mxu0 %v7301
        %v7911 = vpop.f32.mrf.mxu0
        %v7912 = vadd.f32 0.0, %v7911
        %7913 = vmatmul.f32.gmra.mxu0 %v7302
        %v7914 = vpop.f32.mrf.mxu0
        %v7915 = vadd.f32 0.0, %v7914
        %7916 = vmatmul.f32.gmra.mxu0 %v7303
        %v7917 = vpop.f32.mrf.mxu0
        %v7918 = vadd.f32 0.0, %v7917
        %7919 = vmatmul.f32.gmra.mxu0 %v7304
        %v7920 = vpop.f32.mrf.mxu0
        %v7921 = vadd.f32 0.0, %v7920
        %7922 = vmatmul.f32.gmra.mxu0 %v7305
        %v7923 = vpop.f32.mrf.mxu0
        %v7924 = vadd.f32 0.0, %v7923
        %7925 = vmatmul.f32.gmra.mxu0 %v7306
        %v7926 = vpop.f32.mrf.mxu0
        %v7927 = vadd.f32 0.0, %v7926
        %7928 = vmatmul.f32.gmra.mxu0 %v7307
        %v7929 = vpop.f32.mrf.mxu0
        %v7930 = vadd.f32 0.0, %v7929
        %7931 = vmatmul.f32.gmra.mxu0 %v7308
        %v7932 = vpop.f32.mrf.mxu0
        %v7933 = vadd.f32 0.0, %v7932
        %7934 = vmatmul.f32.gmra.mxu0 %v7309
        %v7935 = vpop.f32.mrf.mxu0
        %v7936 = vadd.f32 0.0, %v7935
        %7937 = vmatmul.f32.gmra.mxu0 %v7310
        %v7938 = vpop.f32.mrf.mxu0
        %v7939 = vadd.f32 0.0, %v7938
        %7940 = vmatmul.f32.gmra.mxu0 %v7311
        %v7941 = vpop.f32.mrf.mxu0
        %v7942 = vadd.f32 0.0, %v7941
        %7943 = vmatmul.f32.gmra.mxu0 %v7312
        %v7944 = vpop.f32.mrf.mxu0
        %v7945 = vadd.f32 0.0, %v7944
        %7946 = vmatmul.f32.gmra.mxu0 %v7313
        %v7947 = vpop.f32.mrf.mxu0
        %v7948 = vadd.f32 0.0, %v7947
        %7949 = vmatmul.f32.gmra.mxu0 %v7314
        %v7950 = vpop.f32.mrf.mxu0
        %v7951 = vadd.f32 0.0, %v7950
        %7952 = vmatmul.f32.gmra.mxu0 %v7315
        %v7953 = vpop.f32.mrf.mxu0
        %v7954 = vadd.f32 0.0, %v7953
        %7955 = vmatmul.f32.gmra.mxu0 %v7316
        %v7956 = vpop.f32.mrf.mxu0
        %v7957 = vadd.f32 0.0, %v7956
        %7958 = vmatmul.f32.gmra.mxu0 %v7317
        %v7959 = vpop.f32.mrf.mxu0
        %v7960 = vadd.f32 0.0, %v7959
        %7961 = vmatmul.f32.gmra.mxu0 %v7318
        %v7962 = vpop.f32.mrf.mxu0
        %v7963 = vadd.f32 0.0, %v7962
        %7964 = vmatmul.f32.gmra.mxu0 %v7319
        %v7965 = vpop.f32.mrf.mxu0
        %v7966 = vadd.f32 0.0, %v7965
        %7967 = vmatmul.f32.gmra.mxu0 %v7320
        %v7968 = vpop.f32.mrf.mxu0
        %v7969 = vadd.f32 0.0, %v7968
        %7970 = vmatmul.f32.gmra.mxu0 %v7321
        %v7971 = vpop.f32.mrf.mxu0
        %v7972 = vadd.f32 0.0, %v7971
        %7973 = vmatmul.f32.gmra.mxu0 %v7322
        %v7974 = vpop.f32.mrf.mxu0
        %v7975 = vadd.f32 0.0, %v7974
        %7976 = vmatmul.f32.gmra.mxu0 %v7323
        %v7977 = vpop.f32.mrf.mxu0
        %v7978 = vadd.f32 0.0, %v7977
        %7979 = vmatmul.f32.gmra.mxu0 %v7324
        %v7980 = vpop.f32.mrf.mxu0
        %v7981 = vadd.f32 0.0, %v7980
        %7982 = vmatmul.f32.gmra.mxu0 %v7325
        %v7983 = vpop.f32.mrf.mxu0
        %v7984 = vadd.f32 0.0, %v7983
        %7985 = vmatmul.f32.gmra.mxu0 %v7326
        %v7986 = vpop.f32.mrf.mxu0
        %v7987 = vadd.f32 0.0, %v7986
        %7988 = vmatmul.f32.gmra.mxu0 %v7327
        %v7989 = vpop.f32.mrf.mxu0
        %v7990 = vadd.f32 0.0, %v7989
        %7991 = vmatmul.f32.gmra.mxu0 %v7328
        %v7992 = vpop.f32.mrf.mxu0
        %v7993 = vadd.f32 0.0, %v7992
        %7994 = vmatmul.f32.gmra.mxu0 %v7329
        %v7995 = vpop.f32.mrf.mxu0
        %v7996 = vadd.f32 0.0, %v7995
        %7997 = vdwg.mxu0
        %7998 = vmatpush.msra.mxu0 0.0
        %7999 = vmatpush.msra.mxu0 0.0
        %8000 = vmatpush.msra.mxu0 0.0
        %8001 = vmatpush.msra.mxu0 0.0
        %8002 = vmatpush.msra.mxu0 0.0
        %8003 = vmatpush.msra.mxu0 0.0
        %8004 = vmatpush.msra.mxu0 0.0
        %8005 = vmatpush.msra.mxu0 0.0
        %8006 = vmatpush.msra.mxu0 0.0
        %8007 = vmatpush.msra.mxu0 0.0
        %8008 = vmatpush.msra.mxu0 0.0
        %8009 = vmatpush.msra.mxu0 0.0
        %8010 = vmatpush.msra.mxu0 %v7370
        %8011 = vmatpush.msra.mxu0 %v7368
        %8012 = vmatpush.msra.mxu0 %v7366
        %8013 = vmatpush.msra.mxu0 %v7364
        %8014 = vmatmul.f32.gmra.mxu0 %v7372
        %v8015 = vpop.f32.mrf.mxu0
        %v8016 = vadd.f32 %v7855, %v8015
        %8017 = vmatmul.f32.gmra.mxu0 %v7375
        %v8018 = vpop.f32.mrf.mxu0
        %v8019 = vadd.f32 %v7858, %v8018
        %8020 = vmatmul.f32.gmra.mxu0 %v7378
        %v8021 = vpop.f32.mrf.mxu0
        %v8022 = vadd.f32 %v7861, %v8021
        %8023 = vmatmul.f32.gmra.mxu0 %v7381
        %v8024 = vpop.f32.mrf.mxu0
        %v8025 = vadd.f32 %v7864, %v8024
        %8026 = vmatmul.f32.gmra.mxu0 %v7384
        %v8027 = vpop.f32.mrf.mxu0
        %v8028 = vadd.f32 %v7867, %v8027
        %8029 = vmatmul.f32.gmra.mxu0 %v7387
        %v8030 = vpop.f32.mrf.mxu0
        %v8031 = vadd.f32 %v7870, %v8030
        %8032 = vmatmul.f32.gmra.mxu0 %v7390
        %v8033 = vpop.f32.mrf.mxu0
        %v8034 = vadd.f32 %v7873, %v8033
        %8035 = vmatmul.f32.gmra.mxu0 %v7393
        %v8036 = vpop.f32.mrf.mxu0
        %v8037 = vadd.f32 %v7876, %v8036
        %8038 = vmatmul.f32.gmra.mxu0 %v7396
        %v8039 = vpop.f32.mrf.mxu0
        %v8040 = vadd.f32 %v7879, %v8039
        %8041 = vmatmul.f32.gmra.mxu0 %v7399
        %v8042 = vpop.f32.mrf.mxu0
        %v8043 = vadd.f32 %v7882, %v8042
        %8044 = vmatmul.f32.gmra.mxu0 %v7402
        %v8045 = vpop.f32.mrf.mxu0
        %v8046 = vadd.f32 %v7885, %v8045
        %8047 = vmatmul.f32.gmra.mxu0 %v7405
        %v8048 = vpop.f32.mrf.mxu0
        %v8049 = vadd.f32 %v7888, %v8048
        %8050 = vmatmul.f32.gmra.mxu0 %v7408
        %v8051 = vpop.f32.mrf.mxu0
        %v8052 = vadd.f32 %v7891, %v8051
        %8053 = vmatmul.f32.gmra.mxu0 %v7411
        %v8054 = vpop.f32.mrf.mxu0
        %v8055 = vadd.f32 %v7894, %v8054
        %8056 = vmatmul.f32.gmra.mxu0 %v7414
        %v8057 = vpop.f32.mrf.mxu0
        %v8058 = vadd.f32 %v7897, %v8057
        %8059 = vmatmul.f32.gmra.mxu0 %v7417
        %v8060 = vpop.f32.mrf.mxu0
        %v8061 = vadd.f32 %v7900, %v8060
        %8062 = vmatmul.f32.gmra.mxu0 %v7420
        %v8063 = vpop.f32.mrf.mxu0
        %v8064 = vadd.f32 %v7903, %v8063
        %8065 = vmatmul.f32.gmra.mxu0 %v7423
        %v8066 = vpop.f32.mrf.mxu0
        %v8067 = vadd.f32 %v7906, %v8066
        %8068 = vmatmul.f32.gmra.mxu0 %v7426
        %v8069 = vpop.f32.mrf.mxu0
        %v8070 = vadd.f32 %v7909, %v8069
        %8071 = vmatmul.f32.gmra.mxu0 %v7429
        %v8072 = vpop.f32.mrf.mxu0
        %v8073 = vadd.f32 %v7912, %v8072
        %8074 = vmatmul.f32.gmra.mxu0 %v7432
        %v8075 = vpop.f32.mrf.mxu0
        %v8076 = vadd.f32 %v7915, %v8075
        %8077 = vmatmul.f32.gmra.mxu0 %v7435
        %v8078 = vpop.f32.mrf.mxu0
        %v8079 = vadd.f32 %v7918, %v8078
        %8080 = vmatmul.f32.gmra.mxu0 %v7438
        %v8081 = vpop.f32.mrf.mxu0
        %v8082 = vadd.f32 %v7921, %v8081
        %8083 = vmatmul.f32.gmra.mxu0 %v7441
        %v8084 = vpop.f32.mrf.mxu0
        %v8085 = vadd.f32 %v7924, %v8084
        %8086 = vmatmul.f32.gmra.mxu0 %v7444
        %v8087 = vpop.f32.mrf.mxu0
        %v8088 = vadd.f32 %v7927, %v8087
        %8089 = vmatmul.f32.gmra.mxu0 %v7447
        %v8090 = vpop.f32.mrf.mxu0
        %v8091 = vadd.f32 %v7930, %v8090
        %8092 = vmatmul.f32.gmra.mxu0 %v7450
        %v8093 = vpop.f32.mrf.mxu0
        %v8094 = vadd.f32 %v7933, %v8093
        %8095 = vmatmul.f32.gmra.mxu0 %v7453
        %v8096 = vpop.f32.mrf.mxu0
        %v8097 = vadd.f32 %v7936, %v8096
        %8098 = vmatmul.f32.gmra.mxu0 %v7456
        %v8099 = vpop.f32.mrf.mxu0
        %v8100 = vadd.f32 %v7939, %v8099
        %8101 = vmatmul.f32.gmra.mxu0 %v7459
        %v8102 = vpop.f32.mrf.mxu0
        %v8103 = vadd.f32 %v7942, %v8102
        %8104 = vmatmul.f32.gmra.mxu0 %v7462
        %v8105 = vpop.f32.mrf.mxu0
        %v8106 = vadd.f32 %v7945, %v8105
        %8107 = vmatmul.f32.gmra.mxu0 %v7465
        %v8108 = vpop.f32.mrf.mxu0
        %v8109 = vadd.f32 %v7948, %v8108
        %8110 = vmatmul.f32.gmra.mxu0 %v7468
        %v8111 = vpop.f32.mrf.mxu0
        %v8112 = vadd.f32 %v7951, %v8111
        %8113 = vmatmul.f32.gmra.mxu0 %v7471
        %v8114 = vpop.f32.mrf.mxu0
        %v8115 = vadd.f32 %v7954, %v8114
        %8116 = vmatmul.f32.gmra.mxu0 %v7474
        %v8117 = vpop.f32.mrf.mxu0
        %v8118 = vadd.f32 %v7957, %v8117
        %8119 = vmatmul.f32.gmra.mxu0 %v7477
        %v8120 = vpop.f32.mrf.mxu0
        %v8121 = vadd.f32 %v7960, %v8120
        %8122 = vmatmul.f32.gmra.mxu0 %v7480
        %v8123 = vpop.f32.mrf.mxu0
        %v8124 = vadd.f32 %v7963, %v8123
        %8125 = vmatmul.f32.gmra.mxu0 %v7483
        %v8126 = vpop.f32.mrf.mxu0
        %v8127 = vadd.f32 %v7966, %v8126
        %8128 = vmatmul.f32.gmra.mxu0 %v7486
        %v8129 = vpop.f32.mrf.mxu0
        %v8130 = vadd.f32 %v7969, %v8129
        %8131 = vmatmul.f32.gmra.mxu0 %v7489
        %v8132 = vpop.f32.mrf.mxu0
        %v8133 = vadd.f32 %v7972, %v8132
        %8134 = vmatmul.f32.gmra.mxu0 %v7492
        %v8135 = vpop.f32.mrf.mxu0
        %v8136 = vadd.f32 %v7975, %v8135
        %8137 = vmatmul.f32.gmra.mxu0 %v7495
        %v8138 = vpop.f32.mrf.mxu0
        %v8139 = vadd.f32 %v7978, %v8138
        %8140 = vmatmul.f32.gmra.mxu0 %v7498
        %v8141 = vpop.f32.mrf.mxu0
        %v8142 = vadd.f32 %v7981, %v8141
        %8143 = vmatmul.f32.gmra.mxu0 %v7501
        %v8144 = vpop.f32.mrf.mxu0
        %v8145 = vadd.f32 %v7984, %v8144
        %8146 = vmatmul.f32.gmra.mxu0 %v7504
        %v8147 = vpop.f32.mrf.mxu0
        %v8148 = vadd.f32 %v7987, %v8147
        %8149 = vmatmul.f32.gmra.mxu0 %v7507
        %v8150 = vpop.f32.mrf.mxu0
        %v8151 = vadd.f32 %v7990, %v8150
        %8152 = vmatmul.f32.gmra.mxu0 %v7510
        %v8153 = vpop.f32.mrf.mxu0
        %v8154 = vadd.f32 %v7993, %v8153
        %8155 = vmatmul.f32.gmra.mxu0 %v7513
        %v8156 = vpop.f32.mrf.mxu0
        %v8157 = vadd.f32 %v7996, %v8156
        %8158 = vdwg.mxu0
        %s8159 = scalar_lea.vmem [#allocation8], 2
        %v8160 = vld [vmem:[%s8159] sm:$0x1]
        %v8162 = vperm.slane %v8160, 0
        %v8164 = vadd.f32 %v8162, %v7694
        %v8165 = vadd.f32 %v8162, %v7697
        %v8166 = vadd.f32 %v8162, %v7703
        %v8167 = vadd.f32 %v8162, %v7706
        %v8168 = vadd.f32 %v8162, %v7712
        %v8169 = vadd.f32 %v8162, %v7715
        %v8170 = vadd.f32 %v8162, %v7721
        %v8171 = vadd.f32 %v8162, %v7724
        %v8172 = vadd.f32 %v8162, %v7730
        %v8173 = vadd.f32 %v8162, %v7733
        %v8174 = vadd.f32 %v8162, %v7739
        %v8175 = vadd.f32 %v8162, %v7742
        %v8176 = vadd.f32 %v8162, %v7748
        %v8177 = vadd.f32 %v8162, %v7751
        %v8178 = vadd.f32 %v8162, %v7757
        %v8179 = vadd.f32 %v8162, %v7760
        %v8180 = vadd.f32 %v8162, %v7766
        %v8181 = vadd.f32 %v8162, %v7769
        %v8182 = vadd.f32 %v8162, %v7775
        %v8183 = vadd.f32 %v8162, %v7778
        %v8184 = vadd.f32 %v8162, %v7784
        %v8185 = vadd.f32 %v8162, %v7787
        %v8186 = vadd.f32 %v8162, %v7793
        %v8187 = vadd.f32 %v8162, %v7796
        %v8188 = vadd.f32 %v8162, %v7802
        %v8189 = vadd.f32 %v8162, %v7805
        %v8190 = vadd.f32 %v8162, %v7811
        %v8191 = vadd.f32 %v8162, %v7814
        %v8192 = vadd.f32 %v8162, %v7820
        %v8193 = vadd.f32 %v8162, %v7823
        %v8194 = vadd.f32 %v8162, %v7829
        %v8195 = vadd.f32 %v8162, %v7832
        %v8244 = vrot.slane %v7694, 1
        %v8245 = vrot.slane %v7697, 1
        %v8246 = vsel %vm2732, %v8244, %v8245
        %v8247 = vrot.slane %v7700, 1
        %v8248 = vsel %vm2732, %v8245, %v8247
        %v8249 = vrot.slane %v7703, 1
        %v8250 = vrot.slane %v7706, 1
        %v8251 = vsel %vm2732, %v8249, %v8250
        %v8252 = vrot.slane %v7709, 1
        %v8253 = vsel %vm2732, %v8250, %v8252
        %v8254 = vrot.slane %v7712, 1
        %v8255 = vrot.slane %v7715, 1
        %v8256 = vsel %vm2732, %v8254, %v8255
        %v8257 = vrot.slane %v7718, 1
        %v8258 = vsel %vm2732, %v8255, %v8257
        %v8259 = vrot.slane %v7721, 1
        %v8260 = vrot.slane %v7724, 1
        %v8261 = vsel %vm2732, %v8259, %v8260
        %v8262 = vrot.slane %v7727, 1
        %v8263 = vsel %vm2732, %v8260, %v8262
        %v8264 = vrot.slane %v7730, 1
        %v8265 = vrot.slane %v7733, 1
        %v8266 = vsel %vm2732, %v8264, %v8265
        %v8267 = vrot.slane %v7736, 1
        %v8268 = vsel %vm2732, %v8265, %v8267
        %v8269 = vrot.slane %v7739, 1
        %v8270 = vrot.slane %v7742, 1
        %v8271 = vsel %vm2732, %v8269, %v8270
        %v8272 = vrot.slane %v7745, 1
        %v8273 = vsel %vm2732, %v8270, %v8272
        %v8274 = vrot.slane %v7748, 1
        %v8275 = vrot.slane %v7751, 1
        %v8276 = vsel %vm2732, %v8274, %v8275
        %v8277 = vrot.slane %v7754, 1
        %v8278 = vsel %vm2732, %v8275, %v8277
        %v8279 = vrot.slane %v7757, 1
        %v8280 = vrot.slane %v7760, 1
        %v8281 = vsel %vm2732, %v8279, %v8280
        %v8282 = vrot.slane %v7763, 1
        %v8283 = vsel %vm2732, %v8280, %v8282
        %v8284 = vrot.slane %v7766, 1
        %v8285 = vrot.slane %v7769, 1
        %v8286 = vsel %vm2732, %v8284, %v8285
        %v8287 = vrot.slane %v7772, 1
        %v8288 = vsel %vm2732, %v8285, %v8287
        %v8289 = vrot.slane %v7775, 1
        %v8290 = vrot.slane %v7778, 1
        %v8291 = vsel %vm2732, %v8289, %v8290
        %v8292 = vrot.slane %v7781, 1
        %v8293 = vsel %vm2732, %v8290, %v8292
        %v8294 = vrot.slane %v7784, 1
        %v8295 = vrot.slane %v7787, 1
        %v8296 = vsel %vm2732, %v8294, %v8295
        %v8297 = vrot.slane %v7790, 1
        %v8298 = vsel %vm2732, %v8295, %v8297
        %v8299 = vrot.slane %v7793, 1
        %v8300 = vrot.slane %v7796, 1
        %v8301 = vsel %vm2732, %v8299, %v8300
        %v8302 = vrot.slane %v7799, 1
        %v8303 = vsel %vm2732, %v8300, %v8302
        %v8304 = vrot.slane %v7802, 1
        %v8305 = vrot.slane %v7805, 1
        %v8306 = vsel %vm2732, %v8304, %v8305
        %v8307 = vrot.slane %v7808, 1
        %v8308 = vsel %vm2732, %v8305, %v8307
        %v8309 = vrot.slane %v7811, 1
        %v8310 = vrot.slane %v7814, 1
        %v8311 = vsel %vm2732, %v8309, %v8310
        %v8312 = vrot.slane %v7817, 1
        %v8313 = vsel %vm2732, %v8310, %v8312
        %v8314 = vrot.slane %v7820, 1
        %v8315 = vrot.slane %v7823, 1
        %v8316 = vsel %vm2732, %v8314, %v8315
        %v8317 = vrot.slane %v7826, 1
        %v8318 = vsel %vm2732, %v8315, %v8317
        %v8319 = vrot.slane %v7829, 1
        %v8320 = vrot.slane %v7832, 1
        %v8321 = vsel %vm2732, %v8319, %v8320
        %v8322 = vrot.slane %v7835, 1
        %v8323 = vsel %vm2732, %v8320, %v8322
        %8324 = vrot.lane.b32.xlu0 %v8246, 96
        %v8325 = vpop.permute.xlu0 %8324
        %8326 = vrot.lane.b32.xlu0 %v8248, 96
        %v8327 = vpop.permute.xlu0 %8326
        %8328 = vrot.lane.b32.xlu0 %v8251, 96
        %v8329 = vpop.permute.xlu0 %8328
        %8330 = vrot.lane.b32.xlu0 %v8253, 96
        %v8331 = vpop.permute.xlu0 %8330
        %8332 = vrot.lane.b32.xlu0 %v8256, 96
        %v8333 = vpop.permute.xlu0 %8332
        %8334 = vrot.lane.b32.xlu0 %v8258, 96
        %v8335 = vpop.permute.xlu0 %8334
        %8336 = vrot.lane.b32.xlu0 %v8261, 96
        %v8337 = vpop.permute.xlu0 %8336
        %8338 = vrot.lane.b32.xlu0 %v8263, 96
        %v8339 = vpop.permute.xlu0 %8338
        %8340 = vrot.lane.b32.xlu0 %v8266, 96
        %v8341 = vpop.permute.xlu0 %8340
        %8342 = vrot.lane.b32.xlu0 %v8268, 96
        %v8343 = vpop.permute.xlu0 %8342
        %8344 = vrot.lane.b32.xlu0 %v8271, 96
        %v8345 = vpop.permute.xlu0 %8344
        %8346 = vrot.lane.b32.xlu0 %v8273, 96
        %v8347 = vpop.permute.xlu0 %8346
        %8348 = vrot.lane.b32.xlu0 %v8276, 96
        %v8349 = vpop.permute.xlu0 %8348
        %8350 = vrot.lane.b32.xlu0 %v8278, 96
        %v8351 = vpop.permute.xlu0 %8350
        %8352 = vrot.lane.b32.xlu0 %v8281, 96
        %v8353 = vpop.permute.xlu0 %8352
        %8354 = vrot.lane.b32.xlu0 %v8283, 96
        %v8355 = vpop.permute.xlu0 %8354
        %8356 = vrot.lane.b32.xlu0 %v8286, 96
        %v8357 = vpop.permute.xlu0 %8356
        %8358 = vrot.lane.b32.xlu0 %v8288, 96
        %v8359 = vpop.permute.xlu0 %8358
        %8360 = vrot.lane.b32.xlu0 %v8291, 96
        %v8361 = vpop.permute.xlu0 %8360
        %8362 = vrot.lane.b32.xlu0 %v8293, 96
        %v8363 = vpop.permute.xlu0 %8362
        %8364 = vrot.lane.b32.xlu0 %v8296, 96
        %v8365 = vpop.permute.xlu0 %8364
        %8366 = vrot.lane.b32.xlu0 %v8298, 96
        %v8367 = vpop.permute.xlu0 %8366
        %8368 = vrot.lane.b32.xlu0 %v8301, 96
        %v8369 = vpop.permute.xlu0 %8368
        %8370 = vrot.lane.b32.xlu0 %v8303, 96
        %v8371 = vpop.permute.xlu0 %8370
        %8372 = vrot.lane.b32.xlu0 %v8306, 96
        %v8373 = vpop.permute.xlu0 %8372
        %8374 = vrot.lane.b32.xlu0 %v8308, 96
        %v8375 = vpop.permute.xlu0 %8374
        %8376 = vrot.lane.b32.xlu0 %v8311, 96
        %v8377 = vpop.permute.xlu0 %8376
        %8378 = vrot.lane.b32.xlu0 %v8313, 96
        %v8379 = vpop.permute.xlu0 %8378
        %8380 = vrot.lane.b32.xlu0 %v8316, 96
        %v8381 = vpop.permute.xlu0 %8380
        %8382 = vrot.lane.b32.xlu0 %v8318, 96
        %v8383 = vpop.permute.xlu0 %8382
        %8384 = vrot.lane.b32.xlu0 %v8321, 96
        %v8385 = vpop.permute.xlu0 %8384
        %8386 = vrot.lane.b32.xlu0 %v8323, 96
        %v8387 = vpop.permute.xlu0 %8386
        %v8420 = vadd.f32 %v8164, %v8325
        %v8421 = vadd.f32 %v8165, %v8327
        %v8422 = vadd.f32 %v8166, %v8329
        %v8423 = vadd.f32 %v8167, %v8331
        %v8424 = vadd.f32 %v8168, %v8333
        %v8425 = vadd.f32 %v8169, %v8335
        %v8426 = vadd.f32 %v8170, %v8337
        %v8427 = vadd.f32 %v8171, %v8339
        %v8428 = vadd.f32 %v8172, %v8341
        %v8429 = vadd.f32 %v8173, %v8343
        %v8430 = vadd.f32 %v8174, %v8345
        %v8431 = vadd.f32 %v8175, %v8347
        %v8432 = vadd.f32 %v8176, %v8349
        %v8433 = vadd.f32 %v8177, %v8351
        %v8434 = vadd.f32 %v8178, %v8353
        %v8435 = vadd.f32 %v8179, %v8355
        %v8436 = vadd.f32 %v8180, %v8357
        %v8437 = vadd.f32 %v8181, %v8359
        %v8438 = vadd.f32 %v8182, %v8361
        %v8439 = vadd.f32 %v8183, %v8363
        %v8440 = vadd.f32 %v8184, %v8365
        %v8441 = vadd.f32 %v8185, %v8367
        %v8442 = vadd.f32 %v8186, %v8369
        %v8443 = vadd.f32 %v8187, %v8371
        %v8444 = vadd.f32 %v8188, %v8373
        %v8445 = vadd.f32 %v8189, %v8375
        %v8446 = vadd.f32 %v8190, %v8377
        %v8447 = vadd.f32 %v8191, %v8379
        %v8448 = vadd.f32 %v8192, %v8381
        %v8449 = vadd.f32 %v8193, %v8383
        %v8450 = vadd.f32 %v8194, %v8385
        %v8451 = vadd.f32 %v8195, %v8387
        %v8452 = vrot.slane %v7694, 2
        %v8453 = vrot.slane %v7697, 2
        %v8454 = vsel %vm2941, %v8452, %v8453
        %v8455 = vrot.slane %v7700, 2
        %v8456 = vsel %vm2941, %v8453, %v8455
        %v8457 = vrot.slane %v7703, 2
        %v8458 = vrot.slane %v7706, 2
        %v8459 = vsel %vm2941, %v8457, %v8458
        %v8460 = vrot.slane %v7709, 2
        %v8461 = vsel %vm2941, %v8458, %v8460
        %v8462 = vrot.slane %v7712, 2
        %v8463 = vrot.slane %v7715, 2
        %v8464 = vsel %vm2941, %v8462, %v8463
        %v8465 = vrot.slane %v7718, 2
        %v8466 = vsel %vm2941, %v8463, %v8465
        %v8467 = vrot.slane %v7721, 2
        %v8468 = vrot.slane %v7724, 2
        %v8469 = vsel %vm2941, %v8467, %v8468
        %v8470 = vrot.slane %v7727, 2
        %v8471 = vsel %vm2941, %v8468, %v8470
        %v8472 = vrot.slane %v7730, 2
        %v8473 = vrot.slane %v7733, 2
        %v8474 = vsel %vm2941, %v8472, %v8473
        %v8475 = vrot.slane %v7736, 2
        %v8476 = vsel %vm2941, %v8473, %v8475
        %v8477 = vrot.slane %v7739, 2
        %v8478 = vrot.slane %v7742, 2
        %v8479 = vsel %vm2941, %v8477, %v8478
        %v8480 = vrot.slane %v7745, 2
        %v8481 = vsel %vm2941, %v8478, %v8480
        %v8482 = vrot.slane %v7748, 2
        %v8483 = vrot.slane %v7751, 2
        %v8484 = vsel %vm2941, %v8482, %v8483
        %v8485 = vrot.slane %v7754, 2
        %v8486 = vsel %vm2941, %v8483, %v8485
        %v8487 = vrot.slane %v7757, 2
        %v8488 = vrot.slane %v7760, 2
        %v8489 = vsel %vm2941, %v8487, %v8488
        %v8490 = vrot.slane %v7763, 2
        %v8491 = vsel %vm2941, %v8488, %v8490
        %v8492 = vrot.slane %v7766, 2
        %v8493 = vrot.slane %v7769, 2
        %v8494 = vsel %vm2941, %v8492, %v8493
        %v8495 = vrot.slane %v7772, 2
        %v8496 = vsel %vm2941, %v8493, %v8495
        %v8497 = vrot.slane %v7775, 2
        %v8498 = vrot.slane %v7778, 2
        %v8499 = vsel %vm2941, %v8497, %v8498
        %v8500 = vrot.slane %v7781, 2
        %v8501 = vsel %vm2941, %v8498, %v8500
        %v8502 = vrot.slane %v7784, 2
        %v8503 = vrot.slane %v7787, 2
        %v8504 = vsel %vm2941, %v8502, %v8503
        %v8505 = vrot.slane %v7790, 2
        %v8506 = vsel %vm2941, %v8503, %v8505
        %v8507 = vrot.slane %v7793, 2
        %v8508 = vrot.slane %v7796, 2
        %v8509 = vsel %vm2941, %v8507, %v8508
        %v8510 = vrot.slane %v7799, 2
        %v8511 = vsel %vm2941, %v8508, %v8510
        %v8512 = vrot.slane %v7802, 2
        %v8513 = vrot.slane %v7805, 2
        %v8514 = vsel %vm2941, %v8512, %v8513
        %v8515 = vrot.slane %v7808, 2
        %v8516 = vsel %vm2941, %v8513, %v8515
        %v8517 = vrot.slane %v7811, 2
        %v8518 = vrot.slane %v7814, 2
        %v8519 = vsel %vm2941, %v8517, %v8518
        %v8520 = vrot.slane %v7817, 2
        %v8521 = vsel %vm2941, %v8518, %v8520
        %v8522 = vrot.slane %v7820, 2
        %v8523 = vrot.slane %v7823, 2
        %v8524 = vsel %vm2941, %v8522, %v8523
        %v8525 = vrot.slane %v7826, 2
        %v8526 = vsel %vm2941, %v8523, %v8525
        %v8527 = vrot.slane %v7829, 2
        %v8528 = vrot.slane %v7832, 2
        %v8529 = vsel %vm2941, %v8527, %v8528
        %v8530 = vrot.slane %v7835, 2
        %v8531 = vsel %vm2941, %v8528, %v8530
        %8532 = vrot.lane.b32.xlu0 %v8454, 64
        %v8533 = vpop.permute.xlu0 %8532
        %8534 = vrot.lane.b32.xlu0 %v8456, 64
        %v8535 = vpop.permute.xlu0 %8534
        %8536 = vrot.lane.b32.xlu0 %v8459, 64
        %v8537 = vpop.permute.xlu0 %8536
        %8538 = vrot.lane.b32.xlu0 %v8461, 64
        %v8539 = vpop.permute.xlu0 %8538
        %8540 = vrot.lane.b32.xlu0 %v8464, 64
        %v8541 = vpop.permute.xlu0 %8540
        %8542 = vrot.lane.b32.xlu0 %v8466, 64
        %v8543 = vpop.permute.xlu0 %8542
        %8544 = vrot.lane.b32.xlu0 %v8469, 64
        %v8545 = vpop.permute.xlu0 %8544
        %8546 = vrot.lane.b32.xlu0 %v8471, 64
        %v8547 = vpop.permute.xlu0 %8546
        %8548 = vrot.lane.b32.xlu0 %v8474, 64
        %v8549 = vpop.permute.xlu0 %8548
        %8550 = vrot.lane.b32.xlu0 %v8476, 64
        %v8551 = vpop.permute.xlu0 %8550
        %8552 = vrot.lane.b32.xlu0 %v8479, 64
        %v8553 = vpop.permute.xlu0 %8552
        %8554 = vrot.lane.b32.xlu0 %v8481, 64
        %v8555 = vpop.permute.xlu0 %8554
        %8556 = vrot.lane.b32.xlu0 %v8484, 64
        %v8557 = vpop.permute.xlu0 %8556
        %8558 = vrot.lane.b32.xlu0 %v8486, 64
        %v8559 = vpop.permute.xlu0 %8558
        %8560 = vrot.lane.b32.xlu0 %v8489, 64
        %v8561 = vpop.permute.xlu0 %8560
        %8562 = vrot.lane.b32.xlu0 %v8491, 64
        %v8563 = vpop.permute.xlu0 %8562
        %8564 = vrot.lane.b32.xlu0 %v8494, 64
        %v8565 = vpop.permute.xlu0 %8564
        %8566 = vrot.lane.b32.xlu0 %v8496, 64
        %v8567 = vpop.permute.xlu0 %8566
        %8568 = vrot.lane.b32.xlu0 %v8499, 64
        %v8569 = vpop.permute.xlu0 %8568
        %8570 = vrot.lane.b32.xlu0 %v8501, 64
        %v8571 = vpop.permute.xlu0 %8570
        %8572 = vrot.lane.b32.xlu0 %v8504, 64
        %v8573 = vpop.permute.xlu0 %8572
        %8574 = vrot.lane.b32.xlu0 %v8506, 64
        %v8575 = vpop.permute.xlu0 %8574
        %8576 = vrot.lane.b32.xlu0 %v8509, 64
        %v8577 = vpop.permute.xlu0 %8576
        %8578 = vrot.lane.b32.xlu0 %v8511, 64
        %v8579 = vpop.permute.xlu0 %8578
        %8580 = vrot.lane.b32.xlu0 %v8514, 64
        %v8581 = vpop.permute.xlu0 %8580
        %8582 = vrot.lane.b32.xlu0 %v8516, 64
        %v8583 = vpop.permute.xlu0 %8582
        %8584 = vrot.lane.b32.xlu0 %v8519, 64
        %v8585 = vpop.permute.xlu0 %8584
        %8586 = vrot.lane.b32.xlu0 %v8521, 64
        %v8587 = vpop.permute.xlu0 %8586
        %8588 = vrot.lane.b32.xlu0 %v8524, 64
        %v8589 = vpop.permute.xlu0 %8588
        %8590 = vrot.lane.b32.xlu0 %v8526, 64
        %v8591 = vpop.permute.xlu0 %8590
        %8592 = vrot.lane.b32.xlu0 %v8529, 64
        %v8593 = vpop.permute.xlu0 %8592
        %8594 = vrot.lane.b32.xlu0 %v8531, 64
        %v8595 = vpop.permute.xlu0 %8594
        %v8628 = vadd.f32 %v8420, %v8533
        %v8629 = vadd.f32 %v8421, %v8535
        %v8630 = vadd.f32 %v8422, %v8537
        %v8631 = vadd.f32 %v8423, %v8539
        %v8632 = vadd.f32 %v8424, %v8541
        %v8633 = vadd.f32 %v8425, %v8543
        %v8634 = vadd.f32 %v8426, %v8545
        %v8635 = vadd.f32 %v8427, %v8547
        %v8636 = vadd.f32 %v8428, %v8549
        %v8637 = vadd.f32 %v8429, %v8551
        %v8638 = vadd.f32 %v8430, %v8553
        %v8639 = vadd.f32 %v8431, %v8555
        %v8640 = vadd.f32 %v8432, %v8557
        %v8641 = vadd.f32 %v8433, %v8559
        %v8642 = vadd.f32 %v8434, %v8561
        %v8643 = vadd.f32 %v8435, %v8563
        %v8644 = vadd.f32 %v8436, %v8565
        %v8645 = vadd.f32 %v8437, %v8567
        %v8646 = vadd.f32 %v8438, %v8569
        %v8647 = vadd.f32 %v8439, %v8571
        %v8648 = vadd.f32 %v8440, %v8573
        %v8649 = vadd.f32 %v8441, %v8575
        %v8650 = vadd.f32 %v8442, %v8577
        %v8651 = vadd.f32 %v8443, %v8579
        %v8652 = vadd.f32 %v8444, %v8581
        %v8653 = vadd.f32 %v8445, %v8583
        %v8654 = vadd.f32 %v8446, %v8585
        %v8655 = vadd.f32 %v8447, %v8587
        %v8656 = vadd.f32 %v8448, %v8589
        %v8657 = vadd.f32 %v8449, %v8591
        %v8658 = vadd.f32 %v8450, %v8593
        %v8659 = vadd.f32 %v8451, %v8595
        %v8660 = vrot.slane %v7694, 3
        %v8661 = vrot.slane %v7697, 3
        %v8662 = vsel %vm3150, %v8660, %v8661
        %v8663 = vrot.slane %v7700, 3
        %v8664 = vsel %vm3150, %v8661, %v8663
        %v8665 = vrot.slane %v7703, 3
        %v8666 = vrot.slane %v7706, 3
        %v8667 = vsel %vm3150, %v8665, %v8666
        %v8668 = vrot.slane %v7709, 3
        %v8669 = vsel %vm3150, %v8666, %v8668
        %v8670 = vrot.slane %v7712, 3
        %v8671 = vrot.slane %v7715, 3
        %v8672 = vsel %vm3150, %v8670, %v8671
        %v8673 = vrot.slane %v7718, 3
        %v8674 = vsel %vm3150, %v8671, %v8673
        %v8675 = vrot.slane %v7721, 3
        %v8676 = vrot.slane %v7724, 3
        %v8677 = vsel %vm3150, %v8675, %v8676
        %v8678 = vrot.slane %v7727, 3
        %v8679 = vsel %vm3150, %v8676, %v8678
        %v8680 = vrot.slane %v7730, 3
        %v8681 = vrot.slane %v7733, 3
        %v8682 = vsel %vm3150, %v8680, %v8681
        %v8683 = vrot.slane %v7736, 3
        %v8684 = vsel %vm3150, %v8681, %v8683
        %v8685 = vrot.slane %v7739, 3
        %v8686 = vrot.slane %v7742, 3
        %v8687 = vsel %vm3150, %v8685, %v8686
        %v8688 = vrot.slane %v7745, 3
        %v8689 = vsel %vm3150, %v8686, %v8688
        %v8690 = vrot.slane %v7748, 3
        %v8691 = vrot.slane %v7751, 3
        %v8692 = vsel %vm3150, %v8690, %v8691
        %v8693 = vrot.slane %v7754, 3
        %v8694 = vsel %vm3150, %v8691, %v8693
        %v8695 = vrot.slane %v7757, 3
        %v8696 = vrot.slane %v7760, 3
        %v8697 = vsel %vm3150, %v8695, %v8696
        %v8698 = vrot.slane %v7763, 3
        %v8699 = vsel %vm3150, %v8696, %v8698
        %v8700 = vrot.slane %v7766, 3
        %v8701 = vrot.slane %v7769, 3
        %v8702 = vsel %vm3150, %v8700, %v8701
        %v8703 = vrot.slane %v7772, 3
        %v8704 = vsel %vm3150, %v8701, %v8703
        %v8705 = vrot.slane %v7775, 3
        %v8706 = vrot.slane %v7778, 3
        %v8707 = vsel %vm3150, %v8705, %v8706
        %v8708 = vrot.slane %v7781, 3
        %v8709 = vsel %vm3150, %v8706, %v8708
        %v8710 = vrot.slane %v7784, 3
        %v8711 = vrot.slane %v7787, 3
        %v8712 = vsel %vm3150, %v8710, %v8711
        %v8713 = vrot.slane %v7790, 3
        %v8714 = vsel %vm3150, %v8711, %v8713
        %v8715 = vrot.slane %v7793, 3
        %v8716 = vrot.slane %v7796, 3
        %v8717 = vsel %vm3150, %v8715, %v8716
        %v8718 = vrot.slane %v7799, 3
        %v8719 = vsel %vm3150, %v8716, %v8718
        %v8720 = vrot.slane %v7802, 3
        %v8721 = vrot.slane %v7805, 3
        %v8722 = vsel %vm3150, %v8720, %v8721
        %v8723 = vrot.slane %v7808, 3
        %v8724 = vsel %vm3150, %v8721, %v8723
        %v8725 = vrot.slane %v7811, 3
        %v8726 = vrot.slane %v7814, 3
        %v8727 = vsel %vm3150, %v8725, %v8726
        %v8728 = vrot.slane %v7817, 3
        %v8729 = vsel %vm3150, %v8726, %v8728
        %v8730 = vrot.slane %v7820, 3
        %v8731 = vrot.slane %v7823, 3
        %v8732 = vsel %vm3150, %v8730, %v8731
        %v8733 = vrot.slane %v7826, 3
        %v8734 = vsel %vm3150, %v8731, %v8733
        %v8735 = vrot.slane %v7829, 3
        %v8736 = vrot.slane %v7832, 3
        %v8737 = vsel %vm3150, %v8735, %v8736
        %v8738 = vrot.slane %v7835, 3
        %v8739 = vsel %vm3150, %v8736, %v8738
        %8740 = vrot.lane.b32.xlu0 %v8662, 32
        %v8741 = vpop.permute.xlu0 %8740
        %8742 = vrot.lane.b32.xlu0 %v8664, 32
        %v8743 = vpop.permute.xlu0 %8742
        %8744 = vrot.lane.b32.xlu0 %v8667, 32
        %v8745 = vpop.permute.xlu0 %8744
        %8746 = vrot.lane.b32.xlu0 %v8669, 32
        %v8747 = vpop.permute.xlu0 %8746
        %8748 = vrot.lane.b32.xlu0 %v8672, 32
        %v8749 = vpop.permute.xlu0 %8748
        %8750 = vrot.lane.b32.xlu0 %v8674, 32
        %v8751 = vpop.permute.xlu0 %8750
        %8752 = vrot.lane.b32.xlu0 %v8677, 32
        %v8753 = vpop.permute.xlu0 %8752
        %8754 = vrot.lane.b32.xlu0 %v8679, 32
        %v8755 = vpop.permute.xlu0 %8754
        %8756 = vrot.lane.b32.xlu0 %v8682, 32
        %v8757 = vpop.permute.xlu0 %8756
        %8758 = vrot.lane.b32.xlu0 %v8684, 32
        %v8759 = vpop.permute.xlu0 %8758
        %8760 = vrot.lane.b32.xlu0 %v8687, 32
        %v8761 = vpop.permute.xlu0 %8760
        %8762 = vrot.lane.b32.xlu0 %v8689, 32
        %v8763 = vpop.permute.xlu0 %8762
        %8764 = vrot.lane.b32.xlu0 %v8692, 32
        %v8765 = vpop.permute.xlu0 %8764
        %8766 = vrot.lane.b32.xlu0 %v8694, 32
        %v8767 = vpop.permute.xlu0 %8766
        %8768 = vrot.lane.b32.xlu0 %v8697, 32
        %v8769 = vpop.permute.xlu0 %8768
        %8770 = vrot.lane.b32.xlu0 %v8699, 32
        %v8771 = vpop.permute.xlu0 %8770
        %8772 = vrot.lane.b32.xlu0 %v8702, 32
        %v8773 = vpop.permute.xlu0 %8772
        %8774 = vrot.lane.b32.xlu0 %v8704, 32
        %v8775 = vpop.permute.xlu0 %8774
        %8776 = vrot.lane.b32.xlu0 %v8707, 32
        %v8777 = vpop.permute.xlu0 %8776
        %8778 = vrot.lane.b32.xlu0 %v8709, 32
        %v8779 = vpop.permute.xlu0 %8778
        %8780 = vrot.lane.b32.xlu0 %v8712, 32
        %v8781 = vpop.permute.xlu0 %8780
        %8782 = vrot.lane.b32.xlu0 %v8714, 32
        %v8783 = vpop.permute.xlu0 %8782
        %8784 = vrot.lane.b32.xlu0 %v8717, 32
        %v8785 = vpop.permute.xlu0 %8784
        %8786 = vrot.lane.b32.xlu0 %v8719, 32
        %v8787 = vpop.permute.xlu0 %8786
        %8788 = vrot.lane.b32.xlu0 %v8722, 32
        %v8789 = vpop.permute.xlu0 %8788
        %8790 = vrot.lane.b32.xlu0 %v8724, 32
        %v8791 = vpop.permute.xlu0 %8790
        %8792 = vrot.lane.b32.xlu0 %v8727, 32
        %v8793 = vpop.permute.xlu0 %8792
        %8794 = vrot.lane.b32.xlu0 %v8729, 32
        %v8795 = vpop.permute.xlu0 %8794
        %8796 = vrot.lane.b32.xlu0 %v8732, 32
        %v8797 = vpop.permute.xlu0 %8796
        %8798 = vrot.lane.b32.xlu0 %v8734, 32
        %v8799 = vpop.permute.xlu0 %8798
        %8800 = vrot.lane.b32.xlu0 %v8737, 32
        %v8801 = vpop.permute.xlu0 %8800
        %8802 = vrot.lane.b32.xlu0 %v8739, 32
        %v8803 = vpop.permute.xlu0 %8802
        %v8836 = vadd.f32 %v8628, %v8741
        %v8837 = vadd.f32 %v8629, %v8743
        %v8838 = vadd.f32 %v8630, %v8745
        %v8839 = vadd.f32 %v8631, %v8747
        %v8840 = vadd.f32 %v8632, %v8749
        %v8841 = vadd.f32 %v8633, %v8751
        %v8842 = vadd.f32 %v8634, %v8753
        %v8843 = vadd.f32 %v8635, %v8755
        %v8844 = vadd.f32 %v8636, %v8757
        %v8845 = vadd.f32 %v8637, %v8759
        %v8846 = vadd.f32 %v8638, %v8761
        %v8847 = vadd.f32 %v8639, %v8763
        %v8848 = vadd.f32 %v8640, %v8765
        %v8849 = vadd.f32 %v8641, %v8767
        %v8850 = vadd.f32 %v8642, %v8769
        %v8851 = vadd.f32 %v8643, %v8771
        %v8852 = vadd.f32 %v8644, %v8773
        %v8853 = vadd.f32 %v8645, %v8775
        %v8854 = vadd.f32 %v8646, %v8777
        %v8855 = vadd.f32 %v8647, %v8779
        %v8856 = vadd.f32 %v8648, %v8781
        %v8857 = vadd.f32 %v8649, %v8783
        %v8858 = vadd.f32 %v8650, %v8785
        %v8859 = vadd.f32 %v8651, %v8787
        %v8860 = vadd.f32 %v8652, %v8789
        %v8861 = vadd.f32 %v8653, %v8791
        %v8862 = vadd.f32 %v8654, %v8793
        %v8863 = vadd.f32 %v8655, %v8795
        %v8864 = vadd.f32 %v8656, %v8797
        %v8865 = vadd.f32 %v8657, %v8799
        %v8866 = vadd.f32 %v8658, %v8801
        %v8867 = vadd.f32 %v8659, %v8803
        %v8916 = vrot.slane %v8016, 4
        %v8917 = vrot.slane %v8019, 4
        %v8918 = vsel %vm3407, %v8916, %v8917
        %v8919 = vrot.slane %v8022, 4
        %v8920 = vsel %vm3407, %v8917, %v8919
        %v8921 = vrot.slane %v8025, 4
        %v8922 = vrot.slane %v8028, 4
        %v8923 = vsel %vm3407, %v8921, %v8922
        %v8924 = vrot.slane %v8031, 4
        %v8925 = vsel %vm3407, %v8922, %v8924
        %v8926 = vrot.slane %v8034, 4
        %v8927 = vrot.slane %v8037, 4
        %v8928 = vsel %vm3407, %v8926, %v8927
        %v8929 = vrot.slane %v8040, 4
        %v8930 = vsel %vm3407, %v8927, %v8929
        %v8931 = vrot.slane %v8043, 4
        %v8932 = vrot.slane %v8046, 4
        %v8933 = vsel %vm3407, %v8931, %v8932
        %v8934 = vrot.slane %v8049, 4
        %v8935 = vsel %vm3407, %v8932, %v8934
        %v8936 = vrot.slane %v8052, 4
        %v8937 = vrot.slane %v8055, 4
        %v8938 = vsel %vm3407, %v8936, %v8937
        %v8939 = vrot.slane %v8058, 4
        %v8940 = vsel %vm3407, %v8937, %v8939
        %v8941 = vrot.slane %v8061, 4
        %v8942 = vrot.slane %v8064, 4
        %v8943 = vsel %vm3407, %v8941, %v8942
        %v8944 = vrot.slane %v8067, 4
        %v8945 = vsel %vm3407, %v8942, %v8944
        %v8946 = vrot.slane %v8070, 4
        %v8947 = vrot.slane %v8073, 4
        %v8948 = vsel %vm3407, %v8946, %v8947
        %v8949 = vrot.slane %v8076, 4
        %v8950 = vsel %vm3407, %v8947, %v8949
        %v8951 = vrot.slane %v8079, 4
        %v8952 = vrot.slane %v8082, 4
        %v8953 = vsel %vm3407, %v8951, %v8952
        %v8954 = vrot.slane %v8085, 4
        %v8955 = vsel %vm3407, %v8952, %v8954
        %v8956 = vrot.slane %v8088, 4
        %v8957 = vrot.slane %v8091, 4
        %v8958 = vsel %vm3407, %v8956, %v8957
        %v8959 = vrot.slane %v8094, 4
        %v8960 = vsel %vm3407, %v8957, %v8959
        %v8961 = vrot.slane %v8097, 4
        %v8962 = vrot.slane %v8100, 4
        %v8963 = vsel %vm3407, %v8961, %v8962
        %v8964 = vrot.slane %v8103, 4
        %v8965 = vsel %vm3407, %v8962, %v8964
        %v8966 = vrot.slane %v8106, 4
        %v8967 = vrot.slane %v8109, 4
        %v8968 = vsel %vm3407, %v8966, %v8967
        %v8969 = vrot.slane %v8112, 4
        %v8970 = vsel %vm3407, %v8967, %v8969
        %v8971 = vrot.slane %v8115, 4
        %v8972 = vrot.slane %v8118, 4
        %v8973 = vsel %vm3407, %v8971, %v8972
        %v8974 = vrot.slane %v8121, 4
        %v8975 = vsel %vm3407, %v8972, %v8974
        %v8976 = vrot.slane %v8124, 4
        %v8977 = vrot.slane %v8127, 4
        %v8978 = vsel %vm3407, %v8976, %v8977
        %v8979 = vrot.slane %v8130, 4
        %v8980 = vsel %vm3407, %v8977, %v8979
        %v8981 = vrot.slane %v8133, 4
        %v8982 = vrot.slane %v8136, 4
        %v8983 = vsel %vm3407, %v8981, %v8982
        %v8984 = vrot.slane %v8139, 4
        %v8985 = vsel %vm3407, %v8982, %v8984
        %v8986 = vrot.slane %v8142, 4
        %v8987 = vrot.slane %v8145, 4
        %v8988 = vsel %vm3407, %v8986, %v8987
        %v8989 = vrot.slane %v8148, 4
        %v8990 = vsel %vm3407, %v8987, %v8989
        %v8991 = vrot.slane %v8151, 4
        %v8992 = vrot.slane %v8154, 4
        %v8993 = vsel %vm3407, %v8991, %v8992
        %v8994 = vrot.slane %v8157, 4
        %v8995 = vsel %vm3407, %v8992, %v8994
        %v9028 = vadd.f32 %v8836, %v8918
        %v9029 = vadd.f32 %v8837, %v8920
        %v9030 = vadd.f32 %v8838, %v8923
        %v9031 = vadd.f32 %v8839, %v8925
        %v9032 = vadd.f32 %v8840, %v8928
        %v9033 = vadd.f32 %v8841, %v8930
        %v9034 = vadd.f32 %v8842, %v8933
        %v9035 = vadd.f32 %v8843, %v8935
        %v9036 = vadd.f32 %v8844, %v8938
        %v9037 = vadd.f32 %v8845, %v8940
        %v9038 = vadd.f32 %v8846, %v8943
        %v9039 = vadd.f32 %v8847, %v8945
        %v9040 = vadd.f32 %v8848, %v8948
        %v9041 = vadd.f32 %v8849, %v8950
        %v9042 = vadd.f32 %v8850, %v8953
        %v9043 = vadd.f32 %v8851, %v8955
        %v9044 = vadd.f32 %v8852, %v8958
        %v9045 = vadd.f32 %v8853, %v8960
        %v9046 = vadd.f32 %v8854, %v8963
        %v9047 = vadd.f32 %v8855, %v8965
        %v9048 = vadd.f32 %v8856, %v8968
        %v9049 = vadd.f32 %v8857, %v8970
        %v9050 = vadd.f32 %v8858, %v8973
        %v9051 = vadd.f32 %v8859, %v8975
        %v9052 = vadd.f32 %v8860, %v8978
        %v9053 = vadd.f32 %v8861, %v8980
        %v9054 = vadd.f32 %v8862, %v8983
        %v9055 = vadd.f32 %v8863, %v8985
        %v9056 = vadd.f32 %v8864, %v8988
        %v9057 = vadd.f32 %v8865, %v8990
        %v9058 = vadd.f32 %v8866, %v8993
        %v9059 = vadd.f32 %v8867, %v8995
        %v9060 = vmax.f32 %v9028, 0.0
        %v9061 = vmax.f32 %v9029, 0.0
        %v9062 = vmax.f32 %v9030, 0.0
        %v9063 = vmax.f32 %v9031, 0.0
        %v9064 = vmax.f32 %v9032, 0.0
        %v9065 = vmax.f32 %v9033, 0.0
        %v9066 = vmax.f32 %v9034, 0.0
        %v9067 = vmax.f32 %v9035, 0.0
        %v9068 = vmax.f32 %v9036, 0.0
        %v9069 = vmax.f32 %v9037, 0.0
        %v9070 = vmax.f32 %v9038, 0.0
        %v9071 = vmax.f32 %v9039, 0.0
        %v9072 = vmax.f32 %v9040, 0.0
        %v9073 = vmax.f32 %v9041, 0.0
        %v9074 = vmax.f32 %v9042, 0.0
        %v9075 = vmax.f32 %v9043, 0.0
        %v9076 = vmax.f32 %v9044, 0.0
        %v9077 = vmax.f32 %v9045, 0.0
        %v9078 = vmax.f32 %v9046, 0.0
        %v9079 = vmax.f32 %v9047, 0.0
        %v9080 = vmax.f32 %v9048, 0.0
        %v9081 = vmax.f32 %v9049, 0.0
        %v9082 = vmax.f32 %v9050, 0.0
        %v9083 = vmax.f32 %v9051, 0.0
        %v9084 = vmax.f32 %v9052, 0.0
        %v9085 = vmax.f32 %v9053, 0.0
        %v9086 = vmax.f32 %v9054, 0.0
        %v9087 = vmax.f32 %v9055, 0.0
        %v9088 = vmax.f32 %v9056, 0.0
        %v9089 = vmax.f32 %v9057, 0.0
        %v9090 = vmax.f32 %v9058, 0.0
        %v9091 = vmax.f32 %v9059, 0.0
        %9092 = vst.msk [vmem:[%s822 + $0x2] sm:$0xff] %vm224, %v9060
        %9093 = vst.msk [vmem:[%s822 + $0xa] sm:$0xff] %vm224, %v9061
        %9094 = vst.msk [vmem:[%s822 + $0x1a] sm:$0xff] %vm224, %v9062
        %9095 = vst.msk [vmem:[%s822 + $0x22] sm:$0xff] %vm224, %v9063
        %9096 = vst.msk [vmem:[%s822 + $0x32] sm:$0xff] %vm224, %v9064
        %9097 = vst.msk [vmem:[%s822 + $0x3a] sm:$0xff] %vm224, %v9065
        %9098 = vst.msk [vmem:[%s822 + $0x4a] sm:$0xff] %vm224, %v9066
        %9099 = vst.msk [vmem:[%s822 + $0x52] sm:$0xff] %vm224, %v9067
        %9100 = vst.msk [vmem:[%s822 + $0x62] sm:$0xff] %vm224, %v9068
        %9101 = vst.msk [vmem:[%s822 + $0x6a] sm:$0xff] %vm224, %v9069
        %9102 = vst.msk [vmem:[%s822 + $0x7a] sm:$0xff] %vm224, %v9070
        %9103 = vst.msk [vmem:[%s822 + $0x82] sm:$0xff] %vm224, %v9071
        %9104 = vst.msk [vmem:[%s822 + $0x92] sm:$0xff] %vm224, %v9072
        %9105 = vst.msk [vmem:[%s822 + $0x9a] sm:$0xff] %vm224, %v9073
        %9106 = vst.msk [vmem:[%s822 + $0xaa] sm:$0xff] %vm224, %v9074
        %9107 = vst.msk [vmem:[%s822 + $0xb2] sm:$0xff] %vm224, %v9075
        %9108 = vst.msk [vmem:[%s822 + $0xc2] sm:$0xff] %vm224, %v9076
        %9109 = vst.msk [vmem:[%s822 + $0xca] sm:$0xff] %vm224, %v9077
        %9110 = vst.msk [vmem:[%s822 + $0xda] sm:$0xff] %vm224, %v9078
        %9111 = vst.msk [vmem:[%s822 + $0xe2] sm:$0xff] %vm224, %v9079
        %9112 = vst.msk [vmem:[%s822 + $0xf2] sm:$0xff] %vm224, %v9080
        %9113 = vst.msk [vmem:[%s822 + $0xfa] sm:$0xff] %vm224, %v9081
        %9114 = vst.msk [vmem:[%s822 + $0x10a] sm:$0xff] %vm224, %v9082
        %9115 = vst.msk [vmem:[%s822 + $0x112] sm:$0xff] %vm224, %v9083
        %9116 = vst.msk [vmem:[%s822 + $0x122] sm:$0xff] %vm224, %v9084
        %9117 = vst.msk [vmem:[%s822 + $0x12a] sm:$0xff] %vm224, %v9085
        %9118 = vst.msk [vmem:[%s822 + $0x13a] sm:$0xff] %vm224, %v9086
        %9119 = vst.msk [vmem:[%s822 + $0x142] sm:$0xff] %vm224, %v9087
        %9120 = vst.msk [vmem:[%s822 + $0x152] sm:$0xff] %vm224, %v9088
        %9121 = vst.msk [vmem:[%s822 + $0x15a] sm:$0xff] %vm224, %v9089
        %9122 = vst.msk [vmem:[%s822 + $0x16a] sm:$0xff] %vm224, %v9090
        %9123 = vst.msk [vmem:[%s822 + $0x172] sm:$0xff] %vm224, %v9091
        %v9124 = vld [vmem:[#allocation2] sm:$0xff]
        %v9125 = vld [vmem:[#allocation2 + $0x8] sm:$0xff]
        %v9126 = vld [vmem:[#allocation2 + $0x10] sm:$0xff]
        %v9127 = vld [vmem:[#allocation2 + $0x18] sm:$0xff]
        %v9128 = vld [vmem:[#allocation2 + $0x20] sm:$0xff]
        %v9129 = vld [vmem:[#allocation2 + $0x28] sm:$0xff]
        %v9130 = vld [vmem:[#allocation2 + $0x30] sm:$0xff]
        %v9131 = vld [vmem:[#allocation2 + $0x38] sm:$0xff]
        %v9132 = vld [vmem:[#allocation2 + $0x40] sm:$0xff]
        %v9133 = vld [vmem:[#allocation2 + $0x48] sm:$0xff]
        %v9134 = vld [vmem:[#allocation2 + $0x50] sm:$0xff]
        %v9135 = vld [vmem:[#allocation2 + $0x58] sm:$0xff]
        %v9136 = vld [vmem:[#allocation2 + $0x60] sm:$0xff]
        %v9137 = vld [vmem:[#allocation2 + $0x68] sm:$0xff]
        %v9138 = vld [vmem:[#allocation2 + $0x70] sm:$0xff]
        %v9139 = vld [vmem:[#allocation2 + $0x78] sm:$0xff]
        %v9140 = vld [vmem:[#allocation2 + $0x80] sm:$0xff]
        %v9141 = vld [vmem:[#allocation2 + $0x88] sm:$0xff]
        %v9142 = vld [vmem:[#allocation2 + $0x90] sm:$0xff]
        %v9143 = vld [vmem:[#allocation2 + $0x98] sm:$0xff]
        %v9144 = vld [vmem:[#allocation2 + $0xa0] sm:$0xff]
        %v9145 = vld [vmem:[#allocation2 + $0xa8] sm:$0xff]
        %v9146 = vld [vmem:[#allocation2 + $0xb0] sm:$0xff]
        %v9147 = vld [vmem:[#allocation2 + $0xb8] sm:$0xff]
        %v9148 = vld [vmem:[#allocation2 + $0xc0] sm:$0xff]
        %v9149 = vld [vmem:[#allocation2 + $0xc8] sm:$0xff]
        %v9150 = vld [vmem:[#allocation2 + $0xd0] sm:$0xff]
        %v9151 = vld [vmem:[#allocation2 + $0xd8] sm:$0xff]
        %v9152 = vld [vmem:[#allocation2 + $0xe0] sm:$0xff]
        %v9153 = vld [vmem:[#allocation2 + $0xe8] sm:$0xff]
        %v9154 = vld [vmem:[#allocation2 + $0xf0] sm:$0xff]
        %v9155 = vld [vmem:[#allocation2 + $0xf8] sm:$0xff]
        %v9156 = vld [vmem:[#allocation2 + $0x100] sm:$0xff]
        %v9157 = vld [vmem:[#allocation2 + $0x108] sm:$0xff]
        %v9158 = vld [vmem:[#allocation2 + $0x110] sm:$0xff]
        %v9159 = vld [vmem:[#allocation2 + $0x118] sm:$0xff]
        %v9160 = vld [vmem:[#allocation2 + $0x120] sm:$0xff]
        %v9161 = vld [vmem:[#allocation2 + $0x128] sm:$0xff]
        %v9162 = vld [vmem:[#allocation2 + $0x130] sm:$0xff]
        %v9163 = vld [vmem:[#allocation2 + $0x138] sm:$0xff]
        %v9164 = vld [vmem:[#allocation2 + $0x140] sm:$0xff]
        %v9165 = vld [vmem:[#allocation2 + $0x148] sm:$0xff]
        %v9166 = vld [vmem:[#allocation2 + $0x150] sm:$0xff]
        %v9167 = vld [vmem:[#allocation2 + $0x158] sm:$0xff]
        %v9168 = vld [vmem:[#allocation2 + $0x160] sm:$0xff]
        %v9169 = vld [vmem:[#allocation2 + $0x168] sm:$0xff]
        %v9170 = vld [vmem:[#allocation2 + $0x170] sm:$0xff]
        %v9171 = vld [vmem:[#allocation2 + $0x178] sm:$0xff]
        %v9172 = vld [vmem:[%s903] sm:$0xff]
        %v9173 = vld [vmem:[%s903 + $0x8] sm:$0xff]
        %v9174 = vld [vmem:[%s903 + $0x10] sm:$0xff]
        %v9175 = vld [vmem:[%s903 + $0x18] sm:$0xff]
        %v9176 = vld [vmem:[%s903 + $0x20] sm:$0xff]
        %v9177 = vld [vmem:[%s903 + $0x28] sm:$0xff]
        %v9178 = vld [vmem:[%s903 + $0x30] sm:$0xff]
        %v9179 = vld [vmem:[%s903 + $0x38] sm:$0xff]
        %v9180 = vld [vmem:[%s903 + $0x40] sm:$0xff]
        %v9181 = vld [vmem:[%s903 + $0x48] sm:$0xff]
        %v9182 = vld [vmem:[%s903 + $0x50] sm:$0xff]
        %v9183 = vld [vmem:[%s903 + $0x58] sm:$0xff]
        %v9184 = vld [vmem:[%s903 + $0x60] sm:$0xff]
        %v9185 = vld [vmem:[%s903 + $0x68] sm:$0xff]
        %v9186 = vld [vmem:[%s903 + $0x70] sm:$0xff]
        %v9187 = vld [vmem:[%s903 + $0x78] sm:$0xff]
        %v9188 = vld [vmem:[%s903 + $0x80] sm:$0xff]
        %v9189 = vld [vmem:[%s903 + $0x88] sm:$0xff]
        %v9190 = vld [vmem:[%s903 + $0x90] sm:$0xff]
        %v9191 = vld [vmem:[%s903 + $0x98] sm:$0xff]
        %v9192 = vld [vmem:[%s903 + $0xa0] sm:$0xff]
        %v9193 = vld [vmem:[%s903 + $0xa8] sm:$0xff]
        %v9194 = vld [vmem:[%s903 + $0xb0] sm:$0xff]
        %v9195 = vld [vmem:[%s903 + $0xb8] sm:$0xff]
        %v9196 = vld [vmem:[%s903 + $0xc0] sm:$0xff]
        %v9197 = vld [vmem:[%s903 + $0xc8] sm:$0xff]
        %v9198 = vld [vmem:[%s903 + $0xd0] sm:$0xff]
        %v9199 = vld [vmem:[%s903 + $0xd8] sm:$0xff]
        %v9200 = vld [vmem:[%s903 + $0xe0] sm:$0xff]
        %v9201 = vld [vmem:[%s903 + $0xe8] sm:$0xff]
        %v9202 = vld [vmem:[%s903 + $0xf0] sm:$0xff]
        %v9203 = vld [vmem:[%s903 + $0xf8] sm:$0xff]
        %v9204 = vld [vmem:[%s903 + $0x100] sm:$0xff]
        %v9205 = vld [vmem:[%s903 + $0x108] sm:$0xff]
        %v9206 = vld [vmem:[%s903 + $0x110] sm:$0xff]
        %v9207 = vld [vmem:[%s903 + $0x118] sm:$0xff]
        %v9208 = vld [vmem:[%s903 + $0x120] sm:$0xff]
        %v9209 = vld [vmem:[%s903 + $0x128] sm:$0xff]
        %v9210 = vld [vmem:[%s903 + $0x130] sm:$0xff]
        %v9211 = vld [vmem:[%s903 + $0x138] sm:$0xff]
        %v9212 = vld [vmem:[%s903 + $0x140] sm:$0xff]
        %v9213 = vld [vmem:[%s903 + $0x148] sm:$0xff]
        %v9214 = vld [vmem:[%s903 + $0x150] sm:$0xff]
        %v9215 = vld [vmem:[%s903 + $0x158] sm:$0xff]
        %v9216 = vld [vmem:[%s903 + $0x160] sm:$0xff]
        %v9217 = vld [vmem:[%s903 + $0x168] sm:$0xff]
        %v9218 = vld [vmem:[%s903 + $0x170] sm:$0xff]
        %v9219 = vld [vmem:[%s903 + $0x178] sm:$0xff]
        %v9220 = vld [vmem:[%s822] sm:$0xff]
        %v9221 = vld [vmem:[%s822 + $0x8] sm:$0xff]
        %v9222 = vld [vmem:[%s822 + $0x10] sm:$0xff]
        %v9223 = vld [vmem:[%s822 + $0x18] sm:$0xff]
        %v9224 = vld [vmem:[%s822 + $0x20] sm:$0xff]
        %v9225 = vld [vmem:[%s822 + $0x28] sm:$0xff]
        %v9226 = vld [vmem:[%s822 + $0x30] sm:$0xff]
        %v9227 = vld [vmem:[%s822 + $0x38] sm:$0xff]
        %v9228 = vld [vmem:[%s822 + $0x40] sm:$0xff]
        %v9229 = vld [vmem:[%s822 + $0x48] sm:$0xff]
        %v9230 = vld [vmem:[%s822 + $0x50] sm:$0xff]
        %v9231 = vld [vmem:[%s822 + $0x58] sm:$0xff]
        %v9232 = vld [vmem:[%s822 + $0x60] sm:$0xff]
        %v9233 = vld [vmem:[%s822 + $0x68] sm:$0xff]
        %v9234 = vld [vmem:[%s822 + $0x70] sm:$0xff]
        %v9235 = vld [vmem:[%s822 + $0x78] sm:$0xff]
        %v9236 = vld [vmem:[%s822 + $0x80] sm:$0xff]
        %v9237 = vld [vmem:[%s822 + $0x88] sm:$0xff]
        %v9238 = vld [vmem:[%s822 + $0x90] sm:$0xff]
        %v9239 = vld [vmem:[%s822 + $0x98] sm:$0xff]
        %v9240 = vld [vmem:[%s822 + $0xa0] sm:$0xff]
        %v9241 = vld [vmem:[%s822 + $0xa8] sm:$0xff]
        %v9242 = vld [vmem:[%s822 + $0xb0] sm:$0xff]
        %v9243 = vld [vmem:[%s822 + $0xb8] sm:$0xff]
        %v9244 = vld [vmem:[%s822 + $0xc0] sm:$0xff]
        %v9245 = vld [vmem:[%s822 + $0xc8] sm:$0xff]
        %v9246 = vld [vmem:[%s822 + $0xd0] sm:$0xff]
        %v9247 = vld [vmem:[%s822 + $0xd8] sm:$0xff]
        %v9248 = vld [vmem:[%s822 + $0xe0] sm:$0xff]
        %v9249 = vld [vmem:[%s822 + $0xe8] sm:$0xff]
        %v9250 = vld [vmem:[%s822 + $0xf0] sm:$0xff]
        %v9251 = vld [vmem:[%s822 + $0xf8] sm:$0xff]
        %v9252 = vld [vmem:[%s822 + $0x100] sm:$0xff]
        %v9253 = vld [vmem:[%s822 + $0x108] sm:$0xff]
        %v9254 = vld [vmem:[%s822 + $0x110] sm:$0xff]
        %v9255 = vld [vmem:[%s822 + $0x118] sm:$0xff]
        %v9256 = vld [vmem:[%s822 + $0x120] sm:$0xff]
        %v9257 = vld [vmem:[%s822 + $0x128] sm:$0xff]
        %v9258 = vld [vmem:[%s822 + $0x130] sm:$0xff]
        %v9259 = vld [vmem:[%s822 + $0x138] sm:$0xff]
        %v9260 = vld [vmem:[%s822 + $0x140] sm:$0xff]
        %v9261 = vld [vmem:[%s822 + $0x148] sm:$0xff]
        %v9262 = vld [vmem:[%s822 + $0x150] sm:$0xff]
        %v9263 = vld [vmem:[%s822 + $0x158] sm:$0xff]
        %v9264 = vld [vmem:[%s822 + $0x160] sm:$0xff]
        %v9265 = vld [vmem:[%s822 + $0x168] sm:$0xff]
        %v9266 = vld [vmem:[%s822 + $0x170] sm:$0xff]
        %v9267 = vld [vmem:[%s822 + $0x178] sm:$0xff]
        %v9268 = vld [vmem:[%s1000] sm:$0xff]
        %v9269 = vld [vmem:[%s1000 + $0x8] sm:$0xff]
        %v9270 = vld [vmem:[%s1000 + $0x10] sm:$0xff]
        %v9271 = vld [vmem:[%s1000 + $0x18] sm:$0xff]
        %v9272 = vld [vmem:[%s1000 + $0x20] sm:$0xff]
        %v9273 = vld [vmem:[%s1000 + $0x28] sm:$0xff]
        %v9274 = vld [vmem:[%s1000 + $0x30] sm:$0xff]
        %v9275 = vld [vmem:[%s1000 + $0x38] sm:$0xff]
        %v9276 = vld [vmem:[%s1000 + $0x40] sm:$0xff]
        %v9277 = vld [vmem:[%s1000 + $0x48] sm:$0xff]
        %v9278 = vld [vmem:[%s1000 + $0x50] sm:$0xff]
        %v9279 = vld [vmem:[%s1000 + $0x58] sm:$0xff]
        %v9280 = vld [vmem:[%s1000 + $0x60] sm:$0xff]
        %v9281 = vld [vmem:[%s1000 + $0x68] sm:$0xff]
        %v9282 = vld [vmem:[%s1000 + $0x70] sm:$0xff]
        %v9283 = vld [vmem:[%s1000 + $0x78] sm:$0xff]
        %v9284 = vld [vmem:[%s1000 + $0x80] sm:$0xff]
        %v9285 = vld [vmem:[%s1000 + $0x88] sm:$0xff]
        %v9286 = vld [vmem:[%s1000 + $0x90] sm:$0xff]
        %v9287 = vld [vmem:[%s1000 + $0x98] sm:$0xff]
        %v9288 = vld [vmem:[%s1000 + $0xa0] sm:$0xff]
        %v9289 = vld [vmem:[%s1000 + $0xa8] sm:$0xff]
        %v9290 = vld [vmem:[%s1000 + $0xb0] sm:$0xff]
        %v9291 = vld [vmem:[%s1000 + $0xb8] sm:$0xff]
        %v9292 = vld [vmem:[%s1000 + $0xc0] sm:$0xff]
        %v9293 = vld [vmem:[%s1000 + $0xc8] sm:$0xff]
        %v9294 = vld [vmem:[%s1000 + $0xd0] sm:$0xff]
        %v9295 = vld [vmem:[%s1000 + $0xd8] sm:$0xff]
        %v9296 = vld [vmem:[%s1000 + $0xe0] sm:$0xff]
        %v9297 = vld [vmem:[%s1000 + $0xe8] sm:$0xff]
        %v9298 = vld [vmem:[%s1000 + $0xf0] sm:$0xff]
        %v9299 = vld [vmem:[%s1000 + $0xf8] sm:$0xff]
        %v9300 = vld [vmem:[%s1000 + $0x100] sm:$0xff]
        %v9301 = vld [vmem:[%s1000 + $0x108] sm:$0xff]
        %v9302 = vld [vmem:[%s1000 + $0x110] sm:$0xff]
        %v9303 = vld [vmem:[%s1000 + $0x118] sm:$0xff]
        %v9304 = vld [vmem:[%s1000 + $0x120] sm:$0xff]
        %v9305 = vld [vmem:[%s1000 + $0x128] sm:$0xff]
        %v9306 = vld [vmem:[%s1000 + $0x130] sm:$0xff]
        %v9307 = vld [vmem:[%s1000 + $0x138] sm:$0xff]
        %v9308 = vld [vmem:[%s1000 + $0x140] sm:$0xff]
        %v9309 = vld [vmem:[%s1000 + $0x148] sm:$0xff]
        %v9310 = vld [vmem:[%s1000 + $0x150] sm:$0xff]
        %v9311 = vld [vmem:[%s1000 + $0x158] sm:$0xff]
        %v9312 = vld [vmem:[%s1000 + $0x160] sm:$0xff]
        %v9313 = vld [vmem:[%s1000 + $0x168] sm:$0xff]
        %v9314 = vld [vmem:[%s1000 + $0x170] sm:$0xff]
        %v9315 = vld [vmem:[%s1000 + $0x178] sm:$0xff]
        %v9316 = vld [vmem:[%s1049] sm:$0xff]
        %v9317 = vld [vmem:[%s1049 + $0x8] sm:$0xff]
        %v9318 = vld [vmem:[%s1049 + $0x10] sm:$0xff]
        %v9319 = vld [vmem:[%s1049 + $0x18] sm:$0xff]
        %v9320 = vld [vmem:[%s1049 + $0x20] sm:$0xff]
        %v9321 = vld [vmem:[%s1049 + $0x28] sm:$0xff]
        %v9322 = vld [vmem:[%s1049 + $0x30] sm:$0xff]
        %v9323 = vld [vmem:[%s1049 + $0x38] sm:$0xff]
        %v9324 = vld [vmem:[%s1049 + $0x40] sm:$0xff]
        %v9325 = vld [vmem:[%s1049 + $0x48] sm:$0xff]
        %v9326 = vld [vmem:[%s1049 + $0x50] sm:$0xff]
        %v9327 = vld [vmem:[%s1049 + $0x58] sm:$0xff]
        %v9328 = vld [vmem:[%s1049 + $0x60] sm:$0xff]
        %v9329 = vld [vmem:[%s1049 + $0x68] sm:$0xff]
        %v9330 = vld [vmem:[%s1049 + $0x70] sm:$0xff]
        %v9331 = vld [vmem:[%s1049 + $0x78] sm:$0xff]
        %v9332 = vld [vmem:[%s1049 + $0x80] sm:$0xff]
        %v9333 = vld [vmem:[%s1049 + $0x88] sm:$0xff]
        %v9334 = vld [vmem:[%s1049 + $0x90] sm:$0xff]
        %v9335 = vld [vmem:[%s1049 + $0x98] sm:$0xff]
        %v9336 = vld [vmem:[%s1049 + $0xa0] sm:$0xff]
        %v9337 = vld [vmem:[%s1049 + $0xa8] sm:$0xff]
        %v9338 = vld [vmem:[%s1049 + $0xb0] sm:$0xff]
        %v9339 = vld [vmem:[%s1049 + $0xb8] sm:$0xff]
        %v9340 = vld [vmem:[%s1049 + $0xc0] sm:$0xff]
        %v9341 = vld [vmem:[%s1049 + $0xc8] sm:$0xff]
        %v9342 = vld [vmem:[%s1049 + $0xd0] sm:$0xff]
        %v9343 = vld [vmem:[%s1049 + $0xd8] sm:$0xff]
        %v9344 = vld [vmem:[%s1049 + $0xe0] sm:$0xff]
        %v9345 = vld [vmem:[%s1049 + $0xe8] sm:$0xff]
        %v9346 = vld [vmem:[%s1049 + $0xf0] sm:$0xff]
        %v9347 = vld [vmem:[%s1049 + $0xf8] sm:$0xff]
        %v9348 = vld [vmem:[%s1049 + $0x100] sm:$0xff]
        %v9349 = vld [vmem:[%s1049 + $0x108] sm:$0xff]
        %v9350 = vld [vmem:[%s1049 + $0x110] sm:$0xff]
        %v9351 = vld [vmem:[%s1049 + $0x118] sm:$0xff]
        %v9352 = vld [vmem:[%s1049 + $0x120] sm:$0xff]
        %v9353 = vld [vmem:[%s1049 + $0x128] sm:$0xff]
        %v9354 = vld [vmem:[%s1049 + $0x130] sm:$0xff]
        %v9355 = vld [vmem:[%s1049 + $0x138] sm:$0xff]
        %v9356 = vld [vmem:[%s1049 + $0x140] sm:$0xff]
        %v9357 = vld [vmem:[%s1049 + $0x148] sm:$0xff]
        %v9358 = vld [vmem:[%s1049 + $0x150] sm:$0xff]
        %v9359 = vld [vmem:[%s1049 + $0x158] sm:$0xff]
        %v9360 = vld [vmem:[%s1049 + $0x160] sm:$0xff]
        %v9361 = vld [vmem:[%s1049 + $0x168] sm:$0xff]
        %v9362 = vld [vmem:[%s1049 + $0x170] sm:$0xff]
        %v9363 = vld [vmem:[%s1049 + $0x178] sm:$0xff]
        %9412 = vrot.lane.b32.xlu0 %v9172, 32
        %v9413 = vpop.permute.xlu0 %9412
        %9414 = vrot.lane.b32.xlu0 %v9173, 32
        %v9415 = vpop.permute.xlu0 %9414
        %9416 = vrot.lane.b32.xlu0 %v9174, 32
        %v9417 = vpop.permute.xlu0 %9416
        %9418 = vrot.lane.b32.xlu0 %v9175, 32
        %v9419 = vpop.permute.xlu0 %9418
        %9420 = vrot.lane.b32.xlu0 %v9176, 32
        %v9421 = vpop.permute.xlu0 %9420
        %9422 = vrot.lane.b32.xlu0 %v9177, 32
        %v9423 = vpop.permute.xlu0 %9422
        %9424 = vrot.lane.b32.xlu0 %v9178, 32
        %v9425 = vpop.permute.xlu0 %9424
        %9426 = vrot.lane.b32.xlu0 %v9179, 32
        %v9427 = vpop.permute.xlu0 %9426
        %9428 = vrot.lane.b32.xlu0 %v9180, 32
        %v9429 = vpop.permute.xlu0 %9428
        %9430 = vrot.lane.b32.xlu0 %v9181, 32
        %v9431 = vpop.permute.xlu0 %9430
        %9432 = vrot.lane.b32.xlu0 %v9182, 32
        %v9433 = vpop.permute.xlu0 %9432
        %9434 = vrot.lane.b32.xlu0 %v9183, 32
        %v9435 = vpop.permute.xlu0 %9434
        %9436 = vrot.lane.b32.xlu0 %v9184, 32
        %v9437 = vpop.permute.xlu0 %9436
        %9438 = vrot.lane.b32.xlu0 %v9185, 32
        %v9439 = vpop.permute.xlu0 %9438
        %9440 = vrot.lane.b32.xlu0 %v9186, 32
        %v9441 = vpop.permute.xlu0 %9440
        %9442 = vrot.lane.b32.xlu0 %v9187, 32
        %v9443 = vpop.permute.xlu0 %9442
        %9444 = vrot.lane.b32.xlu0 %v9188, 32
        %v9445 = vpop.permute.xlu0 %9444
        %9446 = vrot.lane.b32.xlu0 %v9189, 32
        %v9447 = vpop.permute.xlu0 %9446
        %9448 = vrot.lane.b32.xlu0 %v9190, 32
        %v9449 = vpop.permute.xlu0 %9448
        %9450 = vrot.lane.b32.xlu0 %v9191, 32
        %v9451 = vpop.permute.xlu0 %9450
        %9452 = vrot.lane.b32.xlu0 %v9192, 32
        %v9453 = vpop.permute.xlu0 %9452
        %9454 = vrot.lane.b32.xlu0 %v9193, 32
        %v9455 = vpop.permute.xlu0 %9454
        %9456 = vrot.lane.b32.xlu0 %v9194, 32
        %v9457 = vpop.permute.xlu0 %9456
        %9458 = vrot.lane.b32.xlu0 %v9195, 32
        %v9459 = vpop.permute.xlu0 %9458
        %9460 = vrot.lane.b32.xlu0 %v9196, 32
        %v9461 = vpop.permute.xlu0 %9460
        %9462 = vrot.lane.b32.xlu0 %v9197, 32
        %v9463 = vpop.permute.xlu0 %9462
        %9464 = vrot.lane.b32.xlu0 %v9198, 32
        %v9465 = vpop.permute.xlu0 %9464
        %9466 = vrot.lane.b32.xlu0 %v9199, 32
        %v9467 = vpop.permute.xlu0 %9466
        %9468 = vrot.lane.b32.xlu0 %v9200, 32
        %v9469 = vpop.permute.xlu0 %9468
        %9470 = vrot.lane.b32.xlu0 %v9201, 32
        %v9471 = vpop.permute.xlu0 %9470
        %9472 = vrot.lane.b32.xlu0 %v9202, 32
        %v9473 = vpop.permute.xlu0 %9472
        %9474 = vrot.lane.b32.xlu0 %v9203, 32
        %v9475 = vpop.permute.xlu0 %9474
        %9476 = vrot.lane.b32.xlu0 %v9204, 32
        %v9477 = vpop.permute.xlu0 %9476
        %9478 = vrot.lane.b32.xlu0 %v9205, 32
        %v9479 = vpop.permute.xlu0 %9478
        %9480 = vrot.lane.b32.xlu0 %v9206, 32
        %v9481 = vpop.permute.xlu0 %9480
        %9482 = vrot.lane.b32.xlu0 %v9207, 32
        %v9483 = vpop.permute.xlu0 %9482
        %9484 = vrot.lane.b32.xlu0 %v9208, 32
        %v9485 = vpop.permute.xlu0 %9484
        %9486 = vrot.lane.b32.xlu0 %v9209, 32
        %v9487 = vpop.permute.xlu0 %9486
        %9488 = vrot.lane.b32.xlu0 %v9210, 32
        %v9489 = vpop.permute.xlu0 %9488
        %9490 = vrot.lane.b32.xlu0 %v9211, 32
        %v9491 = vpop.permute.xlu0 %9490
        %9492 = vrot.lane.b32.xlu0 %v9212, 32
        %v9493 = vpop.permute.xlu0 %9492
        %9494 = vrot.lane.b32.xlu0 %v9213, 32
        %v9495 = vpop.permute.xlu0 %9494
        %9496 = vrot.lane.b32.xlu0 %v9214, 32
        %v9497 = vpop.permute.xlu0 %9496
        %9498 = vrot.lane.b32.xlu0 %v9215, 32
        %v9499 = vpop.permute.xlu0 %9498
        %9500 = vrot.lane.b32.xlu0 %v9216, 32
        %v9501 = vpop.permute.xlu0 %9500
        %9502 = vrot.lane.b32.xlu0 %v9217, 32
        %v9503 = vpop.permute.xlu0 %9502
        %9504 = vrot.lane.b32.xlu0 %v9218, 32
        %v9505 = vpop.permute.xlu0 %9504
        %9506 = vrot.lane.b32.xlu0 %v9219, 32
        %v9507 = vpop.permute.xlu0 %9506
        %9604 = vrot.lane.b32.xlu0 %v9220, 64
        %v9605 = vpop.permute.xlu0 %9604
        %9606 = vrot.lane.b32.xlu0 %v9221, 64
        %v9607 = vpop.permute.xlu0 %9606
        %9608 = vrot.lane.b32.xlu0 %v9222, 64
        %v9609 = vpop.permute.xlu0 %9608
        %9610 = vrot.lane.b32.xlu0 %v9223, 64
        %v9611 = vpop.permute.xlu0 %9610
        %9612 = vrot.lane.b32.xlu0 %v9224, 64
        %v9613 = vpop.permute.xlu0 %9612
        %9614 = vrot.lane.b32.xlu0 %v9225, 64
        %v9615 = vpop.permute.xlu0 %9614
        %9616 = vrot.lane.b32.xlu0 %v9226, 64
        %v9617 = vpop.permute.xlu0 %9616
        %9618 = vrot.lane.b32.xlu0 %v9227, 64
        %v9619 = vpop.permute.xlu0 %9618
        %9620 = vrot.lane.b32.xlu0 %v9228, 64
        %v9621 = vpop.permute.xlu0 %9620
        %9622 = vrot.lane.b32.xlu0 %v9229, 64
        %v9623 = vpop.permute.xlu0 %9622
        %9624 = vrot.lane.b32.xlu0 %v9230, 64
        %v9625 = vpop.permute.xlu0 %9624
        %9626 = vrot.lane.b32.xlu0 %v9231, 64
        %v9627 = vpop.permute.xlu0 %9626
        %9628 = vrot.lane.b32.xlu0 %v9232, 64
        %v9629 = vpop.permute.xlu0 %9628
        %9630 = vrot.lane.b32.xlu0 %v9233, 64
        %v9631 = vpop.permute.xlu0 %9630
        %9632 = vrot.lane.b32.xlu0 %v9234, 64
        %v9633 = vpop.permute.xlu0 %9632
        %9634 = vrot.lane.b32.xlu0 %v9235, 64
        %v9635 = vpop.permute.xlu0 %9634
        %9636 = vrot.lane.b32.xlu0 %v9236, 64
        %v9637 = vpop.permute.xlu0 %9636
        %9638 = vrot.lane.b32.xlu0 %v9237, 64
        %v9639 = vpop.permute.xlu0 %9638
        %9640 = vrot.lane.b32.xlu0 %v9238, 64
        %v9641 = vpop.permute.xlu0 %9640
        %9642 = vrot.lane.b32.xlu0 %v9239, 64
        %v9643 = vpop.permute.xlu0 %9642
        %9644 = vrot.lane.b32.xlu0 %v9240, 64
        %v9645 = vpop.permute.xlu0 %9644
        %9646 = vrot.lane.b32.xlu0 %v9241, 64
        %v9647 = vpop.permute.xlu0 %9646
        %9648 = vrot.lane.b32.xlu0 %v9242, 64
        %v9649 = vpop.permute.xlu0 %9648
        %9650 = vrot.lane.b32.xlu0 %v9243, 64
        %v9651 = vpop.permute.xlu0 %9650
        %9652 = vrot.lane.b32.xlu0 %v9244, 64
        %v9653 = vpop.permute.xlu0 %9652
        %9654 = vrot.lane.b32.xlu0 %v9245, 64
        %v9655 = vpop.permute.xlu0 %9654
        %9656 = vrot.lane.b32.xlu0 %v9246, 64
        %v9657 = vpop.permute.xlu0 %9656
        %9658 = vrot.lane.b32.xlu0 %v9247, 64
        %v9659 = vpop.permute.xlu0 %9658
        %9660 = vrot.lane.b32.xlu0 %v9248, 64
        %v9661 = vpop.permute.xlu0 %9660
        %9662 = vrot.lane.b32.xlu0 %v9249, 64
        %v9663 = vpop.permute.xlu0 %9662
        %9664 = vrot.lane.b32.xlu0 %v9250, 64
        %v9665 = vpop.permute.xlu0 %9664
        %9666 = vrot.lane.b32.xlu0 %v9251, 64
        %v9667 = vpop.permute.xlu0 %9666
        %9668 = vrot.lane.b32.xlu0 %v9252, 64
        %v9669 = vpop.permute.xlu0 %9668
        %9670 = vrot.lane.b32.xlu0 %v9253, 64
        %v9671 = vpop.permute.xlu0 %9670
        %9672 = vrot.lane.b32.xlu0 %v9254, 64
        %v9673 = vpop.permute.xlu0 %9672
        %9674 = vrot.lane.b32.xlu0 %v9255, 64
        %v9675 = vpop.permute.xlu0 %9674
        %9676 = vrot.lane.b32.xlu0 %v9256, 64
        %v9677 = vpop.permute.xlu0 %9676
        %9678 = vrot.lane.b32.xlu0 %v9257, 64
        %v9679 = vpop.permute.xlu0 %9678
        %9680 = vrot.lane.b32.xlu0 %v9258, 64
        %v9681 = vpop.permute.xlu0 %9680
        %9682 = vrot.lane.b32.xlu0 %v9259, 64
        %v9683 = vpop.permute.xlu0 %9682
        %9684 = vrot.lane.b32.xlu0 %v9260, 64
        %v9685 = vpop.permute.xlu0 %9684
        %9686 = vrot.lane.b32.xlu0 %v9261, 64
        %v9687 = vpop.permute.xlu0 %9686
        %9688 = vrot.lane.b32.xlu0 %v9262, 64
        %v9689 = vpop.permute.xlu0 %9688
        %9690 = vrot.lane.b32.xlu0 %v9263, 64
        %v9691 = vpop.permute.xlu0 %9690
        %9692 = vrot.lane.b32.xlu0 %v9264, 64
        %v9693 = vpop.permute.xlu0 %9692
        %9694 = vrot.lane.b32.xlu0 %v9265, 64
        %v9695 = vpop.permute.xlu0 %9694
        %9696 = vrot.lane.b32.xlu0 %v9266, 64
        %v9697 = vpop.permute.xlu0 %9696
        %9698 = vrot.lane.b32.xlu0 %v9267, 64
        %v9699 = vpop.permute.xlu0 %9698
        %9796 = vrot.lane.b32.xlu0 %v9268, 96
        %v9797 = vpop.permute.xlu0 %9796
        %9798 = vrot.lane.b32.xlu0 %v9269, 96
        %v9799 = vpop.permute.xlu0 %9798
        %9800 = vrot.lane.b32.xlu0 %v9270, 96
        %v9801 = vpop.permute.xlu0 %9800
        %9802 = vrot.lane.b32.xlu0 %v9271, 96
        %v9803 = vpop.permute.xlu0 %9802
        %9804 = vrot.lane.b32.xlu0 %v9272, 96
        %v9805 = vpop.permute.xlu0 %9804
        %9806 = vrot.lane.b32.xlu0 %v9273, 96
        %v9807 = vpop.permute.xlu0 %9806
        %9808 = vrot.lane.b32.xlu0 %v9274, 96
        %v9809 = vpop.permute.xlu0 %9808
        %9810 = vrot.lane.b32.xlu0 %v9275, 96
        %v9811 = vpop.permute.xlu0 %9810
        %9812 = vrot.lane.b32.xlu0 %v9276, 96
        %v9813 = vpop.permute.xlu0 %9812
        %9814 = vrot.lane.b32.xlu0 %v9277, 96
        %v9815 = vpop.permute.xlu0 %9814
        %9816 = vrot.lane.b32.xlu0 %v9278, 96
        %v9817 = vpop.permute.xlu0 %9816
        %9818 = vrot.lane.b32.xlu0 %v9279, 96
        %v9819 = vpop.permute.xlu0 %9818
        %9820 = vrot.lane.b32.xlu0 %v9280, 96
        %v9821 = vpop.permute.xlu0 %9820
        %9822 = vrot.lane.b32.xlu0 %v9281, 96
        %v9823 = vpop.permute.xlu0 %9822
        %9824 = vrot.lane.b32.xlu0 %v9282, 96
        %v9825 = vpop.permute.xlu0 %9824
        %9826 = vrot.lane.b32.xlu0 %v9283, 96
        %v9827 = vpop.permute.xlu0 %9826
        %9828 = vrot.lane.b32.xlu0 %v9284, 96
        %v9829 = vpop.permute.xlu0 %9828
        %9830 = vrot.lane.b32.xlu0 %v9285, 96
        %v9831 = vpop.permute.xlu0 %9830
        %9832 = vrot.lane.b32.xlu0 %v9286, 96
        %v9833 = vpop.permute.xlu0 %9832
        %9834 = vrot.lane.b32.xlu0 %v9287, 96
        %v9835 = vpop.permute.xlu0 %9834
        %9836 = vrot.lane.b32.xlu0 %v9288, 96
        %v9837 = vpop.permute.xlu0 %9836
        %9838 = vrot.lane.b32.xlu0 %v9289, 96
        %v9839 = vpop.permute.xlu0 %9838
        %9840 = vrot.lane.b32.xlu0 %v9290, 96
        %v9841 = vpop.permute.xlu0 %9840
        %9842 = vrot.lane.b32.xlu0 %v9291, 96
        %v9843 = vpop.permute.xlu0 %9842
        %9844 = vrot.lane.b32.xlu0 %v9292, 96
        %v9845 = vpop.permute.xlu0 %9844
        %9846 = vrot.lane.b32.xlu0 %v9293, 96
        %v9847 = vpop.permute.xlu0 %9846
        %9848 = vrot.lane.b32.xlu0 %v9294, 96
        %v9849 = vpop.permute.xlu0 %9848
        %9850 = vrot.lane.b32.xlu0 %v9295, 96
        %v9851 = vpop.permute.xlu0 %9850
        %9852 = vrot.lane.b32.xlu0 %v9296, 96
        %v9853 = vpop.permute.xlu0 %9852
        %9854 = vrot.lane.b32.xlu0 %v9297, 96
        %v9855 = vpop.permute.xlu0 %9854
        %9856 = vrot.lane.b32.xlu0 %v9298, 96
        %v9857 = vpop.permute.xlu0 %9856
        %9858 = vrot.lane.b32.xlu0 %v9299, 96
        %v9859 = vpop.permute.xlu0 %9858
        %9860 = vrot.lane.b32.xlu0 %v9300, 96
        %v9861 = vpop.permute.xlu0 %9860
        %9862 = vrot.lane.b32.xlu0 %v9301, 96
        %v9863 = vpop.permute.xlu0 %9862
        %9864 = vrot.lane.b32.xlu0 %v9302, 96
        %v9865 = vpop.permute.xlu0 %9864
        %9866 = vrot.lane.b32.xlu0 %v9303, 96
        %v9867 = vpop.permute.xlu0 %9866
        %9868 = vrot.lane.b32.xlu0 %v9304, 96
        %v9869 = vpop.permute.xlu0 %9868
        %9870 = vrot.lane.b32.xlu0 %v9305, 96
        %v9871 = vpop.permute.xlu0 %9870
        %9872 = vrot.lane.b32.xlu0 %v9306, 96
        %v9873 = vpop.permute.xlu0 %9872
        %9874 = vrot.lane.b32.xlu0 %v9307, 96
        %v9875 = vpop.permute.xlu0 %9874
        %9876 = vrot.lane.b32.xlu0 %v9308, 96
        %v9877 = vpop.permute.xlu0 %9876
        %9878 = vrot.lane.b32.xlu0 %v9309, 96
        %v9879 = vpop.permute.xlu0 %9878
        %9880 = vrot.lane.b32.xlu0 %v9310, 96
        %v9881 = vpop.permute.xlu0 %9880
        %9882 = vrot.lane.b32.xlu0 %v9311, 96
        %v9883 = vpop.permute.xlu0 %9882
        %9884 = vrot.lane.b32.xlu0 %v9312, 96
        %v9885 = vpop.permute.xlu0 %9884
        %9886 = vrot.lane.b32.xlu0 %v9313, 96
        %v9887 = vpop.permute.xlu0 %9886
        %9888 = vrot.lane.b32.xlu0 %v9314, 96
        %v9889 = vpop.permute.xlu0 %9888
        %9890 = vrot.lane.b32.xlu0 %v9315, 96
        %v9891 = vpop.permute.xlu0 %9890
        %v9940 = vsel %vm224, %v9124, %v9413
        %v9941 = vsel %vm224, %v9125, %v9415
        %v9942 = vsel %vm224, %v9126, %v9417
        %v9943 = vsel %vm224, %v9127, %v9419
        %v9944 = vsel %vm224, %v9128, %v9421
        %v9945 = vsel %vm224, %v9129, %v9423
        %v9946 = vsel %vm224, %v9130, %v9425
        %v9947 = vsel %vm224, %v9131, %v9427
        %v9948 = vsel %vm224, %v9132, %v9429
        %v9949 = vsel %vm224, %v9133, %v9431
        %v9950 = vsel %vm224, %v9134, %v9433
        %v9951 = vsel %vm224, %v9135, %v9435
        %v9952 = vsel %vm224, %v9136, %v9437
        %v9953 = vsel %vm224, %v9137, %v9439
        %v9954 = vsel %vm224, %v9138, %v9441
        %v9955 = vsel %vm224, %v9139, %v9443
        %v9956 = vsel %vm224, %v9140, %v9445
        %v9957 = vsel %vm224, %v9141, %v9447
        %v9958 = vsel %vm224, %v9142, %v9449
        %v9959 = vsel %vm224, %v9143, %v9451
        %v9960 = vsel %vm224, %v9144, %v9453
        %v9961 = vsel %vm224, %v9145, %v9455
        %v9962 = vsel %vm224, %v9146, %v9457
        %v9963 = vsel %vm224, %v9147, %v9459
        %v9964 = vsel %vm224, %v9148, %v9461
        %v9965 = vsel %vm224, %v9149, %v9463
        %v9966 = vsel %vm224, %v9150, %v9465
        %v9967 = vsel %vm224, %v9151, %v9467
        %v9968 = vsel %vm224, %v9152, %v9469
        %v9969 = vsel %vm224, %v9153, %v9471
        %v9970 = vsel %vm224, %v9154, %v9473
        %v9971 = vsel %vm224, %v9155, %v9475
        %v9972 = vsel %vm224, %v9156, %v9477
        %v9973 = vsel %vm224, %v9157, %v9479
        %v9974 = vsel %vm224, %v9158, %v9481
        %v9975 = vsel %vm224, %v9159, %v9483
        %v9976 = vsel %vm224, %v9160, %v9485
        %v9977 = vsel %vm224, %v9161, %v9487
        %v9978 = vsel %vm224, %v9162, %v9489
        %v9979 = vsel %vm224, %v9163, %v9491
        %v9980 = vsel %vm224, %v9164, %v9493
        %v9981 = vsel %vm224, %v9165, %v9495
        %v9982 = vsel %vm224, %v9166, %v9497
        %v9983 = vsel %vm224, %v9167, %v9499
        %v9984 = vsel %vm224, %v9168, %v9501
        %v9985 = vsel %vm224, %v9169, %v9503
        %v9986 = vsel %vm224, %v9170, %v9505
        %v9987 = vsel %vm224, %v9171, %v9507
        %v9988 = vsel %vm1722, %v9940, %v9605
        %v9989 = vsel %vm1722, %v9941, %v9607
        %v9990 = vsel %vm1722, %v9942, %v9609
        %v9991 = vsel %vm1722, %v9943, %v9611
        %v9992 = vsel %vm1722, %v9944, %v9613
        %v9993 = vsel %vm1722, %v9945, %v9615
        %v9994 = vsel %vm1722, %v9946, %v9617
        %v9995 = vsel %vm1722, %v9947, %v9619
        %v9996 = vsel %vm1722, %v9948, %v9621
        %v9997 = vsel %vm1722, %v9949, %v9623
        %v9998 = vsel %vm1722, %v9950, %v9625
        %v9999 = vsel %vm1722, %v9951, %v9627
        %v10000 = vsel %vm1722, %v9952, %v9629
        %v10001 = vsel %vm1722, %v9953, %v9631
        %v10002 = vsel %vm1722, %v9954, %v9633
        %v10003 = vsel %vm1722, %v9955, %v9635
        %v10004 = vsel %vm1722, %v9956, %v9637
        %v10005 = vsel %vm1722, %v9957, %v9639
        %v10006 = vsel %vm1722, %v9958, %v9641
        %v10007 = vsel %vm1722, %v9959, %v9643
        %v10008 = vsel %vm1722, %v9960, %v9645
        %v10009 = vsel %vm1722, %v9961, %v9647
        %v10010 = vsel %vm1722, %v9962, %v9649
        %v10011 = vsel %vm1722, %v9963, %v9651
        %v10012 = vsel %vm1722, %v9964, %v9653
        %v10013 = vsel %vm1722, %v9965, %v9655
        %v10014 = vsel %vm1722, %v9966, %v9657
        %v10015 = vsel %vm1722, %v9967, %v9659
        %v10016 = vsel %vm1722, %v9968, %v9661
        %v10017 = vsel %vm1722, %v9969, %v9663
        %v10018 = vsel %vm1722, %v9970, %v9665
        %v10019 = vsel %vm1722, %v9971, %v9667
        %v10020 = vsel %vm1722, %v9972, %v9669
        %v10021 = vsel %vm1722, %v9973, %v9671
        %v10022 = vsel %vm1722, %v9974, %v9673
        %v10023 = vsel %vm1722, %v9975, %v9675
        %v10024 = vsel %vm1722, %v9976, %v9677
        %v10025 = vsel %vm1722, %v9977, %v9679
        %v10026 = vsel %vm1722, %v9978, %v9681
        %v10027 = vsel %vm1722, %v9979, %v9683
        %v10028 = vsel %vm1722, %v9980, %v9685
        %v10029 = vsel %vm1722, %v9981, %v9687
        %v10030 = vsel %vm1722, %v9982, %v9689
        %v10031 = vsel %vm1722, %v9983, %v9691
        %v10032 = vsel %vm1722, %v9984, %v9693
        %v10033 = vsel %vm1722, %v9985, %v9695
        %v10034 = vsel %vm1722, %v9986, %v9697
        %v10035 = vsel %vm1722, %v9987, %v9699
        %v10036 = vsel %vm1771, %v9988, %v9797
        %v10037 = vsel %vm1771, %v9989, %v9799
        %v10038 = vsel %vm1771, %v9990, %v9801
        %v10039 = vsel %vm1771, %v9991, %v9803
        %v10040 = vsel %vm1771, %v9992, %v9805
        %v10041 = vsel %vm1771, %v9993, %v9807
        %v10042 = vsel %vm1771, %v9994, %v9809
        %v10043 = vsel %vm1771, %v9995, %v9811
        %v10044 = vsel %vm1771, %v9996, %v9813
        %v10045 = vsel %vm1771, %v9997, %v9815
        %v10046 = vsel %vm1771, %v9998, %v9817
        %v10047 = vsel %vm1771, %v9999, %v9819
        %v10048 = vsel %vm1771, %v10000, %v9821
        %v10049 = vsel %vm1771, %v10001, %v9823
        %v10050 = vsel %vm1771, %v10002, %v9825
        %v10051 = vsel %vm1771, %v10003, %v9827
        %v10052 = vsel %vm1771, %v10004, %v9829
        %v10053 = vsel %vm1771, %v10005, %v9831
        %v10054 = vsel %vm1771, %v10006, %v9833
        %v10055 = vsel %vm1771, %v10007, %v9835
        %v10056 = vsel %vm1771, %v10008, %v9837
        %v10057 = vsel %vm1771, %v10009, %v9839
        %v10058 = vsel %vm1771, %v10010, %v9841
        %v10059 = vsel %vm1771, %v10011, %v9843
        %v10060 = vsel %vm1771, %v10012, %v9845
        %v10061 = vsel %vm1771, %v10013, %v9847
        %v10062 = vsel %vm1771, %v10014, %v9849
        %v10063 = vsel %vm1771, %v10015, %v9851
        %v10064 = vsel %vm1771, %v10016, %v9853
        %v10065 = vsel %vm1771, %v10017, %v9855
        %v10066 = vsel %vm1771, %v10018, %v9857
        %v10067 = vsel %vm1771, %v10019, %v9859
        %v10068 = vsel %vm1771, %v10020, %v9861
        %v10069 = vsel %vm1771, %v10021, %v9863
        %v10070 = vsel %vm1771, %v10022, %v9865
        %v10071 = vsel %vm1771, %v10023, %v9867
        %v10072 = vsel %vm1771, %v10024, %v9869
        %v10073 = vsel %vm1771, %v10025, %v9871
        %v10074 = vsel %vm1771, %v10026, %v9873
        %v10075 = vsel %vm1771, %v10027, %v9875
        %v10076 = vsel %vm1771, %v10028, %v9877
        %v10077 = vsel %vm1771, %v10029, %v9879
        %v10078 = vsel %vm1771, %v10030, %v9881
        %v10079 = vsel %vm1771, %v10031, %v9883
        %v10080 = vsel %vm1771, %v10032, %v9885
        %v10081 = vsel %vm1771, %v10033, %v9887
        %v10082 = vsel %vm1771, %v10034, %v9889
        %v10083 = vsel %vm1771, %v10035, %v9891
        %s10084 = scalar_lea.vmem [#allocation6], 960
        %v10085 = vld [vmem:[%s10084] sm:$0xff]
        %v10086 = vld [vmem:[%s10084 + $0x8] sm:$0xff]
        %v10087 = vld [vmem:[%s10084 + $0x10] sm:$0xff]
        %v10088 = vld [vmem:[%s10084 + $0x18] sm:$0xff]
        %v10089 = vld [vmem:[%s10084 + $0x20] sm:$0xff]
        %v10090 = vld [vmem:[%s10084 + $0x28] sm:$0xff]
        %v10091 = vld [vmem:[%s10084 + $0x30] sm:$0xff]
        %v10092 = vld [vmem:[%s10084 + $0x38] sm:$0xff]
        %v10093 = vld [vmem:[%s10084 + $0x40] sm:$0xff]
        %v10094 = vld [vmem:[%s10084 + $0x48] sm:$0xff]
        %v10095 = vld [vmem:[%s10084 + $0x50] sm:$0xff]
        %v10096 = vld [vmem:[%s10084 + $0x58] sm:$0xff]
        %v10097 = vld [vmem:[%s10084 + $0x60] sm:$0xff]
        %v10098 = vld [vmem:[%s10084 + $0x68] sm:$0xff]
        %v10099 = vld [vmem:[%s10084 + $0x70] sm:$0xff]
        %v10100 = vld [vmem:[%s10084 + $0x78] sm:$0xff]
        %v10101 = vld [vmem:[%s10084 + $0x80] sm:$0xff]
        %v10102 = vld [vmem:[%s10084 + $0x88] sm:$0xff]
        %v10103 = vld [vmem:[%s10084 + $0x90] sm:$0xff]
        %v10104 = vld [vmem:[%s10084 + $0x98] sm:$0xff]
        %v10105 = vld [vmem:[%s10084 + $0xa0] sm:$0xff]
        %v10106 = vld [vmem:[%s10084 + $0xa8] sm:$0xff]
        %v10107 = vld [vmem:[%s10084 + $0xb0] sm:$0xff]
        %v10108 = vld [vmem:[%s10084 + $0xb8] sm:$0xff]
        %v10109 = vld [vmem:[%s10084 + $0xc0] sm:$0xff]
        %v10110 = vld [vmem:[%s10084 + $0xc8] sm:$0xff]
        %v10111 = vld [vmem:[%s10084 + $0xd0] sm:$0xff]
        %v10112 = vld [vmem:[%s10084 + $0xd8] sm:$0xff]
        %v10113 = vld [vmem:[%s10084 + $0xe0] sm:$0xff]
        %v10114 = vld [vmem:[%s10084 + $0xe8] sm:$0xff]
        %v10115 = vld [vmem:[%s10084 + $0xf0] sm:$0xff]
        %v10116 = vld [vmem:[%s10084 + $0xf8] sm:$0xff]
        %v10117 = vld [vmem:[%s10084 + $0x100] sm:$0xff]
        %v10118 = vld [vmem:[%s10084 + $0x108] sm:$0xff]
        %v10119 = vld [vmem:[%s10084 + $0x110] sm:$0xff]
        %v10120 = vld [vmem:[%s10084 + $0x118] sm:$0xff]
        %v10121 = vld [vmem:[%s10084 + $0x120] sm:$0xff]
        %v10122 = vld [vmem:[%s10084 + $0x128] sm:$0xff]
        %v10123 = vld [vmem:[%s10084 + $0x130] sm:$0xff]
        %v10124 = vld [vmem:[%s10084 + $0x138] sm:$0xff]
        %v10126 = vsel %vm224, %v9316, 0
        %v10129 = vsel %vm224, %v9317, 0
        %v10132 = vsel %vm224, %v9318, 0
        %v10135 = vsel %vm224, %v9319, 0
        %v10138 = vsel %vm224, %v9320, 0
        %v10141 = vsel %vm224, %v9321, 0
        %v10144 = vsel %vm224, %v9322, 0
        %v10147 = vsel %vm224, %v9323, 0
        %v10150 = vsel %vm224, %v9324, 0
        %v10153 = vsel %vm224, %v9325, 0
        %v10156 = vsel %vm224, %v9326, 0
        %v10159 = vsel %vm224, %v9327, 0
        %v10162 = vsel %vm224, %v9328, 0
        %v10165 = vsel %vm224, %v9329, 0
        %v10168 = vsel %vm224, %v9330, 0
        %v10171 = vsel %vm224, %v9331, 0
        %v10174 = vsel %vm224, %v9332, 0
        %v10177 = vsel %vm224, %v9333, 0
        %v10180 = vsel %vm224, %v9334, 0
        %v10183 = vsel %vm224, %v9335, 0
        %v10186 = vsel %vm224, %v9336, 0
        %v10189 = vsel %vm224, %v9337, 0
        %v10192 = vsel %vm224, %v9338, 0
        %v10195 = vsel %vm224, %v9339, 0
        %v10198 = vsel %vm224, %v9340, 0
        %v10201 = vsel %vm224, %v9341, 0
        %v10204 = vsel %vm224, %v9342, 0
        %v10207 = vsel %vm224, %v9343, 0
        %v10210 = vsel %vm224, %v9344, 0
        %v10213 = vsel %vm224, %v9345, 0
        %v10216 = vsel %vm224, %v9346, 0
        %v10219 = vsel %vm224, %v9347, 0
        %v10222 = vsel %vm224, %v9348, 0
        %v10225 = vsel %vm224, %v9349, 0
        %v10228 = vsel %vm224, %v9350, 0
        %v10231 = vsel %vm224, %v9351, 0
        %v10234 = vsel %vm224, %v9352, 0
        %v10237 = vsel %vm224, %v9353, 0
        %v10240 = vsel %vm224, %v9354, 0
        %v10243 = vsel %vm224, %v9355, 0
        %v10246 = vsel %vm224, %v9356, 0
        %v10249 = vsel %vm224, %v9357, 0
        %v10252 = vsel %vm224, %v9358, 0
        %v10255 = vsel %vm224, %v9359, 0
        %v10258 = vsel %vm224, %v9360, 0
        %v10261 = vsel %vm224, %v9361, 0
        %v10264 = vsel %vm224, %v9362, 0
        %v10267 = vsel %vm224, %v9363, 0
        %10269 = vmatpush.msra.mxu0 %v10115
        %10270 = vmatpush.msra.mxu0 %v10113
        %10271 = vmatpush.msra.mxu0 %v10111
        %10272 = vmatpush.msra.mxu0 %v10109
        %10273 = vmatpush.msra.mxu0 %v10107
        %10274 = vmatpush.msra.mxu0 %v10105
        %10275 = vmatpush.msra.mxu0 %v10103
        %10276 = vmatpush.msra.mxu0 %v10101
        %10277 = vmatpush.msra.mxu0 %v10099
        %10278 = vmatpush.msra.mxu0 %v10097
        %10279 = vmatpush.msra.mxu0 %v10095
        %10280 = vmatpush.msra.mxu0 %v10093
        %10281 = vmatpush.msra.mxu0 %v10091
        %10282 = vmatpush.msra.mxu0 %v10089
        %10283 = vmatpush.msra.mxu0 %v10087
        %10284 = vmatpush.msra.mxu0 %v10085
        %10285 = vmatmul.f32.gmra.mxu0 %v10036
        %v10286 = vpop.f32.mrf.mxu0
        %v10287 = vadd.f32 0.0, %v10286
        %10288 = vmatmul.f32.gmra.mxu0 %v10037
        %v10289 = vpop.f32.mrf.mxu0
        %v10290 = vadd.f32 0.0, %v10289
        %10291 = vmatmul.f32.gmra.mxu0 %v10038
        %v10292 = vpop.f32.mrf.mxu0
        %v10293 = vadd.f32 0.0, %v10292
        %10294 = vmatmul.f32.gmra.mxu0 %v10039
        %v10295 = vpop.f32.mrf.mxu0
        %v10296 = vadd.f32 0.0, %v10295
        %10297 = vmatmul.f32.gmra.mxu0 %v10040
        %v10298 = vpop.f32.mrf.mxu0
        %v10299 = vadd.f32 0.0, %v10298
        %10300 = vmatmul.f32.gmra.mxu0 %v10041
        %v10301 = vpop.f32.mrf.mxu0
        %v10302 = vadd.f32 0.0, %v10301
        %10303 = vmatmul.f32.gmra.mxu0 %v10042
        %v10304 = vpop.f32.mrf.mxu0
        %v10305 = vadd.f32 0.0, %v10304
        %10306 = vmatmul.f32.gmra.mxu0 %v10043
        %v10307 = vpop.f32.mrf.mxu0
        %v10308 = vadd.f32 0.0, %v10307
        %10309 = vmatmul.f32.gmra.mxu0 %v10044
        %v10310 = vpop.f32.mrf.mxu0
        %v10311 = vadd.f32 0.0, %v10310
        %10312 = vmatmul.f32.gmra.mxu0 %v10045
        %v10313 = vpop.f32.mrf.mxu0
        %v10314 = vadd.f32 0.0, %v10313
        %10315 = vmatmul.f32.gmra.mxu0 %v10046
        %v10316 = vpop.f32.mrf.mxu0
        %v10317 = vadd.f32 0.0, %v10316
        %10318 = vmatmul.f32.gmra.mxu0 %v10047
        %v10319 = vpop.f32.mrf.mxu0
        %v10320 = vadd.f32 0.0, %v10319
        %10321 = vmatmul.f32.gmra.mxu0 %v10048
        %v10322 = vpop.f32.mrf.mxu0
        %v10323 = vadd.f32 0.0, %v10322
        %10324 = vmatmul.f32.gmra.mxu0 %v10049
        %v10325 = vpop.f32.mrf.mxu0
        %v10326 = vadd.f32 0.0, %v10325
        %10327 = vmatmul.f32.gmra.mxu0 %v10050
        %v10328 = vpop.f32.mrf.mxu0
        %v10329 = vadd.f32 0.0, %v10328
        %10330 = vmatmul.f32.gmra.mxu0 %v10051
        %v10331 = vpop.f32.mrf.mxu0
        %v10332 = vadd.f32 0.0, %v10331
        %10333 = vmatmul.f32.gmra.mxu0 %v10052
        %v10334 = vpop.f32.mrf.mxu0
        %v10335 = vadd.f32 0.0, %v10334
        %10336 = vmatmul.f32.gmra.mxu0 %v10053
        %v10337 = vpop.f32.mrf.mxu0
        %v10338 = vadd.f32 0.0, %v10337
        %10339 = vmatmul.f32.gmra.mxu0 %v10054
        %v10340 = vpop.f32.mrf.mxu0
        %v10341 = vadd.f32 0.0, %v10340
        %10342 = vmatmul.f32.gmra.mxu0 %v10055
        %v10343 = vpop.f32.mrf.mxu0
        %v10344 = vadd.f32 0.0, %v10343
        %10345 = vmatmul.f32.gmra.mxu0 %v10056
        %v10346 = vpop.f32.mrf.mxu0
        %v10347 = vadd.f32 0.0, %v10346
        %10348 = vmatmul.f32.gmra.mxu0 %v10057
        %v10349 = vpop.f32.mrf.mxu0
        %v10350 = vadd.f32 0.0, %v10349
        %10351 = vmatmul.f32.gmra.mxu0 %v10058
        %v10352 = vpop.f32.mrf.mxu0
        %v10353 = vadd.f32 0.0, %v10352
        %10354 = vmatmul.f32.gmra.mxu0 %v10059
        %v10355 = vpop.f32.mrf.mxu0
        %v10356 = vadd.f32 0.0, %v10355
        %10357 = vmatmul.f32.gmra.mxu0 %v10060
        %v10358 = vpop.f32.mrf.mxu0
        %v10359 = vadd.f32 0.0, %v10358
        %10360 = vmatmul.f32.gmra.mxu0 %v10061
        %v10361 = vpop.f32.mrf.mxu0
        %v10362 = vadd.f32 0.0, %v10361
        %10363 = vmatmul.f32.gmra.mxu0 %v10062
        %v10364 = vpop.f32.mrf.mxu0
        %v10365 = vadd.f32 0.0, %v10364
        %10366 = vmatmul.f32.gmra.mxu0 %v10063
        %v10367 = vpop.f32.mrf.mxu0
        %v10368 = vadd.f32 0.0, %v10367
        %10369 = vmatmul.f32.gmra.mxu0 %v10064
        %v10370 = vpop.f32.mrf.mxu0
        %v10371 = vadd.f32 0.0, %v10370
        %10372 = vmatmul.f32.gmra.mxu0 %v10065
        %v10373 = vpop.f32.mrf.mxu0
        %v10374 = vadd.f32 0.0, %v10373
        %10375 = vmatmul.f32.gmra.mxu0 %v10066
        %v10376 = vpop.f32.mrf.mxu0
        %v10377 = vadd.f32 0.0, %v10376
        %10378 = vmatmul.f32.gmra.mxu0 %v10067
        %v10379 = vpop.f32.mrf.mxu0
        %v10380 = vadd.f32 0.0, %v10379
        %10381 = vmatmul.f32.gmra.mxu0 %v10068
        %v10382 = vpop.f32.mrf.mxu0
        %v10383 = vadd.f32 0.0, %v10382
        %10384 = vmatmul.f32.gmra.mxu0 %v10069
        %v10385 = vpop.f32.mrf.mxu0
        %v10386 = vadd.f32 0.0, %v10385
        %10387 = vmatmul.f32.gmra.mxu0 %v10070
        %v10388 = vpop.f32.mrf.mxu0
        %v10389 = vadd.f32 0.0, %v10388
        %10390 = vmatmul.f32.gmra.mxu0 %v10071
        %v10391 = vpop.f32.mrf.mxu0
        %v10392 = vadd.f32 0.0, %v10391
        %10393 = vmatmul.f32.gmra.mxu0 %v10072
        %v10394 = vpop.f32.mrf.mxu0
        %v10395 = vadd.f32 0.0, %v10394
        %10396 = vmatmul.f32.gmra.mxu0 %v10073
        %v10397 = vpop.f32.mrf.mxu0
        %v10398 = vadd.f32 0.0, %v10397
        %10399 = vmatmul.f32.gmra.mxu0 %v10074
        %v10400 = vpop.f32.mrf.mxu0
        %v10401 = vadd.f32 0.0, %v10400
        %10402 = vmatmul.f32.gmra.mxu0 %v10075
        %v10403 = vpop.f32.mrf.mxu0
        %v10404 = vadd.f32 0.0, %v10403
        %10405 = vmatmul.f32.gmra.mxu0 %v10076
        %v10406 = vpop.f32.mrf.mxu0
        %v10407 = vadd.f32 0.0, %v10406
        %10408 = vmatmul.f32.gmra.mxu0 %v10077
        %v10409 = vpop.f32.mrf.mxu0
        %v10410 = vadd.f32 0.0, %v10409
        %10411 = vmatmul.f32.gmra.mxu0 %v10078
        %v10412 = vpop.f32.mrf.mxu0
        %v10413 = vadd.f32 0.0, %v10412
        %10414 = vmatmul.f32.gmra.mxu0 %v10079
        %v10415 = vpop.f32.mrf.mxu0
        %v10416 = vadd.f32 0.0, %v10415
        %10417 = vmatmul.f32.gmra.mxu0 %v10080
        %v10418 = vpop.f32.mrf.mxu0
        %v10419 = vadd.f32 0.0, %v10418
        %10420 = vmatmul.f32.gmra.mxu0 %v10081
        %v10421 = vpop.f32.mrf.mxu0
        %v10422 = vadd.f32 0.0, %v10421
        %10423 = vmatmul.f32.gmra.mxu0 %v10082
        %v10424 = vpop.f32.mrf.mxu0
        %v10425 = vadd.f32 0.0, %v10424
        %10426 = vmatmul.f32.gmra.mxu0 %v10083
        %v10427 = vpop.f32.mrf.mxu0
        %v10428 = vadd.f32 0.0, %v10427
        %10429 = vdwg.mxu0
        %10430 = vmatpush.msra.mxu0 0.0
        %10431 = vmatpush.msra.mxu0 0.0
        %10432 = vmatpush.msra.mxu0 0.0
        %10433 = vmatpush.msra.mxu0 0.0
        %10434 = vmatpush.msra.mxu0 0.0
        %10435 = vmatpush.msra.mxu0 0.0
        %10436 = vmatpush.msra.mxu0 0.0
        %10437 = vmatpush.msra.mxu0 0.0
        %10438 = vmatpush.msra.mxu0 0.0
        %10439 = vmatpush.msra.mxu0 0.0
        %10440 = vmatpush.msra.mxu0 0.0
        %10441 = vmatpush.msra.mxu0 0.0
        %10442 = vmatpush.msra.mxu0 %v10123
        %10443 = vmatpush.msra.mxu0 %v10121
        %10444 = vmatpush.msra.mxu0 %v10119
        %10445 = vmatpush.msra.mxu0 %v10117
        %10446 = vmatmul.f32.gmra.mxu0 %v10126
        %v10447 = vpop.f32.mrf.mxu0
        %v10448 = vadd.f32 %v10287, %v10447
        %10449 = vmatmul.f32.gmra.mxu0 %v10129
        %v10450 = vpop.f32.mrf.mxu0
        %v10451 = vadd.f32 %v10290, %v10450
        %10452 = vmatmul.f32.gmra.mxu0 %v10132
        %v10453 = vpop.f32.mrf.mxu0
        %v10454 = vadd.f32 %v10293, %v10453
        %10455 = vmatmul.f32.gmra.mxu0 %v10135
        %v10456 = vpop.f32.mrf.mxu0
        %v10457 = vadd.f32 %v10296, %v10456
        %10458 = vmatmul.f32.gmra.mxu0 %v10138
        %v10459 = vpop.f32.mrf.mxu0
        %v10460 = vadd.f32 %v10299, %v10459
        %10461 = vmatmul.f32.gmra.mxu0 %v10141
        %v10462 = vpop.f32.mrf.mxu0
        %v10463 = vadd.f32 %v10302, %v10462
        %10464 = vmatmul.f32.gmra.mxu0 %v10144
        %v10465 = vpop.f32.mrf.mxu0
        %v10466 = vadd.f32 %v10305, %v10465
        %10467 = vmatmul.f32.gmra.mxu0 %v10147
        %v10468 = vpop.f32.mrf.mxu0
        %v10469 = vadd.f32 %v10308, %v10468
        %10470 = vmatmul.f32.gmra.mxu0 %v10150
        %v10471 = vpop.f32.mrf.mxu0
        %v10472 = vadd.f32 %v10311, %v10471
        %10473 = vmatmul.f32.gmra.mxu0 %v10153
        %v10474 = vpop.f32.mrf.mxu0
        %v10475 = vadd.f32 %v10314, %v10474
        %10476 = vmatmul.f32.gmra.mxu0 %v10156
        %v10477 = vpop.f32.mrf.mxu0
        %v10478 = vadd.f32 %v10317, %v10477
        %10479 = vmatmul.f32.gmra.mxu0 %v10159
        %v10480 = vpop.f32.mrf.mxu0
        %v10481 = vadd.f32 %v10320, %v10480
        %10482 = vmatmul.f32.gmra.mxu0 %v10162
        %v10483 = vpop.f32.mrf.mxu0
        %v10484 = vadd.f32 %v10323, %v10483
        %10485 = vmatmul.f32.gmra.mxu0 %v10165
        %v10486 = vpop.f32.mrf.mxu0
        %v10487 = vadd.f32 %v10326, %v10486
        %10488 = vmatmul.f32.gmra.mxu0 %v10168
        %v10489 = vpop.f32.mrf.mxu0
        %v10490 = vadd.f32 %v10329, %v10489
        %10491 = vmatmul.f32.gmra.mxu0 %v10171
        %v10492 = vpop.f32.mrf.mxu0
        %v10493 = vadd.f32 %v10332, %v10492
        %10494 = vmatmul.f32.gmra.mxu0 %v10174
        %v10495 = vpop.f32.mrf.mxu0
        %v10496 = vadd.f32 %v10335, %v10495
        %10497 = vmatmul.f32.gmra.mxu0 %v10177
        %v10498 = vpop.f32.mrf.mxu0
        %v10499 = vadd.f32 %v10338, %v10498
        %10500 = vmatmul.f32.gmra.mxu0 %v10180
        %v10501 = vpop.f32.mrf.mxu0
        %v10502 = vadd.f32 %v10341, %v10501
        %10503 = vmatmul.f32.gmra.mxu0 %v10183
        %v10504 = vpop.f32.mrf.mxu0
        %v10505 = vadd.f32 %v10344, %v10504
        %10506 = vmatmul.f32.gmra.mxu0 %v10186
        %v10507 = vpop.f32.mrf.mxu0
        %v10508 = vadd.f32 %v10347, %v10507
        %10509 = vmatmul.f32.gmra.mxu0 %v10189
        %v10510 = vpop.f32.mrf.mxu0
        %v10511 = vadd.f32 %v10350, %v10510
        %10512 = vmatmul.f32.gmra.mxu0 %v10192
        %v10513 = vpop.f32.mrf.mxu0
        %v10514 = vadd.f32 %v10353, %v10513
        %10515 = vmatmul.f32.gmra.mxu0 %v10195
        %v10516 = vpop.f32.mrf.mxu0
        %v10517 = vadd.f32 %v10356, %v10516
        %10518 = vmatmul.f32.gmra.mxu0 %v10198
        %v10519 = vpop.f32.mrf.mxu0
        %v10520 = vadd.f32 %v10359, %v10519
        %10521 = vmatmul.f32.gmra.mxu0 %v10201
        %v10522 = vpop.f32.mrf.mxu0
        %v10523 = vadd.f32 %v10362, %v10522
        %10524 = vmatmul.f32.gmra.mxu0 %v10204
        %v10525 = vpop.f32.mrf.mxu0
        %v10526 = vadd.f32 %v10365, %v10525
        %10527 = vmatmul.f32.gmra.mxu0 %v10207
        %v10528 = vpop.f32.mrf.mxu0
        %v10529 = vadd.f32 %v10368, %v10528
        %10530 = vmatmul.f32.gmra.mxu0 %v10210
        %v10531 = vpop.f32.mrf.mxu0
        %v10532 = vadd.f32 %v10371, %v10531
        %10533 = vmatmul.f32.gmra.mxu0 %v10213
        %v10534 = vpop.f32.mrf.mxu0
        %v10535 = vadd.f32 %v10374, %v10534
        %10536 = vmatmul.f32.gmra.mxu0 %v10216
        %v10537 = vpop.f32.mrf.mxu0
        %v10538 = vadd.f32 %v10377, %v10537
        %10539 = vmatmul.f32.gmra.mxu0 %v10219
        %v10540 = vpop.f32.mrf.mxu0
        %v10541 = vadd.f32 %v10380, %v10540
        %10542 = vmatmul.f32.gmra.mxu0 %v10222
        %v10543 = vpop.f32.mrf.mxu0
        %v10544 = vadd.f32 %v10383, %v10543
        %10545 = vmatmul.f32.gmra.mxu0 %v10225
        %v10546 = vpop.f32.mrf.mxu0
        %v10547 = vadd.f32 %v10386, %v10546
        %10548 = vmatmul.f32.gmra.mxu0 %v10228
        %v10549 = vpop.f32.mrf.mxu0
        %v10550 = vadd.f32 %v10389, %v10549
        %10551 = vmatmul.f32.gmra.mxu0 %v10231
        %v10552 = vpop.f32.mrf.mxu0
        %v10553 = vadd.f32 %v10392, %v10552
        %10554 = vmatmul.f32.gmra.mxu0 %v10234
        %v10555 = vpop.f32.mrf.mxu0
        %v10556 = vadd.f32 %v10395, %v10555
        %10557 = vmatmul.f32.gmra.mxu0 %v10237
        %v10558 = vpop.f32.mrf.mxu0
        %v10559 = vadd.f32 %v10398, %v10558
        %10560 = vmatmul.f32.gmra.mxu0 %v10240
        %v10561 = vpop.f32.mrf.mxu0
        %v10562 = vadd.f32 %v10401, %v10561
        %10563 = vmatmul.f32.gmra.mxu0 %v10243
        %v10564 = vpop.f32.mrf.mxu0
        %v10565 = vadd.f32 %v10404, %v10564
        %10566 = vmatmul.f32.gmra.mxu0 %v10246
        %v10567 = vpop.f32.mrf.mxu0
        %v10568 = vadd.f32 %v10407, %v10567
        %10569 = vmatmul.f32.gmra.mxu0 %v10249
        %v10570 = vpop.f32.mrf.mxu0
        %v10571 = vadd.f32 %v10410, %v10570
        %10572 = vmatmul.f32.gmra.mxu0 %v10252
        %v10573 = vpop.f32.mrf.mxu0
        %v10574 = vadd.f32 %v10413, %v10573
        %10575 = vmatmul.f32.gmra.mxu0 %v10255
        %v10576 = vpop.f32.mrf.mxu0
        %v10577 = vadd.f32 %v10416, %v10576
        %10578 = vmatmul.f32.gmra.mxu0 %v10258
        %v10579 = vpop.f32.mrf.mxu0
        %v10580 = vadd.f32 %v10419, %v10579
        %10581 = vmatmul.f32.gmra.mxu0 %v10261
        %v10582 = vpop.f32.mrf.mxu0
        %v10583 = vadd.f32 %v10422, %v10582
        %10584 = vmatmul.f32.gmra.mxu0 %v10264
        %v10585 = vpop.f32.mrf.mxu0
        %v10586 = vadd.f32 %v10425, %v10585
        %10587 = vmatmul.f32.gmra.mxu0 %v10267
        %v10588 = vpop.f32.mrf.mxu0
        %v10589 = vadd.f32 %v10428, %v10588
        %10590 = vdwg.mxu0
        %10591 = vmatpush.msra.mxu0 %v10116
        %10592 = vmatpush.msra.mxu0 %v10114
        %10593 = vmatpush.msra.mxu0 %v10112
        %10594 = vmatpush.msra.mxu0 %v10110
        %10595 = vmatpush.msra.mxu0 %v10108
        %10596 = vmatpush.msra.mxu0 %v10106
        %10597 = vmatpush.msra.mxu0 %v10104
        %10598 = vmatpush.msra.mxu0 %v10102
        %10599 = vmatpush.msra.mxu0 %v10100
        %10600 = vmatpush.msra.mxu0 %v10098
        %10601 = vmatpush.msra.mxu0 %v10096
        %10602 = vmatpush.msra.mxu0 %v10094
        %10603 = vmatpush.msra.mxu0 %v10092
        %10604 = vmatpush.msra.mxu0 %v10090
        %10605 = vmatpush.msra.mxu0 %v10088
        %10606 = vmatpush.msra.mxu0 %v10086
        %10607 = vmatmul.f32.gmra.mxu0 %v10036
        %v10608 = vpop.f32.mrf.mxu0
        %v10609 = vadd.f32 0.0, %v10608
        %10610 = vmatmul.f32.gmra.mxu0 %v10037
        %v10611 = vpop.f32.mrf.mxu0
        %v10612 = vadd.f32 0.0, %v10611
        %10613 = vmatmul.f32.gmra.mxu0 %v10038
        %v10614 = vpop.f32.mrf.mxu0
        %v10615 = vadd.f32 0.0, %v10614
        %10616 = vmatmul.f32.gmra.mxu0 %v10039
        %v10617 = vpop.f32.mrf.mxu0
        %v10618 = vadd.f32 0.0, %v10617
        %10619 = vmatmul.f32.gmra.mxu0 %v10040
        %v10620 = vpop.f32.mrf.mxu0
        %v10621 = vadd.f32 0.0, %v10620
        %10622 = vmatmul.f32.gmra.mxu0 %v10041
        %v10623 = vpop.f32.mrf.mxu0
        %v10624 = vadd.f32 0.0, %v10623
        %10625 = vmatmul.f32.gmra.mxu0 %v10042
        %v10626 = vpop.f32.mrf.mxu0
        %v10627 = vadd.f32 0.0, %v10626
        %10628 = vmatmul.f32.gmra.mxu0 %v10043
        %v10629 = vpop.f32.mrf.mxu0
        %v10630 = vadd.f32 0.0, %v10629
        %10631 = vmatmul.f32.gmra.mxu0 %v10044
        %v10632 = vpop.f32.mrf.mxu0
        %v10633 = vadd.f32 0.0, %v10632
        %10634 = vmatmul.f32.gmra.mxu0 %v10045
        %v10635 = vpop.f32.mrf.mxu0
        %v10636 = vadd.f32 0.0, %v10635
        %10637 = vmatmul.f32.gmra.mxu0 %v10046
        %v10638 = vpop.f32.mrf.mxu0
        %v10639 = vadd.f32 0.0, %v10638
        %10640 = vmatmul.f32.gmra.mxu0 %v10047
        %v10641 = vpop.f32.mrf.mxu0
        %v10642 = vadd.f32 0.0, %v10641
        %10643 = vmatmul.f32.gmra.mxu0 %v10048
        %v10644 = vpop.f32.mrf.mxu0
        %v10645 = vadd.f32 0.0, %v10644
        %10646 = vmatmul.f32.gmra.mxu0 %v10049
        %v10647 = vpop.f32.mrf.mxu0
        %v10648 = vadd.f32 0.0, %v10647
        %10649 = vmatmul.f32.gmra.mxu0 %v10050
        %v10650 = vpop.f32.mrf.mxu0
        %v10651 = vadd.f32 0.0, %v10650
        %10652 = vmatmul.f32.gmra.mxu0 %v10051
        %v10653 = vpop.f32.mrf.mxu0
        %v10654 = vadd.f32 0.0, %v10653
        %10655 = vmatmul.f32.gmra.mxu0 %v10052
        %v10656 = vpop.f32.mrf.mxu0
        %v10657 = vadd.f32 0.0, %v10656
        %10658 = vmatmul.f32.gmra.mxu0 %v10053
        %v10659 = vpop.f32.mrf.mxu0
        %v10660 = vadd.f32 0.0, %v10659
        %10661 = vmatmul.f32.gmra.mxu0 %v10054
        %v10662 = vpop.f32.mrf.mxu0
        %v10663 = vadd.f32 0.0, %v10662
        %10664 = vmatmul.f32.gmra.mxu0 %v10055
        %v10665 = vpop.f32.mrf.mxu0
        %v10666 = vadd.f32 0.0, %v10665
        %10667 = vmatmul.f32.gmra.mxu0 %v10056
        %v10668 = vpop.f32.mrf.mxu0
        %v10669 = vadd.f32 0.0, %v10668
        %10670 = vmatmul.f32.gmra.mxu0 %v10057
        %v10671 = vpop.f32.mrf.mxu0
        %v10672 = vadd.f32 0.0, %v10671
        %10673 = vmatmul.f32.gmra.mxu0 %v10058
        %v10674 = vpop.f32.mrf.mxu0
        %v10675 = vadd.f32 0.0, %v10674
        %10676 = vmatmul.f32.gmra.mxu0 %v10059
        %v10677 = vpop.f32.mrf.mxu0
        %v10678 = vadd.f32 0.0, %v10677
        %10679 = vmatmul.f32.gmra.mxu0 %v10060
        %v10680 = vpop.f32.mrf.mxu0
        %v10681 = vadd.f32 0.0, %v10680
        %10682 = vmatmul.f32.gmra.mxu0 %v10061
        %v10683 = vpop.f32.mrf.mxu0
        %v10684 = vadd.f32 0.0, %v10683
        %10685 = vmatmul.f32.gmra.mxu0 %v10062
        %v10686 = vpop.f32.mrf.mxu0
        %v10687 = vadd.f32 0.0, %v10686
        %10688 = vmatmul.f32.gmra.mxu0 %v10063
        %v10689 = vpop.f32.mrf.mxu0
        %v10690 = vadd.f32 0.0, %v10689
        %10691 = vmatmul.f32.gmra.mxu0 %v10064
        %v10692 = vpop.f32.mrf.mxu0
        %v10693 = vadd.f32 0.0, %v10692
        %10694 = vmatmul.f32.gmra.mxu0 %v10065
        %v10695 = vpop.f32.mrf.mxu0
        %v10696 = vadd.f32 0.0, %v10695
        %10697 = vmatmul.f32.gmra.mxu0 %v10066
        %v10698 = vpop.f32.mrf.mxu0
        %v10699 = vadd.f32 0.0, %v10698
        %10700 = vmatmul.f32.gmra.mxu0 %v10067
        %v10701 = vpop.f32.mrf.mxu0
        %v10702 = vadd.f32 0.0, %v10701
        %10703 = vmatmul.f32.gmra.mxu0 %v10068
        %v10704 = vpop.f32.mrf.mxu0
        %v10705 = vadd.f32 0.0, %v10704
        %10706 = vmatmul.f32.gmra.mxu0 %v10069
        %v10707 = vpop.f32.mrf.mxu0
        %v10708 = vadd.f32 0.0, %v10707
        %10709 = vmatmul.f32.gmra.mxu0 %v10070
        %v10710 = vpop.f32.mrf.mxu0
        %v10711 = vadd.f32 0.0, %v10710
        %10712 = vmatmul.f32.gmra.mxu0 %v10071
        %v10713 = vpop.f32.mrf.mxu0
        %v10714 = vadd.f32 0.0, %v10713
        %10715 = vmatmul.f32.gmra.mxu0 %v10072
        %v10716 = vpop.f32.mrf.mxu0
        %v10717 = vadd.f32 0.0, %v10716
        %10718 = vmatmul.f32.gmra.mxu0 %v10073
        %v10719 = vpop.f32.mrf.mxu0
        %v10720 = vadd.f32 0.0, %v10719
        %10721 = vmatmul.f32.gmra.mxu0 %v10074
        %v10722 = vpop.f32.mrf.mxu0
        %v10723 = vadd.f32 0.0, %v10722
        %10724 = vmatmul.f32.gmra.mxu0 %v10075
        %v10725 = vpop.f32.mrf.mxu0
        %v10726 = vadd.f32 0.0, %v10725
        %10727 = vmatmul.f32.gmra.mxu0 %v10076
        %v10728 = vpop.f32.mrf.mxu0
        %v10729 = vadd.f32 0.0, %v10728
        %10730 = vmatmul.f32.gmra.mxu0 %v10077
        %v10731 = vpop.f32.mrf.mxu0
        %v10732 = vadd.f32 0.0, %v10731
        %10733 = vmatmul.f32.gmra.mxu0 %v10078
        %v10734 = vpop.f32.mrf.mxu0
        %v10735 = vadd.f32 0.0, %v10734
        %10736 = vmatmul.f32.gmra.mxu0 %v10079
        %v10737 = vpop.f32.mrf.mxu0
        %v10738 = vadd.f32 0.0, %v10737
        %10739 = vmatmul.f32.gmra.mxu0 %v10080
        %v10740 = vpop.f32.mrf.mxu0
        %v10741 = vadd.f32 0.0, %v10740
        %10742 = vmatmul.f32.gmra.mxu0 %v10081
        %v10743 = vpop.f32.mrf.mxu0
        %v10744 = vadd.f32 0.0, %v10743
        %10745 = vmatmul.f32.gmra.mxu0 %v10082
        %v10746 = vpop.f32.mrf.mxu0
        %v10747 = vadd.f32 0.0, %v10746
        %10748 = vmatmul.f32.gmra.mxu0 %v10083
        %v10749 = vpop.f32.mrf.mxu0
        %v10750 = vadd.f32 0.0, %v10749
        %10751 = vdwg.mxu0
        %10752 = vmatpush.msra.mxu0 0.0
        %10753 = vmatpush.msra.mxu0 0.0
        %10754 = vmatpush.msra.mxu0 0.0
        %10755 = vmatpush.msra.mxu0 0.0
        %10756 = vmatpush.msra.mxu0 0.0
        %10757 = vmatpush.msra.mxu0 0.0
        %10758 = vmatpush.msra.mxu0 0.0
        %10759 = vmatpush.msra.mxu0 0.0
        %10760 = vmatpush.msra.mxu0 0.0
        %10761 = vmatpush.msra.mxu0 0.0
        %10762 = vmatpush.msra.mxu0 0.0
        %10763 = vmatpush.msra.mxu0 0.0
        %10764 = vmatpush.msra.mxu0 %v10124
        %10765 = vmatpush.msra.mxu0 %v10122
        %10766 = vmatpush.msra.mxu0 %v10120
        %10767 = vmatpush.msra.mxu0 %v10118
        %10768 = vmatmul.f32.gmra.mxu0 %v10126
        %v10769 = vpop.f32.mrf.mxu0
        %v10770 = vadd.f32 %v10609, %v10769
        %10771 = vmatmul.f32.gmra.mxu0 %v10129
        %v10772 = vpop.f32.mrf.mxu0
        %v10773 = vadd.f32 %v10612, %v10772
        %10774 = vmatmul.f32.gmra.mxu0 %v10132
        %v10775 = vpop.f32.mrf.mxu0
        %v10776 = vadd.f32 %v10615, %v10775
        %10777 = vmatmul.f32.gmra.mxu0 %v10135
        %v10778 = vpop.f32.mrf.mxu0
        %v10779 = vadd.f32 %v10618, %v10778
        %10780 = vmatmul.f32.gmra.mxu0 %v10138
        %v10781 = vpop.f32.mrf.mxu0
        %v10782 = vadd.f32 %v10621, %v10781
        %10783 = vmatmul.f32.gmra.mxu0 %v10141
        %v10784 = vpop.f32.mrf.mxu0
        %v10785 = vadd.f32 %v10624, %v10784
        %10786 = vmatmul.f32.gmra.mxu0 %v10144
        %v10787 = vpop.f32.mrf.mxu0
        %v10788 = vadd.f32 %v10627, %v10787
        %10789 = vmatmul.f32.gmra.mxu0 %v10147
        %v10790 = vpop.f32.mrf.mxu0
        %v10791 = vadd.f32 %v10630, %v10790
        %10792 = vmatmul.f32.gmra.mxu0 %v10150
        %v10793 = vpop.f32.mrf.mxu0
        %v10794 = vadd.f32 %v10633, %v10793
        %10795 = vmatmul.f32.gmra.mxu0 %v10153
        %v10796 = vpop.f32.mrf.mxu0
        %v10797 = vadd.f32 %v10636, %v10796
        %10798 = vmatmul.f32.gmra.mxu0 %v10156
        %v10799 = vpop.f32.mrf.mxu0
        %v10800 = vadd.f32 %v10639, %v10799
        %10801 = vmatmul.f32.gmra.mxu0 %v10159
        %v10802 = vpop.f32.mrf.mxu0
        %v10803 = vadd.f32 %v10642, %v10802
        %10804 = vmatmul.f32.gmra.mxu0 %v10162
        %v10805 = vpop.f32.mrf.mxu0
        %v10806 = vadd.f32 %v10645, %v10805
        %10807 = vmatmul.f32.gmra.mxu0 %v10165
        %v10808 = vpop.f32.mrf.mxu0
        %v10809 = vadd.f32 %v10648, %v10808
        %10810 = vmatmul.f32.gmra.mxu0 %v10168
        %v10811 = vpop.f32.mrf.mxu0
        %v10812 = vadd.f32 %v10651, %v10811
        %10813 = vmatmul.f32.gmra.mxu0 %v10171
        %v10814 = vpop.f32.mrf.mxu0
        %v10815 = vadd.f32 %v10654, %v10814
        %10816 = vmatmul.f32.gmra.mxu0 %v10174
        %v10817 = vpop.f32.mrf.mxu0
        %v10818 = vadd.f32 %v10657, %v10817
        %10819 = vmatmul.f32.gmra.mxu0 %v10177
        %v10820 = vpop.f32.mrf.mxu0
        %v10821 = vadd.f32 %v10660, %v10820
        %10822 = vmatmul.f32.gmra.mxu0 %v10180
        %v10823 = vpop.f32.mrf.mxu0
        %v10824 = vadd.f32 %v10663, %v10823
        %10825 = vmatmul.f32.gmra.mxu0 %v10183
        %v10826 = vpop.f32.mrf.mxu0
        %v10827 = vadd.f32 %v10666, %v10826
        %10828 = vmatmul.f32.gmra.mxu0 %v10186
        %v10829 = vpop.f32.mrf.mxu0
        %v10830 = vadd.f32 %v10669, %v10829
        %10831 = vmatmul.f32.gmra.mxu0 %v10189
        %v10832 = vpop.f32.mrf.mxu0
        %v10833 = vadd.f32 %v10672, %v10832
        %10834 = vmatmul.f32.gmra.mxu0 %v10192
        %v10835 = vpop.f32.mrf.mxu0
        %v10836 = vadd.f32 %v10675, %v10835
        %10837 = vmatmul.f32.gmra.mxu0 %v10195
        %v10838 = vpop.f32.mrf.mxu0
        %v10839 = vadd.f32 %v10678, %v10838
        %10840 = vmatmul.f32.gmra.mxu0 %v10198
        %v10841 = vpop.f32.mrf.mxu0
        %v10842 = vadd.f32 %v10681, %v10841
        %10843 = vmatmul.f32.gmra.mxu0 %v10201
        %v10844 = vpop.f32.mrf.mxu0
        %v10845 = vadd.f32 %v10684, %v10844
        %10846 = vmatmul.f32.gmra.mxu0 %v10204
        %v10847 = vpop.f32.mrf.mxu0
        %v10848 = vadd.f32 %v10687, %v10847
        %10849 = vmatmul.f32.gmra.mxu0 %v10207
        %v10850 = vpop.f32.mrf.mxu0
        %v10851 = vadd.f32 %v10690, %v10850
        %10852 = vmatmul.f32.gmra.mxu0 %v10210
        %v10853 = vpop.f32.mrf.mxu0
        %v10854 = vadd.f32 %v10693, %v10853
        %10855 = vmatmul.f32.gmra.mxu0 %v10213
        %v10856 = vpop.f32.mrf.mxu0
        %v10857 = vadd.f32 %v10696, %v10856
        %10858 = vmatmul.f32.gmra.mxu0 %v10216
        %v10859 = vpop.f32.mrf.mxu0
        %v10860 = vadd.f32 %v10699, %v10859
        %10861 = vmatmul.f32.gmra.mxu0 %v10219
        %v10862 = vpop.f32.mrf.mxu0
        %v10863 = vadd.f32 %v10702, %v10862
        %10864 = vmatmul.f32.gmra.mxu0 %v10222
        %v10865 = vpop.f32.mrf.mxu0
        %v10866 = vadd.f32 %v10705, %v10865
        %10867 = vmatmul.f32.gmra.mxu0 %v10225
        %v10868 = vpop.f32.mrf.mxu0
        %v10869 = vadd.f32 %v10708, %v10868
        %10870 = vmatmul.f32.gmra.mxu0 %v10228
        %v10871 = vpop.f32.mrf.mxu0
        %v10872 = vadd.f32 %v10711, %v10871
        %10873 = vmatmul.f32.gmra.mxu0 %v10231
        %v10874 = vpop.f32.mrf.mxu0
        %v10875 = vadd.f32 %v10714, %v10874
        %10876 = vmatmul.f32.gmra.mxu0 %v10234
        %v10877 = vpop.f32.mrf.mxu0
        %v10878 = vadd.f32 %v10717, %v10877
        %10879 = vmatmul.f32.gmra.mxu0 %v10237
        %v10880 = vpop.f32.mrf.mxu0
        %v10881 = vadd.f32 %v10720, %v10880
        %10882 = vmatmul.f32.gmra.mxu0 %v10240
        %v10883 = vpop.f32.mrf.mxu0
        %v10884 = vadd.f32 %v10723, %v10883
        %10885 = vmatmul.f32.gmra.mxu0 %v10243
        %v10886 = vpop.f32.mrf.mxu0
        %v10887 = vadd.f32 %v10726, %v10886
        %10888 = vmatmul.f32.gmra.mxu0 %v10246
        %v10889 = vpop.f32.mrf.mxu0
        %v10890 = vadd.f32 %v10729, %v10889
        %10891 = vmatmul.f32.gmra.mxu0 %v10249
        %v10892 = vpop.f32.mrf.mxu0
        %v10893 = vadd.f32 %v10732, %v10892
        %10894 = vmatmul.f32.gmra.mxu0 %v10252
        %v10895 = vpop.f32.mrf.mxu0
        %v10896 = vadd.f32 %v10735, %v10895
        %10897 = vmatmul.f32.gmra.mxu0 %v10255
        %v10898 = vpop.f32.mrf.mxu0
        %v10899 = vadd.f32 %v10738, %v10898
        %10900 = vmatmul.f32.gmra.mxu0 %v10258
        %v10901 = vpop.f32.mrf.mxu0
        %v10902 = vadd.f32 %v10741, %v10901
        %10903 = vmatmul.f32.gmra.mxu0 %v10261
        %v10904 = vpop.f32.mrf.mxu0
        %v10905 = vadd.f32 %v10744, %v10904
        %10906 = vmatmul.f32.gmra.mxu0 %v10264
        %v10907 = vpop.f32.mrf.mxu0
        %v10908 = vadd.f32 %v10747, %v10907
        %10909 = vmatmul.f32.gmra.mxu0 %v10267
        %v10910 = vpop.f32.mrf.mxu0
        %v10911 = vadd.f32 %v10750, %v10910
        %10912 = vdwg.mxu0
        %s10913 = scalar_lea.vmem [#allocation8], 3
        %v10914 = vld [vmem:[%s10913] sm:$0x1]
        %v10916 = vperm.slane %v10914, 0
        %v10918 = vadd.f32 %v10916, %v10448
        %v10919 = vadd.f32 %v10916, %v10451
        %v10920 = vadd.f32 %v10916, %v10457
        %v10921 = vadd.f32 %v10916, %v10460
        %v10922 = vadd.f32 %v10916, %v10466
        %v10923 = vadd.f32 %v10916, %v10469
        %v10924 = vadd.f32 %v10916, %v10475
        %v10925 = vadd.f32 %v10916, %v10478
        %v10926 = vadd.f32 %v10916, %v10484
        %v10927 = vadd.f32 %v10916, %v10487
        %v10928 = vadd.f32 %v10916, %v10493
        %v10929 = vadd.f32 %v10916, %v10496
        %v10930 = vadd.f32 %v10916, %v10502
        %v10931 = vadd.f32 %v10916, %v10505
        %v10932 = vadd.f32 %v10916, %v10511
        %v10933 = vadd.f32 %v10916, %v10514
        %v10934 = vadd.f32 %v10916, %v10520
        %v10935 = vadd.f32 %v10916, %v10523
        %v10936 = vadd.f32 %v10916, %v10529
        %v10937 = vadd.f32 %v10916, %v10532
        %v10938 = vadd.f32 %v10916, %v10538
        %v10939 = vadd.f32 %v10916, %v10541
        %v10940 = vadd.f32 %v10916, %v10547
        %v10941 = vadd.f32 %v10916, %v10550
        %v10942 = vadd.f32 %v10916, %v10556
        %v10943 = vadd.f32 %v10916, %v10559
        %v10944 = vadd.f32 %v10916, %v10565
        %v10945 = vadd.f32 %v10916, %v10568
        %v10946 = vadd.f32 %v10916, %v10574
        %v10947 = vadd.f32 %v10916, %v10577
        %v10948 = vadd.f32 %v10916, %v10583
        %v10949 = vadd.f32 %v10916, %v10586
        %v10998 = vrot.slane %v10448, 1
        %v10999 = vrot.slane %v10451, 1
        %v11000 = vsel %vm2732, %v10998, %v10999
        %v11001 = vrot.slane %v10454, 1
        %v11002 = vsel %vm2732, %v10999, %v11001
        %v11003 = vrot.slane %v10457, 1
        %v11004 = vrot.slane %v10460, 1
        %v11005 = vsel %vm2732, %v11003, %v11004
        %v11006 = vrot.slane %v10463, 1
        %v11007 = vsel %vm2732, %v11004, %v11006
        %v11008 = vrot.slane %v10466, 1
        %v11009 = vrot.slane %v10469, 1
        %v11010 = vsel %vm2732, %v11008, %v11009
        %v11011 = vrot.slane %v10472, 1
        %v11012 = vsel %vm2732, %v11009, %v11011
        %v11013 = vrot.slane %v10475, 1
        %v11014 = vrot.slane %v10478, 1
        %v11015 = vsel %vm2732, %v11013, %v11014
        %v11016 = vrot.slane %v10481, 1
        %v11017 = vsel %vm2732, %v11014, %v11016
        %v11018 = vrot.slane %v10484, 1
        %v11019 = vrot.slane %v10487, 1
        %v11020 = vsel %vm2732, %v11018, %v11019
        %v11021 = vrot.slane %v10490, 1
        %v11022 = vsel %vm2732, %v11019, %v11021
        %v11023 = vrot.slane %v10493, 1
        %v11024 = vrot.slane %v10496, 1
        %v11025 = vsel %vm2732, %v11023, %v11024
        %v11026 = vrot.slane %v10499, 1
        %v11027 = vsel %vm2732, %v11024, %v11026
        %v11028 = vrot.slane %v10502, 1
        %v11029 = vrot.slane %v10505, 1
        %v11030 = vsel %vm2732, %v11028, %v11029
        %v11031 = vrot.slane %v10508, 1
        %v11032 = vsel %vm2732, %v11029, %v11031
        %v11033 = vrot.slane %v10511, 1
        %v11034 = vrot.slane %v10514, 1
        %v11035 = vsel %vm2732, %v11033, %v11034
        %v11036 = vrot.slane %v10517, 1
        %v11037 = vsel %vm2732, %v11034, %v11036
        %v11038 = vrot.slane %v10520, 1
        %v11039 = vrot.slane %v10523, 1
        %v11040 = vsel %vm2732, %v11038, %v11039
        %v11041 = vrot.slane %v10526, 1
        %v11042 = vsel %vm2732, %v11039, %v11041
        %v11043 = vrot.slane %v10529, 1
        %v11044 = vrot.slane %v10532, 1
        %v11045 = vsel %vm2732, %v11043, %v11044
        %v11046 = vrot.slane %v10535, 1
        %v11047 = vsel %vm2732, %v11044, %v11046
        %v11048 = vrot.slane %v10538, 1
        %v11049 = vrot.slane %v10541, 1
        %v11050 = vsel %vm2732, %v11048, %v11049
        %v11051 = vrot.slane %v10544, 1
        %v11052 = vsel %vm2732, %v11049, %v11051
        %v11053 = vrot.slane %v10547, 1
        %v11054 = vrot.slane %v10550, 1
        %v11055 = vsel %vm2732, %v11053, %v11054
        %v11056 = vrot.slane %v10553, 1
        %v11057 = vsel %vm2732, %v11054, %v11056
        %v11058 = vrot.slane %v10556, 1
        %v11059 = vrot.slane %v10559, 1
        %v11060 = vsel %vm2732, %v11058, %v11059
        %v11061 = vrot.slane %v10562, 1
        %v11062 = vsel %vm2732, %v11059, %v11061
        %v11063 = vrot.slane %v10565, 1
        %v11064 = vrot.slane %v10568, 1
        %v11065 = vsel %vm2732, %v11063, %v11064
        %v11066 = vrot.slane %v10571, 1
        %v11067 = vsel %vm2732, %v11064, %v11066
        %v11068 = vrot.slane %v10574, 1
        %v11069 = vrot.slane %v10577, 1
        %v11070 = vsel %vm2732, %v11068, %v11069
        %v11071 = vrot.slane %v10580, 1
        %v11072 = vsel %vm2732, %v11069, %v11071
        %v11073 = vrot.slane %v10583, 1
        %v11074 = vrot.slane %v10586, 1
        %v11075 = vsel %vm2732, %v11073, %v11074
        %v11076 = vrot.slane %v10589, 1
        %v11077 = vsel %vm2732, %v11074, %v11076
        %11078 = vrot.lane.b32.xlu0 %v11000, 96
        %v11079 = vpop.permute.xlu0 %11078
        %11080 = vrot.lane.b32.xlu0 %v11002, 96
        %v11081 = vpop.permute.xlu0 %11080
        %11082 = vrot.lane.b32.xlu0 %v11005, 96
        %v11083 = vpop.permute.xlu0 %11082
        %11084 = vrot.lane.b32.xlu0 %v11007, 96
        %v11085 = vpop.permute.xlu0 %11084
        %11086 = vrot.lane.b32.xlu0 %v11010, 96
        %v11087 = vpop.permute.xlu0 %11086
        %11088 = vrot.lane.b32.xlu0 %v11012, 96
        %v11089 = vpop.permute.xlu0 %11088
        %11090 = vrot.lane.b32.xlu0 %v11015, 96
        %v11091 = vpop.permute.xlu0 %11090
        %11092 = vrot.lane.b32.xlu0 %v11017, 96
        %v11093 = vpop.permute.xlu0 %11092
        %11094 = vrot.lane.b32.xlu0 %v11020, 96
        %v11095 = vpop.permute.xlu0 %11094
        %11096 = vrot.lane.b32.xlu0 %v11022, 96
        %v11097 = vpop.permute.xlu0 %11096
        %11098 = vrot.lane.b32.xlu0 %v11025, 96
        %v11099 = vpop.permute.xlu0 %11098
        %11100 = vrot.lane.b32.xlu0 %v11027, 96
        %v11101 = vpop.permute.xlu0 %11100
        %11102 = vrot.lane.b32.xlu0 %v11030, 96
        %v11103 = vpop.permute.xlu0 %11102
        %11104 = vrot.lane.b32.xlu0 %v11032, 96
        %v11105 = vpop.permute.xlu0 %11104
        %11106 = vrot.lane.b32.xlu0 %v11035, 96
        %v11107 = vpop.permute.xlu0 %11106
        %11108 = vrot.lane.b32.xlu0 %v11037, 96
        %v11109 = vpop.permute.xlu0 %11108
        %11110 = vrot.lane.b32.xlu0 %v11040, 96
        %v11111 = vpop.permute.xlu0 %11110
        %11112 = vrot.lane.b32.xlu0 %v11042, 96
        %v11113 = vpop.permute.xlu0 %11112
        %11114 = vrot.lane.b32.xlu0 %v11045, 96
        %v11115 = vpop.permute.xlu0 %11114
        %11116 = vrot.lane.b32.xlu0 %v11047, 96
        %v11117 = vpop.permute.xlu0 %11116
        %11118 = vrot.lane.b32.xlu0 %v11050, 96
        %v11119 = vpop.permute.xlu0 %11118
        %11120 = vrot.lane.b32.xlu0 %v11052, 96
        %v11121 = vpop.permute.xlu0 %11120
        %11122 = vrot.lane.b32.xlu0 %v11055, 96
        %v11123 = vpop.permute.xlu0 %11122
        %11124 = vrot.lane.b32.xlu0 %v11057, 96
        %v11125 = vpop.permute.xlu0 %11124
        %11126 = vrot.lane.b32.xlu0 %v11060, 96
        %v11127 = vpop.permute.xlu0 %11126
        %11128 = vrot.lane.b32.xlu0 %v11062, 96
        %v11129 = vpop.permute.xlu0 %11128
        %11130 = vrot.lane.b32.xlu0 %v11065, 96
        %v11131 = vpop.permute.xlu0 %11130
        %11132 = vrot.lane.b32.xlu0 %v11067, 96
        %v11133 = vpop.permute.xlu0 %11132
        %11134 = vrot.lane.b32.xlu0 %v11070, 96
        %v11135 = vpop.permute.xlu0 %11134
        %11136 = vrot.lane.b32.xlu0 %v11072, 96
        %v11137 = vpop.permute.xlu0 %11136
        %11138 = vrot.lane.b32.xlu0 %v11075, 96
        %v11139 = vpop.permute.xlu0 %11138
        %11140 = vrot.lane.b32.xlu0 %v11077, 96
        %v11141 = vpop.permute.xlu0 %11140
        %v11174 = vadd.f32 %v10918, %v11079
        %v11175 = vadd.f32 %v10919, %v11081
        %v11176 = vadd.f32 %v10920, %v11083
        %v11177 = vadd.f32 %v10921, %v11085
        %v11178 = vadd.f32 %v10922, %v11087
        %v11179 = vadd.f32 %v10923, %v11089
        %v11180 = vadd.f32 %v10924, %v11091
        %v11181 = vadd.f32 %v10925, %v11093
        %v11182 = vadd.f32 %v10926, %v11095
        %v11183 = vadd.f32 %v10927, %v11097
        %v11184 = vadd.f32 %v10928, %v11099
        %v11185 = vadd.f32 %v10929, %v11101
        %v11186 = vadd.f32 %v10930, %v11103
        %v11187 = vadd.f32 %v10931, %v11105
        %v11188 = vadd.f32 %v10932, %v11107
        %v11189 = vadd.f32 %v10933, %v11109
        %v11190 = vadd.f32 %v10934, %v11111
        %v11191 = vadd.f32 %v10935, %v11113
        %v11192 = vadd.f32 %v10936, %v11115
        %v11193 = vadd.f32 %v10937, %v11117
        %v11194 = vadd.f32 %v10938, %v11119
        %v11195 = vadd.f32 %v10939, %v11121
        %v11196 = vadd.f32 %v10940, %v11123
        %v11197 = vadd.f32 %v10941, %v11125
        %v11198 = vadd.f32 %v10942, %v11127
        %v11199 = vadd.f32 %v10943, %v11129
        %v11200 = vadd.f32 %v10944, %v11131
        %v11201 = vadd.f32 %v10945, %v11133
        %v11202 = vadd.f32 %v10946, %v11135
        %v11203 = vadd.f32 %v10947, %v11137
        %v11204 = vadd.f32 %v10948, %v11139
        %v11205 = vadd.f32 %v10949, %v11141
        %v11206 = vrot.slane %v10448, 2
        %v11207 = vrot.slane %v10451, 2
        %v11208 = vsel %vm2941, %v11206, %v11207
        %v11209 = vrot.slane %v10454, 2
        %v11210 = vsel %vm2941, %v11207, %v11209
        %v11211 = vrot.slane %v10457, 2
        %v11212 = vrot.slane %v10460, 2
        %v11213 = vsel %vm2941, %v11211, %v11212
        %v11214 = vrot.slane %v10463, 2
        %v11215 = vsel %vm2941, %v11212, %v11214
        %v11216 = vrot.slane %v10466, 2
        %v11217 = vrot.slane %v10469, 2
        %v11218 = vsel %vm2941, %v11216, %v11217
        %v11219 = vrot.slane %v10472, 2
        %v11220 = vsel %vm2941, %v11217, %v11219
        %v11221 = vrot.slane %v10475, 2
        %v11222 = vrot.slane %v10478, 2
        %v11223 = vsel %vm2941, %v11221, %v11222
        %v11224 = vrot.slane %v10481, 2
        %v11225 = vsel %vm2941, %v11222, %v11224
        %v11226 = vrot.slane %v10484, 2
        %v11227 = vrot.slane %v10487, 2
        %v11228 = vsel %vm2941, %v11226, %v11227
        %v11229 = vrot.slane %v10490, 2
        %v11230 = vsel %vm2941, %v11227, %v11229
        %v11231 = vrot.slane %v10493, 2
        %v11232 = vrot.slane %v10496, 2
        %v11233 = vsel %vm2941, %v11231, %v11232
        %v11234 = vrot.slane %v10499, 2
        %v11235 = vsel %vm2941, %v11232, %v11234
        %v11236 = vrot.slane %v10502, 2
        %v11237 = vrot.slane %v10505, 2
        %v11238 = vsel %vm2941, %v11236, %v11237
        %v11239 = vrot.slane %v10508, 2
        %v11240 = vsel %vm2941, %v11237, %v11239
        %v11241 = vrot.slane %v10511, 2
        %v11242 = vrot.slane %v10514, 2
        %v11243 = vsel %vm2941, %v11241, %v11242
        %v11244 = vrot.slane %v10517, 2
        %v11245 = vsel %vm2941, %v11242, %v11244
        %v11246 = vrot.slane %v10520, 2
        %v11247 = vrot.slane %v10523, 2
        %v11248 = vsel %vm2941, %v11246, %v11247
        %v11249 = vrot.slane %v10526, 2
        %v11250 = vsel %vm2941, %v11247, %v11249
        %v11251 = vrot.slane %v10529, 2
        %v11252 = vrot.slane %v10532, 2
        %v11253 = vsel %vm2941, %v11251, %v11252
        %v11254 = vrot.slane %v10535, 2
        %v11255 = vsel %vm2941, %v11252, %v11254
        %v11256 = vrot.slane %v10538, 2
        %v11257 = vrot.slane %v10541, 2
        %v11258 = vsel %vm2941, %v11256, %v11257
        %v11259 = vrot.slane %v10544, 2
        %v11260 = vsel %vm2941, %v11257, %v11259
        %v11261 = vrot.slane %v10547, 2
        %v11262 = vrot.slane %v10550, 2
        %v11263 = vsel %vm2941, %v11261, %v11262
        %v11264 = vrot.slane %v10553, 2
        %v11265 = vsel %vm2941, %v11262, %v11264
        %v11266 = vrot.slane %v10556, 2
        %v11267 = vrot.slane %v10559, 2
        %v11268 = vsel %vm2941, %v11266, %v11267
        %v11269 = vrot.slane %v10562, 2
        %v11270 = vsel %vm2941, %v11267, %v11269
        %v11271 = vrot.slane %v10565, 2
        %v11272 = vrot.slane %v10568, 2
        %v11273 = vsel %vm2941, %v11271, %v11272
        %v11274 = vrot.slane %v10571, 2
        %v11275 = vsel %vm2941, %v11272, %v11274
        %v11276 = vrot.slane %v10574, 2
        %v11277 = vrot.slane %v10577, 2
        %v11278 = vsel %vm2941, %v11276, %v11277
        %v11279 = vrot.slane %v10580, 2
        %v11280 = vsel %vm2941, %v11277, %v11279
        %v11281 = vrot.slane %v10583, 2
        %v11282 = vrot.slane %v10586, 2
        %v11283 = vsel %vm2941, %v11281, %v11282
        %v11284 = vrot.slane %v10589, 2
        %v11285 = vsel %vm2941, %v11282, %v11284
        %11286 = vrot.lane.b32.xlu0 %v11208, 64
        %v11287 = vpop.permute.xlu0 %11286
        %11288 = vrot.lane.b32.xlu0 %v11210, 64
        %v11289 = vpop.permute.xlu0 %11288
        %11290 = vrot.lane.b32.xlu0 %v11213, 64
        %v11291 = vpop.permute.xlu0 %11290
        %11292 = vrot.lane.b32.xlu0 %v11215, 64
        %v11293 = vpop.permute.xlu0 %11292
        %11294 = vrot.lane.b32.xlu0 %v11218, 64
        %v11295 = vpop.permute.xlu0 %11294
        %11296 = vrot.lane.b32.xlu0 %v11220, 64
        %v11297 = vpop.permute.xlu0 %11296
        %11298 = vrot.lane.b32.xlu0 %v11223, 64
        %v11299 = vpop.permute.xlu0 %11298
        %11300 = vrot.lane.b32.xlu0 %v11225, 64
        %v11301 = vpop.permute.xlu0 %11300
        %11302 = vrot.lane.b32.xlu0 %v11228, 64
        %v11303 = vpop.permute.xlu0 %11302
        %11304 = vrot.lane.b32.xlu0 %v11230, 64
        %v11305 = vpop.permute.xlu0 %11304
        %11306 = vrot.lane.b32.xlu0 %v11233, 64
        %v11307 = vpop.permute.xlu0 %11306
        %11308 = vrot.lane.b32.xlu0 %v11235, 64
        %v11309 = vpop.permute.xlu0 %11308
        %11310 = vrot.lane.b32.xlu0 %v11238, 64
        %v11311 = vpop.permute.xlu0 %11310
        %11312 = vrot.lane.b32.xlu0 %v11240, 64
        %v11313 = vpop.permute.xlu0 %11312
        %11314 = vrot.lane.b32.xlu0 %v11243, 64
        %v11315 = vpop.permute.xlu0 %11314
        %11316 = vrot.lane.b32.xlu0 %v11245, 64
        %v11317 = vpop.permute.xlu0 %11316
        %11318 = vrot.lane.b32.xlu0 %v11248, 64
        %v11319 = vpop.permute.xlu0 %11318
        %11320 = vrot.lane.b32.xlu0 %v11250, 64
        %v11321 = vpop.permute.xlu0 %11320
        %11322 = vrot.lane.b32.xlu0 %v11253, 64
        %v11323 = vpop.permute.xlu0 %11322
        %11324 = vrot.lane.b32.xlu0 %v11255, 64
        %v11325 = vpop.permute.xlu0 %11324
        %11326 = vrot.lane.b32.xlu0 %v11258, 64
        %v11327 = vpop.permute.xlu0 %11326
        %11328 = vrot.lane.b32.xlu0 %v11260, 64
        %v11329 = vpop.permute.xlu0 %11328
        %11330 = vrot.lane.b32.xlu0 %v11263, 64
        %v11331 = vpop.permute.xlu0 %11330
        %11332 = vrot.lane.b32.xlu0 %v11265, 64
        %v11333 = vpop.permute.xlu0 %11332
        %11334 = vrot.lane.b32.xlu0 %v11268, 64
        %v11335 = vpop.permute.xlu0 %11334
        %11336 = vrot.lane.b32.xlu0 %v11270, 64
        %v11337 = vpop.permute.xlu0 %11336
        %11338 = vrot.lane.b32.xlu0 %v11273, 64
        %v11339 = vpop.permute.xlu0 %11338
        %11340 = vrot.lane.b32.xlu0 %v11275, 64
        %v11341 = vpop.permute.xlu0 %11340
        %11342 = vrot.lane.b32.xlu0 %v11278, 64
        %v11343 = vpop.permute.xlu0 %11342
        %11344 = vrot.lane.b32.xlu0 %v11280, 64
        %v11345 = vpop.permute.xlu0 %11344
        %11346 = vrot.lane.b32.xlu0 %v11283, 64
        %v11347 = vpop.permute.xlu0 %11346
        %11348 = vrot.lane.b32.xlu0 %v11285, 64
        %v11349 = vpop.permute.xlu0 %11348
        %v11382 = vadd.f32 %v11174, %v11287
        %v11383 = vadd.f32 %v11175, %v11289
        %v11384 = vadd.f32 %v11176, %v11291
        %v11385 = vadd.f32 %v11177, %v11293
        %v11386 = vadd.f32 %v11178, %v11295
        %v11387 = vadd.f32 %v11179, %v11297
        %v11388 = vadd.f32 %v11180, %v11299
        %v11389 = vadd.f32 %v11181, %v11301
        %v11390 = vadd.f32 %v11182, %v11303
        %v11391 = vadd.f32 %v11183, %v11305
        %v11392 = vadd.f32 %v11184, %v11307
        %v11393 = vadd.f32 %v11185, %v11309
        %v11394 = vadd.f32 %v11186, %v11311
        %v11395 = vadd.f32 %v11187, %v11313
        %v11396 = vadd.f32 %v11188, %v11315
        %v11397 = vadd.f32 %v11189, %v11317
        %v11398 = vadd.f32 %v11190, %v11319
        %v11399 = vadd.f32 %v11191, %v11321
        %v11400 = vadd.f32 %v11192, %v11323
        %v11401 = vadd.f32 %v11193, %v11325
        %v11402 = vadd.f32 %v11194, %v11327
        %v11403 = vadd.f32 %v11195, %v11329
        %v11404 = vadd.f32 %v11196, %v11331
        %v11405 = vadd.f32 %v11197, %v11333
        %v11406 = vadd.f32 %v11198, %v11335
        %v11407 = vadd.f32 %v11199, %v11337
        %v11408 = vadd.f32 %v11200, %v11339
        %v11409 = vadd.f32 %v11201, %v11341
        %v11410 = vadd.f32 %v11202, %v11343
        %v11411 = vadd.f32 %v11203, %v11345
        %v11412 = vadd.f32 %v11204, %v11347
        %v11413 = vadd.f32 %v11205, %v11349
        %v11414 = vrot.slane %v10448, 3
        %v11415 = vrot.slane %v10451, 3
        %v11416 = vsel %vm3150, %v11414, %v11415
        %v11417 = vrot.slane %v10454, 3
        %v11418 = vsel %vm3150, %v11415, %v11417
        %v11419 = vrot.slane %v10457, 3
        %v11420 = vrot.slane %v10460, 3
        %v11421 = vsel %vm3150, %v11419, %v11420
        %v11422 = vrot.slane %v10463, 3
        %v11423 = vsel %vm3150, %v11420, %v11422
        %v11424 = vrot.slane %v10466, 3
        %v11425 = vrot.slane %v10469, 3
        %v11426 = vsel %vm3150, %v11424, %v11425
        %v11427 = vrot.slane %v10472, 3
        %v11428 = vsel %vm3150, %v11425, %v11427
        %v11429 = vrot.slane %v10475, 3
        %v11430 = vrot.slane %v10478, 3
        %v11431 = vsel %vm3150, %v11429, %v11430
        %v11432 = vrot.slane %v10481, 3
        %v11433 = vsel %vm3150, %v11430, %v11432
        %v11434 = vrot.slane %v10484, 3
        %v11435 = vrot.slane %v10487, 3
        %v11436 = vsel %vm3150, %v11434, %v11435
        %v11437 = vrot.slane %v10490, 3
        %v11438 = vsel %vm3150, %v11435, %v11437
        %v11439 = vrot.slane %v10493, 3
        %v11440 = vrot.slane %v10496, 3
        %v11441 = vsel %vm3150, %v11439, %v11440
        %v11442 = vrot.slane %v10499, 3
        %v11443 = vsel %vm3150, %v11440, %v11442
        %v11444 = vrot.slane %v10502, 3
        %v11445 = vrot.slane %v10505, 3
        %v11446 = vsel %vm3150, %v11444, %v11445
        %v11447 = vrot.slane %v10508, 3
        %v11448 = vsel %vm3150, %v11445, %v11447
        %v11449 = vrot.slane %v10511, 3
        %v11450 = vrot.slane %v10514, 3
        %v11451 = vsel %vm3150, %v11449, %v11450
        %v11452 = vrot.slane %v10517, 3
        %v11453 = vsel %vm3150, %v11450, %v11452
        %v11454 = vrot.slane %v10520, 3
        %v11455 = vrot.slane %v10523, 3
        %v11456 = vsel %vm3150, %v11454, %v11455
        %v11457 = vrot.slane %v10526, 3
        %v11458 = vsel %vm3150, %v11455, %v11457
        %v11459 = vrot.slane %v10529, 3
        %v11460 = vrot.slane %v10532, 3
        %v11461 = vsel %vm3150, %v11459, %v11460
        %v11462 = vrot.slane %v10535, 3
        %v11463 = vsel %vm3150, %v11460, %v11462
        %v11464 = vrot.slane %v10538, 3
        %v11465 = vrot.slane %v10541, 3
        %v11466 = vsel %vm3150, %v11464, %v11465
        %v11467 = vrot.slane %v10544, 3
        %v11468 = vsel %vm3150, %v11465, %v11467
        %v11469 = vrot.slane %v10547, 3
        %v11470 = vrot.slane %v10550, 3
        %v11471 = vsel %vm3150, %v11469, %v11470
        %v11472 = vrot.slane %v10553, 3
        %v11473 = vsel %vm3150, %v11470, %v11472
        %v11474 = vrot.slane %v10556, 3
        %v11475 = vrot.slane %v10559, 3
        %v11476 = vsel %vm3150, %v11474, %v11475
        %v11477 = vrot.slane %v10562, 3
        %v11478 = vsel %vm3150, %v11475, %v11477
        %v11479 = vrot.slane %v10565, 3
        %v11480 = vrot.slane %v10568, 3
        %v11481 = vsel %vm3150, %v11479, %v11480
        %v11482 = vrot.slane %v10571, 3
        %v11483 = vsel %vm3150, %v11480, %v11482
        %v11484 = vrot.slane %v10574, 3
        %v11485 = vrot.slane %v10577, 3
        %v11486 = vsel %vm3150, %v11484, %v11485
        %v11487 = vrot.slane %v10580, 3
        %v11488 = vsel %vm3150, %v11485, %v11487
        %v11489 = vrot.slane %v10583, 3
        %v11490 = vrot.slane %v10586, 3
        %v11491 = vsel %vm3150, %v11489, %v11490
        %v11492 = vrot.slane %v10589, 3
        %v11493 = vsel %vm3150, %v11490, %v11492
        %11494 = vrot.lane.b32.xlu0 %v11416, 32
        %v11495 = vpop.permute.xlu0 %11494
        %11496 = vrot.lane.b32.xlu0 %v11418, 32
        %v11497 = vpop.permute.xlu0 %11496
        %11498 = vrot.lane.b32.xlu0 %v11421, 32
        %v11499 = vpop.permute.xlu0 %11498
        %11500 = vrot.lane.b32.xlu0 %v11423, 32
        %v11501 = vpop.permute.xlu0 %11500
        %11502 = vrot.lane.b32.xlu0 %v11426, 32
        %v11503 = vpop.permute.xlu0 %11502
        %11504 = vrot.lane.b32.xlu0 %v11428, 32
        %v11505 = vpop.permute.xlu0 %11504
        %11506 = vrot.lane.b32.xlu0 %v11431, 32
        %v11507 = vpop.permute.xlu0 %11506
        %11508 = vrot.lane.b32.xlu0 %v11433, 32
        %v11509 = vpop.permute.xlu0 %11508
        %11510 = vrot.lane.b32.xlu0 %v11436, 32
        %v11511 = vpop.permute.xlu0 %11510
        %11512 = vrot.lane.b32.xlu0 %v11438, 32
        %v11513 = vpop.permute.xlu0 %11512
        %11514 = vrot.lane.b32.xlu0 %v11441, 32
        %v11515 = vpop.permute.xlu0 %11514
        %11516 = vrot.lane.b32.xlu0 %v11443, 32
        %v11517 = vpop.permute.xlu0 %11516
        %11518 = vrot.lane.b32.xlu0 %v11446, 32
        %v11519 = vpop.permute.xlu0 %11518
        %11520 = vrot.lane.b32.xlu0 %v11448, 32
        %v11521 = vpop.permute.xlu0 %11520
        %11522 = vrot.lane.b32.xlu0 %v11451, 32
        %v11523 = vpop.permute.xlu0 %11522
        %11524 = vrot.lane.b32.xlu0 %v11453, 32
        %v11525 = vpop.permute.xlu0 %11524
        %11526 = vrot.lane.b32.xlu0 %v11456, 32
        %v11527 = vpop.permute.xlu0 %11526
        %11528 = vrot.lane.b32.xlu0 %v11458, 32
        %v11529 = vpop.permute.xlu0 %11528
        %11530 = vrot.lane.b32.xlu0 %v11461, 32
        %v11531 = vpop.permute.xlu0 %11530
        %11532 = vrot.lane.b32.xlu0 %v11463, 32
        %v11533 = vpop.permute.xlu0 %11532
        %11534 = vrot.lane.b32.xlu0 %v11466, 32
        %v11535 = vpop.permute.xlu0 %11534
        %11536 = vrot.lane.b32.xlu0 %v11468, 32
        %v11537 = vpop.permute.xlu0 %11536
        %11538 = vrot.lane.b32.xlu0 %v11471, 32
        %v11539 = vpop.permute.xlu0 %11538
        %11540 = vrot.lane.b32.xlu0 %v11473, 32
        %v11541 = vpop.permute.xlu0 %11540
        %11542 = vrot.lane.b32.xlu0 %v11476, 32
        %v11543 = vpop.permute.xlu0 %11542
        %11544 = vrot.lane.b32.xlu0 %v11478, 32
        %v11545 = vpop.permute.xlu0 %11544
        %11546 = vrot.lane.b32.xlu0 %v11481, 32
        %v11547 = vpop.permute.xlu0 %11546
        %11548 = vrot.lane.b32.xlu0 %v11483, 32
        %v11549 = vpop.permute.xlu0 %11548
        %11550 = vrot.lane.b32.xlu0 %v11486, 32
        %v11551 = vpop.permute.xlu0 %11550
        %11552 = vrot.lane.b32.xlu0 %v11488, 32
        %v11553 = vpop.permute.xlu0 %11552
        %11554 = vrot.lane.b32.xlu0 %v11491, 32
        %v11555 = vpop.permute.xlu0 %11554
        %11556 = vrot.lane.b32.xlu0 %v11493, 32
        %v11557 = vpop.permute.xlu0 %11556
        %v11590 = vadd.f32 %v11382, %v11495
        %v11591 = vadd.f32 %v11383, %v11497
        %v11592 = vadd.f32 %v11384, %v11499
        %v11593 = vadd.f32 %v11385, %v11501
        %v11594 = vadd.f32 %v11386, %v11503
        %v11595 = vadd.f32 %v11387, %v11505
        %v11596 = vadd.f32 %v11388, %v11507
        %v11597 = vadd.f32 %v11389, %v11509
        %v11598 = vadd.f32 %v11390, %v11511
        %v11599 = vadd.f32 %v11391, %v11513
        %v11600 = vadd.f32 %v11392, %v11515
        %v11601 = vadd.f32 %v11393, %v11517
        %v11602 = vadd.f32 %v11394, %v11519
        %v11603 = vadd.f32 %v11395, %v11521
        %v11604 = vadd.f32 %v11396, %v11523
        %v11605 = vadd.f32 %v11397, %v11525
        %v11606 = vadd.f32 %v11398, %v11527
        %v11607 = vadd.f32 %v11399, %v11529
        %v11608 = vadd.f32 %v11400, %v11531
        %v11609 = vadd.f32 %v11401, %v11533
        %v11610 = vadd.f32 %v11402, %v11535
        %v11611 = vadd.f32 %v11403, %v11537
        %v11612 = vadd.f32 %v11404, %v11539
        %v11613 = vadd.f32 %v11405, %v11541
        %v11614 = vadd.f32 %v11406, %v11543
        %v11615 = vadd.f32 %v11407, %v11545
        %v11616 = vadd.f32 %v11408, %v11547
        %v11617 = vadd.f32 %v11409, %v11549
        %v11618 = vadd.f32 %v11410, %v11551
        %v11619 = vadd.f32 %v11411, %v11553
        %v11620 = vadd.f32 %v11412, %v11555
        %v11621 = vadd.f32 %v11413, %v11557
        %v11670 = vrot.slane %v10770, 4
        %v11671 = vrot.slane %v10773, 4
        %v11672 = vsel %vm3407, %v11670, %v11671
        %v11673 = vrot.slane %v10776, 4
        %v11674 = vsel %vm3407, %v11671, %v11673
        %v11675 = vrot.slane %v10779, 4
        %v11676 = vrot.slane %v10782, 4
        %v11677 = vsel %vm3407, %v11675, %v11676
        %v11678 = vrot.slane %v10785, 4
        %v11679 = vsel %vm3407, %v11676, %v11678
        %v11680 = vrot.slane %v10788, 4
        %v11681 = vrot.slane %v10791, 4
        %v11682 = vsel %vm3407, %v11680, %v11681
        %v11683 = vrot.slane %v10794, 4
        %v11684 = vsel %vm3407, %v11681, %v11683
        %v11685 = vrot.slane %v10797, 4
        %v11686 = vrot.slane %v10800, 4
        %v11687 = vsel %vm3407, %v11685, %v11686
        %v11688 = vrot.slane %v10803, 4
        %v11689 = vsel %vm3407, %v11686, %v11688
        %v11690 = vrot.slane %v10806, 4
        %v11691 = vrot.slane %v10809, 4
        %v11692 = vsel %vm3407, %v11690, %v11691
        %v11693 = vrot.slane %v10812, 4
        %v11694 = vsel %vm3407, %v11691, %v11693
        %v11695 = vrot.slane %v10815, 4
        %v11696 = vrot.slane %v10818, 4
        %v11697 = vsel %vm3407, %v11695, %v11696
        %v11698 = vrot.slane %v10821, 4
        %v11699 = vsel %vm3407, %v11696, %v11698
        %v11700 = vrot.slane %v10824, 4
        %v11701 = vrot.slane %v10827, 4
        %v11702 = vsel %vm3407, %v11700, %v11701
        %v11703 = vrot.slane %v10830, 4
        %v11704 = vsel %vm3407, %v11701, %v11703
        %v11705 = vrot.slane %v10833, 4
        %v11706 = vrot.slane %v10836, 4
        %v11707 = vsel %vm3407, %v11705, %v11706
        %v11708 = vrot.slane %v10839, 4
        %v11709 = vsel %vm3407, %v11706, %v11708
        %v11710 = vrot.slane %v10842, 4
        %v11711 = vrot.slane %v10845, 4
        %v11712 = vsel %vm3407, %v11710, %v11711
        %v11713 = vrot.slane %v10848, 4
        %v11714 = vsel %vm3407, %v11711, %v11713
        %v11715 = vrot.slane %v10851, 4
        %v11716 = vrot.slane %v10854, 4
        %v11717 = vsel %vm3407, %v11715, %v11716
        %v11718 = vrot.slane %v10857, 4
        %v11719 = vsel %vm3407, %v11716, %v11718
        %v11720 = vrot.slane %v10860, 4
        %v11721 = vrot.slane %v10863, 4
        %v11722 = vsel %vm3407, %v11720, %v11721
        %v11723 = vrot.slane %v10866, 4
        %v11724 = vsel %vm3407, %v11721, %v11723
        %v11725 = vrot.slane %v10869, 4
        %v11726 = vrot.slane %v10872, 4
        %v11727 = vsel %vm3407, %v11725, %v11726
        %v11728 = vrot.slane %v10875, 4
        %v11729 = vsel %vm3407, %v11726, %v11728
        %v11730 = vrot.slane %v10878, 4
        %v11731 = vrot.slane %v10881, 4
        %v11732 = vsel %vm3407, %v11730, %v11731
        %v11733 = vrot.slane %v10884, 4
        %v11734 = vsel %vm3407, %v11731, %v11733
        %v11735 = vrot.slane %v10887, 4
        %v11736 = vrot.slane %v10890, 4
        %v11737 = vsel %vm3407, %v11735, %v11736
        %v11738 = vrot.slane %v10893, 4
        %v11739 = vsel %vm3407, %v11736, %v11738
        %v11740 = vrot.slane %v10896, 4
        %v11741 = vrot.slane %v10899, 4
        %v11742 = vsel %vm3407, %v11740, %v11741
        %v11743 = vrot.slane %v10902, 4
        %v11744 = vsel %vm3407, %v11741, %v11743
        %v11745 = vrot.slane %v10905, 4
        %v11746 = vrot.slane %v10908, 4
        %v11747 = vsel %vm3407, %v11745, %v11746
        %v11748 = vrot.slane %v10911, 4
        %v11749 = vsel %vm3407, %v11746, %v11748
        %v11782 = vadd.f32 %v11590, %v11672
        %v11783 = vadd.f32 %v11591, %v11674
        %v11784 = vadd.f32 %v11592, %v11677
        %v11785 = vadd.f32 %v11593, %v11679
        %v11786 = vadd.f32 %v11594, %v11682
        %v11787 = vadd.f32 %v11595, %v11684
        %v11788 = vadd.f32 %v11596, %v11687
        %v11789 = vadd.f32 %v11597, %v11689
        %v11790 = vadd.f32 %v11598, %v11692
        %v11791 = vadd.f32 %v11599, %v11694
        %v11792 = vadd.f32 %v11600, %v11697
        %v11793 = vadd.f32 %v11601, %v11699
        %v11794 = vadd.f32 %v11602, %v11702
        %v11795 = vadd.f32 %v11603, %v11704
        %v11796 = vadd.f32 %v11604, %v11707
        %v11797 = vadd.f32 %v11605, %v11709
        %v11798 = vadd.f32 %v11606, %v11712
        %v11799 = vadd.f32 %v11607, %v11714
        %v11800 = vadd.f32 %v11608, %v11717
        %v11801 = vadd.f32 %v11609, %v11719
        %v11802 = vadd.f32 %v11610, %v11722
        %v11803 = vadd.f32 %v11611, %v11724
        %v11804 = vadd.f32 %v11612, %v11727
        %v11805 = vadd.f32 %v11613, %v11729
        %v11806 = vadd.f32 %v11614, %v11732
        %v11807 = vadd.f32 %v11615, %v11734
        %v11808 = vadd.f32 %v11616, %v11737
        %v11809 = vadd.f32 %v11617, %v11739
        %v11810 = vadd.f32 %v11618, %v11742
        %v11811 = vadd.f32 %v11619, %v11744
        %v11812 = vadd.f32 %v11620, %v11747
        %v11813 = vadd.f32 %v11621, %v11749
        %v11814 = vrot.slane %v11786, 4
        %v11815 = vsel %vm374, %v11814, %v11782
        %v11816 = vrot.slane %v11782, 4
        %v11817 = vsel %vm374, %v11786, %v11816
        %v11819 = vunpack.c.l.s4 1983009808
        %v11820 = vunpack.c.0.s8 %v11819
        %v11821 = vperm.slane %v11815, %v11820
        %v11823 = vunpack.c.l.s4 1983009808
        %v11824 = vunpack.c.0.s8 %v11823
        %v11825 = vperm.slane %v11817, %v11824
        %v11826 = vrot.slane %v11788, 4
        %v11827 = vsel %vm374, %v11826, %v11784
        %v11828 = vrot.slane %v11784, 4
        %v11829 = vsel %vm374, %v11788, %v11828
        %v11831 = vunpack.c.l.s4 1983009808
        %v11832 = vunpack.c.0.s8 %v11831
        %v11833 = vperm.slane %v11827, %v11832
        %v11835 = vunpack.c.l.s4 1983009808
        %v11836 = vunpack.c.0.s8 %v11835
        %v11837 = vperm.slane %v11829, %v11836
        %v11838 = vrot.slane %v11794, 4
        %v11839 = vsel %vm374, %v11838, %v11790
        %v11840 = vrot.slane %v11790, 4
        %v11841 = vsel %vm374, %v11794, %v11840
        %v11843 = vunpack.c.l.s4 1983009808
        %v11844 = vunpack.c.0.s8 %v11843
        %v11845 = vperm.slane %v11839, %v11844
        %v11847 = vunpack.c.l.s4 1983009808
        %v11848 = vunpack.c.0.s8 %v11847
        %v11849 = vperm.slane %v11841, %v11848
        %v11850 = vrot.slane %v11796, 4
        %v11851 = vsel %vm374, %v11850, %v11792
        %v11852 = vrot.slane %v11792, 4
        %v11853 = vsel %vm374, %v11796, %v11852
        %v11855 = vunpack.c.l.s4 1983009808
        %v11856 = vunpack.c.0.s8 %v11855
        %v11857 = vperm.slane %v11851, %v11856
        %v11859 = vunpack.c.l.s4 1983009808
        %v11860 = vunpack.c.0.s8 %v11859
        %v11861 = vperm.slane %v11853, %v11860
        %v11862 = vrot.slane %v11833, 4
        %v11863 = vsel %vm374, %v11862, %v11821
        %v11864 = vrot.slane %v11821, 4
        %v11865 = vsel %vm374, %v11833, %v11864
        %v11867 = vunpack.c.l.s4 1934713408
        %v11868 = vunpack.c.0.s8 %v11867
        %v11869 = vperm.slane %v11863, %v11868
        %v11871 = vunpack.c.l.s4 1934713408
        %v11872 = vunpack.c.0.s8 %v11871
        %v11873 = vperm.slane %v11865, %v11872
        %v11874 = vrot.slane %v11837, 4
        %v11875 = vsel %vm374, %v11874, %v11825
        %v11876 = vrot.slane %v11825, 4
        %v11877 = vsel %vm374, %v11837, %v11876
        %v11879 = vunpack.c.l.s4 1934713408
        %v11880 = vunpack.c.0.s8 %v11879
        %v11881 = vperm.slane %v11875, %v11880
        %v11883 = vunpack.c.l.s4 1934713408
        %v11884 = vunpack.c.0.s8 %v11883
        %v11885 = vperm.slane %v11877, %v11884
        %v11886 = vrot.slane %v11857, 4
        %v11887 = vsel %vm374, %v11886, %v11845
        %v11888 = vrot.slane %v11845, 4
        %v11889 = vsel %vm374, %v11857, %v11888
        %v11891 = vunpack.c.l.s4 1934713408
        %v11892 = vunpack.c.0.s8 %v11891
        %v11893 = vperm.slane %v11887, %v11892
        %v11895 = vunpack.c.l.s4 1934713408
        %v11896 = vunpack.c.0.s8 %v11895
        %v11897 = vperm.slane %v11889, %v11896
        %v11898 = vrot.slane %v11861, 4
        %v11899 = vsel %vm374, %v11898, %v11849
        %v11900 = vrot.slane %v11849, 4
        %v11901 = vsel %vm374, %v11861, %v11900
        %v11903 = vunpack.c.l.s4 1934713408
        %v11904 = vunpack.c.0.s8 %v11903
        %v11905 = vperm.slane %v11899, %v11904
        %v11907 = vunpack.c.l.s4 1934713408
        %v11908 = vunpack.c.0.s8 %v11907
        %v11909 = vperm.slane %v11901, %v11908
        %v11910 = vrot.slane %v11893, 4
        %v11911 = vsel %vm374, %v11910, %v11869
        %v11912 = vrot.slane %v11869, 4
        %v11913 = vsel %vm374, %v11893, %v11912
        %v11914 = vrot.slane %v11897, 4
        %v11915 = vsel %vm374, %v11914, %v11873
        %v11916 = vrot.slane %v11873, 4
        %v11917 = vsel %vm374, %v11897, %v11916
        %v11918 = vrot.slane %v11905, 4
        %v11919 = vsel %vm374, %v11918, %v11881
        %v11920 = vrot.slane %v11881, 4
        %v11921 = vsel %vm374, %v11905, %v11920
        %v11922 = vrot.slane %v11909, 4
        %v11923 = vsel %vm374, %v11922, %v11885
        %v11924 = vrot.slane %v11885, 4
        %v11925 = vsel %vm374, %v11909, %v11924
        %v11926 = vrot.slane %v11802, 4
        %v11927 = vsel %vm374, %v11926, %v11798
        %v11928 = vrot.slane %v11798, 4
        %v11929 = vsel %vm374, %v11802, %v11928
        %v11931 = vunpack.c.l.s4 1983009808
        %v11932 = vunpack.c.0.s8 %v11931
        %v11933 = vperm.slane %v11927, %v11932
        %v11935 = vunpack.c.l.s4 1983009808
        %v11936 = vunpack.c.0.s8 %v11935
        %v11937 = vperm.slane %v11929, %v11936
        %v11938 = vrot.slane %v11804, 4
        %v11939 = vsel %vm374, %v11938, %v11800
        %v11940 = vrot.slane %v11800, 4
        %v11941 = vsel %vm374, %v11804, %v11940
        %v11943 = vunpack.c.l.s4 1983009808
        %v11944 = vunpack.c.0.s8 %v11943
        %v11945 = vperm.slane %v11939, %v11944
        %v11947 = vunpack.c.l.s4 1983009808
        %v11948 = vunpack.c.0.s8 %v11947
        %v11949 = vperm.slane %v11941, %v11948
        %v11950 = vrot.slane %v11810, 4
        %v11951 = vsel %vm374, %v11950, %v11806
        %v11952 = vrot.slane %v11806, 4
        %v11953 = vsel %vm374, %v11810, %v11952
        %v11955 = vunpack.c.l.s4 1983009808
        %v11956 = vunpack.c.0.s8 %v11955
        %v11957 = vperm.slane %v11951, %v11956
        %v11959 = vunpack.c.l.s4 1983009808
        %v11960 = vunpack.c.0.s8 %v11959
        %v11961 = vperm.slane %v11953, %v11960
        %v11962 = vrot.slane %v11812, 4
        %v11963 = vsel %vm374, %v11962, %v11808
        %v11964 = vrot.slane %v11808, 4
        %v11965 = vsel %vm374, %v11812, %v11964
        %v11967 = vunpack.c.l.s4 1983009808
        %v11968 = vunpack.c.0.s8 %v11967
        %v11969 = vperm.slane %v11963, %v11968
        %v11971 = vunpack.c.l.s4 1983009808
        %v11972 = vunpack.c.0.s8 %v11971
        %v11973 = vperm.slane %v11965, %v11972
        %v11974 = vrot.slane %v11945, 4
        %v11975 = vsel %vm374, %v11974, %v11933
        %v11976 = vrot.slane %v11933, 4
        %v11977 = vsel %vm374, %v11945, %v11976
        %v11979 = vunpack.c.l.s4 1934713408
        %v11980 = vunpack.c.0.s8 %v11979
        %v11981 = vperm.slane %v11975, %v11980
        %v11983 = vunpack.c.l.s4 1934713408
        %v11984 = vunpack.c.0.s8 %v11983
        %v11985 = vperm.slane %v11977, %v11984
        %v11986 = vrot.slane %v11949, 4
        %v11987 = vsel %vm374, %v11986, %v11937
        %v11988 = vrot.slane %v11937, 4
        %v11989 = vsel %vm374, %v11949, %v11988
        %v11991 = vunpack.c.l.s4 1934713408
        %v11992 = vunpack.c.0.s8 %v11991
        %v11993 = vperm.slane %v11987, %v11992
        %v11995 = vunpack.c.l.s4 1934713408
        %v11996 = vunpack.c.0.s8 %v11995
        %v11997 = vperm.slane %v11989, %v11996
        %v11998 = vrot.slane %v11969, 4
        %v11999 = vsel %vm374, %v11998, %v11957
        %v12000 = vrot.slane %v11957, 4
        %v12001 = vsel %vm374, %v11969, %v12000
        %v12003 = vunpack.c.l.s4 1934713408
        %v12004 = vunpack.c.0.s8 %v12003
        %v12005 = vperm.slane %v11999, %v12004
        %v12007 = vunpack.c.l.s4 1934713408
        %v12008 = vunpack.c.0.s8 %v12007
        %v12009 = vperm.slane %v12001, %v12008
        %v12010 = vrot.slane %v11973, 4
        %v12011 = vsel %vm374, %v12010, %v11961
        %v12012 = vrot.slane %v11961, 4
        %v12013 = vsel %vm374, %v11973, %v12012
        %v12015 = vunpack.c.l.s4 1934713408
        %v12016 = vunpack.c.0.s8 %v12015
        %v12017 = vperm.slane %v12011, %v12016
        %v12019 = vunpack.c.l.s4 1934713408
        %v12020 = vunpack.c.0.s8 %v12019
        %v12021 = vperm.slane %v12013, %v12020
        %v12022 = vrot.slane %v12005, 4
        %v12023 = vsel %vm374, %v12022, %v11981
        %v12024 = vrot.slane %v11981, 4
        %v12025 = vsel %vm374, %v12005, %v12024
        %v12026 = vrot.slane %v12009, 4
        %v12027 = vsel %vm374, %v12026, %v11985
        %v12028 = vrot.slane %v11985, 4
        %v12029 = vsel %vm374, %v12009, %v12028
        %v12030 = vrot.slane %v12017, 4
        %v12031 = vsel %vm374, %v12030, %v11993
        %v12032 = vrot.slane %v11993, 4
        %v12033 = vsel %vm374, %v12017, %v12032
        %v12034 = vrot.slane %v12021, 4
        %v12035 = vsel %vm374, %v12034, %v11997
        %v12036 = vrot.slane %v11997, 4
        %v12037 = vsel %vm374, %v12021, %v12036
        %v12038 = vrot.slane %v11787, 4
        %v12039 = vsel %vm374, %v12038, %v11783
        %v12040 = vrot.slane %v11783, 4
        %v12041 = vsel %vm374, %v11787, %v12040
        %v12043 = vunpack.c.l.s4 1983009808
        %v12044 = vunpack.c.0.s8 %v12043
        %v12045 = vperm.slane %v12039, %v12044
        %v12047 = vunpack.c.l.s4 1983009808
        %v12048 = vunpack.c.0.s8 %v12047
        %v12049 = vperm.slane %v12041, %v12048
        %v12050 = vrot.slane %v11789, 4
        %v12051 = vsel %vm374, %v12050, %v11785
        %v12052 = vrot.slane %v11785, 4
        %v12053 = vsel %vm374, %v11789, %v12052
        %v12055 = vunpack.c.l.s4 1983009808
        %v12056 = vunpack.c.0.s8 %v12055
        %v12057 = vperm.slane %v12051, %v12056
        %v12059 = vunpack.c.l.s4 1983009808
        %v12060 = vunpack.c.0.s8 %v12059
        %v12061 = vperm.slane %v12053, %v12060
        %v12062 = vrot.slane %v11795, 4
        %v12063 = vsel %vm374, %v12062, %v11791
        %v12064 = vrot.slane %v11791, 4
        %v12065 = vsel %vm374, %v11795, %v12064
        %v12067 = vunpack.c.l.s4 1983009808
        %v12068 = vunpack.c.0.s8 %v12067
        %v12069 = vperm.slane %v12063, %v12068
        %v12071 = vunpack.c.l.s4 1983009808
        %v12072 = vunpack.c.0.s8 %v12071
        %v12073 = vperm.slane %v12065, %v12072
        %v12074 = vrot.slane %v11797, 4
        %v12075 = vsel %vm374, %v12074, %v11793
        %v12076 = vrot.slane %v11793, 4
        %v12077 = vsel %vm374, %v11797, %v12076
        %v12079 = vunpack.c.l.s4 1983009808
        %v12080 = vunpack.c.0.s8 %v12079
        %v12081 = vperm.slane %v12075, %v12080
        %v12083 = vunpack.c.l.s4 1983009808
        %v12084 = vunpack.c.0.s8 %v12083
        %v12085 = vperm.slane %v12077, %v12084
        %v12086 = vrot.slane %v12057, 4
        %v12087 = vsel %vm374, %v12086, %v12045
        %v12088 = vrot.slane %v12045, 4
        %v12089 = vsel %vm374, %v12057, %v12088
        %v12091 = vunpack.c.l.s4 1934713408
        %v12092 = vunpack.c.0.s8 %v12091
        %v12093 = vperm.slane %v12087, %v12092
        %v12095 = vunpack.c.l.s4 1934713408
        %v12096 = vunpack.c.0.s8 %v12095
        %v12097 = vperm.slane %v12089, %v12096
        %v12098 = vrot.slane %v12061, 4
        %v12099 = vsel %vm374, %v12098, %v12049
        %v12100 = vrot.slane %v12049, 4
        %v12101 = vsel %vm374, %v12061, %v12100
        %v12103 = vunpack.c.l.s4 1934713408
        %v12104 = vunpack.c.0.s8 %v12103
        %v12105 = vperm.slane %v12099, %v12104
        %v12107 = vunpack.c.l.s4 1934713408
        %v12108 = vunpack.c.0.s8 %v12107
        %v12109 = vperm.slane %v12101, %v12108
        %v12110 = vrot.slane %v12081, 4
        %v12111 = vsel %vm374, %v12110, %v12069
        %v12112 = vrot.slane %v12069, 4
        %v12113 = vsel %vm374, %v12081, %v12112
        %v12115 = vunpack.c.l.s4 1934713408
        %v12116 = vunpack.c.0.s8 %v12115
        %v12117 = vperm.slane %v12111, %v12116
        %v12119 = vunpack.c.l.s4 1934713408
        %v12120 = vunpack.c.0.s8 %v12119
        %v12121 = vperm.slane %v12113, %v12120
        %v12122 = vrot.slane %v12085, 4
        %v12123 = vsel %vm374, %v12122, %v12073
        %v12124 = vrot.slane %v12073, 4
        %v12125 = vsel %vm374, %v12085, %v12124
        %v12127 = vunpack.c.l.s4 1934713408
        %v12128 = vunpack.c.0.s8 %v12127
        %v12129 = vperm.slane %v12123, %v12128
        %v12131 = vunpack.c.l.s4 1934713408
        %v12132 = vunpack.c.0.s8 %v12131
        %v12133 = vperm.slane %v12125, %v12132
        %v12134 = vrot.slane %v12117, 4
        %v12135 = vsel %vm374, %v12134, %v12093
        %v12136 = vrot.slane %v12093, 4
        %v12137 = vsel %vm374, %v12117, %v12136
        %v12138 = vrot.slane %v12121, 4
        %v12139 = vsel %vm374, %v12138, %v12097
        %v12140 = vrot.slane %v12097, 4
        %v12141 = vsel %vm374, %v12121, %v12140
        %v12142 = vrot.slane %v12129, 4
        %v12143 = vsel %vm374, %v12142, %v12105
        %v12144 = vrot.slane %v12105, 4
        %v12145 = vsel %vm374, %v12129, %v12144
        %v12146 = vrot.slane %v12133, 4
        %v12147 = vsel %vm374, %v12146, %v12109
        %v12148 = vrot.slane %v12109, 4
        %v12149 = vsel %vm374, %v12133, %v12148
        %v12150 = vrot.slane %v11803, 4
        %v12151 = vsel %vm374, %v12150, %v11799
        %v12152 = vrot.slane %v11799, 4
        %v12153 = vsel %vm374, %v11803, %v12152
        %v12155 = vunpack.c.l.s4 1983009808
        %v12156 = vunpack.c.0.s8 %v12155
        %v12157 = vperm.slane %v12151, %v12156
        %v12159 = vunpack.c.l.s4 1983009808
        %v12160 = vunpack.c.0.s8 %v12159
        %v12161 = vperm.slane %v12153, %v12160
        %v12162 = vrot.slane %v11805, 4
        %v12163 = vsel %vm374, %v12162, %v11801
        %v12164 = vrot.slane %v11801, 4
        %v12165 = vsel %vm374, %v11805, %v12164
        %v12167 = vunpack.c.l.s4 1983009808
        %v12168 = vunpack.c.0.s8 %v12167
        %v12169 = vperm.slane %v12163, %v12168
        %v12171 = vunpack.c.l.s4 1983009808
        %v12172 = vunpack.c.0.s8 %v12171
        %v12173 = vperm.slane %v12165, %v12172
        %v12174 = vrot.slane %v11811, 4
        %v12175 = vsel %vm374, %v12174, %v11807
        %v12176 = vrot.slane %v11807, 4
        %v12177 = vsel %vm374, %v11811, %v12176
        %v12179 = vunpack.c.l.s4 1983009808
        %v12180 = vunpack.c.0.s8 %v12179
        %v12181 = vperm.slane %v12175, %v12180
        %v12183 = vunpack.c.l.s4 1983009808
        %v12184 = vunpack.c.0.s8 %v12183
        %v12185 = vperm.slane %v12177, %v12184
        %v12186 = vrot.slane %v11813, 4
        %v12187 = vsel %vm374, %v12186, %v11809
        %v12188 = vrot.slane %v11809, 4
        %v12189 = vsel %vm374, %v11813, %v12188
        %v12191 = vunpack.c.l.s4 1983009808
        %v12192 = vunpack.c.0.s8 %v12191
        %v12193 = vperm.slane %v12187, %v12192
        %v12195 = vunpack.c.l.s4 1983009808
        %v12196 = vunpack.c.0.s8 %v12195
        %v12197 = vperm.slane %v12189, %v12196
        %v12198 = vrot.slane %v12169, 4
        %v12199 = vsel %vm374, %v12198, %v12157
        %v12200 = vrot.slane %v12157, 4
        %v12201 = vsel %vm374, %v12169, %v12200
        %v12203 = vunpack.c.l.s4 1934713408
        %v12204 = vunpack.c.0.s8 %v12203
        %v12205 = vperm.slane %v12199, %v12204
        %v12207 = vunpack.c.l.s4 1934713408
        %v12208 = vunpack.c.0.s8 %v12207
        %v12209 = vperm.slane %v12201, %v12208
        %v12210 = vrot.slane %v12173, 4
        %v12211 = vsel %vm374, %v12210, %v12161
        %v12212 = vrot.slane %v12161, 4
        %v12213 = vsel %vm374, %v12173, %v12212
        %v12215 = vunpack.c.l.s4 1934713408
        %v12216 = vunpack.c.0.s8 %v12215
        %v12217 = vperm.slane %v12211, %v12216
        %v12219 = vunpack.c.l.s4 1934713408
        %v12220 = vunpack.c.0.s8 %v12219
        %v12221 = vperm.slane %v12213, %v12220
        %v12222 = vrot.slane %v12193, 4
        %v12223 = vsel %vm374, %v12222, %v12181
        %v12224 = vrot.slane %v12181, 4
        %v12225 = vsel %vm374, %v12193, %v12224
        %v12227 = vunpack.c.l.s4 1934713408
        %v12228 = vunpack.c.0.s8 %v12227
        %v12229 = vperm.slane %v12223, %v12228
        %v12231 = vunpack.c.l.s4 1934713408
        %v12232 = vunpack.c.0.s8 %v12231
        %v12233 = vperm.slane %v12225, %v12232
        %v12234 = vrot.slane %v12197, 4
        %v12235 = vsel %vm374, %v12234, %v12185
        %v12236 = vrot.slane %v12185, 4
        %v12237 = vsel %vm374, %v12197, %v12236
        %v12239 = vunpack.c.l.s4 1934713408
        %v12240 = vunpack.c.0.s8 %v12239
        %v12241 = vperm.slane %v12235, %v12240
        %v12243 = vunpack.c.l.s4 1934713408
        %v12244 = vunpack.c.0.s8 %v12243
        %v12245 = vperm.slane %v12237, %v12244
        %v12246 = vrot.slane %v12229, 4
        %v12247 = vsel %vm374, %v12246, %v12205
        %v12248 = vrot.slane %v12205, 4
        %v12249 = vsel %vm374, %v12229, %v12248
        %v12250 = vrot.slane %v12233, 4
        %v12251 = vsel %vm374, %v12250, %v12209
        %v12252 = vrot.slane %v12209, 4
        %v12253 = vsel %vm374, %v12233, %v12252
        %v12254 = vrot.slane %v12241, 4
        %v12255 = vsel %vm374, %v12254, %v12217
        %v12256 = vrot.slane %v12217, 4
        %v12257 = vsel %vm374, %v12241, %v12256
        %v12258 = vrot.slane %v12245, 4
        %v12259 = vsel %vm374, %v12258, %v12221
        %v12260 = vrot.slane %v12221, 4
        %v12261 = vsel %vm374, %v12245, %v12260
        %12264 = vrot.lane.b32.xlu0 %v11913, 32
        %v12265 = vpop.permute.xlu0 %12264
        %12266 = vrot.lane.b32.xlu0 %v12025, 32
        %v12267 = vpop.permute.xlu0 %12266
        %12272 = vrot.lane.b32.xlu0 %v11915, 64
        %v12273 = vpop.permute.xlu0 %12272
        %12274 = vrot.lane.b32.xlu0 %v12027, 64
        %v12275 = vpop.permute.xlu0 %12274
        %12280 = vrot.lane.b32.xlu0 %v11917, 96
        %v12281 = vpop.permute.xlu0 %12280
        %12282 = vrot.lane.b32.xlu0 %v12029, 96
        %v12283 = vpop.permute.xlu0 %12282
        %12288 = vrot.lane.b32.xlu0 %v11921, 32
        %v12289 = vpop.permute.xlu0 %12288
        %12290 = vrot.lane.b32.xlu0 %v12033, 32
        %v12291 = vpop.permute.xlu0 %12290
        %12296 = vrot.lane.b32.xlu0 %v11923, 64
        %v12297 = vpop.permute.xlu0 %12296
        %12298 = vrot.lane.b32.xlu0 %v12035, 64
        %v12299 = vpop.permute.xlu0 %12298
        %12304 = vrot.lane.b32.xlu0 %v11925, 96
        %v12305 = vpop.permute.xlu0 %12304
        %12306 = vrot.lane.b32.xlu0 %v12037, 96
        %v12307 = vpop.permute.xlu0 %12306
        %12312 = vrot.lane.b32.xlu0 %v12137, 32
        %v12313 = vpop.permute.xlu0 %12312
        %12314 = vrot.lane.b32.xlu0 %v12249, 32
        %v12315 = vpop.permute.xlu0 %12314
        %12320 = vrot.lane.b32.xlu0 %v12139, 64
        %v12321 = vpop.permute.xlu0 %12320
        %12322 = vrot.lane.b32.xlu0 %v12251, 64
        %v12323 = vpop.permute.xlu0 %12322
        %12328 = vrot.lane.b32.xlu0 %v12141, 96
        %v12329 = vpop.permute.xlu0 %12328
        %12330 = vrot.lane.b32.xlu0 %v12253, 96
        %v12331 = vpop.permute.xlu0 %12330
        %12336 = vrot.lane.b32.xlu0 %v12145, 32
        %v12337 = vpop.permute.xlu0 %12336
        %12338 = vrot.lane.b32.xlu0 %v12257, 32
        %v12339 = vpop.permute.xlu0 %12338
        %12344 = vrot.lane.b32.xlu0 %v12147, 64
        %v12345 = vpop.permute.xlu0 %12344
        %12346 = vrot.lane.b32.xlu0 %v12259, 64
        %v12347 = vpop.permute.xlu0 %12346
        %12352 = vrot.lane.b32.xlu0 %v12149, 96
        %v12353 = vpop.permute.xlu0 %12352
        %12354 = vrot.lane.b32.xlu0 %v12261, 96
        %v12355 = vpop.permute.xlu0 %12354
        %v12358 = vsel %vm224, %v11911, %v12265
        %v12359 = vsel %vm224, %v12023, %v12267
        %v12360 = vsel %vm1722, %v12358, %v12273
        %v12361 = vsel %vm1722, %v12359, %v12275
        %v12362 = vsel %vm1771, %v12360, %v12281
        %v12363 = vsel %vm1771, %v12361, %v12283
        %v12364 = vsel %vm224, %v11919, %v12289
        %v12365 = vsel %vm224, %v12031, %v12291
        %v12366 = vsel %vm1722, %v12364, %v12297
        %v12367 = vsel %vm1722, %v12365, %v12299
        %v12368 = vsel %vm1771, %v12366, %v12305
        %v12369 = vsel %vm1771, %v12367, %v12307
        %v12370 = vsel %vm224, %v12135, %v12313
        %v12371 = vsel %vm224, %v12247, %v12315
        %v12372 = vsel %vm1722, %v12370, %v12321
        %v12373 = vsel %vm1722, %v12371, %v12323
        %v12374 = vsel %vm1771, %v12372, %v12329
        %v12375 = vsel %vm1771, %v12373, %v12331
        %v12376 = vsel %vm224, %v12143, %v12337
        %v12377 = vsel %vm224, %v12255, %v12339
        %v12378 = vsel %vm1722, %v12376, %v12345
        %v12379 = vsel %vm1722, %v12377, %v12347
        %v12380 = vsel %vm1771, %v12378, %v12353
        %v12381 = vsel %vm1771, %v12379, %v12355
        %12382 = vst [vmem:[%s223] sm:$0xff] %v12362
        %12383 = vst [vmem:[%s223 + $0x8] sm:$0xff] %v12368
        %12384 = vst [vmem:[%s223 + $0x10] sm:$0xff] %v12374
        %12385 = vst [vmem:[%s223 + $0x18] sm:$0xff] %v12380
        %12386 = vst [vmem:[%s223 + $0x20] sm:$0xff] %v12363
        %12387 = vst [vmem:[%s223 + $0x28] sm:$0xff] %v12369
        %12388 = vst [vmem:[%s223 + $0x30] sm:$0xff] %v12375
        %12389 = vst [vmem:[%s223 + $0x38] sm:$0xff] %v12381
        %s12390 = sand.u32 %s97, 1
        %s12391 = scalar_lea.sflag [#allocation5], %s12390
        %s12392 = sand.u32 %s97, 1
        %s12393 = smul.addr %s12392, 64
        %s12394 = scalar_lea.vmem [#allocation9], %s12393
        // Predicated region
        $region45: #{tpu_custom_call.1} parent=31 // pred_check
          %p12395 = pneg %p107
        $region46: #{tpu_custom_call.1} parent=31 // pred_check_branch
          %12397 = sbr.rel (%p12395) target = $region48
        $region47: #{tpu_custom_call.1} parent=31 // pred_region
          %12399 = vsyncadd %s12391, 0
          %s12400 = smul.addr %s21, 8
          %s12401 = smul.addr %s12400, 8
          %s12402 = scalar_lea.hbm %s3, %s12401
          %s12403 = sshll.u32 %s12394, 4
          %s12404 = int_to_ptr.vmem [resolvable:$true] %s12403
          %s12405 = sshll.u32 %s12402, 4
          %s12406 = int_to_ptr.hbm [resolvable:$true] %s12405
          %12411 = dma.vmem_to_hbm [thread:$0]  %s12404, 1024, %s12406, %s12391, 512, 512, 32
        $region48: #{tpu_custom_call.1} parent=31 // pred_fallthru
          _
      $region32: #{tpu_custom_call.1} parent=5 // pred_fallthru
        _
      %p12412 = scmp.le.s32.totalorder 2, %s16
      // Predicated region
      $region49: #{tpu_custom_call.1} parent=5 // pred_check
        %p12413 = pneg %p12412
      $region50: #{tpu_custom_call.1} parent=5 // pred_check_branch
        %12415 = sbr.rel (%p12413) target = $region52
      $region51: #{tpu_custom_call.1} parent=5 // pred_region
        %s12416 = ssub.s32 %s16, 2
        // Predicated region
        $region53: #{tpu_custom_call.1} parent=51 // pred_check
          %p12417 = pneg %p113
        $region54: #{tpu_custom_call.1} parent=51 // pred_check_branch
          %12419 = sbr.rel (%p12417) target = $region56
        $region55: #{tpu_custom_call.1} parent=51 // pred_region
          %s12420 = sand.u32 %s98, 1
          %s12421 = scalar_lea.sflag [#allocation5], %s12420
          %s12422 = sand.u32 %s98, 1
          %s12423 = smul.addr %s12422, 64
          %s12424 = scalar_lea.vmem [#allocation9], %s12423
          %12426 = dma.done %s12421, 1024
        $region56: #{tpu_custom_call.1} parent=51 // pred_fallthru
          _
      $region52: #{tpu_custom_call.1} parent=5 // pred_fallthru
        _
    $region6: #{tpu_custom_call.1} parent=1 // loop_footer
      %s20 = sadd.s32 1, %s16
    $region7: #{tpu_custom_call.1} parent=1 // loop_footer_branch
      %15 = sbr.rel target = $region3
    $region8: #{tpu_custom_call.1} parent=1 // loop_exit
      _
    %12427 = vsyncpa [#allocation4], 1
    %s12428 = scalar_lea.sflag [#allocation4], 1
    %12429 = vsyncpa %s12428, 1
    %12430 = vsyncpa [#allocation7], 1
    %12431 = vsyncpa [#allocation5], 1
    %s12432 = scalar_lea.sflag [#allocation5], 1
    %12433 = vsyncpa %s12432, 1

</llo_original>
